<compile_context>
chip_gen: v5e
topology: v5e:2x2
jax: 0.10.0
libtpu: 0.0.40
codegen_flags: <defaults>
</compile_context>

<pallas_src>
import math
from functools import partial

import jax
import jax.numpy as jnp
from jax.experimental import pallas as pl
from jax.experimental.pallas import tpu as pltpu


# ----------------------------- in-kernel helpers -----------------------------

def _mm(x_f32, w_bf16):
    # x: (M, Din) f32, w: (Din, Dout) bf16 (pre-transposed in wrapper); bf16 MXU, f32 acc.
    return jax.lax.dot_general(x_f32.astype(jnp.bfloat16), w_bf16,
                               (((1,), (0,)), ((), ())),
                               preferred_element_type=jnp.float32)


def _gelu(x):
    # exact GELU (PyTorch F.gelu default, approximate='none'), f32
    return 0.5 * x * (1.0 + jax.lax.erf(x / math.sqrt(2.0)))


# --------------------------------- fused kernel --------------------------------

def transformer_embed_kernel(num_heads, reduction,
                             x_ref, mem_ref,
                             wqkv_ref, wout_ref, w1_ref, w2_ref, vec_ref,
                             out_ref):
    B, S, D = x_ref.shape
    Sk = mem_ref.shape[1]
    M = B * S
    Mk = B * Sk
    FF = w1_ref.shape[2]
    hd = D // num_heads

    # layer counts derived from slab shapes (static)
    n_attn = wqkv_ref.shape[0]                    # num_enc + 2*num_dec
    n_ffn = w1_ref.shape[0]                       # num_enc + num_dec
    num_dec = n_attn - n_ffn
    num_enc = n_ffn - num_dec
    n_ln = 2 * num_enc + 3 * num_dec

    # static row offsets inside the fused f32 vector slab (biases + LN params)
    off_bqkv = 0
    off_bout = n_attn
    off_b1 = 2 * n_attn
    off_b2 = 2 * n_attn + n_ffn
    off_lng = 2 * n_attn + 2 * n_ffn
    off_lnb = off_lng + n_ln

    def vrow(row, width):
        # one padded row of the vector slab, loaded at point of use -> (1, width) f32
        return vec_ref[row:row + 1, 0:width]

    def layernorm(h, ni):
        g = vrow(off_lng + ni, D)
        b = vrow(off_lnb + ni, D)
        mu = jnp.mean(h, axis=-1, keepdims=True)
        var = jnp.mean((h - mu) ** 2, axis=-1, keepdims=True)
        return (h - mu) * jax.lax.rsqrt(var + 1e-5) * g + b

    def attn(q2d, kv2d, s_k, ai, self_attn):
        # q2d: (M, D) f32 queries; kv2d: (B*s_k, D) f32 keys/values source.
        w_in = wqkv_ref[ai]                       # (D, 3D) bf16; Q cols pre-scaled 1/sqrt(hd)
        b_in = vrow(off_bqkv + ai, 3 * D)         # (1, 3D) f32
        q_proj = _mm(q2d, w_in) + b_in            # (M, 3D); only Q columns consumed
        if self_attn:
            kv_proj = q_proj
        else:
            # full fused projection on the memory too (the unused Q-of-mem column block is
            # ~30 KFLOP on an idle MXU) - avoids lane-slicing the weight slab for cross-attn.
            kv_proj = _mm(kv2d, w_in) + b_in      # (B*s_k, 3D); only K,V columns consumed

        heads = []
        for h in range(num_heads):                # static unroll; outputs stay in vregs
            qh = q_proj[:, h * hd:(h + 1) * hd].reshape(B, S, hd).astype(jnp.bfloat16)
            kh = kv_proj[:, D + h * hd:D + (h + 1) * hd].reshape(B, s_k, hd).astype(jnp.bfloat16)
            vh = kv_proj[:, 2 * D + h * hd:2 * D + (h + 1) * hd].reshape(B, s_k, hd).astype(jnp.bfloat16)
            s = jnp.einsum('bqd,bkd->bqk', qh, kh,
                           preferred_element_type=jnp.float32)          # (B, S, s_k) f32
            s = s - jnp.max(s, axis=-1, keepdims=True)
            p = jnp.exp(s)
            p = p * pl.reciprocal(jnp.sum(p, axis=-1, keepdims=True), approx=True)
            oh = jnp.einsum('bqk,bkd->bqd', p.astype(jnp.bfloat16), vh,
                            preferred_element_type=jnp.float32)         # (B, S, hd) f32
            heads.append(oh.reshape(M, hd))
        cat = jnp.concatenate(heads, axis=-1)                           # (M, D) f32, in vregs
        return _mm(cat, wout_ref[ai]) + vrow(off_bout + ai, D)

    def ffn(h2d, fi):
        h = _gelu(_mm(h2d, w1_ref[fi]) + vrow(off_b1 + fi, FF))
        return _mm(h, w2_ref[fi]) + vrow(off_b2 + fi, D)

    x = x_ref[...].reshape(M, D).astype(jnp.float32)

    ai = fi = ni = 0
    for _ in range(num_enc):
        x = layernorm(x + attn(x, x, S, ai, True), ni); ai += 1; ni += 1
        x = layernorm(x + ffn(x, fi), ni);              fi += 1; ni += 1

    if num_dec:
        mem = mem_ref[...].reshape(Mk, D).astype(jnp.float32)
    for _ in range(num_dec):
        x = layernorm(x + attn(x, x, S, ai, True), ni);    ai += 1; ni += 1
        x = layernorm(x + attn(x, mem, Sk, ai, False), ni); ai += 1; ni += 1
        x = layernorm(x + ffn(x, fi), ni);                  fi += 1; ni += 1

    x3 = x.reshape(B, S, D)
    if reduction == 'mean':
        red = jnp.mean(x3, axis=0)                 # mean over batch axis == PyTorch dim=1
    elif reduction == 'last':
        red = x3[-1]
    else:                                          # 'sum'
        red = jnp.sum(x3, axis=0)
    out_ref[...] = jnp.tanh(red).astype(out_ref.dtype)


# ------------------------------ parameter packing ------------------------------

def pack_transformer_params(enc_params, dec_params, num_heads):
    """Pack per-layer PyTorch-layout params into a handful of stacked slabs:
       bf16 weight stacks (pre-transposed to (Din, Dout), Q rows pre-scaled by 1/sqrt(hd))
       and ONE f32 slab whose rows hold every bias / layernorm vector (padded)."""
    src = enc_params if enc_params else dec_params
    D = src[0][0].shape[1]
    hd = D // num_heads
    scale = 1.0 / math.sqrt(hd)

    wqkv, wout, w1s, w2s = [], [], [], []
    bqkv, bout, b1s, b2s, lng, lnb = [], [], [], [], [], []

    def pack_attn(w_in, b_in, w_o, b_o):
        # fold 1/sqrt(hd) into the Q rows (first D output rows of the (3D, D) in_proj)
        w_in = jnp.concatenate([w_in[:D] * scale, w_in[D:]], axis=0)
        b_in = jnp.concatenate([b_in[:, :D] * scale, b_in[:, D:]], axis=1)
        wqkv.append(w_in.T.astype(jnp.bfloat16))      # (D, 3D)
        wout.append(w_o.T.astype(jnp.bfloat16))       # (D, D)
        bqkv.append(b_in[0])                          # (3D,)
        bout.append(b_o[0])                           # (D,)

    def pack_ffn(w1, b1, w2, b2):
        w1s.append(w1.T.astype(jnp.bfloat16))          # (D, FF)
        w2s.append(w2.T.astype(jnp.bfloat16))          # (FF, D)
        b1s.append(b1[0]); b2s.append(b2[0])

    def pack_ln(g, b):
        lng.append(g[0]); lnb.append(b[0])

    for (w_qkv, b_qkv, w_o, b_o, w1, b1, w2, b2, g1, be1, g2, be2) in enc_params:
        pack_attn(w_qkv, b_qkv, w_o, b_o)
        pack_ffn(w1, b1, w2, b2)
        pack_ln(g1, be1); pack_ln(g2, be2)
    for (sw_qkv, sb_qkv, sw_o, sb_o, cw_qkv, cb_qkv, cw_o, cb_o,
         w1, b1, w2, b2, g1, be1, g2, be2, g3, be3) in dec_params:
        pack_attn(sw_qkv, sb_qkv, sw_o, sb_o)          # decoder self-attn
        pack_attn(cw_qkv, cb_qkv, cw_o, cb_o)          # decoder cross-attn
        pack_ffn(w1, b1, w2, b2)
        pack_ln(g1, be1); pack_ln(g2, be2); pack_ln(g3, be3)

    FF = w1s[0].shape[1]
    width = max(3 * D, FF, D)
    pad = lambda v: jnp.pad(v, (0, width - v.shape[0]))
    vec = jnp.stack([pad(v) for v in (bqkv + bout + b1s + b2s + lng + lnb)]).astype(jnp.float32)

    return (jnp.stack(wqkv), jnp.stack(wout), jnp.stack(w1s), jnp.stack(w2s), vec)


# ------------------------------ pallas wrapper ---------------------------------

def transformer_embed(x_sne, prev_sne, packed, num_heads, reduction='mean'):
    # x_sne / prev_sne: PyTorch layout (S, N, E)
    if reduction not in ('mean', 'last', 'sum'):
        raise NotImplementedError(reduction)
    S, N, E = x_sne.shape

    # one-time 2 KB transposes to batch-major so in-kernel einsums stay in the
    # Mosaic-native single-batch-dim 'bqd,bkd->bqk' form.
    x = jnp.transpose(x_sne, (1, 0, 2))       # (N, S, E)
    mem = jnp.transpose(prev_sne, (1, 0, 2))

    wqkv, wout, w1, w2, vec = packed
    kernel = partial(transformer_embed_kernel, num_heads, reduction)
    vspec = pl.BlockSpec(memory_space=pltpu.MemorySpace.VMEM)
    return pl.pallas_call(
        kernel,
        out_shape=jax.ShapeDtypeStruct((S, E), x_sne.dtype),
        in_specs=[vspec] * 7,
        out_specs=vspec,
        # TODO(synk): at production batch sizes add a grid over N with
        # dimension_semantics=("parallel",) (v7x second TC), and once weights outgrow VMEM
        # (earlier on v7x: 64 MiB) stream per-layer slabs via a grid over layers /
        # pl.Buffered(2); at N=2, D=32 the whole problem is a few KiB and one grid-less
        # call is fastest.
    )(x, mem, wqkv, wout, w1, w2, vec)


# ------------------------------ parameter init --------------------------------

def init_transformer_params(key, num_layers, d_model, ff_dim):
    def w(k, shape):
        return 0.05 * jax.random.normal(k, shape, dtype=jnp.float32)

    zeros = lambda s: jnp.zeros(s, jnp.float32)
    ones = lambda s: jnp.ones(s, jnp.float32)

    enc = []
    keys = iter(jax.random.split(jax.random.fold_in(key, 0), num_layers * 8))
    for _ in range(num_layers):
        enc.append((
            w(next(keys), (3 * d_model, d_model)), zeros((1, 3 * d_model)),  # self-attn in_proj
            w(next(keys), (d_model, d_model)),     zeros((1, d_model)),      # self-attn out_proj
            w(next(keys), (ff_dim, d_model)),      zeros((1, ff_dim)),       # linear1
            w(next(keys), (d_model, ff_dim)),      zeros((1, d_model)),      # linear2
            ones((1, d_model)), zeros((1, d_model)),                         # norm1
            ones((1, d_model)), zeros((1, d_model)),                         # norm2
        ))

    dec = []
    keys = iter(jax.random.split(jax.random.fold_in(key, 1), num_layers * 8))
    for _ in range(num_layers):
        dec.append((
            w(next(keys), (3 * d_model, d_model)), zeros((1, 3 * d_model)),  # self-attn
            w(next(keys), (d_model, d_model)),     zeros((1, d_model)),
            w(next(keys), (3 * d_model, d_model)), zeros((1, 3 * d_model)),  # cross-attn
            w(next(keys), (d_model, d_model)),     zeros((1, d_model)),
            w(next(keys), (ff_dim, d_model)),      zeros((1, ff_dim)),       # linear1
            w(next(keys), (d_model, ff_dim)),      zeros((1, d_model)),      # linear2
            ones((1, d_model)), zeros((1, d_model)),                         # norm1
            ones((1, d_model)), zeros((1, d_model)),                         # norm2
            ones((1, d_model)), zeros((1, d_model)),                         # norm3
        ))
    return enc, dec


# ------------------------------ pure-JAX f32 reference --------------------------

def _ref_layernorm(x, g, b, eps=1e-5):
    mu = jnp.mean(x, axis=-1, keepdims=True)
    var = jnp.mean((x - mu) ** 2, axis=-1, keepdims=True)
    return (x - mu) / jnp.sqrt(var + eps) * g + b


def _ref_gelu(x):
    return 0.5 * x * (1.0 + jax.lax.erf(x / math.sqrt(2.0)))


def _ref_mha(q_in, kv_in, w_in, b_in, w_out, b_out, H):
    B, Sq, D = q_in.shape
    Sk = kv_in.shape[1]
    hd = D // H
    q = (q_in @ w_in[:D].T + b_in[0, :D]).reshape(B, Sq, H, hd)
    k = (kv_in @ w_in[D:2 * D].T + b_in[0, D:2 * D]).reshape(B, Sk, H, hd)
    v = (kv_in @ w_in[2 * D:].T + b_in[0, 2 * D:]).reshape(B, Sk, H, hd)
    s = jnp.einsum('bqhd,bkhd->bhqk', q, k) / math.sqrt(hd)
    p = jax.nn.softmax(s, axis=-1)
    o = jnp.einsum('bhqk,bkhd->bqhd', p, v).reshape(B, Sq, D)
    return o @ w_out.T + b_out[0]


def transformer_embed_ref(x_sne, prev_sne, enc_params, dec_params, H, reduction='mean'):
    x = jnp.transpose(x_sne, (1, 0, 2))
    mem = jnp.transpose(prev_sne, (1, 0, 2))
    for (w_qkv, b_qkv, w_o, b_o, w1, b1, w2, b2, g1, be1, g2, be2) in enc_params:
        x = _ref_layernorm(x + _ref_mha(x, x, w_qkv, b_qkv, w_o, b_o, H), g1, be1)
        ff = _ref_gelu(x @ w1.T + b1[0]) @ w2.T + b2[0]
        x = _ref_layernorm(x + ff, g2, be2)
    for (sw_qkv, sb_qkv, sw_o, sb_o, cw_qkv, cb_qkv, cw_o, cb_o,
         w1, b1, w2, b2, g1, be1, g2, be2, g3, be3) in dec_params:
        x = _ref_layernorm(x + _ref_mha(x, x, sw_qkv, sb_qkv, sw_o, sb_o, H), g1, be1)
        x = _ref_layernorm(x + _ref_mha(x, mem, cw_qkv, cb_qkv, cw_o, cb_o, H), g2, be2)
        ff = _ref_gelu(x @ w1.T + b1[0]) @ w2.T + b2[0]
        x = _ref_layernorm(x + ff, g3, be3)
    if reduction == 'mean':
        r = jnp.mean(x, axis=0)
    elif reduction == 'last':
        r = x[-1]
    else:
        r = jnp.sum(x, axis=0)
    return jnp.tanh(r)


# ----------------------------------- main --------------------------------------

if __name__ == "__main__":
    num_heads, d_model, num_layers, feedforward_dim = 4, 32, 2, 64
    S, N = 8, 2  # sequence length, "batch" (PyTorch dim=1, reduced at the end)

    key = jax.random.PRNGKey(0)
    kx, kprev, kp = jax.random.split(key, 3)

    x = jax.random.normal(kx, (S, N, d_model), dtype=jnp.float32)            # (S, N, E)
    # deterministic stand-in for the `prev_encoding is None` branch (normal, mean=1, std=0.2)
    prev_encoding = 1.0 + 0.2 * jax.random.normal(kprev, (S, N, d_model), dtype=jnp.float32)

    enc_params, dec_params = init_transformer_params(kp, num_layers, d_model, feedforward_dim)

    # one-time packing of all layer weights into a few stacked slabs
    packed = pack_transformer_params(enc_params, dec_params, num_heads)

    run = jax.jit(partial(transformer_embed, num_heads=num_heads, reduction='mean'))
    out = jax.block_until_ready(run(x, prev_encoding, packed))

    assert out.shape == (S, d_model), out.shape
    assert bool(jnp.all(jnp.isfinite(out)))

    # pure-JAX f32 reference (PyTorch semantics); loose tolerance covers the bf16 MXU
    # operands used inside the kernel (f32 accumulation, tanh-bounded output).
    ref = transformer_embed_ref(x, prev_encoding, enc_params, dec_params, num_heads, 'mean')
    err = float(jnp.max(jnp.abs(out - ref)))
    assert err < 1e-1, f"kernel vs reference max abs err {err}"
    print("KERNEL_OK")
</pallas_src>

<mosaic_0001>
module attributes {stable_mosaic.version = 11 : i64} {
  func.func @transformer_embed_kernel(%arg0: memref<2x8x32xf32, #tpu.memory_space<vmem>>, %arg1: memref<2x8x32xf32, #tpu.memory_space<vmem>>, %arg2: memref<6x32x96xbf16, #tpu.memory_space<vmem>>, %arg3: memref<6x32x32xbf16, #tpu.memory_space<vmem>>, %arg4: memref<4x32x64xbf16, #tpu.memory_space<vmem>>, %arg5: memref<4x64x32xbf16, #tpu.memory_space<vmem>>, %arg6: memref<40x96xf32, #tpu.memory_space<vmem>>, %arg7: memref<8x32xf32, #tpu.memory_space<vmem>>) attributes {dimension_semantics = [], scalar_prefetch = 0 : i64, scratch_operands = 0 : i64, tpu.core_type = #tpu.core_type<tc>} {
    %c0 = arith.constant 0 : index
    %c0_0 = arith.constant 0 : index
    %c0_1 = arith.constant 0 : index
    %0 = vector.load %arg0[%c0, %c0_0, %c0_1] : memref<2x8x32xf32, #tpu.memory_space<vmem>>, vector<2x8x32xf32>
    %1 = vector.shape_cast %0 : vector<2x8x32xf32> to vector<16x32xf32>
    %c0_2 = arith.constant 0 : index
    %c0_3 = arith.constant 0 : index
    %c0_4 = arith.constant 0 : index
    %2 = vector.load %arg2[%c0_2, %c0_3, %c0_4] : memref<6x32x96xbf16, #tpu.memory_space<vmem>>, vector<1x32x96xbf16>
    %3 = vector.shape_cast %2 : vector<1x32x96xbf16> to vector<32x96xbf16>
    %c0_5 = arith.constant 0 : index
    %c0_6 = arith.constant 0 : index
    %4 = vector.load %arg6[%c0_5, %c0_6] : memref<40x96xf32, #tpu.memory_space<vmem>>, vector<1x96xf32>
    %5 = arith.truncf %1 : vector<16x32xf32> to vector<16x32xbf16>
    %cst = arith.constant dense<0.000000e+00> : vector<16x96xf32>
    %6 = tpu.matmul %5, %3, %cst {dimension_numbers = #tpu.dot_dimension_numbers<[1], [0], [0], [1], [0, 0, 1, 1], [], []>} : vector<16x32xbf16>, vector<32x96xbf16>, vector<16x96xf32> -> vector<16x96xf32>
    %7 = vector.broadcast %4 : vector<1x96xf32> to vector<16x96xf32>
    %8 = arith.addf %6, %7 : vector<16x96xf32>
    %9 = vector.extract_strided_slice %8 {offsets = [0, 0], sizes = [16, 8], strides = [1, 1]} : vector<16x96xf32> to vector<16x8xf32>
    %10 = vector.shape_cast %9 : vector<16x8xf32> to vector<2x8x8xf32>
    %11 = arith.truncf %10 : vector<2x8x8xf32> to vector<2x8x8xbf16>
    %12 = vector.extract_strided_slice %8 {offsets = [0, 32], sizes = [16, 8], strides = [1, 1]} : vector<16x96xf32> to vector<16x8xf32>
    %13 = vector.shape_cast %12 : vector<16x8xf32> to vector<2x8x8xf32>
    %14 = arith.truncf %13 : vector<2x8x8xf32> to vector<2x8x8xbf16>
    %15 = vector.extract_strided_slice %8 {offsets = [0, 64], sizes = [16, 8], strides = [1, 1]} : vector<16x96xf32> to vector<16x8xf32>
    %16 = vector.shape_cast %15 : vector<16x8xf32> to vector<2x8x8xf32>
    %17 = arith.truncf %16 : vector<2x8x8xf32> to vector<2x8x8xbf16>
    "tpu.trace_start"() <{level = 10 : i32, message = "bqd,bkd->bqk"}> : () -> ()
    %cst_7 = arith.constant dense<0.000000e+00> : vector<2x8x8xf32>
    %18 = tpu.matmul %11, %14, %cst_7 {dimension_numbers = #tpu.dot_dimension_numbers<[2], [2], [1], [1], [0, 0, 0, 1, 1, 1], [0], [0]>} : vector<2x8x8xbf16>, vector<2x8x8xbf16>, vector<2x8x8xf32> -> vector<2x8x8xf32>
    "tpu.trace_stop"() : () -> ()
    %cst_8 = arith.constant dense<0xFF800000> : vector<2x8xf32>
    %19 = vector.multi_reduction <maximumf>, %18, %cst_8 [2] : vector<2x8x8xf32> to vector<2x8xf32>
    %20 = vector.shape_cast %19 : vector<2x8xf32> to vector<2x8x1xf32>
    %21 = vector.broadcast %20 : vector<2x8x1xf32> to vector<2x8x8xf32>
    %22 = arith.subf %18, %21 : vector<2x8x8xf32>
    %23 = math.exp %22 : vector<2x8x8xf32>
    %cst_9 = arith.constant dense<0.000000e+00> : vector<2x8xf32>
    %24 = vector.multi_reduction <add>, %23, %cst_9 [2] : vector<2x8x8xf32> to vector<2x8xf32>
    %25 = vector.shape_cast %24 : vector<2x8xf32> to vector<2x8x1xf32>
    %26 = tpu.reciprocal %25 {approx = true} : vector<2x8x1xf32> -> vector<2x8x1xf32>
    %27 = vector.broadcast %26 : vector<2x8x1xf32> to vector<2x8x8xf32>
    %28 = arith.mulf %23, %27 : vector<2x8x8xf32>
    %29 = arith.truncf %28 : vector<2x8x8xf32> to vector<2x8x8xbf16>
    "tpu.trace_start"() <{level = 10 : i32, message = "bqk,bkd->bqd"}> : () -> ()
    %cst_10 = arith.constant dense<0.000000e+00> : vector<2x8x8xf32>
    %30 = tpu.matmul %29, %17, %cst_10 {dimension_numbers = #tpu.dot_dimension_numbers<[2], [1], [1], [2], [0, 0, 0, 1, 1, 2], [0], [0]>} : vector<2x8x8xbf16>, vector<2x8x8xbf16>, vector<2x8x8xf32> -> vector<2x8x8xf32>
    "tpu.trace_stop"() : () -> ()
    %31 = vector.shape_cast %30 : vector<2x8x8xf32> to vector<16x8xf32>
    %32 = vector.extract_strided_slice %8 {offsets = [0, 8], sizes = [16, 8], strides = [1, 1]} : vector<16x96xf32> to vector<16x8xf32>
    %33 = vector.shape_cast %32 : vector<16x8xf32> to vector<2x8x8xf32>
    %34 = arith.truncf %33 : vector<2x8x8xf32> to vector<2x8x8xbf16>
    %35 = vector.extract_strided_slice %8 {offsets = [0, 40], sizes = [16, 8], strides = [1, 1]} : vector<16x96xf32> to vector<16x8xf32>
    %36 = vector.shape_cast %35 : vector<16x8xf32> to vector<2x8x8xf32>
    %37 = arith.truncf %36 : vector<2x8x8xf32> to vector<2x8x8xbf16>
    %38 = vector.extract_strided_slice %8 {offsets = [0, 72], sizes = [16, 8], strides = [1, 1]} : vector<16x96xf32> to vector<16x8xf32>
    %39 = vector.shape_cast %38 : vector<16x8xf32> to vector<2x8x8xf32>
    %40 = arith.truncf %39 : vector<2x8x8xf32> to vector<2x8x8xbf16>
    "tpu.trace_start"() <{level = 10 : i32, message = "bqd,bkd->bqk"}> : () -> ()
    %cst_11 = arith.constant dense<0.000000e+00> : vector<2x8x8xf32>
    %41 = tpu.matmul %34, %37, %cst_11 {dimension_numbers = #tpu.dot_dimension_numbers<[2], [2], [1], [1], [0, 0, 0, 1, 1, 1], [0], [0]>} : vector<2x8x8xbf16>, vector<2x8x8xbf16>, vector<2x8x8xf32> -> vector<2x8x8xf32>
    "tpu.trace_stop"() : () -> ()
    %cst_12 = arith.constant dense<0xFF800000> : vector<2x8xf32>
    %42 = vector.multi_reduction <maximumf>, %41, %cst_12 [2] : vector<2x8x8xf32> to vector<2x8xf32>
    %43 = vector.shape_cast %42 : vector<2x8xf32> to vector<2x8x1xf32>
    %44 = vector.broadcast %43 : vector<2x8x1xf32> to vector<2x8x8xf32>
    %45 = arith.subf %41, %44 : vector<2x8x8xf32>
    %46 = math.exp %45 : vector<2x8x8xf32>
    %cst_13 = arith.constant dense<0.000000e+00> : vector<2x8xf32>
    %47 = vector.multi_reduction <add>, %46, %cst_13 [2] : vector<2x8x8xf32> to vector<2x8xf32>
    %48 = vector.shape_cast %47 : vector<2x8xf32> to vector<2x8x1xf32>
    %49 = tpu.reciprocal %48 {approx = true} : vector<2x8x1xf32> -> vector<2x8x1xf32>
    %50 = vector.broadcast %49 : vector<2x8x1xf32> to vector<2x8x8xf32>
    %51 = arith.mulf %46, %50 : vector<2x8x8xf32>
    %52 = arith.truncf %51 : vector<2x8x8xf32> to vector<2x8x8xbf16>
    "tpu.trace_start"() <{level = 10 : i32, message = "bqk,bkd->bqd"}> : () -> ()
    %cst_14 = arith.constant dense<0.000000e+00> : vector<2x8x8xf32>
    %53 = tpu.matmul %52, %40, %cst_14 {dimension_numbers = #tpu.dot_dimension_numbers<[2], [1], [1], [2], [0, 0, 0, 1, 1, 2], [0], [0]>} : vector<2x8x8xbf16>, vector<2x8x8xbf16>, vector<2x8x8xf32> -> vector<2x8x8xf32>
    "tpu.trace_stop"() : () -> ()
    %54 = vector.shape_cast %53 : vector<2x8x8xf32> to vector<16x8xf32>
    %55 = vector.extract_strided_slice %8 {offsets = [0, 16], sizes = [16, 8], strides = [1, 1]} : vector<16x96xf32> to vector<16x8xf32>
    %56 = vector.shape_cast %55 : vector<16x8xf32> to vector<2x8x8xf32>
    %57 = arith.truncf %56 : vector<2x8x8xf32> to vector<2x8x8xbf16>
    %58 = vector.extract_strided_slice %8 {offsets = [0, 48], sizes = [16, 8], strides = [1, 1]} : vector<16x96xf32> to vector<16x8xf32>
    %59 = vector.shape_cast %58 : vector<16x8xf32> to vector<2x8x8xf32>
    %60 = arith.truncf %59 : vector<2x8x8xf32> to vector<2x8x8xbf16>
    %61 = vector.extract_strided_slice %8 {offsets = [0, 80], sizes = [16, 8], strides = [1, 1]} : vector<16x96xf32> to vector<16x8xf32>
    %62 = vector.shape_cast %61 : vector<16x8xf32> to vector<2x8x8xf32>
    %63 = arith.truncf %62 : vector<2x8x8xf32> to vector<2x8x8xbf16>
    "tpu.trace_start"() <{level = 10 : i32, message = "bqd,bkd->bqk"}> : () -> ()
    %cst_15 = arith.constant dense<0.000000e+00> : vector<2x8x8xf32>
    %64 = tpu.matmul %57, %60, %cst_15 {dimension_numbers = #tpu.dot_dimension_numbers<[2], [2], [1], [1], [0, 0, 0, 1, 1, 1], [0], [0]>} : vector<2x8x8xbf16>, vector<2x8x8xbf16>, vector<2x8x8xf32> -> vector<2x8x8xf32>
    "tpu.trace_stop"() : () -> ()
    %cst_16 = arith.constant dense<0xFF800000> : vector<2x8xf32>
    %65 = vector.multi_reduction <maximumf>, %64, %cst_16 [2] : vector<2x8x8xf32> to vector<2x8xf32>
    %66 = vector.shape_cast %65 : vector<2x8xf32> to vector<2x8x1xf32>
    %67 = vector.broadcast %66 : vector<2x8x1xf32> to vector<2x8x8xf32>
    %68 = arith.subf %64, %67 : vector<2x8x8xf32>
    %69 = math.exp %68 : vector<2x8x8xf32>
    %cst_17 = arith.constant dense<0.000000e+00> : vector<2x8xf32>
    %70 = vector.multi_reduction <add>, %69, %cst_17 [2] : vector<2x8x8xf32> to vector<2x8xf32>
    %71 = vector.shape_cast %70 : vector<2x8xf32> to vector<2x8x1xf32>
    %72 = tpu.reciprocal %71 {approx = true} : vector<2x8x1xf32> -> vector<2x8x1xf32>
    %73 = vector.broadcast %72 : vector<2x8x1xf32> to vector<2x8x8xf32>
    %74 = arith.mulf %69, %73 : vector<2x8x8xf32>
    %75 = arith.truncf %74 : vector<2x8x8xf32> to vector<2x8x8xbf16>
    "tpu.trace_start"() <{level = 10 : i32, message = "bqk,bkd->bqd"}> : () -> ()
    %cst_18 = arith.constant dense<0.000000e+00> : vector<2x8x8xf32>
    %76 = tpu.matmul %75, %63, %cst_18 {dimension_numbers = #tpu.dot_dimension_numbers<[2], [1], [1], [2], [0, 0, 0, 1, 1, 2], [0], [0]>} : vector<2x8x8xbf16>, vector<2x8x8xbf16>, vector<2x8x8xf32> -> vector<2x8x8xf32>
    "tpu.trace_stop"() : () -> ()
    %77 = vector.shape_cast %76 : vector<2x8x8xf32> to vector<16x8xf32>
    %78 = vector.extract_strided_slice %8 {offsets = [0, 24], sizes = [16, 8], strides = [1, 1]} : vector<16x96xf32> to vector<16x8xf32>
    %79 = vector.shape_cast %78 : vector<16x8xf32> to vector<2x8x8xf32>
    %80 = arith.truncf %79 : vector<2x8x8xf32> to vector<2x8x8xbf16>
    %81 = vector.extract_strided_slice %8 {offsets = [0, 56], sizes = [16, 8], strides = [1, 1]} : vector<16x96xf32> to vector<16x8xf32>
    %82 = vector.shape_cast %81 : vector<16x8xf32> to vector<2x8x8xf32>
    %83 = arith.truncf %82 : vector<2x8x8xf32> to vector<2x8x8xbf16>
    %84 = vector.extract_strided_slice %8 {offsets = [0, 88], sizes = [16, 8], strides = [1, 1]} : vector<16x96xf32> to vector<16x8xf32>
    %85 = vector.shape_cast %84 : vector<16x8xf32> to vector<2x8x8xf32>
    %86 = arith.truncf %85 : vector<2x8x8xf32> to vector<2x8x8xbf16>
    "tpu.trace_start"() <{level = 10 : i32, message = "bqd,bkd->bqk"}> : () -> ()
    %cst_19 = arith.constant dense<0.000000e+00> : vector<2x8x8xf32>
    %87 = tpu.matmul %80, %83, %cst_19 {dimension_numbers = #tpu.dot_dimension_numbers<[2], [2], [1], [1], [0, 0, 0, 1, 1, 1], [0], [0]>} : vector<2x8x8xbf16>, vector<2x8x8xbf16>, vector<2x8x8xf32> -> vector<2x8x8xf32>
    "tpu.trace_stop"() : () -> ()
    %cst_20 = arith.constant dense<0xFF800000> : vector<2x8xf32>
    %88 = vector.multi_reduction <maximumf>, %87, %cst_20 [2] : vector<2x8x8xf32> to vector<2x8xf32>
    %89 = vector.shape_cast %88 : vector<2x8xf32> to vector<2x8x1xf32>
    %90 = vector.broadcast %89 : vector<2x8x1xf32> to vector<2x8x8xf32>
    %91 = arith.subf %87, %90 : vector<2x8x8xf32>
    %92 = math.exp %91 : vector<2x8x8xf32>
    %cst_21 = arith.constant dense<0.000000e+00> : vector<2x8xf32>
    %93 = vector.multi_reduction <add>, %92, %cst_21 [2] : vector<2x8x8xf32> to vector<2x8xf32>
    %94 = vector.shape_cast %93 : vector<2x8xf32> to vector<2x8x1xf32>
    %95 = tpu.reciprocal %94 {approx = true} : vector<2x8x1xf32> -> vector<2x8x1xf32>
    %96 = vector.broadcast %95 : vector<2x8x1xf32> to vector<2x8x8xf32>
    %97 = arith.mulf %92, %96 : vector<2x8x8xf32>
    %98 = arith.truncf %97 : vector<2x8x8xf32> to vector<2x8x8xbf16>
    "tpu.trace_start"() <{level = 10 : i32, message = "bqk,bkd->bqd"}> : () -> ()
    %cst_22 = arith.constant dense<0.000000e+00> : vector<2x8x8xf32>
    %99 = tpu.matmul %98, %86, %cst_22 {dimension_numbers = #tpu.dot_dimension_numbers<[2], [1], [1], [2], [0, 0, 0, 1, 1, 2], [0], [0]>} : vector<2x8x8xbf16>, vector<2x8x8xbf16>, vector<2x8x8xf32> -> vector<2x8x8xf32>
    "tpu.trace_stop"() : () -> ()
    %100 = vector.shape_cast %99 : vector<2x8x8xf32> to vector<16x8xf32>
    %101 = tpu.concatenate %31, %54, %77, %100 in 1 : vector<16x8xf32>, vector<16x8xf32>, vector<16x8xf32>, vector<16x8xf32> -> vector<16x32xf32>
    %c0_23 = arith.constant 0 : index
    %c0_24 = arith.constant 0 : index
    %c0_25 = arith.constant 0 : index
    %102 = vector.load %arg3[%c0_23, %c0_24, %c0_25] : memref<6x32x32xbf16, #tpu.memory_space<vmem>>, vector<1x32x32xbf16>
    %103 = vector.shape_cast %102 : vector<1x32x32xbf16> to vector<32x32xbf16>
    %104 = arith.truncf %101 : vector<16x32xf32> to vector<16x32xbf16>
    %cst_26 = arith.constant dense<0.000000e+00> : vector<16x32xf32>
    %105 = tpu.matmul %104, %103, %cst_26 {dimension_numbers = #tpu.dot_dimension_numbers<[1], [0], [0], [1], [0, 0, 1, 1], [], []>} : vector<16x32xbf16>, vector<32x32xbf16>, vector<16x32xf32> -> vector<16x32xf32>
    %c6 = arith.constant 6 : index
    %c0_27 = arith.constant 0 : index
    %106 = vector.load %arg6[%c6, %c0_27] : memref<40x96xf32, #tpu.memory_space<vmem>>, vector<1x32xf32>
    %107 = vector.broadcast %106 : vector<1x32xf32> to vector<16x32xf32>
    %108 = arith.addf %105, %107 : vector<16x32xf32>
    %109 = arith.addf %1, %108 : vector<16x32xf32>
    %c20 = arith.constant 20 : index
    %c0_28 = arith.constant 0 : index
    %110 = vector.load %arg6[%c20, %c0_28] : memref<40x96xf32, #tpu.memory_space<vmem>>, vector<1x32xf32>
    %c30 = arith.constant 30 : index
    %c0_29 = arith.constant 0 : index
    %111 = vector.load %arg6[%c30, %c0_29] : memref<40x96xf32, #tpu.memory_space<vmem>>, vector<1x32xf32>
    %cst_30 = arith.constant dense<0.000000e+00> : vector<16xf32>
    %112 = vector.multi_reduction <add>, %109, %cst_30 [1] : vector<16x32xf32> to vector<16xf32>
    %113 = vector.shape_cast %112 : vector<16xf32> to vector<16x1xf32>
    %cst_31 = arith.constant 3.200000e+01 : f32
    %114 = vector.broadcast %cst_31 : f32 to vector<16x1xf32>
    %115 = arith.divf %113, %114 : vector<16x1xf32>
    %116 = vector.broadcast %115 : vector<16x1xf32> to vector<16x32xf32>
    %117 = arith.subf %109, %116 : vector<16x32xf32>
    %118 = arith.mulf %117, %117 : vector<16x32xf32>
    %cst_32 = arith.constant dense<0.000000e+00> : vector<16xf32>
    %119 = vector.multi_reduction <add>, %118, %cst_32 [1] : vector<16x32xf32> to vector<16xf32>
    %120 = vector.shape_cast %119 : vector<16xf32> to vector<16x1xf32>
    %cst_33 = arith.constant 3.200000e+01 : f32
    %121 = vector.broadcast %cst_33 : f32 to vector<16x1xf32>
    %122 = arith.divf %120, %121 : vector<16x1xf32>
    %123 = vector.broadcast %115 : vector<16x1xf32> to vector<16x32xf32>
    %124 = arith.subf %109, %123 : vector<16x32xf32>
    %cst_34 = arith.constant 9.99999974E-6 : f32
    %125 = vector.broadcast %cst_34 : f32 to vector<16x1xf32>
    %126 = arith.addf %122, %125 : vector<16x1xf32>
    %127 = math.rsqrt %126 : vector<16x1xf32>
    %128 = vector.broadcast %127 : vector<16x1xf32> to vector<16x32xf32>
    %129 = arith.mulf %124, %128 : vector<16x32xf32>
    %130 = vector.broadcast %110 : vector<1x32xf32> to vector<16x32xf32>
    %131 = arith.mulf %129, %130 : vector<16x32xf32>
    %132 = vector.broadcast %111 : vector<1x32xf32> to vector<16x32xf32>
    %133 = arith.addf %131, %132 : vector<16x32xf32>
    %c0_35 = arith.constant 0 : index
    %c0_36 = arith.constant 0 : index
    %c0_37 = arith.constant 0 : index
    %134 = vector.load %arg4[%c0_35, %c0_36, %c0_37] : memref<4x32x64xbf16, #tpu.memory_space<vmem>>, vector<1x32x64xbf16>
    %135 = vector.shape_cast %134 : vector<1x32x64xbf16> to vector<32x64xbf16>
    %136 = arith.truncf %133 : vector<16x32xf32> to vector<16x32xbf16>
    %cst_38 = arith.constant dense<0.000000e+00> : vector<16x64xf32>
    %137 = tpu.matmul %136, %135, %cst_38 {dimension_numbers = #tpu.dot_dimension_numbers<[1], [0], [0], [1], [0, 0, 1, 1], [], []>} : vector<16x32xbf16>, vector<32x64xbf16>, vector<16x64xf32> -> vector<16x64xf32>
    %c12 = arith.constant 12 : index
    %c0_39 = arith.constant 0 : index
    %138 = vector.load %arg6[%c12, %c0_39] : memref<40x96xf32, #tpu.memory_space<vmem>>, vector<1x64xf32>
    %139 = vector.broadcast %138 : vector<1x64xf32> to vector<16x64xf32>
    %140 = arith.addf %137, %139 : vector<16x64xf32>
    %cst_40 = arith.constant 5.000000e-01 : f32
    %141 = vector.broadcast %cst_40 : f32 to vector<16x64xf32>
    %142 = arith.mulf %141, %140 : vector<16x64xf32>
    %cst_41 = arith.constant 1.41421354 : f32
    %143 = vector.broadcast %cst_41 : f32 to vector<16x64xf32>
    %144 = arith.divf %140, %143 : vector<16x64xf32>
    %145 = math.erf %144 : vector<16x64xf32>
    %cst_42 = arith.constant 1.000000e+00 : f32
    %146 = vector.broadcast %cst_42 : f32 to vector<16x64xf32>
    %147 = arith.addf %146, %145 : vector<16x64xf32>
    %148 = arith.mulf %142, %147 : vector<16x64xf32>
    %c0_43 = arith.constant 0 : index
    %c0_44 = arith.constant 0 : index
    %c0_45 = arith.constant 0 : index
    %149 = vector.load %arg5[%c0_43, %c0_44, %c0_45] : memref<4x64x32xbf16, #tpu.memory_space<vmem>>, vector<1x64x32xbf16>
    %150 = vector.shape_cast %149 : vector<1x64x32xbf16> to vector<64x32xbf16>
    %151 = arith.truncf %148 : vector<16x64xf32> to vector<16x64xbf16>
    %cst_46 = arith.constant dense<0.000000e+00> : vector<16x32xf32>
    %152 = tpu.matmul %151, %150, %cst_46 {dimension_numbers = #tpu.dot_dimension_numbers<[1], [0], [0], [1], [0, 0, 1, 1], [], []>} : vector<16x64xbf16>, vector<64x32xbf16>, vector<16x32xf32> -> vector<16x32xf32>
    %c16 = arith.constant 16 : index
    %c0_47 = arith.constant 0 : index
    %153 = vector.load %arg6[%c16, %c0_47] : memref<40x96xf32, #tpu.memory_space<vmem>>, vector<1x32xf32>
    %154 = vector.broadcast %153 : vector<1x32xf32> to vector<16x32xf32>
    %155 = arith.addf %152, %154 : vector<16x32xf32>
    %156 = arith.addf %133, %155 : vector<16x32xf32>
    %c21 = arith.constant 21 : index
    %c0_48 = arith.constant 0 : index
    %157 = vector.load %arg6[%c21, %c0_48] : memref<40x96xf32, #tpu.memory_space<vmem>>, vector<1x32xf32>
    %c31 = arith.constant 31 : index
    %c0_49 = arith.constant 0 : index
    %158 = vector.load %arg6[%c31, %c0_49] : memref<40x96xf32, #tpu.memory_space<vmem>>, vector<1x32xf32>
    %cst_50 = arith.constant dense<0.000000e+00> : vector<16xf32>
    %159 = vector.multi_reduction <add>, %156, %cst_50 [1] : vector<16x32xf32> to vector<16xf32>
    %160 = vector.shape_cast %159 : vector<16xf32> to vector<16x1xf32>
    %cst_51 = arith.constant 3.200000e+01 : f32
    %161 = vector.broadcast %cst_51 : f32 to vector<16x1xf32>
    %162 = arith.divf %160, %161 : vector<16x1xf32>
    %163 = vector.broadcast %162 : vector<16x1xf32> to vector<16x32xf32>
    %164 = arith.subf %156, %163 : vector<16x32xf32>
    %165 = arith.mulf %164, %164 : vector<16x32xf32>
    %cst_52 = arith.constant dense<0.000000e+00> : vector<16xf32>
    %166 = vector.multi_reduction <add>, %165, %cst_52 [1] : vector<16x32xf32> to vector<16xf32>
    %167 = vector.shape_cast %166 : vector<16xf32> to vector<16x1xf32>
    %cst_53 = arith.constant 3.200000e+01 : f32
    %168 = vector.broadcast %cst_53 : f32 to vector<16x1xf32>
    %169 = arith.divf %167, %168 : vector<16x1xf32>
    %170 = vector.broadcast %162 : vector<16x1xf32> to vector<16x32xf32>
    %171 = arith.subf %156, %170 : vector<16x32xf32>
    %cst_54 = arith.constant 9.99999974E-6 : f32
    %172 = vector.broadcast %cst_54 : f32 to vector<16x1xf32>
    %173 = arith.addf %169, %172 : vector<16x1xf32>
    %174 = math.rsqrt %173 : vector<16x1xf32>
    %175 = vector.broadcast %174 : vector<16x1xf32> to vector<16x32xf32>
    %176 = arith.mulf %171, %175 : vector<16x32xf32>
    %177 = vector.broadcast %157 : vector<1x32xf32> to vector<16x32xf32>
    %178 = arith.mulf %176, %177 : vector<16x32xf32>
    %179 = vector.broadcast %158 : vector<1x32xf32> to vector<16x32xf32>
    %180 = arith.addf %178, %179 : vector<16x32xf32>
    %c1 = arith.constant 1 : index
    %c0_55 = arith.constant 0 : index
    %c0_56 = arith.constant 0 : index
    %181 = vector.load %arg2[%c1, %c0_55, %c0_56] : memref<6x32x96xbf16, #tpu.memory_space<vmem>>, vector<1x32x96xbf16>
    %182 = vector.shape_cast %181 : vector<1x32x96xbf16> to vector<32x96xbf16>
    %c1_57 = arith.constant 1 : index
    %c0_58 = arith.constant 0 : index
    %183 = vector.load %arg6[%c1_57, %c0_58] : memref<40x96xf32, #tpu.memory_space<vmem>>, vector<1x96xf32>
    %184 = arith.truncf %180 : vector<16x32xf32> to vector<16x32xbf16>
    %cst_59 = arith.constant dense<0.000000e+00> : vector<16x96xf32>
    %185 = tpu.matmul %184, %182, %cst_59 {dimension_numbers = #tpu.dot_dimension_numbers<[1], [0], [0], [1], [0, 0, 1, 1], [], []>} : vector<16x32xbf16>, vector<32x96xbf16>, vector<16x96xf32> -> vector<16x96xf32>
    %186 = vector.broadcast %183 : vector<1x96xf32> to vector<16x96xf32>
    %187 = arith.addf %185, %186 : vector<16x96xf32>
    %188 = vector.extract_strided_slice %187 {offsets = [0, 0], sizes = [16, 8], strides = [1, 1]} : vector<16x96xf32> to vector<16x8xf32>
    %189 = vector.shape_cast %188 : vector<16x8xf32> to vector<2x8x8xf32>
    %190 = arith.truncf %189 : vector<2x8x8xf32> to vector<2x8x8xbf16>
    %191 = vector.extract_strided_slice %187 {offsets = [0, 32], sizes = [16, 8], strides = [1, 1]} : vector<16x96xf32> to vector<16x8xf32>
    %192 = vector.shape_cast %191 : vector<16x8xf32> to vector<2x8x8xf32>
    %193 = arith.truncf %192 : vector<2x8x8xf32> to vector<2x8x8xbf16>
    %194 = vector.extract_strided_slice %187 {offsets = [0, 64], sizes = [16, 8], strides = [1, 1]} : vector<16x96xf32> to vector<16x8xf32>
    %195 = vector.shape_cast %194 : vector<16x8xf32> to vector<2x8x8xf32>
    %196 = arith.truncf %195 : vector<2x8x8xf32> to vector<2x8x8xbf16>
    "tpu.trace_start"() <{level = 10 : i32, message = "bqd,bkd->bqk"}> : () -> ()
    %cst_60 = arith.constant dense<0.000000e+00> : vector<2x8x8xf32>
    %197 = tpu.matmul %190, %193, %cst_60 {dimension_numbers = #tpu.dot_dimension_numbers<[2], [2], [1], [1], [0, 0, 0, 1, 1, 1], [0], [0]>} : vector<2x8x8xbf16>, vector<2x8x8xbf16>, vector<2x8x8xf32> -> vector<2x8x8xf32>
    "tpu.trace_stop"() : () -> ()
    %cst_61 = arith.constant dense<0xFF800000> : vector<2x8xf32>
    %198 = vector.multi_reduction <maximumf>, %197, %cst_61 [2] : vector<2x8x8xf32> to vector<2x8xf32>
    %199 = vector.shape_cast %198 : vector<2x8xf32> to vector<2x8x1xf32>
    %200 = vector.broadcast %199 : vector<2x8x1xf32> to vector<2x8x8xf32>
    %201 = arith.subf %197, %200 : vector<2x8x8xf32>
    %202 = math.exp %201 : vector<2x8x8xf32>
    %cst_62 = arith.constant dense<0.000000e+00> : vector<2x8xf32>
    %203 = vector.multi_reduction <add>, %202, %cst_62 [2] : vector<2x8x8xf32> to vector<2x8xf32>
    %204 = vector.shape_cast %203 : vector<2x8xf32> to vector<2x8x1xf32>
    %205 = tpu.reciprocal %204 {approx = true} : vector<2x8x1xf32> -> vector<2x8x1xf32>
    %206 = vector.broadcast %205 : vector<2x8x1xf32> to vector<2x8x8xf32>
    %207 = arith.mulf %202, %206 : vector<2x8x8xf32>
    %208 = arith.truncf %207 : vector<2x8x8xf32> to vector<2x8x8xbf16>
    "tpu.trace_start"() <{level = 10 : i32, message = "bqk,bkd->bqd"}> : () -> ()
    %cst_63 = arith.constant dense<0.000000e+00> : vector<2x8x8xf32>
    %209 = tpu.matmul %208, %196, %cst_63 {dimension_numbers = #tpu.dot_dimension_numbers<[2], [1], [1], [2], [0, 0, 0, 1, 1, 2], [0], [0]>} : vector<2x8x8xbf16>, vector<2x8x8xbf16>, vector<2x8x8xf32> -> vector<2x8x8xf32>
    "tpu.trace_stop"() : () -> ()
    %210 = vector.shape_cast %209 : vector<2x8x8xf32> to vector<16x8xf32>
    %211 = vector.extract_strided_slice %187 {offsets = [0, 8], sizes = [16, 8], strides = [1, 1]} : vector<16x96xf32> to vector<16x8xf32>
    %212 = vector.shape_cast %211 : vector<16x8xf32> to vector<2x8x8xf32>
    %213 = arith.truncf %212 : vector<2x8x8xf32> to vector<2x8x8xbf16>
    %214 = vector.extract_strided_slice %187 {offsets = [0, 40], sizes = [16, 8], strides = [1, 1]} : vector<16x96xf32> to vector<16x8xf32>
    %215 = vector.shape_cast %214 : vector<16x8xf32> to vector<2x8x8xf32>
    %216 = arith.truncf %215 : vector<2x8x8xf32> to vector<2x8x8xbf16>
    %217 = vector.extract_strided_slice %187 {offsets = [0, 72], sizes = [16, 8], strides = [1, 1]} : vector<16x96xf32> to vector<16x8xf32>
    %218 = vector.shape_cast %217 : vector<16x8xf32> to vector<2x8x8xf32>
    %219 = arith.truncf %218 : vector<2x8x8xf32> to vector<2x8x8xbf16>
    "tpu.trace_start"() <{level = 10 : i32, message = "bqd,bkd->bqk"}> : () -> ()
    %cst_64 = arith.constant dense<0.000000e+00> : vector<2x8x8xf32>
    %220 = tpu.matmul %213, %216, %cst_64 {dimension_numbers = #tpu.dot_dimension_numbers<[2], [2], [1], [1], [0, 0, 0, 1, 1, 1], [0], [0]>} : vector<2x8x8xbf16>, vector<2x8x8xbf16>, vector<2x8x8xf32> -> vector<2x8x8xf32>
    "tpu.trace_stop"() : () -> ()
    %cst_65 = arith.constant dense<0xFF800000> : vector<2x8xf32>
    %221 = vector.multi_reduction <maximumf>, %220, %cst_65 [2] : vector<2x8x8xf32> to vector<2x8xf32>
    %222 = vector.shape_cast %221 : vector<2x8xf32> to vector<2x8x1xf32>
    %223 = vector.broadcast %222 : vector<2x8x1xf32> to vector<2x8x8xf32>
    %224 = arith.subf %220, %223 : vector<2x8x8xf32>
    %225 = math.exp %224 : vector<2x8x8xf32>
    %cst_66 = arith.constant dense<0.000000e+00> : vector<2x8xf32>
    %226 = vector.multi_reduction <add>, %225, %cst_66 [2] : vector<2x8x8xf32> to vector<2x8xf32>
    %227 = vector.shape_cast %226 : vector<2x8xf32> to vector<2x8x1xf32>
    %228 = tpu.reciprocal %227 {approx = true} : vector<2x8x1xf32> -> vector<2x8x1xf32>
    %229 = vector.broadcast %228 : vector<2x8x1xf32> to vector<2x8x8xf32>
    %230 = arith.mulf %225, %229 : vector<2x8x8xf32>
    %231 = arith.truncf %230 : vector<2x8x8xf32> to vector<2x8x8xbf16>
    "tpu.trace_start"() <{level = 10 : i32, message = "bqk,bkd->bqd"}> : () -> ()
    %cst_67 = arith.constant dense<0.000000e+00> : vector<2x8x8xf32>
    %232 = tpu.matmul %231, %219, %cst_67 {dimension_numbers = #tpu.dot_dimension_numbers<[2], [1], [1], [2], [0, 0, 0, 1, 1, 2], [0], [0]>} : vector<2x8x8xbf16>, vector<2x8x8xbf16>, vector<2x8x8xf32> -> vector<2x8x8xf32>
    "tpu.trace_stop"() : () -> ()
    %233 = vector.shape_cast %232 : vector<2x8x8xf32> to vector<16x8xf32>
    %234 = vector.extract_strided_slice %187 {offsets = [0, 16], sizes = [16, 8], strides = [1, 1]} : vector<16x96xf32> to vector<16x8xf32>
    %235 = vector.shape_cast %234 : vector<16x8xf32> to vector<2x8x8xf32>
    %236 = arith.truncf %235 : vector<2x8x8xf32> to vector<2x8x8xbf16>
    %237 = vector.extract_strided_slice %187 {offsets = [0, 48], sizes = [16, 8], strides = [1, 1]} : vector<16x96xf32> to vector<16x8xf32>
    %238 = vector.shape_cast %237 : vector<16x8xf32> to vector<2x8x8xf32>
    %239 = arith.truncf %238 : vector<2x8x8xf32> to vector<2x8x8xbf16>
    %240 = vector.extract_strided_slice %187 {offsets = [0, 80], sizes = [16, 8], strides = [1, 1]} : vector<16x96xf32> to vector<16x8xf32>
    %241 = vector.shape_cast %240 : vector<16x8xf32> to vector<2x8x8xf32>
    %242 = arith.truncf %241 : vector<2x8x8xf32> to vector<2x8x8xbf16>
    "tpu.trace_start"() <{level = 10 : i32, message = "bqd,bkd->bqk"}> : () -> ()
    %cst_68 = arith.constant dense<0.000000e+00> : vector<2x8x8xf32>
    %243 = tpu.matmul %236, %239, %cst_68 {dimension_numbers = #tpu.dot_dimension_numbers<[2], [2], [1], [1], [0, 0, 0, 1, 1, 1], [0], [0]>} : vector<2x8x8xbf16>, vector<2x8x8xbf16>, vector<2x8x8xf32> -> vector<2x8x8xf32>
    "tpu.trace_stop"() : () -> ()
    %cst_69 = arith.constant dense<0xFF800000> : vector<2x8xf32>
    %244 = vector.multi_reduction <maximumf>, %243, %cst_69 [2] : vector<2x8x8xf32> to vector<2x8xf32>
    %245 = vector.shape_cast %244 : vector<2x8xf32> to vector<2x8x1xf32>
    %246 = vector.broadcast %245 : vector<2x8x1xf32> to vector<2x8x8xf32>
    %247 = arith.subf %243, %246 : vector<2x8x8xf32>
    %248 = math.exp %247 : vector<2x8x8xf32>
    %cst_70 = arith.constant dense<0.000000e+00> : vector<2x8xf32>
    %249 = vector.multi_reduction <add>, %248, %cst_70 [2] : vector<2x8x8xf32> to vector<2x8xf32>
    %250 = vector.shape_cast %249 : vector<2x8xf32> to vector<2x8x1xf32>
    %251 = tpu.reciprocal %250 {approx = true} : vector<2x8x1xf32> -> vector<2x8x1xf32>
    %252 = vector.broadcast %251 : vector<2x8x1xf32> to vector<2x8x8xf32>
    %253 = arith.mulf %248, %252 : vector<2x8x8xf32>
    %254 = arith.truncf %253 : vector<2x8x8xf32> to vector<2x8x8xbf16>
    "tpu.trace_start"() <{level = 10 : i32, message = "bqk,bkd->bqd"}> : () -> ()
    %cst_71 = arith.constant dense<0.000000e+00> : vector<2x8x8xf32>
    %255 = tpu.matmul %254, %242, %cst_71 {dimension_numbers = #tpu.dot_dimension_numbers<[2], [1], [1], [2], [0, 0, 0, 1, 1, 2], [0], [0]>} : vector<2x8x8xbf16>, vector<2x8x8xbf16>, vector<2x8x8xf32> -> vector<2x8x8xf32>
    "tpu.trace_stop"() : () -> ()
    %256 = vector.shape_cast %255 : vector<2x8x8xf32> to vector<16x8xf32>
    %257 = vector.extract_strided_slice %187 {offsets = [0, 24], sizes = [16, 8], strides = [1, 1]} : vector<16x96xf32> to vector<16x8xf32>
    %258 = vector.shape_cast %257 : vector<16x8xf32> to vector<2x8x8xf32>
    %259 = arith.truncf %258 : vector<2x8x8xf32> to vector<2x8x8xbf16>
    %260 = vector.extract_strided_slice %187 {offsets = [0, 56], sizes = [16, 8], strides = [1, 1]} : vector<16x96xf32> to vector<16x8xf32>
    %261 = vector.shape_cast %260 : vector<16x8xf32> to vector<2x8x8xf32>
    %262 = arith.truncf %261 : vector<2x8x8xf32> to vector<2x8x8xbf16>
    %263 = vector.extract_strided_slice %187 {offsets = [0, 88], sizes = [16, 8], strides = [1, 1]} : vector<16x96xf32> to vector<16x8xf32>
    %264 = vector.shape_cast %263 : vector<16x8xf32> to vector<2x8x8xf32>
    %265 = arith.truncf %264 : vector<2x8x8xf32> to vector<2x8x8xbf16>
    "tpu.trace_start"() <{level = 10 : i32, message = "bqd,bkd->bqk"}> : () -> ()
    %cst_72 = arith.constant dense<0.000000e+00> : vector<2x8x8xf32>
    %266 = tpu.matmul %259, %262, %cst_72 {dimension_numbers = #tpu.dot_dimension_numbers<[2], [2], [1], [1], [0, 0, 0, 1, 1, 1], [0], [0]>} : vector<2x8x8xbf16>, vector<2x8x8xbf16>, vector<2x8x8xf32> -> vector<2x8x8xf32>
    "tpu.trace_stop"() : () -> ()
    %cst_73 = arith.constant dense<0xFF800000> : vector<2x8xf32>
    %267 = vector.multi_reduction <maximumf>, %266, %cst_73 [2] : vector<2x8x8xf32> to vector<2x8xf32>
    %268 = vector.shape_cast %267 : vector<2x8xf32> to vector<2x8x1xf32>
    %269 = vector.broadcast %268 : vector<2x8x1xf32> to vector<2x8x8xf32>
    %270 = arith.subf %266, %269 : vector<2x8x8xf32>
    %271 = math.exp %270 : vector<2x8x8xf32>
    %cst_74 = arith.constant dense<0.000000e+00> : vector<2x8xf32>
    %272 = vector.multi_reduction <add>, %271, %cst_74 [2] : vector<2x8x8xf32> to vector<2x8xf32>
    %273 = vector.shape_cast %272 : vector<2x8xf32> to vector<2x8x1xf32>
    %274 = tpu.reciprocal %273 {approx = true} : vector<2x8x1xf32> -> vector<2x8x1xf32>
    %275 = vector.broadcast %274 : vector<2x8x1xf32> to vector<2x8x8xf32>
    %276 = arith.mulf %271, %275 : vector<2x8x8xf32>
    %277 = arith.truncf %276 : vector<2x8x8xf32> to vector<2x8x8xbf16>
    "tpu.trace_start"() <{level = 10 : i32, message = "bqk,bkd->bqd"}> : () -> ()
    %cst_75 = arith.constant dense<0.000000e+00> : vector<2x8x8xf32>
    %278 = tpu.matmul %277, %265, %cst_75 {dimension_numbers = #tpu.dot_dimension_numbers<[2], [1], [1], [2], [0, 0, 0, 1, 1, 2], [0], [0]>} : vector<2x8x8xbf16>, vector<2x8x8xbf16>, vector<2x8x8xf32> -> vector<2x8x8xf32>
    "tpu.trace_stop"() : () -> ()
    %279 = vector.shape_cast %278 : vector<2x8x8xf32> to vector<16x8xf32>
    %280 = tpu.concatenate %210, %233, %256, %279 in 1 : vector<16x8xf32>, vector<16x8xf32>, vector<16x8xf32>, vector<16x8xf32> -> vector<16x32xf32>
    %c1_76 = arith.constant 1 : index
    %c0_77 = arith.constant 0 : index
    %c0_78 = arith.constant 0 : index
    %281 = vector.load %arg3[%c1_76, %c0_77, %c0_78] : memref<6x32x32xbf16, #tpu.memory_space<vmem>>, vector<1x32x32xbf16>
    %282 = vector.shape_cast %281 : vector<1x32x32xbf16> to vector<32x32xbf16>
    %283 = arith.truncf %280 : vector<16x32xf32> to vector<16x32xbf16>
    %cst_79 = arith.constant dense<0.000000e+00> : vector<16x32xf32>
    %284 = tpu.matmul %283, %282, %cst_79 {dimension_numbers = #tpu.dot_dimension_numbers<[1], [0], [0], [1], [0, 0, 1, 1], [], []>} : vector<16x32xbf16>, vector<32x32xbf16>, vector<16x32xf32> -> vector<16x32xf32>
    %c7 = arith.constant 7 : index
    %c0_80 = arith.constant 0 : index
    %285 = vector.load %arg6[%c7, %c0_80] : memref<40x96xf32, #tpu.memory_space<vmem>>, vector<1x32xf32>
    %286 = vector.broadcast %285 : vector<1x32xf32> to vector<16x32xf32>
    %287 = arith.addf %284, %286 : vector<16x32xf32>
    %288 = arith.addf %180, %287 : vector<16x32xf32>
    %c22 = arith.constant 22 : index
    %c0_81 = arith.constant 0 : index
    %289 = vector.load %arg6[%c22, %c0_81] : memref<40x96xf32, #tpu.memory_space<vmem>>, vector<1x32xf32>
    %c32 = arith.constant 32 : index
    %c0_82 = arith.constant 0 : index
    %290 = vector.load %arg6[%c32, %c0_82] : memref<40x96xf32, #tpu.memory_space<vmem>>, vector<1x32xf32>
    %cst_83 = arith.constant dense<0.000000e+00> : vector<16xf32>
    %291 = vector.multi_reduction <add>, %288, %cst_83 [1] : vector<16x32xf32> to vector<16xf32>
    %292 = vector.shape_cast %291 : vector<16xf32> to vector<16x1xf32>
    %cst_84 = arith.constant 3.200000e+01 : f32
    %293 = vector.broadcast %cst_84 : f32 to vector<16x1xf32>
    %294 = arith.divf %292, %293 : vector<16x1xf32>
    %295 = vector.broadcast %294 : vector<16x1xf32> to vector<16x32xf32>
    %296 = arith.subf %288, %295 : vector<16x32xf32>
    %297 = arith.mulf %296, %296 : vector<16x32xf32>
    %cst_85 = arith.constant dense<0.000000e+00> : vector<16xf32>
    %298 = vector.multi_reduction <add>, %297, %cst_85 [1] : vector<16x32xf32> to vector<16xf32>
    %299 = vector.shape_cast %298 : vector<16xf32> to vector<16x1xf32>
    %cst_86 = arith.constant 3.200000e+01 : f32
    %300 = vector.broadcast %cst_86 : f32 to vector<16x1xf32>
    %301 = arith.divf %299, %300 : vector<16x1xf32>
    %302 = vector.broadcast %294 : vector<16x1xf32> to vector<16x32xf32>
    %303 = arith.subf %288, %302 : vector<16x32xf32>
    %cst_87 = arith.constant 9.99999974E-6 : f32
    %304 = vector.broadcast %cst_87 : f32 to vector<16x1xf32>
    %305 = arith.addf %301, %304 : vector<16x1xf32>
    %306 = math.rsqrt %305 : vector<16x1xf32>
    %307 = vector.broadcast %306 : vector<16x1xf32> to vector<16x32xf32>
    %308 = arith.mulf %303, %307 : vector<16x32xf32>
    %309 = vector.broadcast %289 : vector<1x32xf32> to vector<16x32xf32>
    %310 = arith.mulf %308, %309 : vector<16x32xf32>
    %311 = vector.broadcast %290 : vector<1x32xf32> to vector<16x32xf32>
    %312 = arith.addf %310, %311 : vector<16x32xf32>
    %c1_88 = arith.constant 1 : index
    %c0_89 = arith.constant 0 : index
    %c0_90 = arith.constant 0 : index
    %313 = vector.load %arg4[%c1_88, %c0_89, %c0_90] : memref<4x32x64xbf16, #tpu.memory_space<vmem>>, vector<1x32x64xbf16>
    %314 = vector.shape_cast %313 : vector<1x32x64xbf16> to vector<32x64xbf16>
    %315 = arith.truncf %312 : vector<16x32xf32> to vector<16x32xbf16>
    %cst_91 = arith.constant dense<0.000000e+00> : vector<16x64xf32>
    %316 = tpu.matmul %315, %314, %cst_91 {dimension_numbers = #tpu.dot_dimension_numbers<[1], [0], [0], [1], [0, 0, 1, 1], [], []>} : vector<16x32xbf16>, vector<32x64xbf16>, vector<16x64xf32> -> vector<16x64xf32>
    %c13 = arith.constant 13 : index
    %c0_92 = arith.constant 0 : index
    %317 = vector.load %arg6[%c13, %c0_92] : memref<40x96xf32, #tpu.memory_space<vmem>>, vector<1x64xf32>
    %318 = vector.broadcast %317 : vector<1x64xf32> to vector<16x64xf32>
    %319 = arith.addf %316, %318 : vector<16x64xf32>
    %cst_93 = arith.constant 5.000000e-01 : f32
    %320 = vector.broadcast %cst_93 : f32 to vector<16x64xf32>
    %321 = arith.mulf %320, %319 : vector<16x64xf32>
    %cst_94 = arith.constant 1.41421354 : f32
    %322 = vector.broadcast %cst_94 : f32 to vector<16x64xf32>
    %323 = arith.divf %319, %322 : vector<16x64xf32>
    %324 = math.erf %323 : vector<16x64xf32>
    %cst_95 = arith.constant 1.000000e+00 : f32
    %325 = vector.broadcast %cst_95 : f32 to vector<16x64xf32>
    %326 = arith.addf %325, %324 : vector<16x64xf32>
    %327 = arith.mulf %321, %326 : vector<16x64xf32>
    %c1_96 = arith.constant 1 : index
    %c0_97 = arith.constant 0 : index
    %c0_98 = arith.constant 0 : index
    %328 = vector.load %arg5[%c1_96, %c0_97, %c0_98] : memref<4x64x32xbf16, #tpu.memory_space<vmem>>, vector<1x64x32xbf16>
    %329 = vector.shape_cast %328 : vector<1x64x32xbf16> to vector<64x32xbf16>
    %330 = arith.truncf %327 : vector<16x64xf32> to vector<16x64xbf16>
    %cst_99 = arith.constant dense<0.000000e+00> : vector<16x32xf32>
    %331 = tpu.matmul %330, %329, %cst_99 {dimension_numbers = #tpu.dot_dimension_numbers<[1], [0], [0], [1], [0, 0, 1, 1], [], []>} : vector<16x64xbf16>, vector<64x32xbf16>, vector<16x32xf32> -> vector<16x32xf32>
    %c17 = arith.constant 17 : index
    %c0_100 = arith.constant 0 : index
    %332 = vector.load %arg6[%c17, %c0_100] : memref<40x96xf32, #tpu.memory_space<vmem>>, vector<1x32xf32>
    %333 = vector.broadcast %332 : vector<1x32xf32> to vector<16x32xf32>
    %334 = arith.addf %331, %333 : vector<16x32xf32>
    %335 = arith.addf %312, %334 : vector<16x32xf32>
    %c23 = arith.constant 23 : index
    %c0_101 = arith.constant 0 : index
    %336 = vector.load %arg6[%c23, %c0_101] : memref<40x96xf32, #tpu.memory_space<vmem>>, vector<1x32xf32>
    %c33 = arith.constant 33 : index
    %c0_102 = arith.constant 0 : index
    %337 = vector.load %arg6[%c33, %c0_102] : memref<40x96xf32, #tpu.memory_space<vmem>>, vector<1x32xf32>
    %cst_103 = arith.constant dense<0.000000e+00> : vector<16xf32>
    %338 = vector.multi_reduction <add>, %335, %cst_103 [1] : vector<16x32xf32> to vector<16xf32>
    %339 = vector.shape_cast %338 : vector<16xf32> to vector<16x1xf32>
    %cst_104 = arith.constant 3.200000e+01 : f32
    %340 = vector.broadcast %cst_104 : f32 to vector<16x1xf32>
    %341 = arith.divf %339, %340 : vector<16x1xf32>
    %342 = vector.broadcast %341 : vector<16x1xf32> to vector<16x32xf32>
    %343 = arith.subf %335, %342 : vector<16x32xf32>
    %344 = arith.mulf %343, %343 : vector<16x32xf32>
    %cst_105 = arith.constant dense<0.000000e+00> : vector<16xf32>
    %345 = vector.multi_reduction <add>, %344, %cst_105 [1] : vector<16x32xf32> to vector<16xf32>
    %346 = vector.shape_cast %345 : vector<16xf32> to vector<16x1xf32>
    %cst_106 = arith.constant 3.200000e+01 : f32
    %347 = vector.broadcast %cst_106 : f32 to vector<16x1xf32>
    %348 = arith.divf %346, %347 : vector<16x1xf32>
    %349 = vector.broadcast %341 : vector<16x1xf32> to vector<16x32xf32>
    %350 = arith.subf %335, %349 : vector<16x32xf32>
    %cst_107 = arith.constant 9.99999974E-6 : f32
    %351 = vector.broadcast %cst_107 : f32 to vector<16x1xf32>
    %352 = arith.addf %348, %351 : vector<16x1xf32>
    %353 = math.rsqrt %352 : vector<16x1xf32>
    %354 = vector.broadcast %353 : vector<16x1xf32> to vector<16x32xf32>
    %355 = arith.mulf %350, %354 : vector<16x32xf32>
    %356 = vector.broadcast %336 : vector<1x32xf32> to vector<16x32xf32>
    %357 = arith.mulf %355, %356 : vector<16x32xf32>
    %358 = vector.broadcast %337 : vector<1x32xf32> to vector<16x32xf32>
    %359 = arith.addf %357, %358 : vector<16x32xf32>
    %c0_108 = arith.constant 0 : index
    %c0_109 = arith.constant 0 : index
    %c0_110 = arith.constant 0 : index
    %360 = vector.load %arg1[%c0_108, %c0_109, %c0_110] : memref<2x8x32xf32, #tpu.memory_space<vmem>>, vector<2x8x32xf32>
    %361 = vector.shape_cast %360 : vector<2x8x32xf32> to vector<16x32xf32>
    %c2 = arith.constant 2 : index
    %c0_111 = arith.constant 0 : index
    %c0_112 = arith.constant 0 : index
    %362 = vector.load %arg2[%c2, %c0_111, %c0_112] : memref<6x32x96xbf16, #tpu.memory_space<vmem>>, vector<1x32x96xbf16>
    %363 = vector.shape_cast %362 : vector<1x32x96xbf16> to vector<32x96xbf16>
    %c2_113 = arith.constant 2 : index
    %c0_114 = arith.constant 0 : index
    %364 = vector.load %arg6[%c2_113, %c0_114] : memref<40x96xf32, #tpu.memory_space<vmem>>, vector<1x96xf32>
    %365 = arith.truncf %359 : vector<16x32xf32> to vector<16x32xbf16>
    %cst_115 = arith.constant dense<0.000000e+00> : vector<16x96xf32>
    %366 = tpu.matmul %365, %363, %cst_115 {dimension_numbers = #tpu.dot_dimension_numbers<[1], [0], [0], [1], [0, 0, 1, 1], [], []>} : vector<16x32xbf16>, vector<32x96xbf16>, vector<16x96xf32> -> vector<16x96xf32>
    %367 = vector.broadcast %364 : vector<1x96xf32> to vector<16x96xf32>
    %368 = arith.addf %366, %367 : vector<16x96xf32>
    %369 = vector.extract_strided_slice %368 {offsets = [0, 0], sizes = [16, 8], strides = [1, 1]} : vector<16x96xf32> to vector<16x8xf32>
    %370 = vector.shape_cast %369 : vector<16x8xf32> to vector<2x8x8xf32>
    %371 = arith.truncf %370 : vector<2x8x8xf32> to vector<2x8x8xbf16>
    %372 = vector.extract_strided_slice %368 {offsets = [0, 32], sizes = [16, 8], strides = [1, 1]} : vector<16x96xf32> to vector<16x8xf32>
    %373 = vector.shape_cast %372 : vector<16x8xf32> to vector<2x8x8xf32>
    %374 = arith.truncf %373 : vector<2x8x8xf32> to vector<2x8x8xbf16>
    %375 = vector.extract_strided_slice %368 {offsets = [0, 64], sizes = [16, 8], strides = [1, 1]} : vector<16x96xf32> to vector<16x8xf32>
    %376 = vector.shape_cast %375 : vector<16x8xf32> to vector<2x8x8xf32>
    %377 = arith.truncf %376 : vector<2x8x8xf32> to vector<2x8x8xbf16>
    "tpu.trace_start"() <{level = 10 : i32, message = "bqd,bkd->bqk"}> : () -> ()
    %cst_116 = arith.constant dense<0.000000e+00> : vector<2x8x8xf32>
    %378 = tpu.matmul %371, %374, %cst_116 {dimension_numbers = #tpu.dot_dimension_numbers<[2], [2], [1], [1], [0, 0, 0, 1, 1, 1], [0], [0]>} : vector<2x8x8xbf16>, vector<2x8x8xbf16>, vector<2x8x8xf32> -> vector<2x8x8xf32>
    "tpu.trace_stop"() : () -> ()
    %cst_117 = arith.constant dense<0xFF800000> : vector<2x8xf32>
    %379 = vector.multi_reduction <maximumf>, %378, %cst_117 [2] : vector<2x8x8xf32> to vector<2x8xf32>
    %380 = vector.shape_cast %379 : vector<2x8xf32> to vector<2x8x1xf32>
    %381 = vector.broadcast %380 : vector<2x8x1xf32> to vector<2x8x8xf32>
    %382 = arith.subf %378, %381 : vector<2x8x8xf32>
    %383 = math.exp %382 : vector<2x8x8xf32>
    %cst_118 = arith.constant dense<0.000000e+00> : vector<2x8xf32>
    %384 = vector.multi_reduction <add>, %383, %cst_118 [2] : vector<2x8x8xf32> to vector<2x8xf32>
    %385 = vector.shape_cast %384 : vector<2x8xf32> to vector<2x8x1xf32>
    %386 = tpu.reciprocal %385 {approx = true} : vector<2x8x1xf32> -> vector<2x8x1xf32>
    %387 = vector.broadcast %386 : vector<2x8x1xf32> to vector<2x8x8xf32>
    %388 = arith.mulf %383, %387 : vector<2x8x8xf32>
    %389 = arith.truncf %388 : vector<2x8x8xf32> to vector<2x8x8xbf16>
    "tpu.trace_start"() <{level = 10 : i32, message = "bqk,bkd->bqd"}> : () -> ()
    %cst_119 = arith.constant dense<0.000000e+00> : vector<2x8x8xf32>
    %390 = tpu.matmul %389, %377, %cst_119 {dimension_numbers = #tpu.dot_dimension_numbers<[2], [1], [1], [2], [0, 0, 0, 1, 1, 2], [0], [0]>} : vector<2x8x8xbf16>, vector<2x8x8xbf16>, vector<2x8x8xf32> -> vector<2x8x8xf32>
    "tpu.trace_stop"() : () -> ()
    %391 = vector.shape_cast %390 : vector<2x8x8xf32> to vector<16x8xf32>
    %392 = vector.extract_strided_slice %368 {offsets = [0, 8], sizes = [16, 8], strides = [1, 1]} : vector<16x96xf32> to vector<16x8xf32>
    %393 = vector.shape_cast %392 : vector<16x8xf32> to vector<2x8x8xf32>
    %394 = arith.truncf %393 : vector<2x8x8xf32> to vector<2x8x8xbf16>
    %395 = vector.extract_strided_slice %368 {offsets = [0, 40], sizes = [16, 8], strides = [1, 1]} : vector<16x96xf32> to vector<16x8xf32>
    %396 = vector.shape_cast %395 : vector<16x8xf32> to vector<2x8x8xf32>
    %397 = arith.truncf %396 : vector<2x8x8xf32> to vector<2x8x8xbf16>
    %398 = vector.extract_strided_slice %368 {offsets = [0, 72], sizes = [16, 8], strides = [1, 1]} : vector<16x96xf32> to vector<16x8xf32>
    %399 = vector.shape_cast %398 : vector<16x8xf32> to vector<2x8x8xf32>
    %400 = arith.truncf %399 : vector<2x8x8xf32> to vector<2x8x8xbf16>
    "tpu.trace_start"() <{level = 10 : i32, message = "bqd,bkd->bqk"}> : () -> ()
    %cst_120 = arith.constant dense<0.000000e+00> : vector<2x8x8xf32>
    %401 = tpu.matmul %394, %397, %cst_120 {dimension_numbers = #tpu.dot_dimension_numbers<[2], [2], [1], [1], [0, 0, 0, 1, 1, 1], [0], [0]>} : vector<2x8x8xbf16>, vector<2x8x8xbf16>, vector<2x8x8xf32> -> vector<2x8x8xf32>
    "tpu.trace_stop"() : () -> ()
    %cst_121 = arith.constant dense<0xFF800000> : vector<2x8xf32>
    %402 = vector.multi_reduction <maximumf>, %401, %cst_121 [2] : vector<2x8x8xf32> to vector<2x8xf32>
    %403 = vector.shape_cast %402 : vector<2x8xf32> to vector<2x8x1xf32>
    %404 = vector.broadcast %403 : vector<2x8x1xf32> to vector<2x8x8xf32>
    %405 = arith.subf %401, %404 : vector<2x8x8xf32>
    %406 = math.exp %405 : vector<2x8x8xf32>
    %cst_122 = arith.constant dense<0.000000e+00> : vector<2x8xf32>
    %407 = vector.multi_reduction <add>, %406, %cst_122 [2] : vector<2x8x8xf32> to vector<2x8xf32>
    %408 = vector.shape_cast %407 : vector<2x8xf32> to vector<2x8x1xf32>
    %409 = tpu.reciprocal %408 {approx = true} : vector<2x8x1xf32> -> vector<2x8x1xf32>
    %410 = vector.broadcast %409 : vector<2x8x1xf32> to vector<2x8x8xf32>
    %411 = arith.mulf %406, %410 : vector<2x8x8xf32>
    %412 = arith.truncf %411 : vector<2x8x8xf32> to vector<2x8x8xbf16>
    "tpu.trace_start"() <{level = 10 : i32, message = "bqk,bkd->bqd"}> : () -> ()
    %cst_123 = arith.constant dense<0.000000e+00> : vector<2x8x8xf32>
    %413 = tpu.matmul %412, %400, %cst_123 {dimension_numbers = #tpu.dot_dimension_numbers<[2], [1], [1], [2], [0, 0, 0, 1, 1, 2], [0], [0]>} : vector<2x8x8xbf16>, vector<2x8x8xbf16>, vector<2x8x8xf32> -> vector<2x8x8xf32>
    "tpu.trace_stop"() : () -> ()
    %414 = vector.shape_cast %413 : vector<2x8x8xf32> to vector<16x8xf32>
    %415 = vector.extract_strided_slice %368 {offsets = [0, 16], sizes = [16, 8], strides = [1, 1]} : vector<16x96xf32> to vector<16x8xf32>
    %416 = vector.shape_cast %415 : vector<16x8xf32> to vector<2x8x8xf32>
    %417 = arith.truncf %416 : vector<2x8x8xf32> to vector<2x8x8xbf16>
    %418 = vector.extract_strided_slice %368 {offsets = [0, 48], sizes = [16, 8], strides = [1, 1]} : vector<16x96xf32> to vector<16x8xf32>
    %419 = vector.shape_cast %418 : vector<16x8xf32> to vector<2x8x8xf32>
    %420 = arith.truncf %419 : vector<2x8x8xf32> to vector<2x8x8xbf16>
    %421 = vector.extract_strided_slice %368 {offsets = [0, 80], sizes = [16, 8], strides = [1, 1]} : vector<16x96xf32> to vector<16x8xf32>
    %422 = vector.shape_cast %421 : vector<16x8xf32> to vector<2x8x8xf32>
    %423 = arith.truncf %422 : vector<2x8x8xf32> to vector<2x8x8xbf16>
    "tpu.trace_start"() <{level = 10 : i32, message = "bqd,bkd->bqk"}> : () -> ()
    %cst_124 = arith.constant dense<0.000000e+00> : vector<2x8x8xf32>
    %424 = tpu.matmul %417, %420, %cst_124 {dimension_numbers = #tpu.dot_dimension_numbers<[2], [2], [1], [1], [0, 0, 0, 1, 1, 1], [0], [0]>} : vector<2x8x8xbf16>, vector<2x8x8xbf16>, vector<2x8x8xf32> -> vector<2x8x8xf32>
    "tpu.trace_stop"() : () -> ()
    %cst_125 = arith.constant dense<0xFF800000> : vector<2x8xf32>
    %425 = vector.multi_reduction <maximumf>, %424, %cst_125 [2] : vector<2x8x8xf32> to vector<2x8xf32>
    %426 = vector.shape_cast %425 : vector<2x8xf32> to vector<2x8x1xf32>
    %427 = vector.broadcast %426 : vector<2x8x1xf32> to vector<2x8x8xf32>
    %428 = arith.subf %424, %427 : vector<2x8x8xf32>
    %429 = math.exp %428 : vector<2x8x8xf32>
    %cst_126 = arith.constant dense<0.000000e+00> : vector<2x8xf32>
    %430 = vector.multi_reduction <add>, %429, %cst_126 [2] : vector<2x8x8xf32> to vector<2x8xf32>
    %431 = vector.shape_cast %430 : vector<2x8xf32> to vector<2x8x1xf32>
    %432 = tpu.reciprocal %431 {approx = true} : vector<2x8x1xf32> -> vector<2x8x1xf32>
    %433 = vector.broadcast %432 : vector<2x8x1xf32> to vector<2x8x8xf32>
    %434 = arith.mulf %429, %433 : vector<2x8x8xf32>
    %435 = arith.truncf %434 : vector<2x8x8xf32> to vector<2x8x8xbf16>
    "tpu.trace_start"() <{level = 10 : i32, message = "bqk,bkd->bqd"}> : () -> ()
    %cst_127 = arith.constant dense<0.000000e+00> : vector<2x8x8xf32>
    %436 = tpu.matmul %435, %423, %cst_127 {dimension_numbers = #tpu.dot_dimension_numbers<[2], [1], [1], [2], [0, 0, 0, 1, 1, 2], [0], [0]>} : vector<2x8x8xbf16>, vector<2x8x8xbf16>, vector<2x8x8xf32> -> vector<2x8x8xf32>
    "tpu.trace_stop"() : () -> ()
    %437 = vector.shape_cast %436 : vector<2x8x8xf32> to vector<16x8xf32>
    %438 = vector.extract_strided_slice %368 {offsets = [0, 24], sizes = [16, 8], strides = [1, 1]} : vector<16x96xf32> to vector<16x8xf32>
    %439 = vector.shape_cast %438 : vector<16x8xf32> to vector<2x8x8xf32>
    %440 = arith.truncf %439 : vector<2x8x8xf32> to vector<2x8x8xbf16>
    %441 = vector.extract_strided_slice %368 {offsets = [0, 56], sizes = [16, 8], strides = [1, 1]} : vector<16x96xf32> to vector<16x8xf32>
    %442 = vector.shape_cast %441 : vector<16x8xf32> to vector<2x8x8xf32>
    %443 = arith.truncf %442 : vector<2x8x8xf32> to vector<2x8x8xbf16>
    %444 = vector.extract_strided_slice %368 {offsets = [0, 88], sizes = [16, 8], strides = [1, 1]} : vector<16x96xf32> to vector<16x8xf32>
    %445 = vector.shape_cast %444 : vector<16x8xf32> to vector<2x8x8xf32>
    %446 = arith.truncf %445 : vector<2x8x8xf32> to vector<2x8x8xbf16>
    "tpu.trace_start"() <{level = 10 : i32, message = "bqd,bkd->bqk"}> : () -> ()
    %cst_128 = arith.constant dense<0.000000e+00> : vector<2x8x8xf32>
    %447 = tpu.matmul %440, %443, %cst_128 {dimension_numbers = #tpu.dot_dimension_numbers<[2], [2], [1], [1], [0, 0, 0, 1, 1, 1], [0], [0]>} : vector<2x8x8xbf16>, vector<2x8x8xbf16>, vector<2x8x8xf32> -> vector<2x8x8xf32>
    "tpu.trace_stop"() : () -> ()
    %cst_129 = arith.constant dense<0xFF800000> : vector<2x8xf32>
    %448 = vector.multi_reduction <maximumf>, %447, %cst_129 [2] : vector<2x8x8xf32> to vector<2x8xf32>
    %449 = vector.shape_cast %448 : vector<2x8xf32> to vector<2x8x1xf32>
    %450 = vector.broadcast %449 : vector<2x8x1xf32> to vector<2x8x8xf32>
    %451 = arith.subf %447, %450 : vector<2x8x8xf32>
    %452 = math.exp %451 : vector<2x8x8xf32>
    %cst_130 = arith.constant dense<0.000000e+00> : vector<2x8xf32>
    %453 = vector.multi_reduction <add>, %452, %cst_130 [2] : vector<2x8x8xf32> to vector<2x8xf32>
    %454 = vector.shape_cast %453 : vector<2x8xf32> to vector<2x8x1xf32>
    %455 = tpu.reciprocal %454 {approx = true} : vector<2x8x1xf32> -> vector<2x8x1xf32>
    %456 = vector.broadcast %455 : vector<2x8x1xf32> to vector<2x8x8xf32>
    %457 = arith.mulf %452, %456 : vector<2x8x8xf32>
    %458 = arith.truncf %457 : vector<2x8x8xf32> to vector<2x8x8xbf16>
    "tpu.trace_start"() <{level = 10 : i32, message = "bqk,bkd->bqd"}> : () -> ()
    %cst_131 = arith.constant dense<0.000000e+00> : vector<2x8x8xf32>
    %459 = tpu.matmul %458, %446, %cst_131 {dimension_numbers = #tpu.dot_dimension_numbers<[2], [1], [1], [2], [0, 0, 0, 1, 1, 2], [0], [0]>} : vector<2x8x8xbf16>, vector<2x8x8xbf16>, vector<2x8x8xf32> -> vector<2x8x8xf32>
    "tpu.trace_stop"() : () -> ()
    %460 = vector.shape_cast %459 : vector<2x8x8xf32> to vector<16x8xf32>
    %461 = tpu.concatenate %391, %414, %437, %460 in 1 : vector<16x8xf32>, vector<16x8xf32>, vector<16x8xf32>, vector<16x8xf32> -> vector<16x32xf32>
    %c2_132 = arith.constant 2 : index
    %c0_133 = arith.constant 0 : index
    %c0_134 = arith.constant 0 : index
    %462 = vector.load %arg3[%c2_132, %c0_133, %c0_134] : memref<6x32x32xbf16, #tpu.memory_space<vmem>>, vector<1x32x32xbf16>
    %463 = vector.shape_cast %462 : vector<1x32x32xbf16> to vector<32x32xbf16>
    %464 = arith.truncf %461 : vector<16x32xf32> to vector<16x32xbf16>
    %cst_135 = arith.constant dense<0.000000e+00> : vector<16x32xf32>
    %465 = tpu.matmul %464, %463, %cst_135 {dimension_numbers = #tpu.dot_dimension_numbers<[1], [0], [0], [1], [0, 0, 1, 1], [], []>} : vector<16x32xbf16>, vector<32x32xbf16>, vector<16x32xf32> -> vector<16x32xf32>
    %c8 = arith.constant 8 : index
    %c0_136 = arith.constant 0 : index
    %466 = vector.load %arg6[%c8, %c0_136] : memref<40x96xf32, #tpu.memory_space<vmem>>, vector<1x32xf32>
    %467 = vector.broadcast %466 : vector<1x32xf32> to vector<16x32xf32>
    %468 = arith.addf %465, %467 : vector<16x32xf32>
    %469 = arith.addf %359, %468 : vector<16x32xf32>
    %c24 = arith.constant 24 : index
    %c0_137 = arith.constant 0 : index
    %470 = vector.load %arg6[%c24, %c0_137] : memref<40x96xf32, #tpu.memory_space<vmem>>, vector<1x32xf32>
    %c34 = arith.constant 34 : index
    %c0_138 = arith.constant 0 : index
    %471 = vector.load %arg6[%c34, %c0_138] : memref<40x96xf32, #tpu.memory_space<vmem>>, vector<1x32xf32>
    %cst_139 = arith.constant dense<0.000000e+00> : vector<16xf32>
    %472 = vector.multi_reduction <add>, %469, %cst_139 [1] : vector<16x32xf32> to vector<16xf32>
    %473 = vector.shape_cast %472 : vector<16xf32> to vector<16x1xf32>
    %cst_140 = arith.constant 3.200000e+01 : f32
    %474 = vector.broadcast %cst_140 : f32 to vector<16x1xf32>
    %475 = arith.divf %473, %474 : vector<16x1xf32>
    %476 = vector.broadcast %475 : vector<16x1xf32> to vector<16x32xf32>
    %477 = arith.subf %469, %476 : vector<16x32xf32>
    %478 = arith.mulf %477, %477 : vector<16x32xf32>
    %cst_141 = arith.constant dense<0.000000e+00> : vector<16xf32>
    %479 = vector.multi_reduction <add>, %478, %cst_141 [1] : vector<16x32xf32> to vector<16xf32>
    %480 = vector.shape_cast %479 : vector<16xf32> to vector<16x1xf32>
    %cst_142 = arith.constant 3.200000e+01 : f32
    %481 = vector.broadcast %cst_142 : f32 to vector<16x1xf32>
    %482 = arith.divf %480, %481 : vector<16x1xf32>
    %483 = vector.broadcast %475 : vector<16x1xf32> to vector<16x32xf32>
    %484 = arith.subf %469, %483 : vector<16x32xf32>
    %cst_143 = arith.constant 9.99999974E-6 : f32
    %485 = vector.broadcast %cst_143 : f32 to vector<16x1xf32>
    %486 = arith.addf %482, %485 : vector<16x1xf32>
    %487 = math.rsqrt %486 : vector<16x1xf32>
    %488 = vector.broadcast %487 : vector<16x1xf32> to vector<16x32xf32>
    %489 = arith.mulf %484, %488 : vector<16x32xf32>
    %490 = vector.broadcast %470 : vector<1x32xf32> to vector<16x32xf32>
    %491 = arith.mulf %489, %490 : vector<16x32xf32>
    %492 = vector.broadcast %471 : vector<1x32xf32> to vector<16x32xf32>
    %493 = arith.addf %491, %492 : vector<16x32xf32>
    %c3 = arith.constant 3 : index
    %c0_144 = arith.constant 0 : index
    %c0_145 = arith.constant 0 : index
    %494 = vector.load %arg2[%c3, %c0_144, %c0_145] : memref<6x32x96xbf16, #tpu.memory_space<vmem>>, vector<1x32x96xbf16>
    %495 = vector.shape_cast %494 : vector<1x32x96xbf16> to vector<32x96xbf16>
    %c3_146 = arith.constant 3 : index
    %c0_147 = arith.constant 0 : index
    %496 = vector.load %arg6[%c3_146, %c0_147] : memref<40x96xf32, #tpu.memory_space<vmem>>, vector<1x96xf32>
    %497 = arith.truncf %493 : vector<16x32xf32> to vector<16x32xbf16>
    %cst_148 = arith.constant dense<0.000000e+00> : vector<16x96xf32>
    %498 = tpu.matmul %497, %495, %cst_148 {dimension_numbers = #tpu.dot_dimension_numbers<[1], [0], [0], [1], [0, 0, 1, 1], [], []>} : vector<16x32xbf16>, vector<32x96xbf16>, vector<16x96xf32> -> vector<16x96xf32>
    %499 = vector.broadcast %496 : vector<1x96xf32> to vector<16x96xf32>
    %500 = arith.addf %498, %499 : vector<16x96xf32>
    %501 = arith.truncf %361 : vector<16x32xf32> to vector<16x32xbf16>
    %cst_149 = arith.constant dense<0.000000e+00> : vector<16x96xf32>
    %502 = tpu.matmul %501, %495, %cst_149 {dimension_numbers = #tpu.dot_dimension_numbers<[1], [0], [0], [1], [0, 0, 1, 1], [], []>} : vector<16x32xbf16>, vector<32x96xbf16>, vector<16x96xf32> -> vector<16x96xf32>
    %503 = vector.broadcast %496 : vector<1x96xf32> to vector<16x96xf32>
    %504 = arith.addf %502, %503 : vector<16x96xf32>
    %505 = vector.extract_strided_slice %500 {offsets = [0, 0], sizes = [16, 8], strides = [1, 1]} : vector<16x96xf32> to vector<16x8xf32>
    %506 = vector.shape_cast %505 : vector<16x8xf32> to vector<2x8x8xf32>
    %507 = arith.truncf %506 : vector<2x8x8xf32> to vector<2x8x8xbf16>
    %508 = vector.extract_strided_slice %504 {offsets = [0, 32], sizes = [16, 8], strides = [1, 1]} : vector<16x96xf32> to vector<16x8xf32>
    %509 = vector.shape_cast %508 : vector<16x8xf32> to vector<2x8x8xf32>
    %510 = arith.truncf %509 : vector<2x8x8xf32> to vector<2x8x8xbf16>
    %511 = vector.extract_strided_slice %504 {offsets = [0, 64], sizes = [16, 8], strides = [1, 1]} : vector<16x96xf32> to vector<16x8xf32>
    %512 = vector.shape_cast %511 : vector<16x8xf32> to vector<2x8x8xf32>
    %513 = arith.truncf %512 : vector<2x8x8xf32> to vector<2x8x8xbf16>
    "tpu.trace_start"() <{level = 10 : i32, message = "bqd,bkd->bqk"}> : () -> ()
    %cst_150 = arith.constant dense<0.000000e+00> : vector<2x8x8xf32>
    %514 = tpu.matmul %507, %510, %cst_150 {dimension_numbers = #tpu.dot_dimension_numbers<[2], [2], [1], [1], [0, 0, 0, 1, 1, 1], [0], [0]>} : vector<2x8x8xbf16>, vector<2x8x8xbf16>, vector<2x8x8xf32> -> vector<2x8x8xf32>
    "tpu.trace_stop"() : () -> ()
    %cst_151 = arith.constant dense<0xFF800000> : vector<2x8xf32>
    %515 = vector.multi_reduction <maximumf>, %514, %cst_151 [2] : vector<2x8x8xf32> to vector<2x8xf32>
    %516 = vector.shape_cast %515 : vector<2x8xf32> to vector<2x8x1xf32>
    %517 = vector.broadcast %516 : vector<2x8x1xf32> to vector<2x8x8xf32>
    %518 = arith.subf %514, %517 : vector<2x8x8xf32>
    %519 = math.exp %518 : vector<2x8x8xf32>
    %cst_152 = arith.constant dense<0.000000e+00> : vector<2x8xf32>
    %520 = vector.multi_reduction <add>, %519, %cst_152 [2] : vector<2x8x8xf32> to vector<2x8xf32>
    %521 = vector.shape_cast %520 : vector<2x8xf32> to vector<2x8x1xf32>
    %522 = tpu.reciprocal %521 {approx = true} : vector<2x8x1xf32> -> vector<2x8x1xf32>
    %523 = vector.broadcast %522 : vector<2x8x1xf32> to vector<2x8x8xf32>
    %524 = arith.mulf %519, %523 : vector<2x8x8xf32>
    %525 = arith.truncf %524 : vector<2x8x8xf32> to vector<2x8x8xbf16>
    "tpu.trace_start"() <{level = 10 : i32, message = "bqk,bkd->bqd"}> : () -> ()
    %cst_153 = arith.constant dense<0.000000e+00> : vector<2x8x8xf32>
    %526 = tpu.matmul %525, %513, %cst_153 {dimension_numbers = #tpu.dot_dimension_numbers<[2], [1], [1], [2], [0, 0, 0, 1, 1, 2], [0], [0]>} : vector<2x8x8xbf16>, vector<2x8x8xbf16>, vector<2x8x8xf32> -> vector<2x8x8xf32>
    "tpu.trace_stop"() : () -> ()
    %527 = vector.shape_cast %526 : vector<2x8x8xf32> to vector<16x8xf32>
    %528 = vector.extract_strided_slice %500 {offsets = [0, 8], sizes = [16, 8], strides = [1, 1]} : vector<16x96xf32> to vector<16x8xf32>
    %529 = vector.shape_cast %528 : vector<16x8xf32> to vector<2x8x8xf32>
    %530 = arith.truncf %529 : vector<2x8x8xf32> to vector<2x8x8xbf16>
    %531 = vector.extract_strided_slice %504 {offsets = [0, 40], sizes = [16, 8], strides = [1, 1]} : vector<16x96xf32> to vector<16x8xf32>
    %532 = vector.shape_cast %531 : vector<16x8xf32> to vector<2x8x8xf32>
    %533 = arith.truncf %532 : vector<2x8x8xf32> to vector<2x8x8xbf16>
    %534 = vector.extract_strided_slice %504 {offsets = [0, 72], sizes = [16, 8], strides = [1, 1]} : vector<16x96xf32> to vector<16x8xf32>
    %535 = vector.shape_cast %534 : vector<16x8xf32> to vector<2x8x8xf32>
    %536 = arith.truncf %535 : vector<2x8x8xf32> to vector<2x8x8xbf16>
    "tpu.trace_start"() <{level = 10 : i32, message = "bqd,bkd->bqk"}> : () -> ()
    %cst_154 = arith.constant dense<0.000000e+00> : vector<2x8x8xf32>
    %537 = tpu.matmul %530, %533, %cst_154 {dimension_numbers = #tpu.dot_dimension_numbers<[2], [2], [1], [1], [0, 0, 0, 1, 1, 1], [0], [0]>} : vector<2x8x8xbf16>, vector<2x8x8xbf16>, vector<2x8x8xf32> -> vector<2x8x8xf32>
    "tpu.trace_stop"() : () -> ()
    %cst_155 = arith.constant dense<0xFF800000> : vector<2x8xf32>
    %538 = vector.multi_reduction <maximumf>, %537, %cst_155 [2] : vector<2x8x8xf32> to vector<2x8xf32>
    %539 = vector.shape_cast %538 : vector<2x8xf32> to vector<2x8x1xf32>
    %540 = vector.broadcast %539 : vector<2x8x1xf32> to vector<2x8x8xf32>
    %541 = arith.subf %537, %540 : vector<2x8x8xf32>
    %542 = math.exp %541 : vector<2x8x8xf32>
    %cst_156 = arith.constant dense<0.000000e+00> : vector<2x8xf32>
    %543 = vector.multi_reduction <add>, %542, %cst_156 [2] : vector<2x8x8xf32> to vector<2x8xf32>
    %544 = vector.shape_cast %543 : vector<2x8xf32> to vector<2x8x1xf32>
    %545 = tpu.reciprocal %544 {approx = true} : vector<2x8x1xf32> -> vector<2x8x1xf32>
    %546 = vector.broadcast %545 : vector<2x8x1xf32> to vector<2x8x8xf32>
    %547 = arith.mulf %542, %546 : vector<2x8x8xf32>
    %548 = arith.truncf %547 : vector<2x8x8xf32> to vector<2x8x8xbf16>
    "tpu.trace_start"() <{level = 10 : i32, message = "bqk,bkd->bqd"}> : () -> ()
    %cst_157 = arith.constant dense<0.000000e+00> : vector<2x8x8xf32>
    %549 = tpu.matmul %548, %536, %cst_157 {dimension_numbers = #tpu.dot_dimension_numbers<[2], [1], [1], [2], [0, 0, 0, 1, 1, 2], [0], [0]>} : vector<2x8x8xbf16>, vector<2x8x8xbf16>, vector<2x8x8xf32> -> vector<2x8x8xf32>
    "tpu.trace_stop"() : () -> ()
    %550 = vector.shape_cast %549 : vector<2x8x8xf32> to vector<16x8xf32>
    %551 = vector.extract_strided_slice %500 {offsets = [0, 16], sizes = [16, 8], strides = [1, 1]} : vector<16x96xf32> to vector<16x8xf32>
    %552 = vector.shape_cast %551 : vector<16x8xf32> to vector<2x8x8xf32>
    %553 = arith.truncf %552 : vector<2x8x8xf32> to vector<2x8x8xbf16>
    %554 = vector.extract_strided_slice %504 {offsets = [0, 48], sizes = [16, 8], strides = [1, 1]} : vector<16x96xf32> to vector<16x8xf32>
    %555 = vector.shape_cast %554 : vector<16x8xf32> to vector<2x8x8xf32>
    %556 = arith.truncf %555 : vector<2x8x8xf32> to vector<2x8x8xbf16>
    %557 = vector.extract_strided_slice %504 {offsets = [0, 80], sizes = [16, 8], strides = [1, 1]} : vector<16x96xf32> to vector<16x8xf32>
    %558 = vector.shape_cast %557 : vector<16x8xf32> to vector<2x8x8xf32>
    %559 = arith.truncf %558 : vector<2x8x8xf32> to vector<2x8x8xbf16>
    "tpu.trace_start"() <{level = 10 : i32, message = "bqd,bkd->bqk"}> : () -> ()
    %cst_158 = arith.constant dense<0.000000e+00> : vector<2x8x8xf32>
    %560 = tpu.matmul %553, %556, %cst_158 {dimension_numbers = #tpu.dot_dimension_numbers<[2], [2], [1], [1], [0, 0, 0, 1, 1, 1], [0], [0]>} : vector<2x8x8xbf16>, vector<2x8x8xbf16>, vector<2x8x8xf32> -> vector<2x8x8xf32>
    "tpu.trace_stop"() : () -> ()
    %cst_159 = arith.constant dense<0xFF800000> : vector<2x8xf32>
    %561 = vector.multi_reduction <maximumf>, %560, %cst_159 [2] : vector<2x8x8xf32> to vector<2x8xf32>
    %562 = vector.shape_cast %561 : vector<2x8xf32> to vector<2x8x1xf32>
    %563 = vector.broadcast %562 : vector<2x8x1xf32> to vector<2x8x8xf32>
    %564 = arith.subf %560, %563 : vector<2x8x8xf32>
    %565 = math.exp %564 : vector<2x8x8xf32>
    %cst_160 = arith.constant dense<0.000000e+00> : vector<2x8xf32>
    %566 = vector.multi_reduction <add>, %565, %cst_160 [2] : vector<2x8x8xf32> to vector<2x8xf32>
    %567 = vector.shape_cast %566 : vector<2x8xf32> to vector<2x8x1xf32>
    %568 = tpu.reciprocal %567 {approx = true} : vector<2x8x1xf32> -> vector<2x8x1xf32>
    %569 = vector.broadcast %568 : vector<2x8x1xf32> to vector<2x8x8xf32>
    %570 = arith.mulf %565, %569 : vector<2x8x8xf32>
    %571 = arith.truncf %570 : vector<2x8x8xf32> to vector<2x8x8xbf16>
    "tpu.trace_start"() <{level = 10 : i32, message = "bqk,bkd->bqd"}> : () -> ()
    %cst_161 = arith.constant dense<0.000000e+00> : vector<2x8x8xf32>
    %572 = tpu.matmul %571, %559, %cst_161 {dimension_numbers = #tpu.dot_dimension_numbers<[2], [1], [1], [2], [0, 0, 0, 1, 1, 2], [0], [0]>} : vector<2x8x8xbf16>, vector<2x8x8xbf16>, vector<2x8x8xf32> -> vector<2x8x8xf32>
    "tpu.trace_stop"() : () -> ()
    %573 = vector.shape_cast %572 : vector<2x8x8xf32> to vector<16x8xf32>
    %574 = vector.extract_strided_slice %500 {offsets = [0, 24], sizes = [16, 8], strides = [1, 1]} : vector<16x96xf32> to vector<16x8xf32>
    %575 = vector.shape_cast %574 : vector<16x8xf32> to vector<2x8x8xf32>
    %576 = arith.truncf %575 : vector<2x8x8xf32> to vector<2x8x8xbf16>
    %577 = vector.extract_strided_slice %504 {offsets = [0, 56], sizes = [16, 8], strides = [1, 1]} : vector<16x96xf32> to vector<16x8xf32>
    %578 = vector.shape_cast %577 : vector<16x8xf32> to vector<2x8x8xf32>
    %579 = arith.truncf %578 : vector<2x8x8xf32> to vector<2x8x8xbf16>
    %580 = vector.extract_strided_slice %504 {offsets = [0, 88], sizes = [16, 8], strides = [1, 1]} : vector<16x96xf32> to vector<16x8xf32>
    %581 = vector.shape_cast %580 : vector<16x8xf32> to vector<2x8x8xf32>
    %582 = arith.truncf %581 : vector<2x8x8xf32> to vector<2x8x8xbf16>
    "tpu.trace_start"() <{level = 10 : i32, message = "bqd,bkd->bqk"}> : () -> ()
    %cst_162 = arith.constant dense<0.000000e+00> : vector<2x8x8xf32>
    %583 = tpu.matmul %576, %579, %cst_162 {dimension_numbers = #tpu.dot_dimension_numbers<[2], [2], [1], [1], [0, 0, 0, 1, 1, 1], [0], [0]>} : vector<2x8x8xbf16>, vector<2x8x8xbf16>, vector<2x8x8xf32> -> vector<2x8x8xf32>
    "tpu.trace_stop"() : () -> ()
    %cst_163 = arith.constant dense<0xFF800000> : vector<2x8xf32>
    %584 = vector.multi_reduction <maximumf>, %583, %cst_163 [2] : vector<2x8x8xf32> to vector<2x8xf32>
    %585 = vector.shape_cast %584 : vector<2x8xf32> to vector<2x8x1xf32>
    %586 = vector.broadcast %585 : vector<2x8x1xf32> to vector<2x8x8xf32>
    %587 = arith.subf %583, %586 : vector<2x8x8xf32>
    %588 = math.exp %587 : vector<2x8x8xf32>
    %cst_164 = arith.constant dense<0.000000e+00> : vector<2x8xf32>
    %589 = vector.multi_reduction <add>, %588, %cst_164 [2] : vector<2x8x8xf32> to vector<2x8xf32>
    %590 = vector.shape_cast %589 : vector<2x8xf32> to vector<2x8x1xf32>
    %591 = tpu.reciprocal %590 {approx = true} : vector<2x8x1xf32> -> vector<2x8x1xf32>
    %592 = vector.broadcast %591 : vector<2x8x1xf32> to vector<2x8x8xf32>
    %593 = arith.mulf %588, %592 : vector<2x8x8xf32>
    %594 = arith.truncf %593 : vector<2x8x8xf32> to vector<2x8x8xbf16>
    "tpu.trace_start"() <{level = 10 : i32, message = "bqk,bkd->bqd"}> : () -> ()
    %cst_165 = arith.constant dense<0.000000e+00> : vector<2x8x8xf32>
    %595 = tpu.matmul %594, %582, %cst_165 {dimension_numbers = #tpu.dot_dimension_numbers<[2], [1], [1], [2], [0, 0, 0, 1, 1, 2], [0], [0]>} : vector<2x8x8xbf16>, vector<2x8x8xbf16>, vector<2x8x8xf32> -> vector<2x8x8xf32>
    "tpu.trace_stop"() : () -> ()
    %596 = vector.shape_cast %595 : vector<2x8x8xf32> to vector<16x8xf32>
    %597 = tpu.concatenate %527, %550, %573, %596 in 1 : vector<16x8xf32>, vector<16x8xf32>, vector<16x8xf32>, vector<16x8xf32> -> vector<16x32xf32>
    %c3_166 = arith.constant 3 : index
    %c0_167 = arith.constant 0 : index
    %c0_168 = arith.constant 0 : index
    %598 = vector.load %arg3[%c3_166, %c0_167, %c0_168] : memref<6x32x32xbf16, #tpu.memory_space<vmem>>, vector<1x32x32xbf16>
    %599 = vector.shape_cast %598 : vector<1x32x32xbf16> to vector<32x32xbf16>
    %600 = arith.truncf %597 : vector<16x32xf32> to vector<16x32xbf16>
    %cst_169 = arith.constant dense<0.000000e+00> : vector<16x32xf32>
    %601 = tpu.matmul %600, %599, %cst_169 {dimension_numbers = #tpu.dot_dimension_numbers<[1], [0], [0], [1], [0, 0, 1, 1], [], []>} : vector<16x32xbf16>, vector<32x32xbf16>, vector<16x32xf32> -> vector<16x32xf32>
    %c9 = arith.constant 9 : index
    %c0_170 = arith.constant 0 : index
    %602 = vector.load %arg6[%c9, %c0_170] : memref<40x96xf32, #tpu.memory_space<vmem>>, vector<1x32xf32>
    %603 = vector.broadcast %602 : vector<1x32xf32> to vector<16x32xf32>
    %604 = arith.addf %601, %603 : vector<16x32xf32>
    %605 = arith.addf %493, %604 : vector<16x32xf32>
    %c25 = arith.constant 25 : index
    %c0_171 = arith.constant 0 : index
    %606 = vector.load %arg6[%c25, %c0_171] : memref<40x96xf32, #tpu.memory_space<vmem>>, vector<1x32xf32>
    %c35 = arith.constant 35 : index
    %c0_172 = arith.constant 0 : index
    %607 = vector.load %arg6[%c35, %c0_172] : memref<40x96xf32, #tpu.memory_space<vmem>>, vector<1x32xf32>
    %cst_173 = arith.constant dense<0.000000e+00> : vector<16xf32>
    %608 = vector.multi_reduction <add>, %605, %cst_173 [1] : vector<16x32xf32> to vector<16xf32>
    %609 = vector.shape_cast %608 : vector<16xf32> to vector<16x1xf32>
    %cst_174 = arith.constant 3.200000e+01 : f32
    %610 = vector.broadcast %cst_174 : f32 to vector<16x1xf32>
    %611 = arith.divf %609, %610 : vector<16x1xf32>
    %612 = vector.broadcast %611 : vector<16x1xf32> to vector<16x32xf32>
    %613 = arith.subf %605, %612 : vector<16x32xf32>
    %614 = arith.mulf %613, %613 : vector<16x32xf32>
    %cst_175 = arith.constant dense<0.000000e+00> : vector<16xf32>
    %615 = vector.multi_reduction <add>, %614, %cst_175 [1] : vector<16x32xf32> to vector<16xf32>
    %616 = vector.shape_cast %615 : vector<16xf32> to vector<16x1xf32>
    %cst_176 = arith.constant 3.200000e+01 : f32
    %617 = vector.broadcast %cst_176 : f32 to vector<16x1xf32>
    %618 = arith.divf %616, %617 : vector<16x1xf32>
    %619 = vector.broadcast %611 : vector<16x1xf32> to vector<16x32xf32>
    %620 = arith.subf %605, %619 : vector<16x32xf32>
    %cst_177 = arith.constant 9.99999974E-6 : f32
    %621 = vector.broadcast %cst_177 : f32 to vector<16x1xf32>
    %622 = arith.addf %618, %621 : vector<16x1xf32>
    %623 = math.rsqrt %622 : vector<16x1xf32>
    %624 = vector.broadcast %623 : vector<16x1xf32> to vector<16x32xf32>
    %625 = arith.mulf %620, %624 : vector<16x32xf32>
    %626 = vector.broadcast %606 : vector<1x32xf32> to vector<16x32xf32>
    %627 = arith.mulf %625, %626 : vector<16x32xf32>
    %628 = vector.broadcast %607 : vector<1x32xf32> to vector<16x32xf32>
    %629 = arith.addf %627, %628 : vector<16x32xf32>
    %c2_178 = arith.constant 2 : index
    %c0_179 = arith.constant 0 : index
    %c0_180 = arith.constant 0 : index
    %630 = vector.load %arg4[%c2_178, %c0_179, %c0_180] : memref<4x32x64xbf16, #tpu.memory_space<vmem>>, vector<1x32x64xbf16>
    %631 = vector.shape_cast %630 : vector<1x32x64xbf16> to vector<32x64xbf16>
    %632 = arith.truncf %629 : vector<16x32xf32> to vector<16x32xbf16>
    %cst_181 = arith.constant dense<0.000000e+00> : vector<16x64xf32>
    %633 = tpu.matmul %632, %631, %cst_181 {dimension_numbers = #tpu.dot_dimension_numbers<[1], [0], [0], [1], [0, 0, 1, 1], [], []>} : vector<16x32xbf16>, vector<32x64xbf16>, vector<16x64xf32> -> vector<16x64xf32>
    %c14 = arith.constant 14 : index
    %c0_182 = arith.constant 0 : index
    %634 = vector.load %arg6[%c14, %c0_182] : memref<40x96xf32, #tpu.memory_space<vmem>>, vector<1x64xf32>
    %635 = vector.broadcast %634 : vector<1x64xf32> to vector<16x64xf32>
    %636 = arith.addf %633, %635 : vector<16x64xf32>
    %cst_183 = arith.constant 5.000000e-01 : f32
    %637 = vector.broadcast %cst_183 : f32 to vector<16x64xf32>
    %638 = arith.mulf %637, %636 : vector<16x64xf32>
    %cst_184 = arith.constant 1.41421354 : f32
    %639 = vector.broadcast %cst_184 : f32 to vector<16x64xf32>
    %640 = arith.divf %636, %639 : vector<16x64xf32>
    %641 = math.erf %640 : vector<16x64xf32>
    %cst_185 = arith.constant 1.000000e+00 : f32
    %642 = vector.broadcast %cst_185 : f32 to vector<16x64xf32>
    %643 = arith.addf %642, %641 : vector<16x64xf32>
    %644 = arith.mulf %638, %643 : vector<16x64xf32>
    %c2_186 = arith.constant 2 : index
    %c0_187 = arith.constant 0 : index
    %c0_188 = arith.constant 0 : index
    %645 = vector.load %arg5[%c2_186, %c0_187, %c0_188] : memref<4x64x32xbf16, #tpu.memory_space<vmem>>, vector<1x64x32xbf16>
    %646 = vector.shape_cast %645 : vector<1x64x32xbf16> to vector<64x32xbf16>
    %647 = arith.truncf %644 : vector<16x64xf32> to vector<16x64xbf16>
    %cst_189 = arith.constant dense<0.000000e+00> : vector<16x32xf32>
    %648 = tpu.matmul %647, %646, %cst_189 {dimension_numbers = #tpu.dot_dimension_numbers<[1], [0], [0], [1], [0, 0, 1, 1], [], []>} : vector<16x64xbf16>, vector<64x32xbf16>, vector<16x32xf32> -> vector<16x32xf32>
    %c18 = arith.constant 18 : index
    %c0_190 = arith.constant 0 : index
    %649 = vector.load %arg6[%c18, %c0_190] : memref<40x96xf32, #tpu.memory_space<vmem>>, vector<1x32xf32>
    %650 = vector.broadcast %649 : vector<1x32xf32> to vector<16x32xf32>
    %651 = arith.addf %648, %650 : vector<16x32xf32>
    %652 = arith.addf %629, %651 : vector<16x32xf32>
    %c26 = arith.constant 26 : index
    %c0_191 = arith.constant 0 : index
    %653 = vector.load %arg6[%c26, %c0_191] : memref<40x96xf32, #tpu.memory_space<vmem>>, vector<1x32xf32>
    %c36 = arith.constant 36 : index
    %c0_192 = arith.constant 0 : index
    %654 = vector.load %arg6[%c36, %c0_192] : memref<40x96xf32, #tpu.memory_space<vmem>>, vector<1x32xf32>
    %cst_193 = arith.constant dense<0.000000e+00> : vector<16xf32>
    %655 = vector.multi_reduction <add>, %652, %cst_193 [1] : vector<16x32xf32> to vector<16xf32>
    %656 = vector.shape_cast %655 : vector<16xf32> to vector<16x1xf32>
    %cst_194 = arith.constant 3.200000e+01 : f32
    %657 = vector.broadcast %cst_194 : f32 to vector<16x1xf32>
    %658 = arith.divf %656, %657 : vector<16x1xf32>
    %659 = vector.broadcast %658 : vector<16x1xf32> to vector<16x32xf32>
    %660 = arith.subf %652, %659 : vector<16x32xf32>
    %661 = arith.mulf %660, %660 : vector<16x32xf32>
    %cst_195 = arith.constant dense<0.000000e+00> : vector<16xf32>
    %662 = vector.multi_reduction <add>, %661, %cst_195 [1] : vector<16x32xf32> to vector<16xf32>
    %663 = vector.shape_cast %662 : vector<16xf32> to vector<16x1xf32>
    %cst_196 = arith.constant 3.200000e+01 : f32
    %664 = vector.broadcast %cst_196 : f32 to vector<16x1xf32>
    %665 = arith.divf %663, %664 : vector<16x1xf32>
    %666 = vector.broadcast %658 : vector<16x1xf32> to vector<16x32xf32>
    %667 = arith.subf %652, %666 : vector<16x32xf32>
    %cst_197 = arith.constant 9.99999974E-6 : f32
    %668 = vector.broadcast %cst_197 : f32 to vector<16x1xf32>
    %669 = arith.addf %665, %668 : vector<16x1xf32>
    %670 = math.rsqrt %669 : vector<16x1xf32>
    %671 = vector.broadcast %670 : vector<16x1xf32> to vector<16x32xf32>
    %672 = arith.mulf %667, %671 : vector<16x32xf32>
    %673 = vector.broadcast %653 : vector<1x32xf32> to vector<16x32xf32>
    %674 = arith.mulf %672, %673 : vector<16x32xf32>
    %675 = vector.broadcast %654 : vector<1x32xf32> to vector<16x32xf32>
    %676 = arith.addf %674, %675 : vector<16x32xf32>
    %c4 = arith.constant 4 : index
    %c0_198 = arith.constant 0 : index
    %c0_199 = arith.constant 0 : index
    %677 = vector.load %arg2[%c4, %c0_198, %c0_199] : memref<6x32x96xbf16, #tpu.memory_space<vmem>>, vector<1x32x96xbf16>
    %678 = vector.shape_cast %677 : vector<1x32x96xbf16> to vector<32x96xbf16>
    %c4_200 = arith.constant 4 : index
    %c0_201 = arith.constant 0 : index
    %679 = vector.load %arg6[%c4_200, %c0_201] : memref<40x96xf32, #tpu.memory_space<vmem>>, vector<1x96xf32>
    %680 = arith.truncf %676 : vector<16x32xf32> to vector<16x32xbf16>
    %cst_202 = arith.constant dense<0.000000e+00> : vector<16x96xf32>
    %681 = tpu.matmul %680, %678, %cst_202 {dimension_numbers = #tpu.dot_dimension_numbers<[1], [0], [0], [1], [0, 0, 1, 1], [], []>} : vector<16x32xbf16>, vector<32x96xbf16>, vector<16x96xf32> -> vector<16x96xf32>
    %682 = vector.broadcast %679 : vector<1x96xf32> to vector<16x96xf32>
    %683 = arith.addf %681, %682 : vector<16x96xf32>
    %684 = vector.extract_strided_slice %683 {offsets = [0, 0], sizes = [16, 8], strides = [1, 1]} : vector<16x96xf32> to vector<16x8xf32>
    %685 = vector.shape_cast %684 : vector<16x8xf32> to vector<2x8x8xf32>
    %686 = arith.truncf %685 : vector<2x8x8xf32> to vector<2x8x8xbf16>
    %687 = vector.extract_strided_slice %683 {offsets = [0, 32], sizes = [16, 8], strides = [1, 1]} : vector<16x96xf32> to vector<16x8xf32>
    %688 = vector.shape_cast %687 : vector<16x8xf32> to vector<2x8x8xf32>
    %689 = arith.truncf %688 : vector<2x8x8xf32> to vector<2x8x8xbf16>
    %690 = vector.extract_strided_slice %683 {offsets = [0, 64], sizes = [16, 8], strides = [1, 1]} : vector<16x96xf32> to vector<16x8xf32>
    %691 = vector.shape_cast %690 : vector<16x8xf32> to vector<2x8x8xf32>
    %692 = arith.truncf %691 : vector<2x8x8xf32> to vector<2x8x8xbf16>
    "tpu.trace_start"() <{level = 10 : i32, message = "bqd,bkd->bqk"}> : () -> ()
    %cst_203 = arith.constant dense<0.000000e+00> : vector<2x8x8xf32>
    %693 = tpu.matmul %686, %689, %cst_203 {dimension_numbers = #tpu.dot_dimension_numbers<[2], [2], [1], [1], [0, 0, 0, 1, 1, 1], [0], [0]>} : vector<2x8x8xbf16>, vector<2x8x8xbf16>, vector<2x8x8xf32> -> vector<2x8x8xf32>
    "tpu.trace_stop"() : () -> ()
    %cst_204 = arith.constant dense<0xFF800000> : vector<2x8xf32>
    %694 = vector.multi_reduction <maximumf>, %693, %cst_204 [2] : vector<2x8x8xf32> to vector<2x8xf32>
    %695 = vector.shape_cast %694 : vector<2x8xf32> to vector<2x8x1xf32>
    %696 = vector.broadcast %695 : vector<2x8x1xf32> to vector<2x8x8xf32>
    %697 = arith.subf %693, %696 : vector<2x8x8xf32>
    %698 = math.exp %697 : vector<2x8x8xf32>
    %cst_205 = arith.constant dense<0.000000e+00> : vector<2x8xf32>
    %699 = vector.multi_reduction <add>, %698, %cst_205 [2] : vector<2x8x8xf32> to vector<2x8xf32>
    %700 = vector.shape_cast %699 : vector<2x8xf32> to vector<2x8x1xf32>
    %701 = tpu.reciprocal %700 {approx = true} : vector<2x8x1xf32> -> vector<2x8x1xf32>
    %702 = vector.broadcast %701 : vector<2x8x1xf32> to vector<2x8x8xf32>
    %703 = arith.mulf %698, %702 : vector<2x8x8xf32>
    %704 = arith.truncf %703 : vector<2x8x8xf32> to vector<2x8x8xbf16>
    "tpu.trace_start"() <{level = 10 : i32, message = "bqk,bkd->bqd"}> : () -> ()
    %cst_206 = arith.constant dense<0.000000e+00> : vector<2x8x8xf32>
    %705 = tpu.matmul %704, %692, %cst_206 {dimension_numbers = #tpu.dot_dimension_numbers<[2], [1], [1], [2], [0, 0, 0, 1, 1, 2], [0], [0]>} : vector<2x8x8xbf16>, vector<2x8x8xbf16>, vector<2x8x8xf32> -> vector<2x8x8xf32>
    "tpu.trace_stop"() : () -> ()
    %706 = vector.shape_cast %705 : vector<2x8x8xf32> to vector<16x8xf32>
    %707 = vector.extract_strided_slice %683 {offsets = [0, 8], sizes = [16, 8], strides = [1, 1]} : vector<16x96xf32> to vector<16x8xf32>
    %708 = vector.shape_cast %707 : vector<16x8xf32> to vector<2x8x8xf32>
    %709 = arith.truncf %708 : vector<2x8x8xf32> to vector<2x8x8xbf16>
    %710 = vector.extract_strided_slice %683 {offsets = [0, 40], sizes = [16, 8], strides = [1, 1]} : vector<16x96xf32> to vector<16x8xf32>
    %711 = vector.shape_cast %710 : vector<16x8xf32> to vector<2x8x8xf32>
    %712 = arith.truncf %711 : vector<2x8x8xf32> to vector<2x8x8xbf16>
    %713 = vector.extract_strided_slice %683 {offsets = [0, 72], sizes = [16, 8], strides = [1, 1]} : vector<16x96xf32> to vector<16x8xf32>
    %714 = vector.shape_cast %713 : vector<16x8xf32> to vector<2x8x8xf32>
    %715 = arith.truncf %714 : vector<2x8x8xf32> to vector<2x8x8xbf16>
    "tpu.trace_start"() <{level = 10 : i32, message = "bqd,bkd->bqk"}> : () -> ()
    %cst_207 = arith.constant dense<0.000000e+00> : vector<2x8x8xf32>
    %716 = tpu.matmul %709, %712, %cst_207 {dimension_numbers = #tpu.dot_dimension_numbers<[2], [2], [1], [1], [0, 0, 0, 1, 1, 1], [0], [0]>} : vector<2x8x8xbf16>, vector<2x8x8xbf16>, vector<2x8x8xf32> -> vector<2x8x8xf32>
    "tpu.trace_stop"() : () -> ()
    %cst_208 = arith.constant dense<0xFF800000> : vector<2x8xf32>
    %717 = vector.multi_reduction <maximumf>, %716, %cst_208 [2] : vector<2x8x8xf32> to vector<2x8xf32>
    %718 = vector.shape_cast %717 : vector<2x8xf32> to vector<2x8x1xf32>
    %719 = vector.broadcast %718 : vector<2x8x1xf32> to vector<2x8x8xf32>
    %720 = arith.subf %716, %719 : vector<2x8x8xf32>
    %721 = math.exp %720 : vector<2x8x8xf32>
    %cst_209 = arith.constant dense<0.000000e+00> : vector<2x8xf32>
    %722 = vector.multi_reduction <add>, %721, %cst_209 [2] : vector<2x8x8xf32> to vector<2x8xf32>
    %723 = vector.shape_cast %722 : vector<2x8xf32> to vector<2x8x1xf32>
    %724 = tpu.reciprocal %723 {approx = true} : vector<2x8x1xf32> -> vector<2x8x1xf32>
    %725 = vector.broadcast %724 : vector<2x8x1xf32> to vector<2x8x8xf32>
    %726 = arith.mulf %721, %725 : vector<2x8x8xf32>
    %727 = arith.truncf %726 : vector<2x8x8xf32> to vector<2x8x8xbf16>
    "tpu.trace_start"() <{level = 10 : i32, message = "bqk,bkd->bqd"}> : () -> ()
    %cst_210 = arith.constant dense<0.000000e+00> : vector<2x8x8xf32>
    %728 = tpu.matmul %727, %715, %cst_210 {dimension_numbers = #tpu.dot_dimension_numbers<[2], [1], [1], [2], [0, 0, 0, 1, 1, 2], [0], [0]>} : vector<2x8x8xbf16>, vector<2x8x8xbf16>, vector<2x8x8xf32> -> vector<2x8x8xf32>
    "tpu.trace_stop"() : () -> ()
    %729 = vector.shape_cast %728 : vector<2x8x8xf32> to vector<16x8xf32>
    %730 = vector.extract_strided_slice %683 {offsets = [0, 16], sizes = [16, 8], strides = [1, 1]} : vector<16x96xf32> to vector<16x8xf32>
    %731 = vector.shape_cast %730 : vector<16x8xf32> to vector<2x8x8xf32>
    %732 = arith.truncf %731 : vector<2x8x8xf32> to vector<2x8x8xbf16>
    %733 = vector.extract_strided_slice %683 {offsets = [0, 48], sizes = [16, 8], strides = [1, 1]} : vector<16x96xf32> to vector<16x8xf32>
    %734 = vector.shape_cast %733 : vector<16x8xf32> to vector<2x8x8xf32>
    %735 = arith.truncf %734 : vector<2x8x8xf32> to vector<2x8x8xbf16>
    %736 = vector.extract_strided_slice %683 {offsets = [0, 80], sizes = [16, 8], strides = [1, 1]} : vector<16x96xf32> to vector<16x8xf32>
    %737 = vector.shape_cast %736 : vector<16x8xf32> to vector<2x8x8xf32>
    %738 = arith.truncf %737 : vector<2x8x8xf32> to vector<2x8x8xbf16>
    "tpu.trace_start"() <{level = 10 : i32, message = "bqd,bkd->bqk"}> : () -> ()
    %cst_211 = arith.constant dense<0.000000e+00> : vector<2x8x8xf32>
    %739 = tpu.matmul %732, %735, %cst_211 {dimension_numbers = #tpu.dot_dimension_numbers<[2], [2], [1], [1], [0, 0, 0, 1, 1, 1], [0], [0]>} : vector<2x8x8xbf16>, vector<2x8x8xbf16>, vector<2x8x8xf32> -> vector<2x8x8xf32>
    "tpu.trace_stop"() : () -> ()
    %cst_212 = arith.constant dense<0xFF800000> : vector<2x8xf32>
    %740 = vector.multi_reduction <maximumf>, %739, %cst_212 [2] : vector<2x8x8xf32> to vector<2x8xf32>
    %741 = vector.shape_cast %740 : vector<2x8xf32> to vector<2x8x1xf32>
    %742 = vector.broadcast %741 : vector<2x8x1xf32> to vector<2x8x8xf32>
    %743 = arith.subf %739, %742 : vector<2x8x8xf32>
    %744 = math.exp %743 : vector<2x8x8xf32>
    %cst_213 = arith.constant dense<0.000000e+00> : vector<2x8xf32>
    %745 = vector.multi_reduction <add>, %744, %cst_213 [2] : vector<2x8x8xf32> to vector<2x8xf32>
    %746 = vector.shape_cast %745 : vector<2x8xf32> to vector<2x8x1xf32>
    %747 = tpu.reciprocal %746 {approx = true} : vector<2x8x1xf32> -> vector<2x8x1xf32>
    %748 = vector.broadcast %747 : vector<2x8x1xf32> to vector<2x8x8xf32>
    %749 = arith.mulf %744, %748 : vector<2x8x8xf32>
    %750 = arith.truncf %749 : vector<2x8x8xf32> to vector<2x8x8xbf16>
    "tpu.trace_start"() <{level = 10 : i32, message = "bqk,bkd->bqd"}> : () -> ()
    %cst_214 = arith.constant dense<0.000000e+00> : vector<2x8x8xf32>
    %751 = tpu.matmul %750, %738, %cst_214 {dimension_numbers = #tpu.dot_dimension_numbers<[2], [1], [1], [2], [0, 0, 0, 1, 1, 2], [0], [0]>} : vector<2x8x8xbf16>, vector<2x8x8xbf16>, vector<2x8x8xf32> -> vector<2x8x8xf32>
    "tpu.trace_stop"() : () -> ()
    %752 = vector.shape_cast %751 : vector<2x8x8xf32> to vector<16x8xf32>
    %753 = vector.extract_strided_slice %683 {offsets = [0, 24], sizes = [16, 8], strides = [1, 1]} : vector<16x96xf32> to vector<16x8xf32>
    %754 = vector.shape_cast %753 : vector<16x8xf32> to vector<2x8x8xf32>
    %755 = arith.truncf %754 : vector<2x8x8xf32> to vector<2x8x8xbf16>
    %756 = vector.extract_strided_slice %683 {offsets = [0, 56], sizes = [16, 8], strides = [1, 1]} : vector<16x96xf32> to vector<16x8xf32>
    %757 = vector.shape_cast %756 : vector<16x8xf32> to vector<2x8x8xf32>
    %758 = arith.truncf %757 : vector<2x8x8xf32> to vector<2x8x8xbf16>
    %759 = vector.extract_strided_slice %683 {offsets = [0, 88], sizes = [16, 8], strides = [1, 1]} : vector<16x96xf32> to vector<16x8xf32>
    %760 = vector.shape_cast %759 : vector<16x8xf32> to vector<2x8x8xf32>
    %761 = arith.truncf %760 : vector<2x8x8xf32> to vector<2x8x8xbf16>
    "tpu.trace_start"() <{level = 10 : i32, message = "bqd,bkd->bqk"}> : () -> ()
    %cst_215 = arith.constant dense<0.000000e+00> : vector<2x8x8xf32>
    %762 = tpu.matmul %755, %758, %cst_215 {dimension_numbers = #tpu.dot_dimension_numbers<[2], [2], [1], [1], [0, 0, 0, 1, 1, 1], [0], [0]>} : vector<2x8x8xbf16>, vector<2x8x8xbf16>, vector<2x8x8xf32> -> vector<2x8x8xf32>
    "tpu.trace_stop"() : () -> ()
    %cst_216 = arith.constant dense<0xFF800000> : vector<2x8xf32>
    %763 = vector.multi_reduction <maximumf>, %762, %cst_216 [2] : vector<2x8x8xf32> to vector<2x8xf32>
    %764 = vector.shape_cast %763 : vector<2x8xf32> to vector<2x8x1xf32>
    %765 = vector.broadcast %764 : vector<2x8x1xf32> to vector<2x8x8xf32>
    %766 = arith.subf %762, %765 : vector<2x8x8xf32>
    %767 = math.exp %766 : vector<2x8x8xf32>
    %cst_217 = arith.constant dense<0.000000e+00> : vector<2x8xf32>
    %768 = vector.multi_reduction <add>, %767, %cst_217 [2] : vector<2x8x8xf32> to vector<2x8xf32>
    %769 = vector.shape_cast %768 : vector<2x8xf32> to vector<2x8x1xf32>
    %770 = tpu.reciprocal %769 {approx = true} : vector<2x8x1xf32> -> vector<2x8x1xf32>
    %771 = vector.broadcast %770 : vector<2x8x1xf32> to vector<2x8x8xf32>
    %772 = arith.mulf %767, %771 : vector<2x8x8xf32>
    %773 = arith.truncf %772 : vector<2x8x8xf32> to vector<2x8x8xbf16>
    "tpu.trace_start"() <{level = 10 : i32, message = "bqk,bkd->bqd"}> : () -> ()
    %cst_218 = arith.constant dense<0.000000e+00> : vector<2x8x8xf32>
    %774 = tpu.matmul %773, %761, %cst_218 {dimension_numbers = #tpu.dot_dimension_numbers<[2], [1], [1], [2], [0, 0, 0, 1, 1, 2], [0], [0]>} : vector<2x8x8xbf16>, vector<2x8x8xbf16>, vector<2x8x8xf32> -> vector<2x8x8xf32>
    "tpu.trace_stop"() : () -> ()
    %775 = vector.shape_cast %774 : vector<2x8x8xf32> to vector<16x8xf32>
    %776 = tpu.concatenate %706, %729, %752, %775 in 1 : vector<16x8xf32>, vector<16x8xf32>, vector<16x8xf32>, vector<16x8xf32> -> vector<16x32xf32>
    %c4_219 = arith.constant 4 : index
    %c0_220 = arith.constant 0 : index
    %c0_221 = arith.constant 0 : index
    %777 = vector.load %arg3[%c4_219, %c0_220, %c0_221] : memref<6x32x32xbf16, #tpu.memory_space<vmem>>, vector<1x32x32xbf16>
    %778 = vector.shape_cast %777 : vector<1x32x32xbf16> to vector<32x32xbf16>
    %779 = arith.truncf %776 : vector<16x32xf32> to vector<16x32xbf16>
    %cst_222 = arith.constant dense<0.000000e+00> : vector<16x32xf32>
    %780 = tpu.matmul %779, %778, %cst_222 {dimension_numbers = #tpu.dot_dimension_numbers<[1], [0], [0], [1], [0, 0, 1, 1], [], []>} : vector<16x32xbf16>, vector<32x32xbf16>, vector<16x32xf32> -> vector<16x32xf32>
    %c10 = arith.constant 10 : index
    %c0_223 = arith.constant 0 : index
    %781 = vector.load %arg6[%c10, %c0_223] : memref<40x96xf32, #tpu.memory_space<vmem>>, vector<1x32xf32>
    %782 = vector.broadcast %781 : vector<1x32xf32> to vector<16x32xf32>
    %783 = arith.addf %780, %782 : vector<16x32xf32>
    %784 = arith.addf %676, %783 : vector<16x32xf32>
    %c27 = arith.constant 27 : index
    %c0_224 = arith.constant 0 : index
    %785 = vector.load %arg6[%c27, %c0_224] : memref<40x96xf32, #tpu.memory_space<vmem>>, vector<1x32xf32>
    %c37 = arith.constant 37 : index
    %c0_225 = arith.constant 0 : index
    %786 = vector.load %arg6[%c37, %c0_225] : memref<40x96xf32, #tpu.memory_space<vmem>>, vector<1x32xf32>
    %cst_226 = arith.constant dense<0.000000e+00> : vector<16xf32>
    %787 = vector.multi_reduction <add>, %784, %cst_226 [1] : vector<16x32xf32> to vector<16xf32>
    %788 = vector.shape_cast %787 : vector<16xf32> to vector<16x1xf32>
    %cst_227 = arith.constant 3.200000e+01 : f32
    %789 = vector.broadcast %cst_227 : f32 to vector<16x1xf32>
    %790 = arith.divf %788, %789 : vector<16x1xf32>
    %791 = vector.broadcast %790 : vector<16x1xf32> to vector<16x32xf32>
    %792 = arith.subf %784, %791 : vector<16x32xf32>
    %793 = arith.mulf %792, %792 : vector<16x32xf32>
    %cst_228 = arith.constant dense<0.000000e+00> : vector<16xf32>
    %794 = vector.multi_reduction <add>, %793, %cst_228 [1] : vector<16x32xf32> to vector<16xf32>
    %795 = vector.shape_cast %794 : vector<16xf32> to vector<16x1xf32>
    %cst_229 = arith.constant 3.200000e+01 : f32
    %796 = vector.broadcast %cst_229 : f32 to vector<16x1xf32>
    %797 = arith.divf %795, %796 : vector<16x1xf32>
    %798 = vector.broadcast %790 : vector<16x1xf32> to vector<16x32xf32>
    %799 = arith.subf %784, %798 : vector<16x32xf32>
    %cst_230 = arith.constant 9.99999974E-6 : f32
    %800 = vector.broadcast %cst_230 : f32 to vector<16x1xf32>
    %801 = arith.addf %797, %800 : vector<16x1xf32>
    %802 = math.rsqrt %801 : vector<16x1xf32>
    %803 = vector.broadcast %802 : vector<16x1xf32> to vector<16x32xf32>
    %804 = arith.mulf %799, %803 : vector<16x32xf32>
    %805 = vector.broadcast %785 : vector<1x32xf32> to vector<16x32xf32>
    %806 = arith.mulf %804, %805 : vector<16x32xf32>
    %807 = vector.broadcast %786 : vector<1x32xf32> to vector<16x32xf32>
    %808 = arith.addf %806, %807 : vector<16x32xf32>
    %c5 = arith.constant 5 : index
    %c0_231 = arith.constant 0 : index
    %c0_232 = arith.constant 0 : index
    %809 = vector.load %arg2[%c5, %c0_231, %c0_232] : memref<6x32x96xbf16, #tpu.memory_space<vmem>>, vector<1x32x96xbf16>
    %810 = vector.shape_cast %809 : vector<1x32x96xbf16> to vector<32x96xbf16>
    %c5_233 = arith.constant 5 : index
    %c0_234 = arith.constant 0 : index
    %811 = vector.load %arg6[%c5_233, %c0_234] : memref<40x96xf32, #tpu.memory_space<vmem>>, vector<1x96xf32>
    %812 = arith.truncf %808 : vector<16x32xf32> to vector<16x32xbf16>
    %cst_235 = arith.constant dense<0.000000e+00> : vector<16x96xf32>
    %813 = tpu.matmul %812, %810, %cst_235 {dimension_numbers = #tpu.dot_dimension_numbers<[1], [0], [0], [1], [0, 0, 1, 1], [], []>} : vector<16x32xbf16>, vector<32x96xbf16>, vector<16x96xf32> -> vector<16x96xf32>
    %814 = vector.broadcast %811 : vector<1x96xf32> to vector<16x96xf32>
    %815 = arith.addf %813, %814 : vector<16x96xf32>
    %816 = arith.truncf %361 : vector<16x32xf32> to vector<16x32xbf16>
    %cst_236 = arith.constant dense<0.000000e+00> : vector<16x96xf32>
    %817 = tpu.matmul %816, %810, %cst_236 {dimension_numbers = #tpu.dot_dimension_numbers<[1], [0], [0], [1], [0, 0, 1, 1], [], []>} : vector<16x32xbf16>, vector<32x96xbf16>, vector<16x96xf32> -> vector<16x96xf32>
    %818 = vector.broadcast %811 : vector<1x96xf32> to vector<16x96xf32>
    %819 = arith.addf %817, %818 : vector<16x96xf32>
    %820 = vector.extract_strided_slice %815 {offsets = [0, 0], sizes = [16, 8], strides = [1, 1]} : vector<16x96xf32> to vector<16x8xf32>
    %821 = vector.shape_cast %820 : vector<16x8xf32> to vector<2x8x8xf32>
    %822 = arith.truncf %821 : vector<2x8x8xf32> to vector<2x8x8xbf16>
    %823 = vector.extract_strided_slice %819 {offsets = [0, 32], sizes = [16, 8], strides = [1, 1]} : vector<16x96xf32> to vector<16x8xf32>
    %824 = vector.shape_cast %823 : vector<16x8xf32> to vector<2x8x8xf32>
    %825 = arith.truncf %824 : vector<2x8x8xf32> to vector<2x8x8xbf16>
    %826 = vector.extract_strided_slice %819 {offsets = [0, 64], sizes = [16, 8], strides = [1, 1]} : vector<16x96xf32> to vector<16x8xf32>
    %827 = vector.shape_cast %826 : vector<16x8xf32> to vector<2x8x8xf32>
    %828 = arith.truncf %827 : vector<2x8x8xf32> to vector<2x8x8xbf16>
    "tpu.trace_start"() <{level = 10 : i32, message = "bqd,bkd->bqk"}> : () -> ()
    %cst_237 = arith.constant dense<0.000000e+00> : vector<2x8x8xf32>
    %829 = tpu.matmul %822, %825, %cst_237 {dimension_numbers = #tpu.dot_dimension_numbers<[2], [2], [1], [1], [0, 0, 0, 1, 1, 1], [0], [0]>} : vector<2x8x8xbf16>, vector<2x8x8xbf16>, vector<2x8x8xf32> -> vector<2x8x8xf32>
    "tpu.trace_stop"() : () -> ()
    %cst_238 = arith.constant dense<0xFF800000> : vector<2x8xf32>
    %830 = vector.multi_reduction <maximumf>, %829, %cst_238 [2] : vector<2x8x8xf32> to vector<2x8xf32>
    %831 = vector.shape_cast %830 : vector<2x8xf32> to vector<2x8x1xf32>
    %832 = vector.broadcast %831 : vector<2x8x1xf32> to vector<2x8x8xf32>
    %833 = arith.subf %829, %832 : vector<2x8x8xf32>
    %834 = math.exp %833 : vector<2x8x8xf32>
    %cst_239 = arith.constant dense<0.000000e+00> : vector<2x8xf32>
    %835 = vector.multi_reduction <add>, %834, %cst_239 [2] : vector<2x8x8xf32> to vector<2x8xf32>
    %836 = vector.shape_cast %835 : vector<2x8xf32> to vector<2x8x1xf32>
    %837 = tpu.reciprocal %836 {approx = true} : vector<2x8x1xf32> -> vector<2x8x1xf32>
    %838 = vector.broadcast %837 : vector<2x8x1xf32> to vector<2x8x8xf32>
    %839 = arith.mulf %834, %838 : vector<2x8x8xf32>
    %840 = arith.truncf %839 : vector<2x8x8xf32> to vector<2x8x8xbf16>
    "tpu.trace_start"() <{level = 10 : i32, message = "bqk,bkd->bqd"}> : () -> ()
    %cst_240 = arith.constant dense<0.000000e+00> : vector<2x8x8xf32>
    %841 = tpu.matmul %840, %828, %cst_240 {dimension_numbers = #tpu.dot_dimension_numbers<[2], [1], [1], [2], [0, 0, 0, 1, 1, 2], [0], [0]>} : vector<2x8x8xbf16>, vector<2x8x8xbf16>, vector<2x8x8xf32> -> vector<2x8x8xf32>
    "tpu.trace_stop"() : () -> ()
    %842 = vector.shape_cast %841 : vector<2x8x8xf32> to vector<16x8xf32>
    %843 = vector.extract_strided_slice %815 {offsets = [0, 8], sizes = [16, 8], strides = [1, 1]} : vector<16x96xf32> to vector<16x8xf32>
    %844 = vector.shape_cast %843 : vector<16x8xf32> to vector<2x8x8xf32>
    %845 = arith.truncf %844 : vector<2x8x8xf32> to vector<2x8x8xbf16>
    %846 = vector.extract_strided_slice %819 {offsets = [0, 40], sizes = [16, 8], strides = [1, 1]} : vector<16x96xf32> to vector<16x8xf32>
    %847 = vector.shape_cast %846 : vector<16x8xf32> to vector<2x8x8xf32>
    %848 = arith.truncf %847 : vector<2x8x8xf32> to vector<2x8x8xbf16>
    %849 = vector.extract_strided_slice %819 {offsets = [0, 72], sizes = [16, 8], strides = [1, 1]} : vector<16x96xf32> to vector<16x8xf32>
    %850 = vector.shape_cast %849 : vector<16x8xf32> to vector<2x8x8xf32>
    %851 = arith.truncf %850 : vector<2x8x8xf32> to vector<2x8x8xbf16>
    "tpu.trace_start"() <{level = 10 : i32, message = "bqd,bkd->bqk"}> : () -> ()
    %cst_241 = arith.constant dense<0.000000e+00> : vector<2x8x8xf32>
    %852 = tpu.matmul %845, %848, %cst_241 {dimension_numbers = #tpu.dot_dimension_numbers<[2], [2], [1], [1], [0, 0, 0, 1, 1, 1], [0], [0]>} : vector<2x8x8xbf16>, vector<2x8x8xbf16>, vector<2x8x8xf32> -> vector<2x8x8xf32>
    "tpu.trace_stop"() : () -> ()
    %cst_242 = arith.constant dense<0xFF800000> : vector<2x8xf32>
    %853 = vector.multi_reduction <maximumf>, %852, %cst_242 [2] : vector<2x8x8xf32> to vector<2x8xf32>
    %854 = vector.shape_cast %853 : vector<2x8xf32> to vector<2x8x1xf32>
    %855 = vector.broadcast %854 : vector<2x8x1xf32> to vector<2x8x8xf32>
    %856 = arith.subf %852, %855 : vector<2x8x8xf32>
    %857 = math.exp %856 : vector<2x8x8xf32>
    %cst_243 = arith.constant dense<0.000000e+00> : vector<2x8xf32>
    %858 = vector.multi_reduction <add>, %857, %cst_243 [2] : vector<2x8x8xf32> to vector<2x8xf32>
    %859 = vector.shape_cast %858 : vector<2x8xf32> to vector<2x8x1xf32>
    %860 = tpu.reciprocal %859 {approx = true} : vector<2x8x1xf32> -> vector<2x8x1xf32>
    %861 = vector.broadcast %860 : vector<2x8x1xf32> to vector<2x8x8xf32>
    %862 = arith.mulf %857, %861 : vector<2x8x8xf32>
    %863 = arith.truncf %862 : vector<2x8x8xf32> to vector<2x8x8xbf16>
    "tpu.trace_start"() <{level = 10 : i32, message = "bqk,bkd->bqd"}> : () -> ()
    %cst_244 = arith.constant dense<0.000000e+00> : vector<2x8x8xf32>
    %864 = tpu.matmul %863, %851, %cst_244 {dimension_numbers = #tpu.dot_dimension_numbers<[2], [1], [1], [2], [0, 0, 0, 1, 1, 2], [0], [0]>} : vector<2x8x8xbf16>, vector<2x8x8xbf16>, vector<2x8x8xf32> -> vector<2x8x8xf32>
    "tpu.trace_stop"() : () -> ()
    %865 = vector.shape_cast %864 : vector<2x8x8xf32> to vector<16x8xf32>
    %866 = vector.extract_strided_slice %815 {offsets = [0, 16], sizes = [16, 8], strides = [1, 1]} : vector<16x96xf32> to vector<16x8xf32>
    %867 = vector.shape_cast %866 : vector<16x8xf32> to vector<2x8x8xf32>
    %868 = arith.truncf %867 : vector<2x8x8xf32> to vector<2x8x8xbf16>
    %869 = vector.extract_strided_slice %819 {offsets = [0, 48], sizes = [16, 8], strides = [1, 1]} : vector<16x96xf32> to vector<16x8xf32>
    %870 = vector.shape_cast %869 : vector<16x8xf32> to vector<2x8x8xf32>
    %871 = arith.truncf %870 : vector<2x8x8xf32> to vector<2x8x8xbf16>
    %872 = vector.extract_strided_slice %819 {offsets = [0, 80], sizes = [16, 8], strides = [1, 1]} : vector<16x96xf32> to vector<16x8xf32>
    %873 = vector.shape_cast %872 : vector<16x8xf32> to vector<2x8x8xf32>
    %874 = arith.truncf %873 : vector<2x8x8xf32> to vector<2x8x8xbf16>
    "tpu.trace_start"() <{level = 10 : i32, message = "bqd,bkd->bqk"}> : () -> ()
    %cst_245 = arith.constant dense<0.000000e+00> : vector<2x8x8xf32>
    %875 = tpu.matmul %868, %871, %cst_245 {dimension_numbers = #tpu.dot_dimension_numbers<[2], [2], [1], [1], [0, 0, 0, 1, 1, 1], [0], [0]>} : vector<2x8x8xbf16>, vector<2x8x8xbf16>, vector<2x8x8xf32> -> vector<2x8x8xf32>
    "tpu.trace_stop"() : () -> ()
    %cst_246 = arith.constant dense<0xFF800000> : vector<2x8xf32>
    %876 = vector.multi_reduction <maximumf>, %875, %cst_246 [2] : vector<2x8x8xf32> to vector<2x8xf32>
    %877 = vector.shape_cast %876 : vector<2x8xf32> to vector<2x8x1xf32>
    %878 = vector.broadcast %877 : vector<2x8x1xf32> to vector<2x8x8xf32>
    %879 = arith.subf %875, %878 : vector<2x8x8xf32>
    %880 = math.exp %879 : vector<2x8x8xf32>
    %cst_247 = arith.constant dense<0.000000e+00> : vector<2x8xf32>
    %881 = vector.multi_reduction <add>, %880, %cst_247 [2] : vector<2x8x8xf32> to vector<2x8xf32>
    %882 = vector.shape_cast %881 : vector<2x8xf32> to vector<2x8x1xf32>
    %883 = tpu.reciprocal %882 {approx = true} : vector<2x8x1xf32> -> vector<2x8x1xf32>
    %884 = vector.broadcast %883 : vector<2x8x1xf32> to vector<2x8x8xf32>
    %885 = arith.mulf %880, %884 : vector<2x8x8xf32>
    %886 = arith.truncf %885 : vector<2x8x8xf32> to vector<2x8x8xbf16>
    "tpu.trace_start"() <{level = 10 : i32, message = "bqk,bkd->bqd"}> : () -> ()
    %cst_248 = arith.constant dense<0.000000e+00> : vector<2x8x8xf32>
    %887 = tpu.matmul %886, %874, %cst_248 {dimension_numbers = #tpu.dot_dimension_numbers<[2], [1], [1], [2], [0, 0, 0, 1, 1, 2], [0], [0]>} : vector<2x8x8xbf16>, vector<2x8x8xbf16>, vector<2x8x8xf32> -> vector<2x8x8xf32>
    "tpu.trace_stop"() : () -> ()
    %888 = vector.shape_cast %887 : vector<2x8x8xf32> to vector<16x8xf32>
    %889 = vector.extract_strided_slice %815 {offsets = [0, 24], sizes = [16, 8], strides = [1, 1]} : vector<16x96xf32> to vector<16x8xf32>
    %890 = vector.shape_cast %889 : vector<16x8xf32> to vector<2x8x8xf32>
    %891 = arith.truncf %890 : vector<2x8x8xf32> to vector<2x8x8xbf16>
    %892 = vector.extract_strided_slice %819 {offsets = [0, 56], sizes = [16, 8], strides = [1, 1]} : vector<16x96xf32> to vector<16x8xf32>
    %893 = vector.shape_cast %892 : vector<16x8xf32> to vector<2x8x8xf32>
    %894 = arith.truncf %893 : vector<2x8x8xf32> to vector<2x8x8xbf16>
    %895 = vector.extract_strided_slice %819 {offsets = [0, 88], sizes = [16, 8], strides = [1, 1]} : vector<16x96xf32> to vector<16x8xf32>
    %896 = vector.shape_cast %895 : vector<16x8xf32> to vector<2x8x8xf32>
    %897 = arith.truncf %896 : vector<2x8x8xf32> to vector<2x8x8xbf16>
    "tpu.trace_start"() <{level = 10 : i32, message = "bqd,bkd->bqk"}> : () -> ()
    %cst_249 = arith.constant dense<0.000000e+00> : vector<2x8x8xf32>
    %898 = tpu.matmul %891, %894, %cst_249 {dimension_numbers = #tpu.dot_dimension_numbers<[2], [2], [1], [1], [0, 0, 0, 1, 1, 1], [0], [0]>} : vector<2x8x8xbf16>, vector<2x8x8xbf16>, vector<2x8x8xf32> -> vector<2x8x8xf32>
    "tpu.trace_stop"() : () -> ()
    %cst_250 = arith.constant dense<0xFF800000> : vector<2x8xf32>
    %899 = vector.multi_reduction <maximumf>, %898, %cst_250 [2] : vector<2x8x8xf32> to vector<2x8xf32>
    %900 = vector.shape_cast %899 : vector<2x8xf32> to vector<2x8x1xf32>
    %901 = vector.broadcast %900 : vector<2x8x1xf32> to vector<2x8x8xf32>
    %902 = arith.subf %898, %901 : vector<2x8x8xf32>
    %903 = math.exp %902 : vector<2x8x8xf32>
    %cst_251 = arith.constant dense<0.000000e+00> : vector<2x8xf32>
    %904 = vector.multi_reduction <add>, %903, %cst_251 [2] : vector<2x8x8xf32> to vector<2x8xf32>
    %905 = vector.shape_cast %904 : vector<2x8xf32> to vector<2x8x1xf32>
    %906 = tpu.reciprocal %905 {approx = true} : vector<2x8x1xf32> -> vector<2x8x1xf32>
    %907 = vector.broadcast %906 : vector<2x8x1xf32> to vector<2x8x8xf32>
    %908 = arith.mulf %903, %907 : vector<2x8x8xf32>
    %909 = arith.truncf %908 : vector<2x8x8xf32> to vector<2x8x8xbf16>
    "tpu.trace_start"() <{level = 10 : i32, message = "bqk,bkd->bqd"}> : () -> ()
    %cst_252 = arith.constant dense<0.000000e+00> : vector<2x8x8xf32>
    %910 = tpu.matmul %909, %897, %cst_252 {dimension_numbers = #tpu.dot_dimension_numbers<[2], [1], [1], [2], [0, 0, 0, 1, 1, 2], [0], [0]>} : vector<2x8x8xbf16>, vector<2x8x8xbf16>, vector<2x8x8xf32> -> vector<2x8x8xf32>
    "tpu.trace_stop"() : () -> ()
    %911 = vector.shape_cast %910 : vector<2x8x8xf32> to vector<16x8xf32>
    %912 = tpu.concatenate %842, %865, %888, %911 in 1 : vector<16x8xf32>, vector<16x8xf32>, vector<16x8xf32>, vector<16x8xf32> -> vector<16x32xf32>
    %c5_253 = arith.constant 5 : index
    %c0_254 = arith.constant 0 : index
    %c0_255 = arith.constant 0 : index
    %913 = vector.load %arg3[%c5_253, %c0_254, %c0_255] : memref<6x32x32xbf16, #tpu.memory_space<vmem>>, vector<1x32x32xbf16>
    %914 = vector.shape_cast %913 : vector<1x32x32xbf16> to vector<32x32xbf16>
    %915 = arith.truncf %912 : vector<16x32xf32> to vector<16x32xbf16>
    %cst_256 = arith.constant dense<0.000000e+00> : vector<16x32xf32>
    %916 = tpu.matmul %915, %914, %cst_256 {dimension_numbers = #tpu.dot_dimension_numbers<[1], [0], [0], [1], [0, 0, 1, 1], [], []>} : vector<16x32xbf16>, vector<32x32xbf16>, vector<16x32xf32> -> vector<16x32xf32>
    %c11 = arith.constant 11 : index
    %c0_257 = arith.constant 0 : index
    %917 = vector.load %arg6[%c11, %c0_257] : memref<40x96xf32, #tpu.memory_space<vmem>>, vector<1x32xf32>
    %918 = vector.broadcast %917 : vector<1x32xf32> to vector<16x32xf32>
    %919 = arith.addf %916, %918 : vector<16x32xf32>
    %920 = arith.addf %808, %919 : vector<16x32xf32>
    %c28 = arith.constant 28 : index
    %c0_258 = arith.constant 0 : index
    %921 = vector.load %arg6[%c28, %c0_258] : memref<40x96xf32, #tpu.memory_space<vmem>>, vector<1x32xf32>
    %c38 = arith.constant 38 : index
    %c0_259 = arith.constant 0 : index
    %922 = vector.load %arg6[%c38, %c0_259] : memref<40x96xf32, #tpu.memory_space<vmem>>, vector<1x32xf32>
    %cst_260 = arith.constant dense<0.000000e+00> : vector<16xf32>
    %923 = vector.multi_reduction <add>, %920, %cst_260 [1] : vector<16x32xf32> to vector<16xf32>
    %924 = vector.shape_cast %923 : vector<16xf32> to vector<16x1xf32>
    %cst_261 = arith.constant 3.200000e+01 : f32
    %925 = vector.broadcast %cst_261 : f32 to vector<16x1xf32>
    %926 = arith.divf %924, %925 : vector<16x1xf32>
    %927 = vector.broadcast %926 : vector<16x1xf32> to vector<16x32xf32>
    %928 = arith.subf %920, %927 : vector<16x32xf32>
    %929 = arith.mulf %928, %928 : vector<16x32xf32>
    %cst_262 = arith.constant dense<0.000000e+00> : vector<16xf32>
    %930 = vector.multi_reduction <add>, %929, %cst_262 [1] : vector<16x32xf32> to vector<16xf32>
    %931 = vector.shape_cast %930 : vector<16xf32> to vector<16x1xf32>
    %cst_263 = arith.constant 3.200000e+01 : f32
    %932 = vector.broadcast %cst_263 : f32 to vector<16x1xf32>
    %933 = arith.divf %931, %932 : vector<16x1xf32>
    %934 = vector.broadcast %926 : vector<16x1xf32> to vector<16x32xf32>
    %935 = arith.subf %920, %934 : vector<16x32xf32>
    %cst_264 = arith.constant 9.99999974E-6 : f32
    %936 = vector.broadcast %cst_264 : f32 to vector<16x1xf32>
    %937 = arith.addf %933, %936 : vector<16x1xf32>
    %938 = math.rsqrt %937 : vector<16x1xf32>
    %939 = vector.broadcast %938 : vector<16x1xf32> to vector<16x32xf32>
    %940 = arith.mulf %935, %939 : vector<16x32xf32>
    %941 = vector.broadcast %921 : vector<1x32xf32> to vector<16x32xf32>
    %942 = arith.mulf %940, %941 : vector<16x32xf32>
    %943 = vector.broadcast %922 : vector<1x32xf32> to vector<16x32xf32>
    %944 = arith.addf %942, %943 : vector<16x32xf32>
    %c3_265 = arith.constant 3 : index
    %c0_266 = arith.constant 0 : index
    %c0_267 = arith.constant 0 : index
    %945 = vector.load %arg4[%c3_265, %c0_266, %c0_267] : memref<4x32x64xbf16, #tpu.memory_space<vmem>>, vector<1x32x64xbf16>
    %946 = vector.shape_cast %945 : vector<1x32x64xbf16> to vector<32x64xbf16>
    %947 = arith.truncf %944 : vector<16x32xf32> to vector<16x32xbf16>
    %cst_268 = arith.constant dense<0.000000e+00> : vector<16x64xf32>
    %948 = tpu.matmul %947, %946, %cst_268 {dimension_numbers = #tpu.dot_dimension_numbers<[1], [0], [0], [1], [0, 0, 1, 1], [], []>} : vector<16x32xbf16>, vector<32x64xbf16>, vector<16x64xf32> -> vector<16x64xf32>
    %c15 = arith.constant 15 : index
    %c0_269 = arith.constant 0 : index
    %949 = vector.load %arg6[%c15, %c0_269] : memref<40x96xf32, #tpu.memory_space<vmem>>, vector<1x64xf32>
    %950 = vector.broadcast %949 : vector<1x64xf32> to vector<16x64xf32>
    %951 = arith.addf %948, %950 : vector<16x64xf32>
    %cst_270 = arith.constant 5.000000e-01 : f32
    %952 = vector.broadcast %cst_270 : f32 to vector<16x64xf32>
    %953 = arith.mulf %952, %951 : vector<16x64xf32>
    %cst_271 = arith.constant 1.41421354 : f32
    %954 = vector.broadcast %cst_271 : f32 to vector<16x64xf32>
    %955 = arith.divf %951, %954 : vector<16x64xf32>
    %956 = math.erf %955 : vector<16x64xf32>
    %cst_272 = arith.constant 1.000000e+00 : f32
    %957 = vector.broadcast %cst_272 : f32 to vector<16x64xf32>
    %958 = arith.addf %957, %956 : vector<16x64xf32>
    %959 = arith.mulf %953, %958 : vector<16x64xf32>
    %c3_273 = arith.constant 3 : index
    %c0_274 = arith.constant 0 : index
    %c0_275 = arith.constant 0 : index
    %960 = vector.load %arg5[%c3_273, %c0_274, %c0_275] : memref<4x64x32xbf16, #tpu.memory_space<vmem>>, vector<1x64x32xbf16>
    %961 = vector.shape_cast %960 : vector<1x64x32xbf16> to vector<64x32xbf16>
    %962 = arith.truncf %959 : vector<16x64xf32> to vector<16x64xbf16>
    %cst_276 = arith.constant dense<0.000000e+00> : vector<16x32xf32>
    %963 = tpu.matmul %962, %961, %cst_276 {dimension_numbers = #tpu.dot_dimension_numbers<[1], [0], [0], [1], [0, 0, 1, 1], [], []>} : vector<16x64xbf16>, vector<64x32xbf16>, vector<16x32xf32> -> vector<16x32xf32>
    %c19 = arith.constant 19 : index
    %c0_277 = arith.constant 0 : index
    %964 = vector.load %arg6[%c19, %c0_277] : memref<40x96xf32, #tpu.memory_space<vmem>>, vector<1x32xf32>
    %965 = vector.broadcast %964 : vector<1x32xf32> to vector<16x32xf32>
    %966 = arith.addf %963, %965 : vector<16x32xf32>
    %967 = arith.addf %944, %966 : vector<16x32xf32>
    %c29 = arith.constant 29 : index
    %c0_278 = arith.constant 0 : index
    %968 = vector.load %arg6[%c29, %c0_278] : memref<40x96xf32, #tpu.memory_space<vmem>>, vector<1x32xf32>
    %c39 = arith.constant 39 : index
    %c0_279 = arith.constant 0 : index
    %969 = vector.load %arg6[%c39, %c0_279] : memref<40x96xf32, #tpu.memory_space<vmem>>, vector<1x32xf32>
    %cst_280 = arith.constant dense<0.000000e+00> : vector<16xf32>
    %970 = vector.multi_reduction <add>, %967, %cst_280 [1] : vector<16x32xf32> to vector<16xf32>
    %971 = vector.shape_cast %970 : vector<16xf32> to vector<16x1xf32>
    %cst_281 = arith.constant 3.200000e+01 : f32
    %972 = vector.broadcast %cst_281 : f32 to vector<16x1xf32>
    %973 = arith.divf %971, %972 : vector<16x1xf32>
    %974 = vector.broadcast %973 : vector<16x1xf32> to vector<16x32xf32>
    %975 = arith.subf %967, %974 : vector<16x32xf32>
    %976 = arith.mulf %975, %975 : vector<16x32xf32>
    %cst_282 = arith.constant dense<0.000000e+00> : vector<16xf32>
    %977 = vector.multi_reduction <add>, %976, %cst_282 [1] : vector<16x32xf32> to vector<16xf32>
    %978 = vector.shape_cast %977 : vector<16xf32> to vector<16x1xf32>
    %cst_283 = arith.constant 3.200000e+01 : f32
    %979 = vector.broadcast %cst_283 : f32 to vector<16x1xf32>
    %980 = arith.divf %978, %979 : vector<16x1xf32>
    %981 = vector.broadcast %973 : vector<16x1xf32> to vector<16x32xf32>
    %982 = arith.subf %967, %981 : vector<16x32xf32>
    %cst_284 = arith.constant 9.99999974E-6 : f32
    %983 = vector.broadcast %cst_284 : f32 to vector<16x1xf32>
    %984 = arith.addf %980, %983 : vector<16x1xf32>
    %985 = math.rsqrt %984 : vector<16x1xf32>
    %986 = vector.broadcast %985 : vector<16x1xf32> to vector<16x32xf32>
    %987 = arith.mulf %982, %986 : vector<16x32xf32>
    %988 = vector.broadcast %968 : vector<1x32xf32> to vector<16x32xf32>
    %989 = arith.mulf %987, %988 : vector<16x32xf32>
    %990 = vector.broadcast %969 : vector<1x32xf32> to vector<16x32xf32>
    %991 = arith.addf %989, %990 : vector<16x32xf32>
    %992 = vector.shape_cast %991 : vector<16x32xf32> to vector<2x8x32xf32>
    %cst_285 = arith.constant dense<0.000000e+00> : vector<8x32xf32>
    %993 = vector.multi_reduction <add>, %992, %cst_285 [0] : vector<2x8x32xf32> to vector<8x32xf32>
    %cst_286 = arith.constant 2.000000e+00 : f32
    %994 = vector.broadcast %cst_286 : f32 to vector<8x32xf32>
    %995 = arith.divf %993, %994 : vector<8x32xf32>
    %996 = math.tanh %995 : vector<8x32xf32>
    %c0_287 = arith.constant 0 : index
    %c0_288 = arith.constant 0 : index
    %997 = vector.load %arg7[%c0_287, %c0_288] : memref<8x32xf32, #tpu.memory_space<vmem>>, vector<8x32xf32>
    tpu.vector_store %arg7[%c0_287, %c0_288], %996 {strides = array<i32>} : memref<8x32xf32, #tpu.memory_space<vmem>>, vector<8x32xf32>,
    return
  }
}

</mosaic_0001>

<llo_original>
// kernel: transformer_embed.1
$region0: #{transformer_embed.1}
  #allocation0 [shape = 'u32[]', space=smem, size = 0x4, offset = 0x4, fixed_abs, tag = 'smem constant byte address 0x4 - core index']
  #allocation1 [shape = 'u32[72,128]{1,0:T(1,128)}', space=vmem, size = 0x9000, scoped, tag = 'internal scratch']
  %s0 = inlined_call_operand.vmem [shape: f32[2,8,32], index: 0, kind: input, shape index: {}]
  %s1 = inlined_call_operand.vmem [shape: f32[2,8,32], index: 1, kind: input, shape index: {}]
  %s2 = inlined_call_operand.vmem [shape: bf16[6,32,96], index: 2, kind: input, shape index: {}]
  %s3 = inlined_call_operand.vmem [shape: bf16[6,32,32], index: 3, kind: input, shape index: {}]
  %s4 = inlined_call_operand.hbm [shape: bf16[4,32,64], index: 4, kind: input, shape index: {}]
  %s5 = inlined_call_operand.vmem [shape: bf16[4,64,32], index: 5, kind: input, shape index: {}]
  %s6 = inlined_call_operand.hbm [shape: f32[40,96], index: 6, kind: input, shape index: {}]
  %s7 = inlined_call_operand.hbm [shape: f32[8,32], index: 7, kind: output, shape index: {}]
  %s8 = sld [smem:[#allocation0]]
  $region46: #{transformer_embed.1} parent=0
    _
  %s10 = ssub.s32 1, %s8
  %s11 = scalar_select 0, %s10, %s8
  $region1: #{transformer_embed.1} parent=0
    #allocation2 [shape = 'u8[32768]{0}', space=vmem, size = 0x8000, scoped, tag = 'input window, operand 4, single buffered']
    #allocation3 [shape = 's32[1]{0}', space=sflag, size = 0x4, scoped, tag = 'scoped memory for transformer_embed.1']
    #allocation4 [shape = 's32[1]{0}', space=sflag, size = 0x4, scoped, tag = 'scoped memory for transformer_embed.1']
    #allocation5 [shape = 'u8[20480]{0}', space=vmem, size = 0x5000, scoped, tag = 'input window, operand 6, single buffered']
    #allocation6 [shape = 's32[1]{0}', space=sflag, size = 0x4, scoped, tag = 'scoped memory for transformer_embed.1']
    #allocation7 [shape = 'u8[4096]{0}', space=vmem, size = 0x1000, scoped, tag = 'output window, operand 0, single buffered']
    %12 = vsyncpa [#allocation3], 0
    %13 = vsyncpa [#allocation6], 0
    %14 = vsyncpa [#allocation4], 0
    // Predicated region
    $region2: #{transformer_embed.1} parent=1 // pred_check
      _
    $region3: #{transformer_embed.1} parent=1 // pred_check_branch
      %16 = sbr.rel (0) target = $region5
    $region4: #{transformer_embed.1} parent=1 // pred_region
      _
    $region5: #{transformer_embed.1} parent=1 // pred_fallthru
      _
    // Predicated region
    $region6: #{transformer_embed.1} parent=1 // pred_check
      _
    $region7: #{transformer_embed.1} parent=1 // pred_check_branch
      %18 = sbr.rel (0) target = $region9
    $region8: #{transformer_embed.1} parent=1 // pred_region
      _
    $region9: #{transformer_embed.1} parent=1 // pred_fallthru
      _
    // Predicated region
    $region10: #{transformer_embed.1} parent=1 // pred_check
      _
    $region11: #{transformer_embed.1} parent=1 // pred_check_branch
      %20 = sbr.rel (0) target = $region13
    $region12: #{transformer_embed.1} parent=1 // pred_region
      _
    $region13: #{transformer_embed.1} parent=1 // pred_fallthru
      _
    // Predicated region
    $region14: #{transformer_embed.1} parent=1 // pred_check
      _
    $region15: #{transformer_embed.1} parent=1 // pred_check_branch
      %22 = sbr.rel (0) target = $region17
    $region16: #{transformer_embed.1} parent=1 // pred_region
      _
    $region17: #{transformer_embed.1} parent=1 // pred_fallthru
      _
    // Predicated region
    $region18: #{transformer_embed.1} parent=1 // pred_check
      _
    $region19: #{transformer_embed.1} parent=1 // pred_check_branch
      %24 = sbr.rel (0) target = $region21
    $region20: #{transformer_embed.1} parent=1 // pred_region
      %26 = vsyncadd [#allocation3], 0
      %s27 = sshll.u32 %s4, 4
      %s28 = int_to_ptr.hbm [resolvable:$true] %s27
      %s29 = sshll.u32 [#allocation2], 4
      %s30 = int_to_ptr.vmem [resolvable:$true] %s29
      %35 = dma.hbm_to_vmem [thread:$0]  %s28, 1024, %s30, [#allocation3], 64, 64, 4
    $region21: #{transformer_embed.1} parent=1 // pred_fallthru
      _
    // Predicated region
    $region22: #{transformer_embed.1} parent=1 // pred_check
      _
    $region23: #{transformer_embed.1} parent=1 // pred_check_branch
      %37 = sbr.rel (0) target = $region25
    $region24: #{transformer_embed.1} parent=1 // pred_region
      _
    $region25: #{transformer_embed.1} parent=1 // pred_fallthru
      _
    // Predicated region
    $region26: #{transformer_embed.1} parent=1 // pred_check
      _
    $region27: #{transformer_embed.1} parent=1 // pred_check_branch
      %39 = sbr.rel (0) target = $region29
    $region28: #{transformer_embed.1} parent=1 // pred_region
      %41 = vsyncadd [#allocation6], 0
      %s42 = sshll.u32 %s6, 4
      %s43 = int_to_ptr.hbm [resolvable:$true] %s42
      %s44 = sshll.u32 [#allocation5], 4
      %s45 = int_to_ptr.vmem [resolvable:$true] %s44
      %50 = dma.hbm_to_vmem [thread:$0]  %s43, 640, %s45, [#allocation6], 128, 128, 8
    $region29: #{transformer_embed.1} parent=1 // pred_fallthru
      _
    // Predicated region
    $region30: #{transformer_embed.1} parent=1 // pred_check
      _
    $region31: #{transformer_embed.1} parent=1 // pred_check_branch
      %52 = sbr.rel (0) target = $region33
    $region32: #{transformer_embed.1} parent=1 // pred_region
      %54 = dma.done [#allocation3], 1024
    $region33: #{transformer_embed.1} parent=1 // pred_fallthru
      _
    // Predicated region
    $region34: #{transformer_embed.1} parent=1 // pred_check
      _
    $region35: #{transformer_embed.1} parent=1 // pred_check_branch
      %56 = sbr.rel (0) target = $region37
    $region36: #{transformer_embed.1} parent=1 // pred_region
      %58 = dma.done [#allocation6], 640
    $region37: #{transformer_embed.1} parent=1 // pred_fallthru
      _
    %v60 = vld [vmem:[%s0] sm:$0xff]
    %v61 = vld [vmem:[%s0 + $0x8] sm:$0xff]
    %v62 = vld [vmem:[%s2] sm:$0xf]
    %v63 = vld [vmem:[%s2 + $0x4] sm:$0xf]
    %v64 = vld [vmem:[%s2 + $0x8] sm:$0xf]
    %v65 = vld [vmem:[%s2 + $0xc] sm:$0xf]
    %v66 = vld [vmem:[#allocation5] sm:$0x1]
    %v67 = vpack.c.bf16 %v61, %v60
    %v68 = vperm.slane %v66, 0
    %v73 = vunpack.c.l.b16 %v62
    %v74 = vunpack.c.l.b16 %v63
    %v75 = vunpack.c.l.b16 %v64
    %v76 = vunpack.c.l.b16 %v65
    %v77 = vpack.c.b16 %v74, %v73
    %v78 = vpack.c.b16 %v76, %v75
    %vm81 = vcmask 261120
    %v83 = vsel %vm81, %v67, 0
    %85 = vmatpush.bf16.msra.mxu0 0
    %86 = vmatpush.bf16.msra.mxu0 0
    %87 = vmatpush.bf16.msra.mxu0 0
    %88 = vmatpush.bf16.msra.mxu0 0
    %89 = vmatpush.bf16.msra.mxu0 0
    %90 = vmatpush.bf16.msra.mxu0 0
    %91 = vmatpush.bf16.msra.mxu0 %v78
    %92 = vmatpush.bf16.msra.mxu0 %v77
    %93 = vmatmul.bf16.gmra.mxu0 %v83
    %v94 = vpop.f32.mrf.mxu0
    %v95 = vadd.f32 %v68, %v94
    %v96 = vpop.f32.mrf.mxu0
    %v97 = vadd.f32 %v68, %v96
    %98 = vdwg.mxu0
    %v99 = vpack.c.bf16 %v95, %v95
    %v100 = vpack.c.bf16 %v97, %v97
    %v102 = vunpack.c.l.b16 %v99
    %v103 = vpack.c.b16 %v102, %v102
    %104 = vrot.lane.b32.xlu0 %v103, 96
    %v105 = vpop.permute.xlu0 %104
    %vm106 = vcmask 64512
    %v108 = vsel %vm106, %v99, 0
    %v111 = vsel %vm106, %v105, 0
    %113 = vmatpush.bf16.xpose.msra.mxu0 0
    %114 = vmatpush.bf16.xpose.msra.mxu0 0
    %115 = vmatpush.bf16.xpose.msra.mxu0 0
    %116 = vmatpush.bf16.xpose.msra.mxu0 0
    %117 = vmatpush.bf16.xpose.msra.mxu0 0
    %118 = vmatpush.bf16.xpose.msra.mxu0 0
    %119 = vmatpush.bf16.xpose.msra.mxu0 0
    %120 = vmatpush.bf16.xpose.msra.mxu0 %v111
    %121 = vmatmul.bf16.gmra.mxu0 %v108
    %v122 = vpop.f32.mrf.mxu0
    %v123 = vadd.f32 0.0, %v122
    %v124 = vpop.f32.mrf.mxu0
    %125 = vdwg.mxu0
    %v127 = vunpack.c.l.b16 %v100
    %v128 = vpack.c.b16 %v127, %v127
    %129 = vrot.lane.b32.xlu0 %v128, 96
    %v130 = vpop.permute.xlu0 %129
    %v132 = vsel %vm106, %v100, 0
    %v135 = vsel %vm106, %v130, 0
    %137 = vmatpush.bf16.xpose.msra.mxu0 0
    %138 = vmatpush.bf16.xpose.msra.mxu0 0
    %139 = vmatpush.bf16.xpose.msra.mxu0 0
    %140 = vmatpush.bf16.xpose.msra.mxu0 0
    %141 = vmatpush.bf16.xpose.msra.mxu0 0
    %142 = vmatpush.bf16.xpose.msra.mxu0 0
    %143 = vmatpush.bf16.xpose.msra.mxu0 0
    %144 = vmatpush.bf16.xpose.msra.mxu0 %v135
    %145 = vmatmul.bf16.gmra.mxu0 %v132
    %v146 = vpop.f32.mrf.mxu0
    %v147 = vadd.f32 0.0, %v146
    %v148 = vpop.f32.mrf.mxu0
    %149 = vdwg.mxu0
    %v150 = vsel %vm106, %v123, -inf
    %151 = vmax.xlane.f32.xlu0 %v150
    %v152 = vpop.xlane.xlu0 %151
    %v153 = vsel %vm106, %v147, -inf
    %154 = vmax.xlane.f32.xlu0 %v153
    %v155 = vpop.xlane.xlu0 %154
    %v156 = vsub.f32 %v123, %v152
    %v157 = vsub.f32 %v147, %v155
    %v158 = vmul.f32 %v156, 1.442695
    %v159 = vpow.pop %v158
    %v160 = vmul.f32 %v157, 1.442695
    %v161 = vpow.pop %v160
    %v162 = vsel %vm106, %v159, 0.0
    %163 = vadd.xlane.f32.xlu0 %v162
    %v164 = vpop.xlane.xlu0 %163
    %v165 = vsel %vm106, %v161, 0.0
    %166 = vadd.xlane.f32.xlu0 %v165
    %v167 = vpop.xlane.xlu0 %166
    %v168 = vrcp.pop %v164
    %v169 = vrcp.pop %v167
    %v170 = vmul.f32 %v159, %v168
    %v171 = vmul.f32 %v161, %v169
    %v172 = vpack.c.bf16 %v170, %v170
    %v173 = vpack.c.bf16 %v171, %v171
    %174 = vrot.lane.b32.xlu0 %v103, 64
    %v175 = vpop.permute.xlu0 %174
    %v177 = vsel %vm106, %v172, 0
    %vm179 = vcmask 1043456
    %v181 = vsel %vm179, %v175, 0
    %183 = vmatpush.bf16.msra.mxu0 0
    %184 = vmatpush.bf16.msra.mxu0 0
    %185 = vmatpush.bf16.msra.mxu0 0
    %186 = vmatpush.bf16.msra.mxu0 0
    %187 = vmatpush.bf16.msra.mxu0 0
    %188 = vmatpush.bf16.msra.mxu0 0
    %189 = vmatpush.bf16.msra.mxu0 0
    %190 = vmatpush.bf16.msra.mxu0 %v181
    %191 = vmatmul.bf16.gmra.mxu0 %v177
    %v192 = vpop.f32.mrf.mxu0
    %v193 = vadd.f32 0.0, %v192
    %v194 = vpop.f32.mrf.mxu0
    %195 = vdwg.mxu0
    %196 = vrot.lane.b32.xlu0 %v128, 64
    %v197 = vpop.permute.xlu0 %196
    %v199 = vsel %vm106, %v173, 0
    %v202 = vsel %vm179, %v197, 0
    %204 = vmatpush.bf16.msra.mxu0 0
    %205 = vmatpush.bf16.msra.mxu0 0
    %206 = vmatpush.bf16.msra.mxu0 0
    %207 = vmatpush.bf16.msra.mxu0 0
    %208 = vmatpush.bf16.msra.mxu0 0
    %209 = vmatpush.bf16.msra.mxu0 0
    %210 = vmatpush.bf16.msra.mxu0 0
    %211 = vmatpush.bf16.msra.mxu0 %v202
    %212 = vmatmul.bf16.gmra.mxu0 %v199
    %v213 = vpop.f32.mrf.mxu0
    %v214 = vadd.f32 0.0, %v213
    %v215 = vpop.f32.mrf.mxu0
    %216 = vdwg.mxu0
    %217 = vrot.lane.b32.xlu0 %v103, 120
    %v218 = vpop.permute.xlu0 %217
    %219 = vrot.lane.b32.xlu0 %v103, 88
    %v220 = vpop.permute.xlu0 %219
    %v222 = vsel %vm106, %v218, 0
    %v225 = vsel %vm106, %v220, 0
    %227 = vmatpush.bf16.xpose.msra.mxu0 0
    %228 = vmatpush.bf16.xpose.msra.mxu0 0
    %229 = vmatpush.bf16.xpose.msra.mxu0 0
    %230 = vmatpush.bf16.xpose.msra.mxu0 0
    %231 = vmatpush.bf16.xpose.msra.mxu0 0
    %232 = vmatpush.bf16.xpose.msra.mxu0 0
    %233 = vmatpush.bf16.xpose.msra.mxu0 0
    %234 = vmatpush.bf16.xpose.msra.mxu0 %v225
    %235 = vmatmul.bf16.gmra.mxu0 %v222
    %v236 = vpop.f32.mrf.mxu0
    %v237 = vadd.f32 0.0, %v236
    %v238 = vpop.f32.mrf.mxu0
    %239 = vdwg.mxu0
    %240 = vrot.lane.b32.xlu0 %v128, 120
    %v241 = vpop.permute.xlu0 %240
    %242 = vrot.lane.b32.xlu0 %v128, 88
    %v243 = vpop.permute.xlu0 %242
    %v245 = vsel %vm106, %v241, 0
    %v248 = vsel %vm106, %v243, 0
    %250 = vmatpush.bf16.xpose.msra.mxu0 0
    %251 = vmatpush.bf16.xpose.msra.mxu0 0
    %252 = vmatpush.bf16.xpose.msra.mxu0 0
    %253 = vmatpush.bf16.xpose.msra.mxu0 0
    %254 = vmatpush.bf16.xpose.msra.mxu0 0
    %255 = vmatpush.bf16.xpose.msra.mxu0 0
    %256 = vmatpush.bf16.xpose.msra.mxu0 0
    %257 = vmatpush.bf16.xpose.msra.mxu0 %v248
    %258 = vmatmul.bf16.gmra.mxu0 %v245
    %v259 = vpop.f32.mrf.mxu0
    %v260 = vadd.f32 0.0, %v259
    %v261 = vpop.f32.mrf.mxu0
    %262 = vdwg.mxu0
    %v263 = vsel %vm106, %v237, -inf
    %264 = vmax.xlane.f32.xlu0 %v263
    %v265 = vpop.xlane.xlu0 %264
    %v266 = vsel %vm106, %v260, -inf
    %267 = vmax.xlane.f32.xlu0 %v266
    %v268 = vpop.xlane.xlu0 %267
    %v269 = vsub.f32 %v237, %v265
    %v270 = vsub.f32 %v260, %v268
    %v271 = vmul.f32 %v269, 1.442695
    %v272 = vpow.pop %v271
    %v273 = vmul.f32 %v270, 1.442695
    %v274 = vpow.pop %v273
    %v275 = vsel %vm106, %v272, 0.0
    %276 = vadd.xlane.f32.xlu0 %v275
    %v277 = vpop.xlane.xlu0 %276
    %v278 = vsel %vm106, %v274, 0.0
    %279 = vadd.xlane.f32.xlu0 %v278
    %v280 = vpop.xlane.xlu0 %279
    %v281 = vrcp.pop %v277
    %v282 = vrcp.pop %v280
    %v283 = vmul.f32 %v272, %v281
    %v284 = vmul.f32 %v274, %v282
    %v285 = vpack.c.bf16 %v283, %v283
    %v286 = vpack.c.bf16 %v284, %v284
    %287 = vrot.lane.b32.xlu0 %v103, 56
    %v288 = vpop.permute.xlu0 %287
    %v290 = vsel %vm106, %v285, 0
    %v293 = vsel %vm179, %v288, 0
    %295 = vmatpush.bf16.msra.mxu0 0
    %296 = vmatpush.bf16.msra.mxu0 0
    %297 = vmatpush.bf16.msra.mxu0 0
    %298 = vmatpush.bf16.msra.mxu0 0
    %299 = vmatpush.bf16.msra.mxu0 0
    %300 = vmatpush.bf16.msra.mxu0 0
    %301 = vmatpush.bf16.msra.mxu0 0
    %302 = vmatpush.bf16.msra.mxu0 %v293
    %303 = vmatmul.bf16.gmra.mxu0 %v290
    %v304 = vpop.f32.mrf.mxu0
    %v305 = vadd.f32 0.0, %v304
    %v306 = vpop.f32.mrf.mxu0
    %307 = vdwg.mxu0
    %308 = vrot.lane.b32.xlu0 %v128, 56
    %v309 = vpop.permute.xlu0 %308
    %v311 = vsel %vm106, %v286, 0
    %v314 = vsel %vm179, %v309, 0
    %316 = vmatpush.bf16.msra.mxu0 0
    %317 = vmatpush.bf16.msra.mxu0 0
    %318 = vmatpush.bf16.msra.mxu0 0
    %319 = vmatpush.bf16.msra.mxu0 0
    %320 = vmatpush.bf16.msra.mxu0 0
    %321 = vmatpush.bf16.msra.mxu0 0
    %322 = vmatpush.bf16.msra.mxu0 0
    %323 = vmatpush.bf16.msra.mxu0 %v314
    %324 = vmatmul.bf16.gmra.mxu0 %v311
    %v325 = vpop.f32.mrf.mxu0
    %v326 = vadd.f32 0.0, %v325
    %v327 = vpop.f32.mrf.mxu0
    %328 = vdwg.mxu0
    %329 = vrot.lane.b32.xlu0 %v103, 112
    %v330 = vpop.permute.xlu0 %329
    %331 = vrot.lane.b32.xlu0 %v103, 80
    %v332 = vpop.permute.xlu0 %331
    %v334 = vsel %vm106, %v330, 0
    %v337 = vsel %vm106, %v332, 0
    %339 = vmatpush.bf16.xpose.msra.mxu0 0
    %340 = vmatpush.bf16.xpose.msra.mxu0 0
    %341 = vmatpush.bf16.xpose.msra.mxu0 0
    %342 = vmatpush.bf16.xpose.msra.mxu0 0
    %343 = vmatpush.bf16.xpose.msra.mxu0 0
    %344 = vmatpush.bf16.xpose.msra.mxu0 0
    %345 = vmatpush.bf16.xpose.msra.mxu0 0
    %346 = vmatpush.bf16.xpose.msra.mxu0 %v337
    %347 = vmatmul.bf16.gmra.mxu0 %v334
    %v348 = vpop.f32.mrf.mxu0
    %v349 = vadd.f32 0.0, %v348
    %v350 = vpop.f32.mrf.mxu0
    %351 = vdwg.mxu0
    %352 = vrot.lane.b32.xlu0 %v128, 112
    %v353 = vpop.permute.xlu0 %352
    %354 = vrot.lane.b32.xlu0 %v128, 80
    %v355 = vpop.permute.xlu0 %354
    %v357 = vsel %vm106, %v353, 0
    %v360 = vsel %vm106, %v355, 0
    %362 = vmatpush.bf16.xpose.msra.mxu0 0
    %363 = vmatpush.bf16.xpose.msra.mxu0 0
    %364 = vmatpush.bf16.xpose.msra.mxu0 0
    %365 = vmatpush.bf16.xpose.msra.mxu0 0
    %366 = vmatpush.bf16.xpose.msra.mxu0 0
    %367 = vmatpush.bf16.xpose.msra.mxu0 0
    %368 = vmatpush.bf16.xpose.msra.mxu0 0
    %369 = vmatpush.bf16.xpose.msra.mxu0 %v360
    %370 = vmatmul.bf16.gmra.mxu0 %v357
    %v371 = vpop.f32.mrf.mxu0
    %v372 = vadd.f32 0.0, %v371
    %v373 = vpop.f32.mrf.mxu0
    %374 = vdwg.mxu0
    %v375 = vsel %vm106, %v349, -inf
    %376 = vmax.xlane.f32.xlu0 %v375
    %v377 = vpop.xlane.xlu0 %376
    %v378 = vsel %vm106, %v372, -inf
    %379 = vmax.xlane.f32.xlu0 %v378
    %v380 = vpop.xlane.xlu0 %379
    %v381 = vsub.f32 %v349, %v377
    %v382 = vsub.f32 %v372, %v380
    %v383 = vmul.f32 %v381, 1.442695
    %v384 = vpow.pop %v383
    %v385 = vmul.f32 %v382, 1.442695
    %v386 = vpow.pop %v385
    %v387 = vsel %vm106, %v384, 0.0
    %388 = vadd.xlane.f32.xlu0 %v387
    %v389 = vpop.xlane.xlu0 %388
    %v390 = vsel %vm106, %v386, 0.0
    %391 = vadd.xlane.f32.xlu0 %v390
    %v392 = vpop.xlane.xlu0 %391
    %v393 = vrcp.pop %v389
    %v394 = vrcp.pop %v392
    %v395 = vmul.f32 %v384, %v393
    %v396 = vmul.f32 %v386, %v394
    %v397 = vpack.c.bf16 %v395, %v395
    %v398 = vpack.c.bf16 %v396, %v396
    %399 = vrot.lane.b32.xlu0 %v103, 48
    %v400 = vpop.permute.xlu0 %399
    %v402 = vsel %vm106, %v397, 0
    %v405 = vsel %vm179, %v400, 0
    %407 = vmatpush.bf16.msra.mxu0 0
    %408 = vmatpush.bf16.msra.mxu0 0
    %409 = vmatpush.bf16.msra.mxu0 0
    %410 = vmatpush.bf16.msra.mxu0 0
    %411 = vmatpush.bf16.msra.mxu0 0
    %412 = vmatpush.bf16.msra.mxu0 0
    %413 = vmatpush.bf16.msra.mxu0 0
    %414 = vmatpush.bf16.msra.mxu0 %v405
    %415 = vmatmul.bf16.gmra.mxu0 %v402
    %v416 = vpop.f32.mrf.mxu0
    %v417 = vadd.f32 0.0, %v416
    %v418 = vpop.f32.mrf.mxu0
    %419 = vdwg.mxu0
    %420 = vrot.lane.b32.xlu0 %v128, 48
    %v421 = vpop.permute.xlu0 %420
    %v423 = vsel %vm106, %v398, 0
    %v426 = vsel %vm179, %v421, 0
    %428 = vmatpush.bf16.msra.mxu0 0
    %429 = vmatpush.bf16.msra.mxu0 0
    %430 = vmatpush.bf16.msra.mxu0 0
    %431 = vmatpush.bf16.msra.mxu0 0
    %432 = vmatpush.bf16.msra.mxu0 0
    %433 = vmatpush.bf16.msra.mxu0 0
    %434 = vmatpush.bf16.msra.mxu0 0
    %435 = vmatpush.bf16.msra.mxu0 %v426
    %436 = vmatmul.bf16.gmra.mxu0 %v423
    %v437 = vpop.f32.mrf.mxu0
    %v438 = vadd.f32 0.0, %v437
    %v439 = vpop.f32.mrf.mxu0
    %440 = vdwg.mxu0
    %441 = vrot.lane.b32.xlu0 %v103, 104
    %v442 = vpop.permute.xlu0 %441
    %443 = vrot.lane.b32.xlu0 %v103, 72
    %v444 = vpop.permute.xlu0 %443
    %v446 = vsel %vm106, %v442, 0
    %v449 = vsel %vm106, %v444, 0
    %451 = vmatpush.bf16.xpose.msra.mxu0 0
    %452 = vmatpush.bf16.xpose.msra.mxu0 0
    %453 = vmatpush.bf16.xpose.msra.mxu0 0
    %454 = vmatpush.bf16.xpose.msra.mxu0 0
    %455 = vmatpush.bf16.xpose.msra.mxu0 0
    %456 = vmatpush.bf16.xpose.msra.mxu0 0
    %457 = vmatpush.bf16.xpose.msra.mxu0 0
    %458 = vmatpush.bf16.xpose.msra.mxu0 %v449
    %459 = vmatmul.bf16.gmra.mxu0 %v446
    %v460 = vpop.f32.mrf.mxu0
    %v461 = vadd.f32 0.0, %v460
    %v462 = vpop.f32.mrf.mxu0
    %463 = vdwg.mxu0
    %464 = vrot.lane.b32.xlu0 %v128, 104
    %v465 = vpop.permute.xlu0 %464
    %466 = vrot.lane.b32.xlu0 %v128, 72
    %v467 = vpop.permute.xlu0 %466
    %v469 = vsel %vm106, %v465, 0
    %v472 = vsel %vm106, %v467, 0
    %474 = vmatpush.bf16.xpose.msra.mxu0 0
    %475 = vmatpush.bf16.xpose.msra.mxu0 0
    %476 = vmatpush.bf16.xpose.msra.mxu0 0
    %477 = vmatpush.bf16.xpose.msra.mxu0 0
    %478 = vmatpush.bf16.xpose.msra.mxu0 0
    %479 = vmatpush.bf16.xpose.msra.mxu0 0
    %480 = vmatpush.bf16.xpose.msra.mxu0 0
    %481 = vmatpush.bf16.xpose.msra.mxu0 %v472
    %482 = vmatmul.bf16.gmra.mxu0 %v469
    %v483 = vpop.f32.mrf.mxu0
    %v484 = vadd.f32 0.0, %v483
    %v485 = vpop.f32.mrf.mxu0
    %486 = vdwg.mxu0
    %v487 = vsel %vm106, %v461, -inf
    %488 = vmax.xlane.f32.xlu0 %v487
    %v489 = vpop.xlane.xlu0 %488
    %v490 = vsel %vm106, %v484, -inf
    %491 = vmax.xlane.f32.xlu0 %v490
    %v492 = vpop.xlane.xlu0 %491
    %v493 = vsub.f32 %v461, %v489
    %v494 = vsub.f32 %v484, %v492
    %v495 = vmul.f32 %v493, 1.442695
    %v496 = vpow.pop %v495
    %v497 = vmul.f32 %v494, 1.442695
    %v498 = vpow.pop %v497
    %v499 = vsel %vm106, %v496, 0.0
    %500 = vadd.xlane.f32.xlu0 %v499
    %v501 = vpop.xlane.xlu0 %500
    %v502 = vsel %vm106, %v498, 0.0
    %503 = vadd.xlane.f32.xlu0 %v502
    %v504 = vpop.xlane.xlu0 %503
    %v505 = vrcp.pop %v501
    %v506 = vrcp.pop %v504
    %v507 = vmul.f32 %v496, %v505
    %v508 = vmul.f32 %v498, %v506
    %v509 = vpack.c.bf16 %v507, %v507
    %v510 = vpack.c.bf16 %v508, %v508
    %511 = vrot.lane.b32.xlu0 %v103, 40
    %v512 = vpop.permute.xlu0 %511
    %v514 = vsel %vm106, %v509, 0
    %v517 = vsel %vm179, %v512, 0
    %519 = vmatpush.bf16.msra.mxu0 0
    %520 = vmatpush.bf16.msra.mxu0 0
    %521 = vmatpush.bf16.msra.mxu0 0
    %522 = vmatpush.bf16.msra.mxu0 0
    %523 = vmatpush.bf16.msra.mxu0 0
    %524 = vmatpush.bf16.msra.mxu0 0
    %525 = vmatpush.bf16.msra.mxu0 0
    %526 = vmatpush.bf16.msra.mxu0 %v517
    %527 = vmatmul.bf16.gmra.mxu0 %v514
    %v528 = vpop.f32.mrf.mxu0
    %v529 = vadd.f32 0.0, %v528
    %v530 = vpop.f32.mrf.mxu0
    %531 = vdwg.mxu0
    %532 = vrot.lane.b32.xlu0 %v128, 40
    %v533 = vpop.permute.xlu0 %532
    %v535 = vsel %vm106, %v510, 0
    %v538 = vsel %vm179, %v533, 0
    %540 = vmatpush.bf16.msra.mxu0 0
    %541 = vmatpush.bf16.msra.mxu0 0
    %542 = vmatpush.bf16.msra.mxu0 0
    %543 = vmatpush.bf16.msra.mxu0 0
    %544 = vmatpush.bf16.msra.mxu0 0
    %545 = vmatpush.bf16.msra.mxu0 0
    %546 = vmatpush.bf16.msra.mxu0 0
    %547 = vmatpush.bf16.msra.mxu0 %v538
    %548 = vmatmul.bf16.gmra.mxu0 %v535
    %v549 = vpop.f32.mrf.mxu0
    %v550 = vadd.f32 0.0, %v549
    %v551 = vpop.f32.mrf.mxu0
    %552 = vdwg.mxu0
    %555 = vrot.lane.b32.xlu0 %v305, 8
    %v556 = vpop.permute.xlu0 %555
    %557 = vrot.lane.b32.xlu0 %v326, 8
    %v558 = vpop.permute.xlu0 %557
    %563 = vrot.lane.b32.xlu0 %v417, 16
    %v564 = vpop.permute.xlu0 %563
    %565 = vrot.lane.b32.xlu0 %v438, 16
    %v566 = vpop.permute.xlu0 %565
    %571 = vrot.lane.b32.xlu0 %v529, 24
    %v572 = vpop.permute.xlu0 %571
    %573 = vrot.lane.b32.xlu0 %v550, 24
    %v574 = vpop.permute.xlu0 %573
    %v577 = vsel %vm106, %v193, %v556
    %v578 = vsel %vm106, %v214, %v558
    %vm579 = vcmask 130048
    %v580 = vsel %vm579, %v577, %v564
    %v581 = vsel %vm579, %v578, %v566
    %vm582 = vcmask 195584
    %v583 = vsel %vm582, %v580, %v572
    %v584 = vsel %vm582, %v581, %v574
    %v585 = vld [vmem:[%s3] sm:$0xf]
    %v586 = vld [vmem:[%s3 + $0x4] sm:$0xf]
    %v587 = vld [vmem:[%s3 + $0x8] sm:$0xf]
    %v588 = vld [vmem:[%s3 + $0xc] sm:$0xf]
    %v589 = vpack.c.bf16 %v584, %v583
    %v590 = vld [vmem:[#allocation5 + $0x6] sm:$0x1]
    %v591 = vperm.slane %v590, 0
    %v596 = vunpack.c.l.b16 %v585
    %v597 = vunpack.c.l.b16 %v586
    %v598 = vunpack.c.l.b16 %v587
    %v599 = vunpack.c.l.b16 %v588
    %v600 = vpack.c.b16 %v597, %v596
    %v601 = vpack.c.b16 %v599, %v598
    %v605 = vsel %vm81, %v589, 0
    %607 = vmatpush.bf16.msra.mxu0 0
    %608 = vmatpush.bf16.msra.mxu0 0
    %609 = vmatpush.bf16.msra.mxu0 0
    %610 = vmatpush.bf16.msra.mxu0 0
    %611 = vmatpush.bf16.msra.mxu0 0
    %612 = vmatpush.bf16.msra.mxu0 0
    %613 = vmatpush.bf16.msra.mxu0 %v601
    %614 = vmatpush.bf16.msra.mxu0 %v600
    %615 = vmatmul.bf16.gmra.mxu0 %v605
    %v616 = vpop.f32.mrf.mxu0
    %v617 = vadd.f32 %v591, %v616
    %v618 = vpop.f32.mrf.mxu0
    %v619 = vadd.f32 %v591, %v618
    %620 = vdwg.mxu0
    %v621 = vadd.f32 %v60, %v617
    %v622 = vadd.f32 %v61, %v619
    %v623 = vld [vmem:[#allocation5 + $0x14] sm:$0x1]
    %v624 = vld [vmem:[#allocation5 + $0x1e] sm:$0x1]
    %v625 = vsel %vm81, %v621, 0.0
    %626 = vadd.xlane.f32.xlu0 %v625
    %v627 = vpop.xlane.xlu0 %626
    %v628 = vsel %vm81, %v622, 0.0
    %629 = vadd.xlane.f32.xlu0 %v628
    %v630 = vpop.xlane.xlu0 %629
    %v631 = vrcp.pop 32.0
    %v632 = vmul.f32 32.0, %v631
    %v633 = vsub.f32 1.0, %v632
    %v634 = vmul.f32 %v631, %v633
    %v635 = vadd.f32 %v631, %v634
    %vm636 = vweird.f32 %v631
    %v637 = vsel %vm636, %v631, %v635
    %v638 = vmul.f32 %v627, %v637
    %v639 = vmul.f32 %v630, %v637
    %v640 = vsub.f32 %v621, %v638
    %v641 = vsub.f32 %v622, %v639
    %v642 = vmul.f32 %v640, %v640
    %v643 = vmul.f32 %v641, %v641
    %v644 = vsel %vm81, %v642, 0.0
    %645 = vadd.xlane.f32.xlu0 %v644
    %v646 = vpop.xlane.xlu0 %645
    %v647 = vsel %vm81, %v643, 0.0
    %648 = vadd.xlane.f32.xlu0 %v647
    %v649 = vpop.xlane.xlu0 %648
    %v650 = vmul.f32 %v646, %v637
    %v651 = vmul.f32 %v649, %v637
    %v652 = vadd.f32 %v650, 1e-05
    %v653 = vadd.f32 %v651, 1e-05
    %v654 = vrsqrt.pop %v652
    %v655 = vmul.f32 %v654, %v652
    %v656 = vmul.f32 %v655, %v654
    %v657 = vmul.f32 0.5, %v656
    %v658 = vsub.f32 1.5, %v657
    %v659 = vmul.f32 %v654, %v658
    %vm660 = vweird.f32 %v652
    %vm661 = vweird.f32 %v654
    %vm662 = vmor %vm660, %vm661
    %v663 = vsel %vm662, %v654, %v659
    %v664 = vrsqrt.pop %v653
    %v665 = vmul.f32 %v664, %v653
    %v666 = vmul.f32 %v665, %v664
    %v667 = vmul.f32 0.5, %v666
    %v668 = vsub.f32 1.5, %v667
    %v669 = vmul.f32 %v664, %v668
    %vm670 = vweird.f32 %v653
    %vm671 = vweird.f32 %v664
    %vm672 = vmor %vm670, %vm671
    %v673 = vsel %vm672, %v664, %v669
    %v674 = vmul.f32 %v640, %v663
    %v675 = vmul.f32 %v641, %v673
    %v676 = vperm.slane %v623, 0
    %v677 = vmul.f32 %v674, %v676
    %v678 = vmul.f32 %v675, %v676
    %v679 = vperm.slane %v624, 0
    %v680 = vadd.f32 %v677, %v679
    %v681 = vadd.f32 %v678, %v679
    %v682 = vld [vmem:[#allocation2] sm:$0xf]
    %v683 = vld [vmem:[#allocation2 + $0x4] sm:$0xf]
    %v684 = vld [vmem:[#allocation2 + $0x8] sm:$0xf]
    %v685 = vld [vmem:[#allocation2 + $0xc] sm:$0xf]
    %v686 = vpack.c.bf16 %v681, %v680
    %v687 = vld [vmem:[#allocation5 + $0xc] sm:$0x1]
    %v688 = vperm.slane %v687, 0
    %v693 = vunpack.c.l.b16 %v682
    %v694 = vunpack.c.l.b16 %v683
    %v695 = vunpack.c.l.b16 %v684
    %v696 = vunpack.c.l.b16 %v685
    %v697 = vpack.c.b16 %v694, %v693
    %v698 = vpack.c.b16 %v696, %v695
    %v702 = vsel %vm81, %v686, 0
    %704 = vmatpush.bf16.msra.mxu0 0
    %705 = vmatpush.bf16.msra.mxu0 0
    %706 = vmatpush.bf16.msra.mxu0 0
    %707 = vmatpush.bf16.msra.mxu0 0
    %708 = vmatpush.bf16.msra.mxu0 0
    %709 = vmatpush.bf16.msra.mxu0 0
    %710 = vmatpush.bf16.msra.mxu0 %v698
    %711 = vmatpush.bf16.msra.mxu0 %v697
    %712 = vmatmul.bf16.gmra.mxu0 %v702
    %v713 = vpop.f32.mrf.mxu0
    %v714 = vadd.f32 %v688, %v713
    %v715 = vpop.f32.mrf.mxu0
    %v716 = vadd.f32 %v688, %v715
    %717 = vdwg.mxu0
    %v718 = vmul.f32 %v714, 0.5
    %v719 = vmul.f32 %v716, 0.5
    %v720 = vrcp.pop 1.4142135
    %v721 = vmul.f32 1.4142135, %v720
    %v722 = vsub.f32 1.0, %v721
    %v723 = vmul.f32 %v720, %v722
    %v724 = vadd.f32 %v720, %v723
    %vm725 = vweird.f32 %v720
    %v726 = vsel %vm725, %v720, %v724
    %v727 = vmul.f32 %v714, %v726
    %v728 = vmul.f32 %v716, %v726
    %v729 = vmul.f32 %v727, %v727
    %v730 = vmin.f32 16.0, %v729
    %v731 = vmul.f32 %v730, 2.1237322e-06
    %v732 = vadd.f32 %v731, 0.00028619796
    %v733 = vmul.f32 %v730, %v732
    %v734 = vadd.f32 %v733, 0.0036580483
    %v735 = vmul.f32 %v730, %v734
    %v736 = vadd.f32 %v735, 0.05243302
    %v737 = vmul.f32 %v730, %v736
    %v738 = vadd.f32 %v737, 0.18741608
    %v739 = vmul.f32 %v730, %v738
    %v740 = vadd.f32 %v739, 1.1283791
    %v741 = vmul.f32 %v727, %v740
    %v742 = vmul.f32 %v730, 3.8918573e-05
    %v743 = vadd.f32 %v742, 0.001143296
    %v744 = vmul.f32 %v730, %v743
    %v745 = vadd.f32 %v744, 0.014752088
    %v746 = vmul.f32 %v730, %v745
    %v747 = vadd.f32 %v746, 0.112945676
    %v748 = vmul.f32 %v730, %v747
    %v749 = vadd.f32 %v748, 0.4994258
    %v750 = vmul.f32 %v730, %v749
    %v751 = vadd.f32 %v750, 1.0
    %v752 = vrcp.pop %v751
    %v753 = vmul.f32 %v751, %v752
    %v754 = vsub.f32 1.0, %v753
    %v755 = vmul.f32 %v752, %v754
    %v756 = vadd.f32 %v752, %v755
    %vm757 = vweird.f32 %v751
    %vm758 = vweird.f32 %v752
    %vm759 = vmor %vm757, %vm758
    %v760 = vsel %vm759, %v752, %v756
    %v761 = vand.u32 2147483647, %v751
    %vm762 = vcmp.eq.f32.partialorder %v761, 8.507059e+37
    %v763 = vand.u32 %v751, 2147483648
    %v764 = vor.u32 1.1754944e-38, %v763
    %v765 = vsel %vm762, %v764, %v760
    %v766 = vmul.f32 %v741, %v765
    %v767 = vmin.f32 %v766, 1.0
    %v768 = vmax.f32 %v767, -1.0
    %v769 = vmul.f32 %v728, %v728
    %v770 = vmin.f32 16.0, %v769
    %v771 = vmul.f32 %v770, 2.1237322e-06
    %v772 = vadd.f32 %v771, 0.00028619796
    %v773 = vmul.f32 %v770, %v772
    %v774 = vadd.f32 %v773, 0.0036580483
    %v775 = vmul.f32 %v770, %v774
    %v776 = vadd.f32 %v775, 0.05243302
    %v777 = vmul.f32 %v770, %v776
    %v778 = vadd.f32 %v777, 0.18741608
    %v779 = vmul.f32 %v770, %v778
    %v780 = vadd.f32 %v779, 1.1283791
    %v781 = vmul.f32 %v728, %v780
    %v782 = vmul.f32 %v770, 3.8918573e-05
    %v783 = vadd.f32 %v782, 0.001143296
    %v784 = vmul.f32 %v770, %v783
    %v785 = vadd.f32 %v784, 0.014752088
    %v786 = vmul.f32 %v770, %v785
    %v787 = vadd.f32 %v786, 0.112945676
    %v788 = vmul.f32 %v770, %v787
    %v789 = vadd.f32 %v788, 0.4994258
    %v790 = vmul.f32 %v770, %v789
    %v791 = vadd.f32 %v790, 1.0
    %v792 = vrcp.pop %v791
    %v793 = vmul.f32 %v791, %v792
    %v794 = vsub.f32 1.0, %v793
    %v795 = vmul.f32 %v792, %v794
    %v796 = vadd.f32 %v792, %v795
    %vm797 = vweird.f32 %v791
    %vm798 = vweird.f32 %v792
    %vm799 = vmor %vm797, %vm798
    %v800 = vsel %vm799, %v792, %v796
    %v801 = vand.u32 2147483647, %v791
    %vm802 = vcmp.eq.f32.partialorder %v801, 8.507059e+37
    %v803 = vand.u32 %v791, 2147483648
    %v804 = vor.u32 1.1754944e-38, %v803
    %v805 = vsel %vm802, %v804, %v800
    %v806 = vmul.f32 %v781, %v805
    %v807 = vmin.f32 %v806, 1.0
    %v808 = vmax.f32 %v807, -1.0
    %v809 = vadd.f32 %v768, 1.0
    %v810 = vadd.f32 %v808, 1.0
    %v811 = vmul.f32 %v718, %v809
    %v812 = vmul.f32 %v719, %v810
    %v813 = vld [vmem:[%s5] sm:$0xf]
    %v814 = vld [vmem:[%s5 + $0x4] sm:$0xf]
    %v815 = vld [vmem:[%s5 + $0x8] sm:$0xf]
    %v816 = vld [vmem:[%s5 + $0xc] sm:$0xf]
    %v817 = vld [vmem:[%s5 + $0x10] sm:$0xf]
    %v818 = vld [vmem:[%s5 + $0x14] sm:$0xf]
    %v819 = vld [vmem:[%s5 + $0x18] sm:$0xf]
    %v820 = vld [vmem:[%s5 + $0x1c] sm:$0xf]
    %v821 = vpack.c.bf16 %v812, %v811
    %v822 = vld [vmem:[#allocation5 + $0x10] sm:$0x1]
    %v823 = vperm.slane %v822, 0
    %v832 = vunpack.c.l.b16 %v813
    %v833 = vunpack.c.l.b16 %v814
    %v834 = vunpack.c.l.b16 %v815
    %v835 = vunpack.c.l.b16 %v816
    %v836 = vunpack.c.l.b16 %v817
    %v837 = vunpack.c.l.b16 %v818
    %v838 = vunpack.c.l.b16 %v819
    %v839 = vunpack.c.l.b16 %v820
    %v840 = vpack.c.b16 %v833, %v832
    %v841 = vpack.c.b16 %v835, %v834
    %v842 = vpack.c.b16 %v837, %v836
    %v843 = vpack.c.b16 %v839, %v838
    %vm848 = vcmask 523264
    %v850 = vsel %vm848, %v821, 0
    %852 = vmatpush.bf16.msra.mxu0 0
    %853 = vmatpush.bf16.msra.mxu0 0
    %854 = vmatpush.bf16.msra.mxu0 0
    %855 = vmatpush.bf16.msra.mxu0 0
    %856 = vmatpush.bf16.msra.mxu0 %v843
    %857 = vmatpush.bf16.msra.mxu0 %v842
    %858 = vmatpush.bf16.msra.mxu0 %v841
    %859 = vmatpush.bf16.msra.mxu0 %v840
    %860 = vmatmul.bf16.gmra.mxu0 %v850
    %v861 = vpop.f32.mrf.mxu0
    %v862 = vadd.f32 %v823, %v861
    %v863 = vpop.f32.mrf.mxu0
    %v864 = vadd.f32 %v823, %v863
    %865 = vdwg.mxu0
    %v866 = vadd.f32 %v680, %v862
    %v867 = vadd.f32 %v681, %v864
    %v868 = vld [vmem:[#allocation5 + $0x15] sm:$0x1]
    %v869 = vld [vmem:[#allocation5 + $0x1f] sm:$0x1]
    %v870 = vsel %vm81, %v866, 0.0
    %871 = vadd.xlane.f32.xlu0 %v870
    %v872 = vpop.xlane.xlu0 %871
    %v873 = vsel %vm81, %v867, 0.0
    %874 = vadd.xlane.f32.xlu0 %v873
    %v875 = vpop.xlane.xlu0 %874
    %v876 = vmul.f32 %v872, %v637
    %v877 = vmul.f32 %v875, %v637
    %v878 = vsub.f32 %v866, %v876
    %v879 = vsub.f32 %v867, %v877
    %v880 = vmul.f32 %v878, %v878
    %v881 = vmul.f32 %v879, %v879
    %v882 = vsel %vm81, %v880, 0.0
    %883 = vadd.xlane.f32.xlu0 %v882
    %v884 = vpop.xlane.xlu0 %883
    %v885 = vsel %vm81, %v881, 0.0
    %886 = vadd.xlane.f32.xlu0 %v885
    %v887 = vpop.xlane.xlu0 %886
    %v888 = vmul.f32 %v884, %v637
    %v889 = vmul.f32 %v887, %v637
    %v890 = vadd.f32 %v888, 1e-05
    %v891 = vadd.f32 %v889, 1e-05
    %v892 = vrsqrt.pop %v890
    %v893 = vmul.f32 %v892, %v890
    %v894 = vmul.f32 %v893, %v892
    %v895 = vmul.f32 0.5, %v894
    %v896 = vsub.f32 1.5, %v895
    %v897 = vmul.f32 %v892, %v896
    %vm898 = vweird.f32 %v890
    %vm899 = vweird.f32 %v892
    %vm900 = vmor %vm898, %vm899
    %v901 = vsel %vm900, %v892, %v897
    %v902 = vrsqrt.pop %v891
    %v903 = vmul.f32 %v902, %v891
    %v904 = vmul.f32 %v903, %v902
    %v905 = vmul.f32 0.5, %v904
    %v906 = vsub.f32 1.5, %v905
    %v907 = vmul.f32 %v902, %v906
    %vm908 = vweird.f32 %v891
    %vm909 = vweird.f32 %v902
    %vm910 = vmor %vm908, %vm909
    %v911 = vsel %vm910, %v902, %v907
    %v912 = vmul.f32 %v878, %v901
    %v913 = vmul.f32 %v879, %v911
    %v914 = vperm.slane %v868, 0
    %v915 = vmul.f32 %v912, %v914
    %v916 = vmul.f32 %v913, %v914
    %v917 = vperm.slane %v869, 0
    %v918 = vadd.f32 %v915, %v917
    %v919 = vadd.f32 %v916, %v917
    %s920 = scalar_lea.vmem %s2, 16
    %v921 = vld [vmem:[%s920] sm:$0xf]
    %v922 = vld [vmem:[%s920 + $0x4] sm:$0xf]
    %v923 = vld [vmem:[%s920 + $0x8] sm:$0xf]
    %v924 = vld [vmem:[%s920 + $0xc] sm:$0xf]
    %v925 = vld [vmem:[#allocation5 + $0x1] sm:$0x1]
    %v926 = vpack.c.bf16 %v919, %v918
    %v927 = vperm.slane %v925, 0
    %v932 = vunpack.c.l.b16 %v921
    %v933 = vunpack.c.l.b16 %v922
    %v934 = vunpack.c.l.b16 %v923
    %v935 = vunpack.c.l.b16 %v924
    %v936 = vpack.c.b16 %v933, %v932
    %v937 = vpack.c.b16 %v935, %v934
    %v941 = vsel %vm81, %v926, 0
    %943 = vmatpush.bf16.msra.mxu0 0
    %944 = vmatpush.bf16.msra.mxu0 0
    %945 = vmatpush.bf16.msra.mxu0 0
    %946 = vmatpush.bf16.msra.mxu0 0
    %947 = vmatpush.bf16.msra.mxu0 0
    %948 = vmatpush.bf16.msra.mxu0 0
    %949 = vmatpush.bf16.msra.mxu0 %v937
    %950 = vmatpush.bf16.msra.mxu0 %v936
    %951 = vmatmul.bf16.gmra.mxu0 %v941
    %v952 = vpop.f32.mrf.mxu0
    %v953 = vadd.f32 %v927, %v952
    %v954 = vpop.f32.mrf.mxu0
    %v955 = vadd.f32 %v927, %v954
    %956 = vdwg.mxu0
    %v957 = vpack.c.bf16 %v953, %v953
    %v958 = vpack.c.bf16 %v955, %v955
    %v960 = vunpack.c.l.b16 %v957
    %v961 = vpack.c.b16 %v960, %v960
    %962 = vrot.lane.b32.xlu0 %v961, 96
    %v963 = vpop.permute.xlu0 %962
    %v965 = vsel %vm106, %v957, 0
    %v968 = vsel %vm106, %v963, 0
    %970 = vmatpush.bf16.xpose.msra.mxu0 0
    %971 = vmatpush.bf16.xpose.msra.mxu0 0
    %972 = vmatpush.bf16.xpose.msra.mxu0 0
    %973 = vmatpush.bf16.xpose.msra.mxu0 0
    %974 = vmatpush.bf16.xpose.msra.mxu0 0
    %975 = vmatpush.bf16.xpose.msra.mxu0 0
    %976 = vmatpush.bf16.xpose.msra.mxu0 0
    %977 = vmatpush.bf16.xpose.msra.mxu0 %v968
    %978 = vmatmul.bf16.gmra.mxu0 %v965
    %v979 = vpop.f32.mrf.mxu0
    %v980 = vadd.f32 0.0, %v979
    %v981 = vpop.f32.mrf.mxu0
    %982 = vdwg.mxu0
    %v984 = vunpack.c.l.b16 %v958
    %v985 = vpack.c.b16 %v984, %v984
    %986 = vrot.lane.b32.xlu0 %v985, 96
    %v987 = vpop.permute.xlu0 %986
    %v989 = vsel %vm106, %v958, 0
    %v992 = vsel %vm106, %v987, 0
    %994 = vmatpush.bf16.xpose.msra.mxu0 0
    %995 = vmatpush.bf16.xpose.msra.mxu0 0
    %996 = vmatpush.bf16.xpose.msra.mxu0 0
    %997 = vmatpush.bf16.xpose.msra.mxu0 0
    %998 = vmatpush.bf16.xpose.msra.mxu0 0
    %999 = vmatpush.bf16.xpose.msra.mxu0 0
    %1000 = vmatpush.bf16.xpose.msra.mxu0 0
    %1001 = vmatpush.bf16.xpose.msra.mxu0 %v992
    %1002 = vmatmul.bf16.gmra.mxu0 %v989
    %v1003 = vpop.f32.mrf.mxu0
    %v1004 = vadd.f32 0.0, %v1003
    %v1005 = vpop.f32.mrf.mxu0
    %1006 = vdwg.mxu0
    %v1007 = vsel %vm106, %v980, -inf
    %1008 = vmax.xlane.f32.xlu0 %v1007
    %v1009 = vpop.xlane.xlu0 %1008
    %v1010 = vsel %vm106, %v1004, -inf
    %1011 = vmax.xlane.f32.xlu0 %v1010
    %v1012 = vpop.xlane.xlu0 %1011
    %v1013 = vsub.f32 %v980, %v1009
    %v1014 = vsub.f32 %v1004, %v1012
    %v1015 = vmul.f32 %v1013, 1.442695
    %v1016 = vpow.pop %v1015
    %v1017 = vmul.f32 %v1014, 1.442695
    %v1018 = vpow.pop %v1017
    %v1019 = vsel %vm106, %v1016, 0.0
    %1020 = vadd.xlane.f32.xlu0 %v1019
    %v1021 = vpop.xlane.xlu0 %1020
    %v1022 = vsel %vm106, %v1018, 0.0
    %1023 = vadd.xlane.f32.xlu0 %v1022
    %v1024 = vpop.xlane.xlu0 %1023
    %v1025 = vrcp.pop %v1021
    %v1026 = vrcp.pop %v1024
    %v1027 = vmul.f32 %v1016, %v1025
    %v1028 = vmul.f32 %v1018, %v1026
    %v1029 = vpack.c.bf16 %v1027, %v1027
    %v1030 = vpack.c.bf16 %v1028, %v1028
    %1031 = vrot.lane.b32.xlu0 %v961, 64
    %v1032 = vpop.permute.xlu0 %1031
    %v1034 = vsel %vm106, %v1029, 0
    %v1037 = vsel %vm179, %v1032, 0
    %1039 = vmatpush.bf16.msra.mxu0 0
    %1040 = vmatpush.bf16.msra.mxu0 0
    %1041 = vmatpush.bf16.msra.mxu0 0
    %1042 = vmatpush.bf16.msra.mxu0 0
    %1043 = vmatpush.bf16.msra.mxu0 0
    %1044 = vmatpush.bf16.msra.mxu0 0
    %1045 = vmatpush.bf16.msra.mxu0 0
    %1046 = vmatpush.bf16.msra.mxu0 %v1037
    %1047 = vmatmul.bf16.gmra.mxu0 %v1034
    %v1048 = vpop.f32.mrf.mxu0
    %v1049 = vadd.f32 0.0, %v1048
    %v1050 = vpop.f32.mrf.mxu0
    %1051 = vdwg.mxu0
    %1052 = vrot.lane.b32.xlu0 %v985, 64
    %v1053 = vpop.permute.xlu0 %1052
    %v1055 = vsel %vm106, %v1030, 0
    %v1058 = vsel %vm179, %v1053, 0
    %1060 = vmatpush.bf16.msra.mxu0 0
    %1061 = vmatpush.bf16.msra.mxu0 0
    %1062 = vmatpush.bf16.msra.mxu0 0
    %1063 = vmatpush.bf16.msra.mxu0 0
    %1064 = vmatpush.bf16.msra.mxu0 0
    %1065 = vmatpush.bf16.msra.mxu0 0
    %1066 = vmatpush.bf16.msra.mxu0 0
    %1067 = vmatpush.bf16.msra.mxu0 %v1058
    %1068 = vmatmul.bf16.gmra.mxu0 %v1055
    %v1069 = vpop.f32.mrf.mxu0
    %v1070 = vadd.f32 0.0, %v1069
    %v1071 = vpop.f32.mrf.mxu0
    %1072 = vdwg.mxu0
    %1073 = vrot.lane.b32.xlu0 %v961, 120
    %v1074 = vpop.permute.xlu0 %1073
    %1075 = vrot.lane.b32.xlu0 %v961, 88
    %v1076 = vpop.permute.xlu0 %1075
    %v1078 = vsel %vm106, %v1074, 0
    %v1081 = vsel %vm106, %v1076, 0
    %1083 = vmatpush.bf16.xpose.msra.mxu0 0
    %1084 = vmatpush.bf16.xpose.msra.mxu0 0
    %1085 = vmatpush.bf16.xpose.msra.mxu0 0
    %1086 = vmatpush.bf16.xpose.msra.mxu0 0
    %1087 = vmatpush.bf16.xpose.msra.mxu0 0
    %1088 = vmatpush.bf16.xpose.msra.mxu0 0
    %1089 = vmatpush.bf16.xpose.msra.mxu0 0
    %1090 = vmatpush.bf16.xpose.msra.mxu0 %v1081
    %1091 = vmatmul.bf16.gmra.mxu0 %v1078
    %v1092 = vpop.f32.mrf.mxu0
    %v1093 = vadd.f32 0.0, %v1092
    %v1094 = vpop.f32.mrf.mxu0
    %1095 = vdwg.mxu0
    %1096 = vrot.lane.b32.xlu0 %v985, 120
    %v1097 = vpop.permute.xlu0 %1096
    %1098 = vrot.lane.b32.xlu0 %v985, 88
    %v1099 = vpop.permute.xlu0 %1098
    %v1101 = vsel %vm106, %v1097, 0
    %v1104 = vsel %vm106, %v1099, 0
    %1106 = vmatpush.bf16.xpose.msra.mxu0 0
    %1107 = vmatpush.bf16.xpose.msra.mxu0 0
    %1108 = vmatpush.bf16.xpose.msra.mxu0 0
    %1109 = vmatpush.bf16.xpose.msra.mxu0 0
    %1110 = vmatpush.bf16.xpose.msra.mxu0 0
    %1111 = vmatpush.bf16.xpose.msra.mxu0 0
    %1112 = vmatpush.bf16.xpose.msra.mxu0 0
    %1113 = vmatpush.bf16.xpose.msra.mxu0 %v1104
    %1114 = vmatmul.bf16.gmra.mxu0 %v1101
    %v1115 = vpop.f32.mrf.mxu0
    %v1116 = vadd.f32 0.0, %v1115
    %v1117 = vpop.f32.mrf.mxu0
    %1118 = vdwg.mxu0
    %v1119 = vsel %vm106, %v1093, -inf
    %1120 = vmax.xlane.f32.xlu0 %v1119
    %v1121 = vpop.xlane.xlu0 %1120
    %v1122 = vsel %vm106, %v1116, -inf
    %1123 = vmax.xlane.f32.xlu0 %v1122
    %v1124 = vpop.xlane.xlu0 %1123
    %v1125 = vsub.f32 %v1093, %v1121
    %v1126 = vsub.f32 %v1116, %v1124
    %v1127 = vmul.f32 %v1125, 1.442695
    %v1128 = vpow.pop %v1127
    %v1129 = vmul.f32 %v1126, 1.442695
    %v1130 = vpow.pop %v1129
    %v1131 = vsel %vm106, %v1128, 0.0
    %1132 = vadd.xlane.f32.xlu0 %v1131
    %v1133 = vpop.xlane.xlu0 %1132
    %v1134 = vsel %vm106, %v1130, 0.0
    %1135 = vadd.xlane.f32.xlu0 %v1134
    %v1136 = vpop.xlane.xlu0 %1135
    %v1137 = vrcp.pop %v1133
    %v1138 = vrcp.pop %v1136
    %v1139 = vmul.f32 %v1128, %v1137
    %v1140 = vmul.f32 %v1130, %v1138
    %v1141 = vpack.c.bf16 %v1139, %v1139
    %v1142 = vpack.c.bf16 %v1140, %v1140
    %1143 = vrot.lane.b32.xlu0 %v961, 56
    %v1144 = vpop.permute.xlu0 %1143
    %v1146 = vsel %vm106, %v1141, 0
    %v1149 = vsel %vm179, %v1144, 0
    %1151 = vmatpush.bf16.msra.mxu0 0
    %1152 = vmatpush.bf16.msra.mxu0 0
    %1153 = vmatpush.bf16.msra.mxu0 0
    %1154 = vmatpush.bf16.msra.mxu0 0
    %1155 = vmatpush.bf16.msra.mxu0 0
    %1156 = vmatpush.bf16.msra.mxu0 0
    %1157 = vmatpush.bf16.msra.mxu0 0
    %1158 = vmatpush.bf16.msra.mxu0 %v1149
    %1159 = vmatmul.bf16.gmra.mxu0 %v1146
    %v1160 = vpop.f32.mrf.mxu0
    %v1161 = vadd.f32 0.0, %v1160
    %v1162 = vpop.f32.mrf.mxu0
    %1163 = vdwg.mxu0
    %1164 = vrot.lane.b32.xlu0 %v985, 56
    %v1165 = vpop.permute.xlu0 %1164
    %v1167 = vsel %vm106, %v1142, 0
    %v1170 = vsel %vm179, %v1165, 0
    %1172 = vmatpush.bf16.msra.mxu0 0
    %1173 = vmatpush.bf16.msra.mxu0 0
    %1174 = vmatpush.bf16.msra.mxu0 0
    %1175 = vmatpush.bf16.msra.mxu0 0
    %1176 = vmatpush.bf16.msra.mxu0 0
    %1177 = vmatpush.bf16.msra.mxu0 0
    %1178 = vmatpush.bf16.msra.mxu0 0
    %1179 = vmatpush.bf16.msra.mxu0 %v1170
    %1180 = vmatmul.bf16.gmra.mxu0 %v1167
    %v1181 = vpop.f32.mrf.mxu0
    %v1182 = vadd.f32 0.0, %v1181
    %v1183 = vpop.f32.mrf.mxu0
    %1184 = vdwg.mxu0
    %1185 = vrot.lane.b32.xlu0 %v961, 112
    %v1186 = vpop.permute.xlu0 %1185
    %1187 = vrot.lane.b32.xlu0 %v961, 80
    %v1188 = vpop.permute.xlu0 %1187
    %v1190 = vsel %vm106, %v1186, 0
    %v1193 = vsel %vm106, %v1188, 0
    %1195 = vmatpush.bf16.xpose.msra.mxu0 0
    %1196 = vmatpush.bf16.xpose.msra.mxu0 0
    %1197 = vmatpush.bf16.xpose.msra.mxu0 0
    %1198 = vmatpush.bf16.xpose.msra.mxu0 0
    %1199 = vmatpush.bf16.xpose.msra.mxu0 0
    %1200 = vmatpush.bf16.xpose.msra.mxu0 0
    %1201 = vmatpush.bf16.xpose.msra.mxu0 0
    %1202 = vmatpush.bf16.xpose.msra.mxu0 %v1193
    %1203 = vmatmul.bf16.gmra.mxu0 %v1190
    %v1204 = vpop.f32.mrf.mxu0
    %v1205 = vadd.f32 0.0, %v1204
    %v1206 = vpop.f32.mrf.mxu0
    %1207 = vdwg.mxu0
    %1208 = vrot.lane.b32.xlu0 %v985, 112
    %v1209 = vpop.permute.xlu0 %1208
    %1210 = vrot.lane.b32.xlu0 %v985, 80
    %v1211 = vpop.permute.xlu0 %1210
    %v1213 = vsel %vm106, %v1209, 0
    %v1216 = vsel %vm106, %v1211, 0
    %1218 = vmatpush.bf16.xpose.msra.mxu0 0
    %1219 = vmatpush.bf16.xpose.msra.mxu0 0
    %1220 = vmatpush.bf16.xpose.msra.mxu0 0
    %1221 = vmatpush.bf16.xpose.msra.mxu0 0
    %1222 = vmatpush.bf16.xpose.msra.mxu0 0
    %1223 = vmatpush.bf16.xpose.msra.mxu0 0
    %1224 = vmatpush.bf16.xpose.msra.mxu0 0
    %1225 = vmatpush.bf16.xpose.msra.mxu0 %v1216
    %1226 = vmatmul.bf16.gmra.mxu0 %v1213
    %v1227 = vpop.f32.mrf.mxu0
    %v1228 = vadd.f32 0.0, %v1227
    %v1229 = vpop.f32.mrf.mxu0
    %1230 = vdwg.mxu0
    %v1231 = vsel %vm106, %v1205, -inf
    %1232 = vmax.xlane.f32.xlu0 %v1231
    %v1233 = vpop.xlane.xlu0 %1232
    %v1234 = vsel %vm106, %v1228, -inf
    %1235 = vmax.xlane.f32.xlu0 %v1234
    %v1236 = vpop.xlane.xlu0 %1235
    %v1237 = vsub.f32 %v1205, %v1233
    %v1238 = vsub.f32 %v1228, %v1236
    %v1239 = vmul.f32 %v1237, 1.442695
    %v1240 = vpow.pop %v1239
    %v1241 = vmul.f32 %v1238, 1.442695
    %v1242 = vpow.pop %v1241
    %v1243 = vsel %vm106, %v1240, 0.0
    %1244 = vadd.xlane.f32.xlu0 %v1243
    %v1245 = vpop.xlane.xlu0 %1244
    %v1246 = vsel %vm106, %v1242, 0.0
    %1247 = vadd.xlane.f32.xlu0 %v1246
    %v1248 = vpop.xlane.xlu0 %1247
    %v1249 = vrcp.pop %v1245
    %v1250 = vrcp.pop %v1248
    %v1251 = vmul.f32 %v1240, %v1249
    %v1252 = vmul.f32 %v1242, %v1250
    %v1253 = vpack.c.bf16 %v1251, %v1251
    %v1254 = vpack.c.bf16 %v1252, %v1252
    %1255 = vrot.lane.b32.xlu0 %v961, 48
    %v1256 = vpop.permute.xlu0 %1255
    %v1258 = vsel %vm106, %v1253, 0
    %v1261 = vsel %vm179, %v1256, 0
    %1263 = vmatpush.bf16.msra.mxu0 0
    %1264 = vmatpush.bf16.msra.mxu0 0
    %1265 = vmatpush.bf16.msra.mxu0 0
    %1266 = vmatpush.bf16.msra.mxu0 0
    %1267 = vmatpush.bf16.msra.mxu0 0
    %1268 = vmatpush.bf16.msra.mxu0 0
    %1269 = vmatpush.bf16.msra.mxu0 0
    %1270 = vmatpush.bf16.msra.mxu0 %v1261
    %1271 = vmatmul.bf16.gmra.mxu0 %v1258
    %v1272 = vpop.f32.mrf.mxu0
    %v1273 = vadd.f32 0.0, %v1272
    %v1274 = vpop.f32.mrf.mxu0
    %1275 = vdwg.mxu0
    %1276 = vrot.lane.b32.xlu0 %v985, 48
    %v1277 = vpop.permute.xlu0 %1276
    %v1279 = vsel %vm106, %v1254, 0
    %v1282 = vsel %vm179, %v1277, 0
    %1284 = vmatpush.bf16.msra.mxu0 0
    %1285 = vmatpush.bf16.msra.mxu0 0
    %1286 = vmatpush.bf16.msra.mxu0 0
    %1287 = vmatpush.bf16.msra.mxu0 0
    %1288 = vmatpush.bf16.msra.mxu0 0
    %1289 = vmatpush.bf16.msra.mxu0 0
    %1290 = vmatpush.bf16.msra.mxu0 0
    %1291 = vmatpush.bf16.msra.mxu0 %v1282
    %1292 = vmatmul.bf16.gmra.mxu0 %v1279
    %v1293 = vpop.f32.mrf.mxu0
    %v1294 = vadd.f32 0.0, %v1293
    %v1295 = vpop.f32.mrf.mxu0
    %1296 = vdwg.mxu0
    %1297 = vrot.lane.b32.xlu0 %v961, 104
    %v1298 = vpop.permute.xlu0 %1297
    %1299 = vrot.lane.b32.xlu0 %v961, 72
    %v1300 = vpop.permute.xlu0 %1299
    %v1302 = vsel %vm106, %v1298, 0
    %v1305 = vsel %vm106, %v1300, 0
    %1307 = vmatpush.bf16.xpose.msra.mxu0 0
    %1308 = vmatpush.bf16.xpose.msra.mxu0 0
    %1309 = vmatpush.bf16.xpose.msra.mxu0 0
    %1310 = vmatpush.bf16.xpose.msra.mxu0 0
    %1311 = vmatpush.bf16.xpose.msra.mxu0 0
    %1312 = vmatpush.bf16.xpose.msra.mxu0 0
    %1313 = vmatpush.bf16.xpose.msra.mxu0 0
    %1314 = vmatpush.bf16.xpose.msra.mxu0 %v1305
    %1315 = vmatmul.bf16.gmra.mxu0 %v1302
    %v1316 = vpop.f32.mrf.mxu0
    %v1317 = vadd.f32 0.0, %v1316
    %v1318 = vpop.f32.mrf.mxu0
    %1319 = vdwg.mxu0
    %1320 = vrot.lane.b32.xlu0 %v985, 104
    %v1321 = vpop.permute.xlu0 %1320
    %1322 = vrot.lane.b32.xlu0 %v985, 72
    %v1323 = vpop.permute.xlu0 %1322
    %v1325 = vsel %vm106, %v1321, 0
    %v1328 = vsel %vm106, %v1323, 0
    %1330 = vmatpush.bf16.xpose.msra.mxu0 0
    %1331 = vmatpush.bf16.xpose.msra.mxu0 0
    %1332 = vmatpush.bf16.xpose.msra.mxu0 0
    %1333 = vmatpush.bf16.xpose.msra.mxu0 0
    %1334 = vmatpush.bf16.xpose.msra.mxu0 0
    %1335 = vmatpush.bf16.xpose.msra.mxu0 0
    %1336 = vmatpush.bf16.xpose.msra.mxu0 0
    %1337 = vmatpush.bf16.xpose.msra.mxu0 %v1328
    %1338 = vmatmul.bf16.gmra.mxu0 %v1325
    %v1339 = vpop.f32.mrf.mxu0
    %v1340 = vadd.f32 0.0, %v1339
    %v1341 = vpop.f32.mrf.mxu0
    %1342 = vdwg.mxu0
    %v1343 = vsel %vm106, %v1317, -inf
    %1344 = vmax.xlane.f32.xlu0 %v1343
    %v1345 = vpop.xlane.xlu0 %1344
    %v1346 = vsel %vm106, %v1340, -inf
    %1347 = vmax.xlane.f32.xlu0 %v1346
    %v1348 = vpop.xlane.xlu0 %1347
    %v1349 = vsub.f32 %v1317, %v1345
    %v1350 = vsub.f32 %v1340, %v1348
    %v1351 = vmul.f32 %v1349, 1.442695
    %v1352 = vpow.pop %v1351
    %v1353 = vmul.f32 %v1350, 1.442695
    %v1354 = vpow.pop %v1353
    %v1355 = vsel %vm106, %v1352, 0.0
    %1356 = vadd.xlane.f32.xlu0 %v1355
    %v1357 = vpop.xlane.xlu0 %1356
    %v1358 = vsel %vm106, %v1354, 0.0
    %1359 = vadd.xlane.f32.xlu0 %v1358
    %v1360 = vpop.xlane.xlu0 %1359
    %v1361 = vrcp.pop %v1357
    %v1362 = vrcp.pop %v1360
    %v1363 = vmul.f32 %v1352, %v1361
    %v1364 = vmul.f32 %v1354, %v1362
    %v1365 = vpack.c.bf16 %v1363, %v1363
    %v1366 = vpack.c.bf16 %v1364, %v1364
    %1367 = vrot.lane.b32.xlu0 %v961, 40
    %v1368 = vpop.permute.xlu0 %1367
    %v1370 = vsel %vm106, %v1365, 0
    %v1373 = vsel %vm179, %v1368, 0
    %1375 = vmatpush.bf16.msra.mxu0 0
    %1376 = vmatpush.bf16.msra.mxu0 0
    %1377 = vmatpush.bf16.msra.mxu0 0
    %1378 = vmatpush.bf16.msra.mxu0 0
    %1379 = vmatpush.bf16.msra.mxu0 0
    %1380 = vmatpush.bf16.msra.mxu0 0
    %1381 = vmatpush.bf16.msra.mxu0 0
    %1382 = vmatpush.bf16.msra.mxu0 %v1373
    %1383 = vmatmul.bf16.gmra.mxu0 %v1370
    %v1384 = vpop.f32.mrf.mxu0
    %v1385 = vadd.f32 0.0, %v1384
    %v1386 = vpop.f32.mrf.mxu0
    %1387 = vdwg.mxu0
    %1388 = vrot.lane.b32.xlu0 %v985, 40
    %v1389 = vpop.permute.xlu0 %1388
    %v1391 = vsel %vm106, %v1366, 0
    %v1394 = vsel %vm179, %v1389, 0
    %1396 = vmatpush.bf16.msra.mxu0 0
    %1397 = vmatpush.bf16.msra.mxu0 0
    %1398 = vmatpush.bf16.msra.mxu0 0
    %1399 = vmatpush.bf16.msra.mxu0 0
    %1400 = vmatpush.bf16.msra.mxu0 0
    %1401 = vmatpush.bf16.msra.mxu0 0
    %1402 = vmatpush.bf16.msra.mxu0 0
    %1403 = vmatpush.bf16.msra.mxu0 %v1394
    %1404 = vmatmul.bf16.gmra.mxu0 %v1391
    %v1405 = vpop.f32.mrf.mxu0
    %v1406 = vadd.f32 0.0, %v1405
    %v1407 = vpop.f32.mrf.mxu0
    %1408 = vdwg.mxu0
    %1411 = vrot.lane.b32.xlu0 %v1161, 8
    %v1412 = vpop.permute.xlu0 %1411
    %1413 = vrot.lane.b32.xlu0 %v1182, 8
    %v1414 = vpop.permute.xlu0 %1413
    %1419 = vrot.lane.b32.xlu0 %v1273, 16
    %v1420 = vpop.permute.xlu0 %1419
    %1421 = vrot.lane.b32.xlu0 %v1294, 16
    %v1422 = vpop.permute.xlu0 %1421
    %1427 = vrot.lane.b32.xlu0 %v1385, 24
    %v1428 = vpop.permute.xlu0 %1427
    %1429 = vrot.lane.b32.xlu0 %v1406, 24
    %v1430 = vpop.permute.xlu0 %1429
    %v1433 = vsel %vm106, %v1049, %v1412
    %v1434 = vsel %vm106, %v1070, %v1414
    %v1435 = vsel %vm579, %v1433, %v1420
    %v1436 = vsel %vm579, %v1434, %v1422
    %v1437 = vsel %vm582, %v1435, %v1428
    %v1438 = vsel %vm582, %v1436, %v1430
    %s1439 = scalar_lea.vmem %s3, 16
    %v1440 = vld [vmem:[%s1439] sm:$0xf]
    %v1441 = vld [vmem:[%s1439 + $0x4] sm:$0xf]
    %v1442 = vld [vmem:[%s1439 + $0x8] sm:$0xf]
    %v1443 = vld [vmem:[%s1439 + $0xc] sm:$0xf]
    %v1444 = vpack.c.bf16 %v1438, %v1437
    %v1445 = vld [vmem:[#allocation5 + $0x7] sm:$0x1]
    %v1446 = vperm.slane %v1445, 0
    %v1451 = vunpack.c.l.b16 %v1440
    %v1452 = vunpack.c.l.b16 %v1441
    %v1453 = vunpack.c.l.b16 %v1442
    %v1454 = vunpack.c.l.b16 %v1443
    %v1455 = vpack.c.b16 %v1452, %v1451
    %v1456 = vpack.c.b16 %v1454, %v1453
    %v1460 = vsel %vm81, %v1444, 0
    %1462 = vmatpush.bf16.msra.mxu0 0
    %1463 = vmatpush.bf16.msra.mxu0 0
    %1464 = vmatpush.bf16.msra.mxu0 0
    %1465 = vmatpush.bf16.msra.mxu0 0
    %1466 = vmatpush.bf16.msra.mxu0 0
    %1467 = vmatpush.bf16.msra.mxu0 0
    %1468 = vmatpush.bf16.msra.mxu0 %v1456
    %1469 = vmatpush.bf16.msra.mxu0 %v1455
    %1470 = vmatmul.bf16.gmra.mxu0 %v1460
    %v1471 = vpop.f32.mrf.mxu0
    %v1472 = vadd.f32 %v1446, %v1471
    %v1473 = vpop.f32.mrf.mxu0
    %v1474 = vadd.f32 %v1446, %v1473
    %1475 = vdwg.mxu0
    %v1476 = vadd.f32 %v918, %v1472
    %v1477 = vadd.f32 %v919, %v1474
    %v1478 = vld [vmem:[#allocation5 + $0x16] sm:$0x1]
    %v1479 = vld [vmem:[#allocation5 + $0x20] sm:$0x1]
    %v1480 = vsel %vm81, %v1476, 0.0
    %1481 = vadd.xlane.f32.xlu0 %v1480
    %v1482 = vpop.xlane.xlu0 %1481
    %v1483 = vsel %vm81, %v1477, 0.0
    %1484 = vadd.xlane.f32.xlu0 %v1483
    %v1485 = vpop.xlane.xlu0 %1484
    %v1486 = vmul.f32 %v1482, %v637
    %v1487 = vmul.f32 %v1485, %v637
    %v1488 = vsub.f32 %v1476, %v1486
    %v1489 = vsub.f32 %v1477, %v1487
    %v1490 = vmul.f32 %v1488, %v1488
    %v1491 = vmul.f32 %v1489, %v1489
    %v1492 = vsel %vm81, %v1490, 0.0
    %1493 = vadd.xlane.f32.xlu0 %v1492
    %v1494 = vpop.xlane.xlu0 %1493
    %v1495 = vsel %vm81, %v1491, 0.0
    %1496 = vadd.xlane.f32.xlu0 %v1495
    %v1497 = vpop.xlane.xlu0 %1496
    %v1498 = vmul.f32 %v1494, %v637
    %v1499 = vmul.f32 %v1497, %v637
    %v1500 = vadd.f32 %v1498, 1e-05
    %v1501 = vadd.f32 %v1499, 1e-05
    %v1502 = vrsqrt.pop %v1500
    %v1503 = vmul.f32 %v1502, %v1500
    %v1504 = vmul.f32 %v1503, %v1502
    %v1505 = vmul.f32 0.5, %v1504
    %v1506 = vsub.f32 1.5, %v1505
    %v1507 = vmul.f32 %v1502, %v1506
    %vm1508 = vweird.f32 %v1500
    %vm1509 = vweird.f32 %v1502
    %vm1510 = vmor %vm1508, %vm1509
    %v1511 = vsel %vm1510, %v1502, %v1507
    %v1512 = vrsqrt.pop %v1501
    %v1513 = vmul.f32 %v1512, %v1501
    %v1514 = vmul.f32 %v1513, %v1512
    %v1515 = vmul.f32 0.5, %v1514
    %v1516 = vsub.f32 1.5, %v1515
    %v1517 = vmul.f32 %v1512, %v1516
    %vm1518 = vweird.f32 %v1501
    %vm1519 = vweird.f32 %v1512
    %vm1520 = vmor %vm1518, %vm1519
    %v1521 = vsel %vm1520, %v1512, %v1517
    %v1522 = vmul.f32 %v1488, %v1511
    %v1523 = vmul.f32 %v1489, %v1521
    %v1524 = vperm.slane %v1478, 0
    %v1525 = vmul.f32 %v1522, %v1524
    %v1526 = vmul.f32 %v1523, %v1524
    %v1527 = vperm.slane %v1479, 0
    %v1528 = vadd.f32 %v1525, %v1527
    %v1529 = vadd.f32 %v1526, %v1527
    %s1530 = scalar_lea.vmem [#allocation2], 16
    %v1531 = vld [vmem:[%s1530] sm:$0xf]
    %v1532 = vld [vmem:[%s1530 + $0x4] sm:$0xf]
    %v1533 = vld [vmem:[%s1530 + $0x8] sm:$0xf]
    %v1534 = vld [vmem:[%s1530 + $0xc] sm:$0xf]
    %v1535 = vpack.c.bf16 %v1529, %v1528
    %v1536 = vld [vmem:[#allocation5 + $0xd] sm:$0x1]
    %v1537 = vperm.slane %v1536, 0
    %v1542 = vunpack.c.l.b16 %v1531
    %v1543 = vunpack.c.l.b16 %v1532
    %v1544 = vunpack.c.l.b16 %v1533
    %v1545 = vunpack.c.l.b16 %v1534
    %v1546 = vpack.c.b16 %v1543, %v1542
    %v1547 = vpack.c.b16 %v1545, %v1544
    %v1551 = vsel %vm81, %v1535, 0
    %1553 = vmatpush.bf16.msra.mxu0 0
    %1554 = vmatpush.bf16.msra.mxu0 0
    %1555 = vmatpush.bf16.msra.mxu0 0
    %1556 = vmatpush.bf16.msra.mxu0 0
    %1557 = vmatpush.bf16.msra.mxu0 0
    %1558 = vmatpush.bf16.msra.mxu0 0
    %1559 = vmatpush.bf16.msra.mxu0 %v1547
    %1560 = vmatpush.bf16.msra.mxu0 %v1546
    %1561 = vmatmul.bf16.gmra.mxu0 %v1551
    %v1562 = vpop.f32.mrf.mxu0
    %v1563 = vadd.f32 %v1537, %v1562
    %v1564 = vpop.f32.mrf.mxu0
    %v1565 = vadd.f32 %v1537, %v1564
    %1566 = vdwg.mxu0
    %v1567 = vmul.f32 %v1563, 0.5
    %v1568 = vmul.f32 %v1565, 0.5
    %v1569 = vmul.f32 %v1563, %v726
    %v1570 = vmul.f32 %v1565, %v726
    %v1571 = vmul.f32 %v1569, %v1569
    %v1572 = vmin.f32 16.0, %v1571
    %v1573 = vmul.f32 %v1572, 2.1237322e-06
    %v1574 = vadd.f32 %v1573, 0.00028619796
    %v1575 = vmul.f32 %v1572, %v1574
    %v1576 = vadd.f32 %v1575, 0.0036580483
    %v1577 = vmul.f32 %v1572, %v1576
    %v1578 = vadd.f32 %v1577, 0.05243302
    %v1579 = vmul.f32 %v1572, %v1578
    %v1580 = vadd.f32 %v1579, 0.18741608
    %v1581 = vmul.f32 %v1572, %v1580
    %v1582 = vadd.f32 %v1581, 1.1283791
    %v1583 = vmul.f32 %v1569, %v1582
    %v1584 = vmul.f32 %v1572, 3.8918573e-05
    %v1585 = vadd.f32 %v1584, 0.001143296
    %v1586 = vmul.f32 %v1572, %v1585
    %v1587 = vadd.f32 %v1586, 0.014752088
    %v1588 = vmul.f32 %v1572, %v1587
    %v1589 = vadd.f32 %v1588, 0.112945676
    %v1590 = vmul.f32 %v1572, %v1589
    %v1591 = vadd.f32 %v1590, 0.4994258
    %v1592 = vmul.f32 %v1572, %v1591
    %v1593 = vadd.f32 %v1592, 1.0
    %v1594 = vrcp.pop %v1593
    %v1595 = vmul.f32 %v1593, %v1594
    %v1596 = vsub.f32 1.0, %v1595
    %v1597 = vmul.f32 %v1594, %v1596
    %v1598 = vadd.f32 %v1594, %v1597
    %vm1599 = vweird.f32 %v1593
    %vm1600 = vweird.f32 %v1594
    %vm1601 = vmor %vm1599, %vm1600
    %v1602 = vsel %vm1601, %v1594, %v1598
    %v1603 = vand.u32 2147483647, %v1593
    %vm1604 = vcmp.eq.f32.partialorder %v1603, 8.507059e+37
    %v1605 = vand.u32 %v1593, 2147483648
    %v1606 = vor.u32 1.1754944e-38, %v1605
    %v1607 = vsel %vm1604, %v1606, %v1602
    %v1608 = vmul.f32 %v1583, %v1607
    %v1609 = vmin.f32 %v1608, 1.0
    %v1610 = vmax.f32 %v1609, -1.0
    %v1611 = vmul.f32 %v1570, %v1570
    %v1612 = vmin.f32 16.0, %v1611
    %v1613 = vmul.f32 %v1612, 2.1237322e-06
    %v1614 = vadd.f32 %v1613, 0.00028619796
    %v1615 = vmul.f32 %v1612, %v1614
    %v1616 = vadd.f32 %v1615, 0.0036580483
    %v1617 = vmul.f32 %v1612, %v1616
    %v1618 = vadd.f32 %v1617, 0.05243302
    %v1619 = vmul.f32 %v1612, %v1618
    %v1620 = vadd.f32 %v1619, 0.18741608
    %v1621 = vmul.f32 %v1612, %v1620
    %v1622 = vadd.f32 %v1621, 1.1283791
    %v1623 = vmul.f32 %v1570, %v1622
    %v1624 = vmul.f32 %v1612, 3.8918573e-05
    %v1625 = vadd.f32 %v1624, 0.001143296
    %v1626 = vmul.f32 %v1612, %v1625
    %v1627 = vadd.f32 %v1626, 0.014752088
    %v1628 = vmul.f32 %v1612, %v1627
    %v1629 = vadd.f32 %v1628, 0.112945676
    %v1630 = vmul.f32 %v1612, %v1629
    %v1631 = vadd.f32 %v1630, 0.4994258
    %v1632 = vmul.f32 %v1612, %v1631
    %v1633 = vadd.f32 %v1632, 1.0
    %v1634 = vrcp.pop %v1633
    %v1635 = vmul.f32 %v1633, %v1634
    %v1636 = vsub.f32 1.0, %v1635
    %v1637 = vmul.f32 %v1634, %v1636
    %v1638 = vadd.f32 %v1634, %v1637
    %vm1639 = vweird.f32 %v1633
    %vm1640 = vweird.f32 %v1634
    %vm1641 = vmor %vm1639, %vm1640
    %v1642 = vsel %vm1641, %v1634, %v1638
    %v1643 = vand.u32 2147483647, %v1633
    %vm1644 = vcmp.eq.f32.partialorder %v1643, 8.507059e+37
    %v1645 = vand.u32 %v1633, 2147483648
    %v1646 = vor.u32 1.1754944e-38, %v1645
    %v1647 = vsel %vm1644, %v1646, %v1642
    %v1648 = vmul.f32 %v1623, %v1647
    %v1649 = vmin.f32 %v1648, 1.0
    %v1650 = vmax.f32 %v1649, -1.0
    %v1651 = vadd.f32 %v1610, 1.0
    %v1652 = vadd.f32 %v1650, 1.0
    %v1653 = vmul.f32 %v1567, %v1651
    %v1654 = vmul.f32 %v1568, %v1652
    %s1655 = scalar_lea.vmem %s5, 32
    %v1656 = vld [vmem:[%s1655] sm:$0xf]
    %v1657 = vld [vmem:[%s1655 + $0x4] sm:$0xf]
    %v1658 = vld [vmem:[%s1655 + $0x8] sm:$0xf]
    %v1659 = vld [vmem:[%s1655 + $0xc] sm:$0xf]
    %v1660 = vld [vmem:[%s1655 + $0x10] sm:$0xf]
    %v1661 = vld [vmem:[%s1655 + $0x14] sm:$0xf]
    %v1662 = vld [vmem:[%s1655 + $0x18] sm:$0xf]
    %v1663 = vld [vmem:[%s1655 + $0x1c] sm:$0xf]
    %v1664 = vpack.c.bf16 %v1654, %v1653
    %v1665 = vld [vmem:[#allocation5 + $0x11] sm:$0x1]
    %v1666 = vperm.slane %v1665, 0
    %v1675 = vunpack.c.l.b16 %v1656
    %v1676 = vunpack.c.l.b16 %v1657
    %v1677 = vunpack.c.l.b16 %v1658
    %v1678 = vunpack.c.l.b16 %v1659
    %v1679 = vunpack.c.l.b16 %v1660
    %v1680 = vunpack.c.l.b16 %v1661
    %v1681 = vunpack.c.l.b16 %v1662
    %v1682 = vunpack.c.l.b16 %v1663
    %v1683 = vpack.c.b16 %v1676, %v1675
    %v1684 = vpack.c.b16 %v1678, %v1677
    %v1685 = vpack.c.b16 %v1680, %v1679
    %v1686 = vpack.c.b16 %v1682, %v1681
    %v1692 = vsel %vm848, %v1664, 0
    %1694 = vmatpush.bf16.msra.mxu0 0
    %1695 = vmatpush.bf16.msra.mxu0 0
    %1696 = vmatpush.bf16.msra.mxu0 0
    %1697 = vmatpush.bf16.msra.mxu0 0
    %1698 = vmatpush.bf16.msra.mxu0 %v1686
    %1699 = vmatpush.bf16.msra.mxu0 %v1685
    %1700 = vmatpush.bf16.msra.mxu0 %v1684
    %1701 = vmatpush.bf16.msra.mxu0 %v1683
    %1702 = vmatmul.bf16.gmra.mxu0 %v1692
    %v1703 = vpop.f32.mrf.mxu0
    %v1704 = vadd.f32 %v1666, %v1703
    %v1705 = vpop.f32.mrf.mxu0
    %v1706 = vadd.f32 %v1666, %v1705
    %1707 = vdwg.mxu0
    %v1708 = vadd.f32 %v1528, %v1704
    %v1709 = vadd.f32 %v1529, %v1706
    %v1710 = vld [vmem:[#allocation5 + $0x17] sm:$0x1]
    %v1711 = vld [vmem:[#allocation5 + $0x21] sm:$0x1]
    %v1712 = vsel %vm81, %v1708, 0.0
    %1713 = vadd.xlane.f32.xlu0 %v1712
    %v1714 = vpop.xlane.xlu0 %1713
    %v1715 = vsel %vm81, %v1709, 0.0
    %1716 = vadd.xlane.f32.xlu0 %v1715
    %v1717 = vpop.xlane.xlu0 %1716
    %v1718 = vmul.f32 %v1714, %v637
    %v1719 = vmul.f32 %v1717, %v637
    %v1720 = vsub.f32 %v1708, %v1718
    %v1721 = vsub.f32 %v1709, %v1719
    %v1722 = vmul.f32 %v1720, %v1720
    %v1723 = vmul.f32 %v1721, %v1721
    %v1724 = vsel %vm81, %v1722, 0.0
    %1725 = vadd.xlane.f32.xlu0 %v1724
    %v1726 = vpop.xlane.xlu0 %1725
    %v1727 = vsel %vm81, %v1723, 0.0
    %1728 = vadd.xlane.f32.xlu0 %v1727
    %v1729 = vpop.xlane.xlu0 %1728
    %v1730 = vmul.f32 %v1726, %v637
    %v1731 = vmul.f32 %v1729, %v637
    %v1732 = vadd.f32 %v1730, 1e-05
    %v1733 = vadd.f32 %v1731, 1e-05
    %v1734 = vrsqrt.pop %v1732
    %v1735 = vmul.f32 %v1734, %v1732
    %v1736 = vmul.f32 %v1735, %v1734
    %v1737 = vmul.f32 0.5, %v1736
    %v1738 = vsub.f32 1.5, %v1737
    %v1739 = vmul.f32 %v1734, %v1738
    %vm1740 = vweird.f32 %v1732
    %vm1741 = vweird.f32 %v1734
    %vm1742 = vmor %vm1740, %vm1741
    %v1743 = vsel %vm1742, %v1734, %v1739
    %v1744 = vrsqrt.pop %v1733
    %v1745 = vmul.f32 %v1744, %v1733
    %v1746 = vmul.f32 %v1745, %v1744
    %v1747 = vmul.f32 0.5, %v1746
    %v1748 = vsub.f32 1.5, %v1747
    %v1749 = vmul.f32 %v1744, %v1748
    %vm1750 = vweird.f32 %v1733
    %vm1751 = vweird.f32 %v1744
    %vm1752 = vmor %vm1750, %vm1751
    %v1753 = vsel %vm1752, %v1744, %v1749
    %v1754 = vmul.f32 %v1720, %v1743
    %v1755 = vmul.f32 %v1721, %v1753
    %v1756 = vperm.slane %v1710, 0
    %v1757 = vmul.f32 %v1754, %v1756
    %v1758 = vmul.f32 %v1755, %v1756
    %v1759 = vperm.slane %v1711, 0
    %v1760 = vadd.f32 %v1757, %v1759
    %v1761 = vadd.f32 %v1758, %v1759
    %v1762 = vld [vmem:[%s1] sm:$0xff]
    %v1763 = vld [vmem:[%s1 + $0x8] sm:$0xff]
    %s1764 = scalar_lea.vmem %s2, 32
    %v1765 = vld [vmem:[%s1764] sm:$0xf]
    %v1766 = vld [vmem:[%s1764 + $0x4] sm:$0xf]
    %v1767 = vld [vmem:[%s1764 + $0x8] sm:$0xf]
    %v1768 = vld [vmem:[%s1764 + $0xc] sm:$0xf]
    %v1769 = vld [vmem:[#allocation5 + $0x2] sm:$0x1]
    %v1770 = vpack.c.bf16 %v1761, %v1760
    %v1771 = vperm.slane %v1769, 0
    %v1776 = vunpack.c.l.b16 %v1765
    %v1777 = vunpack.c.l.b16 %v1766
    %v1778 = vunpack.c.l.b16 %v1767
    %v1779 = vunpack.c.l.b16 %v1768
    %v1780 = vpack.c.b16 %v1777, %v1776
    %v1781 = vpack.c.b16 %v1779, %v1778
    %v1785 = vsel %vm81, %v1770, 0
    %1787 = vmatpush.bf16.msra.mxu0 0
    %1788 = vmatpush.bf16.msra.mxu0 0
    %1789 = vmatpush.bf16.msra.mxu0 0
    %1790 = vmatpush.bf16.msra.mxu0 0
    %1791 = vmatpush.bf16.msra.mxu0 0
    %1792 = vmatpush.bf16.msra.mxu0 0
    %1793 = vmatpush.bf16.msra.mxu0 %v1781
    %1794 = vmatpush.bf16.msra.mxu0 %v1780
    %1795 = vmatmul.bf16.gmra.mxu0 %v1785
    %v1796 = vpop.f32.mrf.mxu0
    %v1797 = vadd.f32 %v1771, %v1796
    %v1798 = vpop.f32.mrf.mxu0
    %v1799 = vadd.f32 %v1771, %v1798
    %1800 = vdwg.mxu0
    %v1801 = vpack.c.bf16 %v1797, %v1797
    %v1802 = vpack.c.bf16 %v1799, %v1799
    %v1804 = vunpack.c.l.b16 %v1801
    %v1805 = vpack.c.b16 %v1804, %v1804
    %1806 = vrot.lane.b32.xlu0 %v1805, 96
    %v1807 = vpop.permute.xlu0 %1806
    %v1809 = vsel %vm106, %v1801, 0
    %v1812 = vsel %vm106, %v1807, 0
    %1814 = vmatpush.bf16.xpose.msra.mxu0 0
    %1815 = vmatpush.bf16.xpose.msra.mxu0 0
    %1816 = vmatpush.bf16.xpose.msra.mxu0 0
    %1817 = vmatpush.bf16.xpose.msra.mxu0 0
    %1818 = vmatpush.bf16.xpose.msra.mxu0 0
    %1819 = vmatpush.bf16.xpose.msra.mxu0 0
    %1820 = vmatpush.bf16.xpose.msra.mxu0 0
    %1821 = vmatpush.bf16.xpose.msra.mxu0 %v1812
    %1822 = vmatmul.bf16.gmra.mxu0 %v1809
    %v1823 = vpop.f32.mrf.mxu0
    %v1824 = vadd.f32 0.0, %v1823
    %v1825 = vpop.f32.mrf.mxu0
    %1826 = vdwg.mxu0
    %v1828 = vunpack.c.l.b16 %v1802
    %v1829 = vpack.c.b16 %v1828, %v1828
    %1830 = vrot.lane.b32.xlu0 %v1829, 96
    %v1831 = vpop.permute.xlu0 %1830
    %v1833 = vsel %vm106, %v1802, 0
    %v1836 = vsel %vm106, %v1831, 0
    %1838 = vmatpush.bf16.xpose.msra.mxu0 0
    %1839 = vmatpush.bf16.xpose.msra.mxu0 0
    %1840 = vmatpush.bf16.xpose.msra.mxu0 0
    %1841 = vmatpush.bf16.xpose.msra.mxu0 0
    %1842 = vmatpush.bf16.xpose.msra.mxu0 0
    %1843 = vmatpush.bf16.xpose.msra.mxu0 0
    %1844 = vmatpush.bf16.xpose.msra.mxu0 0
    %1845 = vmatpush.bf16.xpose.msra.mxu0 %v1836
    %1846 = vmatmul.bf16.gmra.mxu0 %v1833
    %v1847 = vpop.f32.mrf.mxu0
    %v1848 = vadd.f32 0.0, %v1847
    %v1849 = vpop.f32.mrf.mxu0
    %1850 = vdwg.mxu0
    %v1851 = vsel %vm106, %v1824, -inf
    %1852 = vmax.xlane.f32.xlu0 %v1851
    %v1853 = vpop.xlane.xlu0 %1852
    %v1854 = vsel %vm106, %v1848, -inf
    %1855 = vmax.xlane.f32.xlu0 %v1854
    %v1856 = vpop.xlane.xlu0 %1855
    %v1857 = vsub.f32 %v1824, %v1853
    %v1858 = vsub.f32 %v1848, %v1856
    %v1859 = vmul.f32 %v1857, 1.442695
    %v1860 = vpow.pop %v1859
    %v1861 = vmul.f32 %v1858, 1.442695
    %v1862 = vpow.pop %v1861
    %v1863 = vsel %vm106, %v1860, 0.0
    %1864 = vadd.xlane.f32.xlu0 %v1863
    %v1865 = vpop.xlane.xlu0 %1864
    %v1866 = vsel %vm106, %v1862, 0.0
    %1867 = vadd.xlane.f32.xlu0 %v1866
    %v1868 = vpop.xlane.xlu0 %1867
    %v1869 = vrcp.pop %v1865
    %v1870 = vrcp.pop %v1868
    %v1871 = vmul.f32 %v1860, %v1869
    %v1872 = vmul.f32 %v1862, %v1870
    %v1873 = vpack.c.bf16 %v1871, %v1871
    %v1874 = vpack.c.bf16 %v1872, %v1872
    %1875 = vrot.lane.b32.xlu0 %v1805, 64
    %v1876 = vpop.permute.xlu0 %1875
    %v1878 = vsel %vm106, %v1873, 0
    %v1881 = vsel %vm179, %v1876, 0
    %1883 = vmatpush.bf16.msra.mxu0 0
    %1884 = vmatpush.bf16.msra.mxu0 0
    %1885 = vmatpush.bf16.msra.mxu0 0
    %1886 = vmatpush.bf16.msra.mxu0 0
    %1887 = vmatpush.bf16.msra.mxu0 0
    %1888 = vmatpush.bf16.msra.mxu0 0
    %1889 = vmatpush.bf16.msra.mxu0 0
    %1890 = vmatpush.bf16.msra.mxu0 %v1881
    %1891 = vmatmul.bf16.gmra.mxu0 %v1878
    %v1892 = vpop.f32.mrf.mxu0
    %v1893 = vadd.f32 0.0, %v1892
    %v1894 = vpop.f32.mrf.mxu0
    %1895 = vdwg.mxu0
    %1896 = vrot.lane.b32.xlu0 %v1829, 64
    %v1897 = vpop.permute.xlu0 %1896
    %v1899 = vsel %vm106, %v1874, 0
    %v1902 = vsel %vm179, %v1897, 0
    %1904 = vmatpush.bf16.msra.mxu0 0
    %1905 = vmatpush.bf16.msra.mxu0 0
    %1906 = vmatpush.bf16.msra.mxu0 0
    %1907 = vmatpush.bf16.msra.mxu0 0
    %1908 = vmatpush.bf16.msra.mxu0 0
    %1909 = vmatpush.bf16.msra.mxu0 0
    %1910 = vmatpush.bf16.msra.mxu0 0
    %1911 = vmatpush.bf16.msra.mxu0 %v1902
    %1912 = vmatmul.bf16.gmra.mxu0 %v1899
    %v1913 = vpop.f32.mrf.mxu0
    %v1914 = vadd.f32 0.0, %v1913
    %v1915 = vpop.f32.mrf.mxu0
    %1916 = vdwg.mxu0
    %1917 = vrot.lane.b32.xlu0 %v1805, 120
    %v1918 = vpop.permute.xlu0 %1917
    %1919 = vrot.lane.b32.xlu0 %v1805, 88
    %v1920 = vpop.permute.xlu0 %1919
    %v1922 = vsel %vm106, %v1918, 0
    %v1925 = vsel %vm106, %v1920, 0
    %1927 = vmatpush.bf16.xpose.msra.mxu0 0
    %1928 = vmatpush.bf16.xpose.msra.mxu0 0
    %1929 = vmatpush.bf16.xpose.msra.mxu0 0
    %1930 = vmatpush.bf16.xpose.msra.mxu0 0
    %1931 = vmatpush.bf16.xpose.msra.mxu0 0
    %1932 = vmatpush.bf16.xpose.msra.mxu0 0
    %1933 = vmatpush.bf16.xpose.msra.mxu0 0
    %1934 = vmatpush.bf16.xpose.msra.mxu0 %v1925
    %1935 = vmatmul.bf16.gmra.mxu0 %v1922
    %v1936 = vpop.f32.mrf.mxu0
    %v1937 = vadd.f32 0.0, %v1936
    %v1938 = vpop.f32.mrf.mxu0
    %1939 = vdwg.mxu0
    %1940 = vrot.lane.b32.xlu0 %v1829, 120
    %v1941 = vpop.permute.xlu0 %1940
    %1942 = vrot.lane.b32.xlu0 %v1829, 88
    %v1943 = vpop.permute.xlu0 %1942
    %v1945 = vsel %vm106, %v1941, 0
    %v1948 = vsel %vm106, %v1943, 0
    %1950 = vmatpush.bf16.xpose.msra.mxu0 0
    %1951 = vmatpush.bf16.xpose.msra.mxu0 0
    %1952 = vmatpush.bf16.xpose.msra.mxu0 0
    %1953 = vmatpush.bf16.xpose.msra.mxu0 0
    %1954 = vmatpush.bf16.xpose.msra.mxu0 0
    %1955 = vmatpush.bf16.xpose.msra.mxu0 0
    %1956 = vmatpush.bf16.xpose.msra.mxu0 0
    %1957 = vmatpush.bf16.xpose.msra.mxu0 %v1948
    %1958 = vmatmul.bf16.gmra.mxu0 %v1945
    %v1959 = vpop.f32.mrf.mxu0
    %v1960 = vadd.f32 0.0, %v1959
    %v1961 = vpop.f32.mrf.mxu0
    %1962 = vdwg.mxu0
    %v1963 = vsel %vm106, %v1937, -inf
    %1964 = vmax.xlane.f32.xlu0 %v1963
    %v1965 = vpop.xlane.xlu0 %1964
    %v1966 = vsel %vm106, %v1960, -inf
    %1967 = vmax.xlane.f32.xlu0 %v1966
    %v1968 = vpop.xlane.xlu0 %1967
    %v1969 = vsub.f32 %v1937, %v1965
    %v1970 = vsub.f32 %v1960, %v1968
    %v1971 = vmul.f32 %v1969, 1.442695
    %v1972 = vpow.pop %v1971
    %v1973 = vmul.f32 %v1970, 1.442695
    %v1974 = vpow.pop %v1973
    %v1975 = vsel %vm106, %v1972, 0.0
    %1976 = vadd.xlane.f32.xlu0 %v1975
    %v1977 = vpop.xlane.xlu0 %1976
    %v1978 = vsel %vm106, %v1974, 0.0
    %1979 = vadd.xlane.f32.xlu0 %v1978
    %v1980 = vpop.xlane.xlu0 %1979
    %v1981 = vrcp.pop %v1977
    %v1982 = vrcp.pop %v1980
    %v1983 = vmul.f32 %v1972, %v1981
    %v1984 = vmul.f32 %v1974, %v1982
    %v1985 = vpack.c.bf16 %v1983, %v1983
    %v1986 = vpack.c.bf16 %v1984, %v1984
    %1987 = vrot.lane.b32.xlu0 %v1805, 56
    %v1988 = vpop.permute.xlu0 %1987
    %v1990 = vsel %vm106, %v1985, 0
    %v1993 = vsel %vm179, %v1988, 0
    %1995 = vmatpush.bf16.msra.mxu0 0
    %1996 = vmatpush.bf16.msra.mxu0 0
    %1997 = vmatpush.bf16.msra.mxu0 0
    %1998 = vmatpush.bf16.msra.mxu0 0
    %1999 = vmatpush.bf16.msra.mxu0 0
    %2000 = vmatpush.bf16.msra.mxu0 0
    %2001 = vmatpush.bf16.msra.mxu0 0
    %2002 = vmatpush.bf16.msra.mxu0 %v1993
    %2003 = vmatmul.bf16.gmra.mxu0 %v1990
    %v2004 = vpop.f32.mrf.mxu0
    %v2005 = vadd.f32 0.0, %v2004
    %v2006 = vpop.f32.mrf.mxu0
    %2007 = vdwg.mxu0
    %2008 = vrot.lane.b32.xlu0 %v1829, 56
    %v2009 = vpop.permute.xlu0 %2008
    %v2011 = vsel %vm106, %v1986, 0
    %v2014 = vsel %vm179, %v2009, 0
    %2016 = vmatpush.bf16.msra.mxu0 0
    %2017 = vmatpush.bf16.msra.mxu0 0
    %2018 = vmatpush.bf16.msra.mxu0 0
    %2019 = vmatpush.bf16.msra.mxu0 0
    %2020 = vmatpush.bf16.msra.mxu0 0
    %2021 = vmatpush.bf16.msra.mxu0 0
    %2022 = vmatpush.bf16.msra.mxu0 0
    %2023 = vmatpush.bf16.msra.mxu0 %v2014
    %2024 = vmatmul.bf16.gmra.mxu0 %v2011
    %v2025 = vpop.f32.mrf.mxu0
    %v2026 = vadd.f32 0.0, %v2025
    %v2027 = vpop.f32.mrf.mxu0
    %2028 = vdwg.mxu0
    %2029 = vrot.lane.b32.xlu0 %v1805, 112
    %v2030 = vpop.permute.xlu0 %2029
    %2031 = vrot.lane.b32.xlu0 %v1805, 80
    %v2032 = vpop.permute.xlu0 %2031
    %v2034 = vsel %vm106, %v2030, 0
    %v2037 = vsel %vm106, %v2032, 0
    %2039 = vmatpush.bf16.xpose.msra.mxu0 0
    %2040 = vmatpush.bf16.xpose.msra.mxu0 0
    %2041 = vmatpush.bf16.xpose.msra.mxu0 0
    %2042 = vmatpush.bf16.xpose.msra.mxu0 0
    %2043 = vmatpush.bf16.xpose.msra.mxu0 0
    %2044 = vmatpush.bf16.xpose.msra.mxu0 0
    %2045 = vmatpush.bf16.xpose.msra.mxu0 0
    %2046 = vmatpush.bf16.xpose.msra.mxu0 %v2037
    %2047 = vmatmul.bf16.gmra.mxu0 %v2034
    %v2048 = vpop.f32.mrf.mxu0
    %v2049 = vadd.f32 0.0, %v2048
    %v2050 = vpop.f32.mrf.mxu0
    %2051 = vdwg.mxu0
    %2052 = vrot.lane.b32.xlu0 %v1829, 112
    %v2053 = vpop.permute.xlu0 %2052
    %2054 = vrot.lane.b32.xlu0 %v1829, 80
    %v2055 = vpop.permute.xlu0 %2054
    %v2057 = vsel %vm106, %v2053, 0
    %v2060 = vsel %vm106, %v2055, 0
    %2062 = vmatpush.bf16.xpose.msra.mxu0 0
    %2063 = vmatpush.bf16.xpose.msra.mxu0 0
    %2064 = vmatpush.bf16.xpose.msra.mxu0 0
    %2065 = vmatpush.bf16.xpose.msra.mxu0 0
    %2066 = vmatpush.bf16.xpose.msra.mxu0 0
    %2067 = vmatpush.bf16.xpose.msra.mxu0 0
    %2068 = vmatpush.bf16.xpose.msra.mxu0 0
    %2069 = vmatpush.bf16.xpose.msra.mxu0 %v2060
    %2070 = vmatmul.bf16.gmra.mxu0 %v2057
    %v2071 = vpop.f32.mrf.mxu0
    %v2072 = vadd.f32 0.0, %v2071
    %v2073 = vpop.f32.mrf.mxu0
    %2074 = vdwg.mxu0
    %v2075 = vsel %vm106, %v2049, -inf
    %2076 = vmax.xlane.f32.xlu0 %v2075
    %v2077 = vpop.xlane.xlu0 %2076
    %v2078 = vsel %vm106, %v2072, -inf
    %2079 = vmax.xlane.f32.xlu0 %v2078
    %v2080 = vpop.xlane.xlu0 %2079
    %v2081 = vsub.f32 %v2049, %v2077
    %v2082 = vsub.f32 %v2072, %v2080
    %v2083 = vmul.f32 %v2081, 1.442695
    %v2084 = vpow.pop %v2083
    %v2085 = vmul.f32 %v2082, 1.442695
    %v2086 = vpow.pop %v2085
    %v2087 = vsel %vm106, %v2084, 0.0
    %2088 = vadd.xlane.f32.xlu0 %v2087
    %v2089 = vpop.xlane.xlu0 %2088
    %v2090 = vsel %vm106, %v2086, 0.0
    %2091 = vadd.xlane.f32.xlu0 %v2090
    %v2092 = vpop.xlane.xlu0 %2091
    %v2093 = vrcp.pop %v2089
    %v2094 = vrcp.pop %v2092
    %v2095 = vmul.f32 %v2084, %v2093
    %v2096 = vmul.f32 %v2086, %v2094
    %v2097 = vpack.c.bf16 %v2095, %v2095
    %v2098 = vpack.c.bf16 %v2096, %v2096
    %2099 = vrot.lane.b32.xlu0 %v1805, 48
    %v2100 = vpop.permute.xlu0 %2099
    %v2102 = vsel %vm106, %v2097, 0
    %v2105 = vsel %vm179, %v2100, 0
    %2107 = vmatpush.bf16.msra.mxu0 0
    %2108 = vmatpush.bf16.msra.mxu0 0
    %2109 = vmatpush.bf16.msra.mxu0 0
    %2110 = vmatpush.bf16.msra.mxu0 0
    %2111 = vmatpush.bf16.msra.mxu0 0
    %2112 = vmatpush.bf16.msra.mxu0 0
    %2113 = vmatpush.bf16.msra.mxu0 0
    %2114 = vmatpush.bf16.msra.mxu0 %v2105
    %2115 = vmatmul.bf16.gmra.mxu0 %v2102
    %v2116 = vpop.f32.mrf.mxu0
    %v2117 = vadd.f32 0.0, %v2116
    %v2118 = vpop.f32.mrf.mxu0
    %2119 = vdwg.mxu0
    %2120 = vrot.lane.b32.xlu0 %v1829, 48
    %v2121 = vpop.permute.xlu0 %2120
    %v2123 = vsel %vm106, %v2098, 0
    %v2126 = vsel %vm179, %v2121, 0
    %2128 = vmatpush.bf16.msra.mxu0 0
    %2129 = vmatpush.bf16.msra.mxu0 0
    %2130 = vmatpush.bf16.msra.mxu0 0
    %2131 = vmatpush.bf16.msra.mxu0 0
    %2132 = vmatpush.bf16.msra.mxu0 0
    %2133 = vmatpush.bf16.msra.mxu0 0
    %2134 = vmatpush.bf16.msra.mxu0 0
    %2135 = vmatpush.bf16.msra.mxu0 %v2126
    %2136 = vmatmul.bf16.gmra.mxu0 %v2123
    %v2137 = vpop.f32.mrf.mxu0
    %v2138 = vadd.f32 0.0, %v2137
    %v2139 = vpop.f32.mrf.mxu0
    %2140 = vdwg.mxu0
    %2141 = vrot.lane.b32.xlu0 %v1805, 104
    %v2142 = vpop.permute.xlu0 %2141
    %2143 = vrot.lane.b32.xlu0 %v1805, 72
    %v2144 = vpop.permute.xlu0 %2143
    %v2146 = vsel %vm106, %v2142, 0
    %v2149 = vsel %vm106, %v2144, 0
    %2151 = vmatpush.bf16.xpose.msra.mxu0 0
    %2152 = vmatpush.bf16.xpose.msra.mxu0 0
    %2153 = vmatpush.bf16.xpose.msra.mxu0 0
    %2154 = vmatpush.bf16.xpose.msra.mxu0 0
    %2155 = vmatpush.bf16.xpose.msra.mxu0 0
    %2156 = vmatpush.bf16.xpose.msra.mxu0 0
    %2157 = vmatpush.bf16.xpose.msra.mxu0 0
    %2158 = vmatpush.bf16.xpose.msra.mxu0 %v2149
    %2159 = vmatmul.bf16.gmra.mxu0 %v2146
    %v2160 = vpop.f32.mrf.mxu0
    %v2161 = vadd.f32 0.0, %v2160
    %v2162 = vpop.f32.mrf.mxu0
    %2163 = vdwg.mxu0
    %2164 = vrot.lane.b32.xlu0 %v1829, 104
    %v2165 = vpop.permute.xlu0 %2164
    %2166 = vrot.lane.b32.xlu0 %v1829, 72
    %v2167 = vpop.permute.xlu0 %2166
    %v2169 = vsel %vm106, %v2165, 0
    %v2172 = vsel %vm106, %v2167, 0
    %2174 = vmatpush.bf16.xpose.msra.mxu0 0
    %2175 = vmatpush.bf16.xpose.msra.mxu0 0
    %2176 = vmatpush.bf16.xpose.msra.mxu0 0
    %2177 = vmatpush.bf16.xpose.msra.mxu0 0
    %2178 = vmatpush.bf16.xpose.msra.mxu0 0
    %2179 = vmatpush.bf16.xpose.msra.mxu0 0
    %2180 = vmatpush.bf16.xpose.msra.mxu0 0
    %2181 = vmatpush.bf16.xpose.msra.mxu0 %v2172
    %2182 = vmatmul.bf16.gmra.mxu0 %v2169
    %v2183 = vpop.f32.mrf.mxu0
    %v2184 = vadd.f32 0.0, %v2183
    %v2185 = vpop.f32.mrf.mxu0
    %2186 = vdwg.mxu0
    %v2187 = vsel %vm106, %v2161, -inf
    %2188 = vmax.xlane.f32.xlu0 %v2187
    %v2189 = vpop.xlane.xlu0 %2188
    %v2190 = vsel %vm106, %v2184, -inf
    %2191 = vmax.xlane.f32.xlu0 %v2190
    %v2192 = vpop.xlane.xlu0 %2191
    %v2193 = vsub.f32 %v2161, %v2189
    %v2194 = vsub.f32 %v2184, %v2192
    %v2195 = vmul.f32 %v2193, 1.442695
    %v2196 = vpow.pop %v2195
    %v2197 = vmul.f32 %v2194, 1.442695
    %v2198 = vpow.pop %v2197
    %v2199 = vsel %vm106, %v2196, 0.0
    %2200 = vadd.xlane.f32.xlu0 %v2199
    %v2201 = vpop.xlane.xlu0 %2200
    %v2202 = vsel %vm106, %v2198, 0.0
    %2203 = vadd.xlane.f32.xlu0 %v2202
    %v2204 = vpop.xlane.xlu0 %2203
    %v2205 = vrcp.pop %v2201
    %v2206 = vrcp.pop %v2204
    %v2207 = vmul.f32 %v2196, %v2205
    %v2208 = vmul.f32 %v2198, %v2206
    %v2209 = vpack.c.bf16 %v2207, %v2207
    %v2210 = vpack.c.bf16 %v2208, %v2208
    %2211 = vrot.lane.b32.xlu0 %v1805, 40
    %v2212 = vpop.permute.xlu0 %2211
    %v2214 = vsel %vm106, %v2209, 0
    %v2217 = vsel %vm179, %v2212, 0
    %2219 = vmatpush.bf16.msra.mxu0 0
    %2220 = vmatpush.bf16.msra.mxu0 0
    %2221 = vmatpush.bf16.msra.mxu0 0
    %2222 = vmatpush.bf16.msra.mxu0 0
    %2223 = vmatpush.bf16.msra.mxu0 0
    %2224 = vmatpush.bf16.msra.mxu0 0
    %2225 = vmatpush.bf16.msra.mxu0 0
    %2226 = vmatpush.bf16.msra.mxu0 %v2217
    %2227 = vmatmul.bf16.gmra.mxu0 %v2214
    %v2228 = vpop.f32.mrf.mxu0
    %v2229 = vadd.f32 0.0, %v2228
    %v2230 = vpop.f32.mrf.mxu0
    %2231 = vdwg.mxu0
    %2232 = vrot.lane.b32.xlu0 %v1829, 40
    %v2233 = vpop.permute.xlu0 %2232
    %v2235 = vsel %vm106, %v2210, 0
    %v2238 = vsel %vm179, %v2233, 0
    %2240 = vmatpush.bf16.msra.mxu0 0
    %2241 = vmatpush.bf16.msra.mxu0 0
    %2242 = vmatpush.bf16.msra.mxu0 0
    %2243 = vmatpush.bf16.msra.mxu0 0
    %2244 = vmatpush.bf16.msra.mxu0 0
    %2245 = vmatpush.bf16.msra.mxu0 0
    %2246 = vmatpush.bf16.msra.mxu0 0
    %2247 = vmatpush.bf16.msra.mxu0 %v2238
    %2248 = vmatmul.bf16.gmra.mxu0 %v2235
    %v2249 = vpop.f32.mrf.mxu0
    %v2250 = vadd.f32 0.0, %v2249
    %v2251 = vpop.f32.mrf.mxu0
    %2252 = vdwg.mxu0
    %2255 = vrot.lane.b32.xlu0 %v2005, 8
    %v2256 = vpop.permute.xlu0 %2255
    %2257 = vrot.lane.b32.xlu0 %v2026, 8
    %v2258 = vpop.permute.xlu0 %2257
    %2263 = vrot.lane.b32.xlu0 %v2117, 16
    %v2264 = vpop.permute.xlu0 %2263
    %2265 = vrot.lane.b32.xlu0 %v2138, 16
    %v2266 = vpop.permute.xlu0 %2265
    %2271 = vrot.lane.b32.xlu0 %v2229, 24
    %v2272 = vpop.permute.xlu0 %2271
    %2273 = vrot.lane.b32.xlu0 %v2250, 24
    %v2274 = vpop.permute.xlu0 %2273
    %v2277 = vsel %vm106, %v1893, %v2256
    %v2278 = vsel %vm106, %v1914, %v2258
    %v2279 = vsel %vm579, %v2277, %v2264
    %v2280 = vsel %vm579, %v2278, %v2266
    %v2281 = vsel %vm582, %v2279, %v2272
    %v2282 = vsel %vm582, %v2280, %v2274
    %s2283 = scalar_lea.vmem %s3, 32
    %v2284 = vld [vmem:[%s2283] sm:$0xf]
    %v2285 = vld [vmem:[%s2283 + $0x4] sm:$0xf]
    %v2286 = vld [vmem:[%s2283 + $0x8] sm:$0xf]
    %v2287 = vld [vmem:[%s2283 + $0xc] sm:$0xf]
    %v2288 = vpack.c.bf16 %v2282, %v2281
    %v2289 = vld [vmem:[#allocation5 + $0x8] sm:$0x1]
    %v2290 = vperm.slane %v2289, 0
    %v2295 = vunpack.c.l.b16 %v2284
    %v2296 = vunpack.c.l.b16 %v2285
    %v2297 = vunpack.c.l.b16 %v2286
    %v2298 = vunpack.c.l.b16 %v2287
    %v2299 = vpack.c.b16 %v2296, %v2295
    %v2300 = vpack.c.b16 %v2298, %v2297
    %v2304 = vsel %vm81, %v2288, 0
    %2306 = vmatpush.bf16.msra.mxu0 0
    %2307 = vmatpush.bf16.msra.mxu0 0
    %2308 = vmatpush.bf16.msra.mxu0 0
    %2309 = vmatpush.bf16.msra.mxu0 0
    %2310 = vmatpush.bf16.msra.mxu0 0
    %2311 = vmatpush.bf16.msra.mxu0 0
    %2312 = vmatpush.bf16.msra.mxu0 %v2300
    %2313 = vmatpush.bf16.msra.mxu0 %v2299
    %2314 = vmatmul.bf16.gmra.mxu0 %v2304
    %v2315 = vpop.f32.mrf.mxu0
    %v2316 = vadd.f32 %v2290, %v2315
    %v2317 = vpop.f32.mrf.mxu0
    %v2318 = vadd.f32 %v2290, %v2317
    %2319 = vdwg.mxu0
    %v2320 = vadd.f32 %v1760, %v2316
    %v2321 = vadd.f32 %v1761, %v2318
    %v2322 = vld [vmem:[#allocation5 + $0x18] sm:$0x1]
    %v2323 = vld [vmem:[#allocation5 + $0x22] sm:$0x1]
    %v2324 = vsel %vm81, %v2320, 0.0
    %2325 = vadd.xlane.f32.xlu0 %v2324
    %v2326 = vpop.xlane.xlu0 %2325
    %v2327 = vsel %vm81, %v2321, 0.0
    %2328 = vadd.xlane.f32.xlu0 %v2327
    %v2329 = vpop.xlane.xlu0 %2328
    %v2330 = vmul.f32 %v2326, %v637
    %v2331 = vmul.f32 %v2329, %v637
    %v2332 = vsub.f32 %v2320, %v2330
    %v2333 = vsub.f32 %v2321, %v2331
    %v2334 = vmul.f32 %v2332, %v2332
    %v2335 = vmul.f32 %v2333, %v2333
    %v2336 = vsel %vm81, %v2334, 0.0
    %2337 = vadd.xlane.f32.xlu0 %v2336
    %v2338 = vpop.xlane.xlu0 %2337
    %v2339 = vsel %vm81, %v2335, 0.0
    %2340 = vadd.xlane.f32.xlu0 %v2339
    %v2341 = vpop.xlane.xlu0 %2340
    %v2342 = vmul.f32 %v2338, %v637
    %v2343 = vmul.f32 %v2341, %v637
    %v2344 = vadd.f32 %v2342, 1e-05
    %v2345 = vadd.f32 %v2343, 1e-05
    %v2346 = vrsqrt.pop %v2344
    %v2347 = vmul.f32 %v2346, %v2344
    %v2348 = vmul.f32 %v2347, %v2346
    %v2349 = vmul.f32 0.5, %v2348
    %v2350 = vsub.f32 1.5, %v2349
    %v2351 = vmul.f32 %v2346, %v2350
    %vm2352 = vweird.f32 %v2344
    %vm2353 = vweird.f32 %v2346
    %vm2354 = vmor %vm2352, %vm2353
    %v2355 = vsel %vm2354, %v2346, %v2351
    %v2356 = vrsqrt.pop %v2345
    %v2357 = vmul.f32 %v2356, %v2345
    %v2358 = vmul.f32 %v2357, %v2356
    %v2359 = vmul.f32 0.5, %v2358
    %v2360 = vsub.f32 1.5, %v2359
    %v2361 = vmul.f32 %v2356, %v2360
    %vm2362 = vweird.f32 %v2345
    %vm2363 = vweird.f32 %v2356
    %vm2364 = vmor %vm2362, %vm2363
    %v2365 = vsel %vm2364, %v2356, %v2361
    %v2366 = vmul.f32 %v2332, %v2355
    %v2367 = vmul.f32 %v2333, %v2365
    %v2368 = vperm.slane %v2322, 0
    %v2369 = vmul.f32 %v2366, %v2368
    %v2370 = vmul.f32 %v2367, %v2368
    %v2371 = vperm.slane %v2323, 0
    %v2372 = vadd.f32 %v2369, %v2371
    %v2373 = vadd.f32 %v2370, %v2371
    %s2374 = scalar_lea.vmem %s2, 48
    %v2375 = vld [vmem:[%s2374] sm:$0xf]
    %v2376 = vld [vmem:[%s2374 + $0x4] sm:$0xf]
    %v2377 = vld [vmem:[%s2374 + $0x8] sm:$0xf]
    %v2378 = vld [vmem:[%s2374 + $0xc] sm:$0xf]
    %v2379 = vld [vmem:[#allocation5 + $0x3] sm:$0x1]
    %v2380 = vpack.c.bf16 %v2373, %v2372
    %v2381 = vperm.slane %v2379, 0
    %v2386 = vunpack.c.l.b16 %v2375
    %v2387 = vunpack.c.l.b16 %v2376
    %v2388 = vunpack.c.l.b16 %v2377
    %v2389 = vunpack.c.l.b16 %v2378
    %v2390 = vpack.c.b16 %v2387, %v2386
    %v2391 = vpack.c.b16 %v2389, %v2388
    %v2395 = vsel %vm81, %v2380, 0
    %2397 = vmatpush.bf16.msra.mxu0 0
    %2398 = vmatpush.bf16.msra.mxu0 0
    %2399 = vmatpush.bf16.msra.mxu0 0
    %2400 = vmatpush.bf16.msra.mxu0 0
    %2401 = vmatpush.bf16.msra.mxu0 0
    %2402 = vmatpush.bf16.msra.mxu0 0
    %2403 = vmatpush.bf16.msra.mxu0 %v2391
    %2404 = vmatpush.bf16.msra.mxu0 %v2390
    %2405 = vmatmul.bf16.gmra.mxu0 %v2395
    %v2406 = vpop.f32.mrf.mxu0
    %v2407 = vadd.f32 %v2381, %v2406
    %v2408 = vpop.f32.mrf.mxu0
    %v2409 = vadd.f32 %v2381, %v2408
    %2410 = vdwg.mxu0
    %v2411 = vpack.c.bf16 %v1763, %v1762
    %v2413 = vsel %vm81, %v2411, 0
    %2415 = vmatpush.bf16.msra.mxu0 0
    %2416 = vmatpush.bf16.msra.mxu0 0
    %2417 = vmatpush.bf16.msra.mxu0 0
    %2418 = vmatpush.bf16.msra.mxu0 0
    %2419 = vmatpush.bf16.msra.mxu0 0
    %2420 = vmatpush.bf16.msra.mxu0 0
    %2421 = vmatpush.bf16.msra.mxu0 %v2391
    %2422 = vmatpush.bf16.msra.mxu0 %v2390
    %2423 = vmatmul.bf16.gmra.mxu0 %v2413
    %v2424 = vpop.f32.mrf.mxu0
    %v2425 = vadd.f32 %v2381, %v2424
    %v2426 = vpop.f32.mrf.mxu0
    %v2427 = vadd.f32 %v2381, %v2426
    %2428 = vdwg.mxu0
    %v2429 = vpack.c.bf16 %v2407, %v2407
    %v2430 = vpack.c.bf16 %v2409, %v2409
    %v2431 = vpack.c.bf16 %v2425, %v2425
    %v2432 = vpack.c.bf16 %v2427, %v2427
    %v2434 = vunpack.c.l.b16 %v2431
    %v2435 = vpack.c.b16 %v2434, %v2434
    %2436 = vrot.lane.b32.xlu0 %v2435, 96
    %v2437 = vpop.permute.xlu0 %2436
    %v2439 = vsel %vm106, %v2429, 0
    %v2442 = vsel %vm106, %v2437, 0
    %2444 = vmatpush.bf16.xpose.msra.mxu0 0
    %2445 = vmatpush.bf16.xpose.msra.mxu0 0
    %2446 = vmatpush.bf16.xpose.msra.mxu0 0
    %2447 = vmatpush.bf16.xpose.msra.mxu0 0
    %2448 = vmatpush.bf16.xpose.msra.mxu0 0
    %2449 = vmatpush.bf16.xpose.msra.mxu0 0
    %2450 = vmatpush.bf16.xpose.msra.mxu0 0
    %2451 = vmatpush.bf16.xpose.msra.mxu0 %v2442
    %2452 = vmatmul.bf16.gmra.mxu0 %v2439
    %v2453 = vpop.f32.mrf.mxu0
    %v2454 = vadd.f32 0.0, %v2453
    %v2455 = vpop.f32.mrf.mxu0
    %2456 = vdwg.mxu0
    %v2458 = vunpack.c.l.b16 %v2432
    %v2459 = vpack.c.b16 %v2458, %v2458
    %2460 = vrot.lane.b32.xlu0 %v2459, 96
    %v2461 = vpop.permute.xlu0 %2460
    %v2463 = vsel %vm106, %v2430, 0
    %v2466 = vsel %vm106, %v2461, 0
    %2468 = vmatpush.bf16.xpose.msra.mxu0 0
    %2469 = vmatpush.bf16.xpose.msra.mxu0 0
    %2470 = vmatpush.bf16.xpose.msra.mxu0 0
    %2471 = vmatpush.bf16.xpose.msra.mxu0 0
    %2472 = vmatpush.bf16.xpose.msra.mxu0 0
    %2473 = vmatpush.bf16.xpose.msra.mxu0 0
    %2474 = vmatpush.bf16.xpose.msra.mxu0 0
    %2475 = vmatpush.bf16.xpose.msra.mxu0 %v2466
    %2476 = vmatmul.bf16.gmra.mxu0 %v2463
    %v2477 = vpop.f32.mrf.mxu0
    %v2478 = vadd.f32 0.0, %v2477
    %v2479 = vpop.f32.mrf.mxu0
    %2480 = vdwg.mxu0
    %v2481 = vsel %vm106, %v2454, -inf
    %2482 = vmax.xlane.f32.xlu0 %v2481
    %v2483 = vpop.xlane.xlu0 %2482
    %v2484 = vsel %vm106, %v2478, -inf
    %2485 = vmax.xlane.f32.xlu0 %v2484
    %v2486 = vpop.xlane.xlu0 %2485
    %v2487 = vsub.f32 %v2454, %v2483
    %v2488 = vsub.f32 %v2478, %v2486
    %v2489 = vmul.f32 %v2487, 1.442695
    %v2490 = vpow.pop %v2489
    %v2491 = vmul.f32 %v2488, 1.442695
    %v2492 = vpow.pop %v2491
    %v2493 = vsel %vm106, %v2490, 0.0
    %2494 = vadd.xlane.f32.xlu0 %v2493
    %v2495 = vpop.xlane.xlu0 %2494
    %v2496 = vsel %vm106, %v2492, 0.0
    %2497 = vadd.xlane.f32.xlu0 %v2496
    %v2498 = vpop.xlane.xlu0 %2497
    %v2499 = vrcp.pop %v2495
    %v2500 = vrcp.pop %v2498
    %v2501 = vmul.f32 %v2490, %v2499
    %v2502 = vmul.f32 %v2492, %v2500
    %v2503 = vpack.c.bf16 %v2501, %v2501
    %v2504 = vpack.c.bf16 %v2502, %v2502
    %2505 = vrot.lane.b32.xlu0 %v2435, 64
    %v2506 = vpop.permute.xlu0 %2505
    %v2508 = vsel %vm106, %v2503, 0
    %v2511 = vsel %vm179, %v2506, 0
    %2513 = vmatpush.bf16.msra.mxu0 0
    %2514 = vmatpush.bf16.msra.mxu0 0
    %2515 = vmatpush.bf16.msra.mxu0 0
    %2516 = vmatpush.bf16.msra.mxu0 0
    %2517 = vmatpush.bf16.msra.mxu0 0
    %2518 = vmatpush.bf16.msra.mxu0 0
    %2519 = vmatpush.bf16.msra.mxu0 0
    %2520 = vmatpush.bf16.msra.mxu0 %v2511
    %2521 = vmatmul.bf16.gmra.mxu0 %v2508
    %v2522 = vpop.f32.mrf.mxu0
    %v2523 = vadd.f32 0.0, %v2522
    %v2524 = vpop.f32.mrf.mxu0
    %2525 = vdwg.mxu0
    %2526 = vrot.lane.b32.xlu0 %v2459, 64
    %v2527 = vpop.permute.xlu0 %2526
    %v2529 = vsel %vm106, %v2504, 0
    %v2532 = vsel %vm179, %v2527, 0
    %2534 = vmatpush.bf16.msra.mxu0 0
    %2535 = vmatpush.bf16.msra.mxu0 0
    %2536 = vmatpush.bf16.msra.mxu0 0
    %2537 = vmatpush.bf16.msra.mxu0 0
    %2538 = vmatpush.bf16.msra.mxu0 0
    %2539 = vmatpush.bf16.msra.mxu0 0
    %2540 = vmatpush.bf16.msra.mxu0 0
    %2541 = vmatpush.bf16.msra.mxu0 %v2532
    %2542 = vmatmul.bf16.gmra.mxu0 %v2529
    %v2543 = vpop.f32.mrf.mxu0
    %v2544 = vadd.f32 0.0, %v2543
    %v2545 = vpop.f32.mrf.mxu0
    %2546 = vdwg.mxu0
    %v2548 = vunpack.c.l.b16 %v2429
    %v2549 = vpack.c.b16 %v2548, %v2548
    %2550 = vrot.lane.b32.xlu0 %v2549, 120
    %v2551 = vpop.permute.xlu0 %2550
    %2552 = vrot.lane.b32.xlu0 %v2435, 88
    %v2553 = vpop.permute.xlu0 %2552
    %v2555 = vsel %vm106, %v2551, 0
    %v2558 = vsel %vm106, %v2553, 0
    %2560 = vmatpush.bf16.xpose.msra.mxu0 0
    %2561 = vmatpush.bf16.xpose.msra.mxu0 0
    %2562 = vmatpush.bf16.xpose.msra.mxu0 0
    %2563 = vmatpush.bf16.xpose.msra.mxu0 0
    %2564 = vmatpush.bf16.xpose.msra.mxu0 0
    %2565 = vmatpush.bf16.xpose.msra.mxu0 0
    %2566 = vmatpush.bf16.xpose.msra.mxu0 0
    %2567 = vmatpush.bf16.xpose.msra.mxu0 %v2558
    %2568 = vmatmul.bf16.gmra.mxu0 %v2555
    %v2569 = vpop.f32.mrf.mxu0
    %v2570 = vadd.f32 0.0, %v2569
    %v2571 = vpop.f32.mrf.mxu0
    %2572 = vdwg.mxu0
    %v2574 = vunpack.c.l.b16 %v2430
    %v2575 = vpack.c.b16 %v2574, %v2574
    %2576 = vrot.lane.b32.xlu0 %v2575, 120
    %v2577 = vpop.permute.xlu0 %2576
    %2578 = vrot.lane.b32.xlu0 %v2459, 88
    %v2579 = vpop.permute.xlu0 %2578
    %v2581 = vsel %vm106, %v2577, 0
    %v2584 = vsel %vm106, %v2579, 0
    %2586 = vmatpush.bf16.xpose.msra.mxu0 0
    %2587 = vmatpush.bf16.xpose.msra.mxu0 0
    %2588 = vmatpush.bf16.xpose.msra.mxu0 0
    %2589 = vmatpush.bf16.xpose.msra.mxu0 0
    %2590 = vmatpush.bf16.xpose.msra.mxu0 0
    %2591 = vmatpush.bf16.xpose.msra.mxu0 0
    %2592 = vmatpush.bf16.xpose.msra.mxu0 0
    %2593 = vmatpush.bf16.xpose.msra.mxu0 %v2584
    %2594 = vmatmul.bf16.gmra.mxu0 %v2581
    %v2595 = vpop.f32.mrf.mxu0
    %v2596 = vadd.f32 0.0, %v2595
    %v2597 = vpop.f32.mrf.mxu0
    %2598 = vdwg.mxu0
    %v2599 = vsel %vm106, %v2570, -inf
    %2600 = vmax.xlane.f32.xlu0 %v2599
    %v2601 = vpop.xlane.xlu0 %2600
    %v2602 = vsel %vm106, %v2596, -inf
    %2603 = vmax.xlane.f32.xlu0 %v2602
    %v2604 = vpop.xlane.xlu0 %2603
    %v2605 = vsub.f32 %v2570, %v2601
    %v2606 = vsub.f32 %v2596, %v2604
    %v2607 = vmul.f32 %v2605, 1.442695
    %v2608 = vpow.pop %v2607
    %v2609 = vmul.f32 %v2606, 1.442695
    %v2610 = vpow.pop %v2609
    %v2611 = vsel %vm106, %v2608, 0.0
    %2612 = vadd.xlane.f32.xlu0 %v2611
    %v2613 = vpop.xlane.xlu0 %2612
    %v2614 = vsel %vm106, %v2610, 0.0
    %2615 = vadd.xlane.f32.xlu0 %v2614
    %v2616 = vpop.xlane.xlu0 %2615
    %v2617 = vrcp.pop %v2613
    %v2618 = vrcp.pop %v2616
    %v2619 = vmul.f32 %v2608, %v2617
    %v2620 = vmul.f32 %v2610, %v2618
    %v2621 = vpack.c.bf16 %v2619, %v2619
    %v2622 = vpack.c.bf16 %v2620, %v2620
    %2623 = vrot.lane.b32.xlu0 %v2435, 56
    %v2624 = vpop.permute.xlu0 %2623
    %v2626 = vsel %vm106, %v2621, 0
    %v2629 = vsel %vm179, %v2624, 0
    %2631 = vmatpush.bf16.msra.mxu0 0
    %2632 = vmatpush.bf16.msra.mxu0 0
    %2633 = vmatpush.bf16.msra.mxu0 0
    %2634 = vmatpush.bf16.msra.mxu0 0
    %2635 = vmatpush.bf16.msra.mxu0 0
    %2636 = vmatpush.bf16.msra.mxu0 0
    %2637 = vmatpush.bf16.msra.mxu0 0
    %2638 = vmatpush.bf16.msra.mxu0 %v2629
    %2639 = vmatmul.bf16.gmra.mxu0 %v2626
    %v2640 = vpop.f32.mrf.mxu0
    %v2641 = vadd.f32 0.0, %v2640
    %v2642 = vpop.f32.mrf.mxu0
    %2643 = vdwg.mxu0
    %2644 = vrot.lane.b32.xlu0 %v2459, 56
    %v2645 = vpop.permute.xlu0 %2644
    %v2647 = vsel %vm106, %v2622, 0
    %v2650 = vsel %vm179, %v2645, 0
    %2652 = vmatpush.bf16.msra.mxu0 0
    %2653 = vmatpush.bf16.msra.mxu0 0
    %2654 = vmatpush.bf16.msra.mxu0 0
    %2655 = vmatpush.bf16.msra.mxu0 0
    %2656 = vmatpush.bf16.msra.mxu0 0
    %2657 = vmatpush.bf16.msra.mxu0 0
    %2658 = vmatpush.bf16.msra.mxu0 0
    %2659 = vmatpush.bf16.msra.mxu0 %v2650
    %2660 = vmatmul.bf16.gmra.mxu0 %v2647
    %v2661 = vpop.f32.mrf.mxu0
    %v2662 = vadd.f32 0.0, %v2661
    %v2663 = vpop.f32.mrf.mxu0
    %2664 = vdwg.mxu0
    %2665 = vrot.lane.b32.xlu0 %v2549, 112
    %v2666 = vpop.permute.xlu0 %2665
    %2667 = vrot.lane.b32.xlu0 %v2435, 80
    %v2668 = vpop.permute.xlu0 %2667
    %v2670 = vsel %vm106, %v2666, 0
    %v2673 = vsel %vm106, %v2668, 0
    %2675 = vmatpush.bf16.xpose.msra.mxu0 0
    %2676 = vmatpush.bf16.xpose.msra.mxu0 0
    %2677 = vmatpush.bf16.xpose.msra.mxu0 0
    %2678 = vmatpush.bf16.xpose.msra.mxu0 0
    %2679 = vmatpush.bf16.xpose.msra.mxu0 0
    %2680 = vmatpush.bf16.xpose.msra.mxu0 0
    %2681 = vmatpush.bf16.xpose.msra.mxu0 0
    %2682 = vmatpush.bf16.xpose.msra.mxu0 %v2673
    %2683 = vmatmul.bf16.gmra.mxu0 %v2670
    %v2684 = vpop.f32.mrf.mxu0
    %v2685 = vadd.f32 0.0, %v2684
    %v2686 = vpop.f32.mrf.mxu0
    %2687 = vdwg.mxu0
    %2688 = vrot.lane.b32.xlu0 %v2575, 112
    %v2689 = vpop.permute.xlu0 %2688
    %2690 = vrot.lane.b32.xlu0 %v2459, 80
    %v2691 = vpop.permute.xlu0 %2690
    %v2693 = vsel %vm106, %v2689, 0
    %v2696 = vsel %vm106, %v2691, 0
    %2698 = vmatpush.bf16.xpose.msra.mxu0 0
    %2699 = vmatpush.bf16.xpose.msra.mxu0 0
    %2700 = vmatpush.bf16.xpose.msra.mxu0 0
    %2701 = vmatpush.bf16.xpose.msra.mxu0 0
    %2702 = vmatpush.bf16.xpose.msra.mxu0 0
    %2703 = vmatpush.bf16.xpose.msra.mxu0 0
    %2704 = vmatpush.bf16.xpose.msra.mxu0 0
    %2705 = vmatpush.bf16.xpose.msra.mxu0 %v2696
    %2706 = vmatmul.bf16.gmra.mxu0 %v2693
    %v2707 = vpop.f32.mrf.mxu0
    %v2708 = vadd.f32 0.0, %v2707
    %v2709 = vpop.f32.mrf.mxu0
    %2710 = vdwg.mxu0
    %v2711 = vsel %vm106, %v2685, -inf
    %2712 = vmax.xlane.f32.xlu0 %v2711
    %v2713 = vpop.xlane.xlu0 %2712
    %v2714 = vsel %vm106, %v2708, -inf
    %2715 = vmax.xlane.f32.xlu0 %v2714
    %v2716 = vpop.xlane.xlu0 %2715
    %v2717 = vsub.f32 %v2685, %v2713
    %v2718 = vsub.f32 %v2708, %v2716
    %v2719 = vmul.f32 %v2717, 1.442695
    %v2720 = vpow.pop %v2719
    %v2721 = vmul.f32 %v2718, 1.442695
    %v2722 = vpow.pop %v2721
    %v2723 = vsel %vm106, %v2720, 0.0
    %2724 = vadd.xlane.f32.xlu0 %v2723
    %v2725 = vpop.xlane.xlu0 %2724
    %v2726 = vsel %vm106, %v2722, 0.0
    %2727 = vadd.xlane.f32.xlu0 %v2726
    %v2728 = vpop.xlane.xlu0 %2727
    %v2729 = vrcp.pop %v2725
    %v2730 = vrcp.pop %v2728
    %v2731 = vmul.f32 %v2720, %v2729
    %v2732 = vmul.f32 %v2722, %v2730
    %v2733 = vpack.c.bf16 %v2731, %v2731
    %v2734 = vpack.c.bf16 %v2732, %v2732
    %2735 = vrot.lane.b32.xlu0 %v2435, 48
    %v2736 = vpop.permute.xlu0 %2735
    %v2738 = vsel %vm106, %v2733, 0
    %v2741 = vsel %vm179, %v2736, 0
    %2743 = vmatpush.bf16.msra.mxu0 0
    %2744 = vmatpush.bf16.msra.mxu0 0
    %2745 = vmatpush.bf16.msra.mxu0 0
    %2746 = vmatpush.bf16.msra.mxu0 0
    %2747 = vmatpush.bf16.msra.mxu0 0
    %2748 = vmatpush.bf16.msra.mxu0 0
    %2749 = vmatpush.bf16.msra.mxu0 0
    %2750 = vmatpush.bf16.msra.mxu0 %v2741
    %2751 = vmatmul.bf16.gmra.mxu0 %v2738
    %v2752 = vpop.f32.mrf.mxu0
    %v2753 = vadd.f32 0.0, %v2752
    %v2754 = vpop.f32.mrf.mxu0
    %2755 = vdwg.mxu0
    %2756 = vrot.lane.b32.xlu0 %v2459, 48
    %v2757 = vpop.permute.xlu0 %2756
    %v2759 = vsel %vm106, %v2734, 0
    %v2762 = vsel %vm179, %v2757, 0
    %2764 = vmatpush.bf16.msra.mxu0 0
    %2765 = vmatpush.bf16.msra.mxu0 0
    %2766 = vmatpush.bf16.msra.mxu0 0
    %2767 = vmatpush.bf16.msra.mxu0 0
    %2768 = vmatpush.bf16.msra.mxu0 0
    %2769 = vmatpush.bf16.msra.mxu0 0
    %2770 = vmatpush.bf16.msra.mxu0 0
    %2771 = vmatpush.bf16.msra.mxu0 %v2762
    %2772 = vmatmul.bf16.gmra.mxu0 %v2759
    %v2773 = vpop.f32.mrf.mxu0
    %v2774 = vadd.f32 0.0, %v2773
    %v2775 = vpop.f32.mrf.mxu0
    %2776 = vdwg.mxu0
    %2777 = vrot.lane.b32.xlu0 %v2549, 104
    %v2778 = vpop.permute.xlu0 %2777
    %2779 = vrot.lane.b32.xlu0 %v2435, 72
    %v2780 = vpop.permute.xlu0 %2779
    %v2782 = vsel %vm106, %v2778, 0
    %v2785 = vsel %vm106, %v2780, 0
    %2787 = vmatpush.bf16.xpose.msra.mxu0 0
    %2788 = vmatpush.bf16.xpose.msra.mxu0 0
    %2789 = vmatpush.bf16.xpose.msra.mxu0 0
    %2790 = vmatpush.bf16.xpose.msra.mxu0 0
    %2791 = vmatpush.bf16.xpose.msra.mxu0 0
    %2792 = vmatpush.bf16.xpose.msra.mxu0 0
    %2793 = vmatpush.bf16.xpose.msra.mxu0 0
    %2794 = vmatpush.bf16.xpose.msra.mxu0 %v2785
    %2795 = vmatmul.bf16.gmra.mxu0 %v2782
    %v2796 = vpop.f32.mrf.mxu0
    %v2797 = vadd.f32 0.0, %v2796
    %v2798 = vpop.f32.mrf.mxu0
    %2799 = vdwg.mxu0
    %2800 = vrot.lane.b32.xlu0 %v2575, 104
    %v2801 = vpop.permute.xlu0 %2800
    %2802 = vrot.lane.b32.xlu0 %v2459, 72
    %v2803 = vpop.permute.xlu0 %2802
    %v2805 = vsel %vm106, %v2801, 0
    %v2808 = vsel %vm106, %v2803, 0
    %2810 = vmatpush.bf16.xpose.msra.mxu0 0
    %2811 = vmatpush.bf16.xpose.msra.mxu0 0
    %2812 = vmatpush.bf16.xpose.msra.mxu0 0
    %2813 = vmatpush.bf16.xpose.msra.mxu0 0
    %2814 = vmatpush.bf16.xpose.msra.mxu0 0
    %2815 = vmatpush.bf16.xpose.msra.mxu0 0
    %2816 = vmatpush.bf16.xpose.msra.mxu0 0
    %2817 = vmatpush.bf16.xpose.msra.mxu0 %v2808
    %2818 = vmatmul.bf16.gmra.mxu0 %v2805
    %v2819 = vpop.f32.mrf.mxu0
    %v2820 = vadd.f32 0.0, %v2819
    %v2821 = vpop.f32.mrf.mxu0
    %2822 = vdwg.mxu0
    %v2823 = vsel %vm106, %v2797, -inf
    %2824 = vmax.xlane.f32.xlu0 %v2823
    %v2825 = vpop.xlane.xlu0 %2824
    %v2826 = vsel %vm106, %v2820, -inf
    %2827 = vmax.xlane.f32.xlu0 %v2826
    %v2828 = vpop.xlane.xlu0 %2827
    %v2829 = vsub.f32 %v2797, %v2825
    %v2830 = vsub.f32 %v2820, %v2828
    %v2831 = vmul.f32 %v2829, 1.442695
    %v2832 = vpow.pop %v2831
    %v2833 = vmul.f32 %v2830, 1.442695
    %v2834 = vpow.pop %v2833
    %v2835 = vsel %vm106, %v2832, 0.0
    %2836 = vadd.xlane.f32.xlu0 %v2835
    %v2837 = vpop.xlane.xlu0 %2836
    %v2838 = vsel %vm106, %v2834, 0.0
    %2839 = vadd.xlane.f32.xlu0 %v2838
    %v2840 = vpop.xlane.xlu0 %2839
    %v2841 = vrcp.pop %v2837
    %v2842 = vrcp.pop %v2840
    %v2843 = vmul.f32 %v2832, %v2841
    %v2844 = vmul.f32 %v2834, %v2842
    %v2845 = vpack.c.bf16 %v2843, %v2843
    %v2846 = vpack.c.bf16 %v2844, %v2844
    %2847 = vrot.lane.b32.xlu0 %v2435, 40
    %v2848 = vpop.permute.xlu0 %2847
    %v2850 = vsel %vm106, %v2845, 0
    %v2853 = vsel %vm179, %v2848, 0
    %2855 = vmatpush.bf16.msra.mxu0 0
    %2856 = vmatpush.bf16.msra.mxu0 0
    %2857 = vmatpush.bf16.msra.mxu0 0
    %2858 = vmatpush.bf16.msra.mxu0 0
    %2859 = vmatpush.bf16.msra.mxu0 0
    %2860 = vmatpush.bf16.msra.mxu0 0
    %2861 = vmatpush.bf16.msra.mxu0 0
    %2862 = vmatpush.bf16.msra.mxu0 %v2853
    %2863 = vmatmul.bf16.gmra.mxu0 %v2850
    %v2864 = vpop.f32.mrf.mxu0
    %v2865 = vadd.f32 0.0, %v2864
    %v2866 = vpop.f32.mrf.mxu0
    %2867 = vdwg.mxu0
    %2868 = vrot.lane.b32.xlu0 %v2459, 40
    %v2869 = vpop.permute.xlu0 %2868
    %v2871 = vsel %vm106, %v2846, 0
    %v2874 = vsel %vm179, %v2869, 0
    %2876 = vmatpush.bf16.msra.mxu0 0
    %2877 = vmatpush.bf16.msra.mxu0 0
    %2878 = vmatpush.bf16.msra.mxu0 0
    %2879 = vmatpush.bf16.msra.mxu0 0
    %2880 = vmatpush.bf16.msra.mxu0 0
    %2881 = vmatpush.bf16.msra.mxu0 0
    %2882 = vmatpush.bf16.msra.mxu0 0
    %2883 = vmatpush.bf16.msra.mxu0 %v2874
    %2884 = vmatmul.bf16.gmra.mxu0 %v2871
    %v2885 = vpop.f32.mrf.mxu0
    %v2886 = vadd.f32 0.0, %v2885
    %v2887 = vpop.f32.mrf.mxu0
    %2888 = vdwg.mxu0
    %2891 = vrot.lane.b32.xlu0 %v2641, 8
    %v2892 = vpop.permute.xlu0 %2891
    %2893 = vrot.lane.b32.xlu0 %v2662, 8
    %v2894 = vpop.permute.xlu0 %2893
    %2899 = vrot.lane.b32.xlu0 %v2753, 16
    %v2900 = vpop.permute.xlu0 %2899
    %2901 = vrot.lane.b32.xlu0 %v2774, 16
    %v2902 = vpop.permute.xlu0 %2901
    %2907 = vrot.lane.b32.xlu0 %v2865, 24
    %v2908 = vpop.permute.xlu0 %2907
    %2909 = vrot.lane.b32.xlu0 %v2886, 24
    %v2910 = vpop.permute.xlu0 %2909
    %v2913 = vsel %vm106, %v2523, %v2892
    %v2914 = vsel %vm106, %v2544, %v2894
    %v2915 = vsel %vm579, %v2913, %v2900
    %v2916 = vsel %vm579, %v2914, %v2902
    %v2917 = vsel %vm582, %v2915, %v2908
    %v2918 = vsel %vm582, %v2916, %v2910
    %s2919 = scalar_lea.vmem %s3, 48
    %v2920 = vld [vmem:[%s2919] sm:$0xf]
    %v2921 = vld [vmem:[%s2919 + $0x4] sm:$0xf]
    %v2922 = vld [vmem:[%s2919 + $0x8] sm:$0xf]
    %v2923 = vld [vmem:[%s2919 + $0xc] sm:$0xf]
    %v2924 = vpack.c.bf16 %v2918, %v2917
    %v2925 = vld [vmem:[#allocation5 + $0x9] sm:$0x1]
    %v2926 = vperm.slane %v2925, 0
    %v2931 = vunpack.c.l.b16 %v2920
    %v2932 = vunpack.c.l.b16 %v2921
    %v2933 = vunpack.c.l.b16 %v2922
    %v2934 = vunpack.c.l.b16 %v2923
    %v2935 = vpack.c.b16 %v2932, %v2931
    %v2936 = vpack.c.b16 %v2934, %v2933
    %v2940 = vsel %vm81, %v2924, 0
    %2942 = vmatpush.bf16.msra.mxu0 0
    %2943 = vmatpush.bf16.msra.mxu0 0
    %2944 = vmatpush.bf16.msra.mxu0 0
    %2945 = vmatpush.bf16.msra.mxu0 0
    %2946 = vmatpush.bf16.msra.mxu0 0
    %2947 = vmatpush.bf16.msra.mxu0 0
    %2948 = vmatpush.bf16.msra.mxu0 %v2936
    %2949 = vmatpush.bf16.msra.mxu0 %v2935
    %2950 = vmatmul.bf16.gmra.mxu0 %v2940
    %v2951 = vpop.f32.mrf.mxu0
    %v2952 = vadd.f32 %v2926, %v2951
    %v2953 = vpop.f32.mrf.mxu0
    %v2954 = vadd.f32 %v2926, %v2953
    %2955 = vdwg.mxu0
    %v2956 = vadd.f32 %v2372, %v2952
    %v2957 = vadd.f32 %v2373, %v2954
    %v2958 = vld [vmem:[#allocation5 + $0x19] sm:$0x1]
    %v2959 = vld [vmem:[#allocation5 + $0x23] sm:$0x1]
    %v2960 = vsel %vm81, %v2956, 0.0
    %2961 = vadd.xlane.f32.xlu0 %v2960
    %v2962 = vpop.xlane.xlu0 %2961
    %v2963 = vsel %vm81, %v2957, 0.0
    %2964 = vadd.xlane.f32.xlu0 %v2963
    %v2965 = vpop.xlane.xlu0 %2964
    %v2966 = vmul.f32 %v2962, %v637
    %v2967 = vmul.f32 %v2965, %v637
    %v2968 = vsub.f32 %v2956, %v2966
    %v2969 = vsub.f32 %v2957, %v2967
    %v2970 = vmul.f32 %v2968, %v2968
    %v2971 = vmul.f32 %v2969, %v2969
    %v2972 = vsel %vm81, %v2970, 0.0
    %2973 = vadd.xlane.f32.xlu0 %v2972
    %v2974 = vpop.xlane.xlu0 %2973
    %v2975 = vsel %vm81, %v2971, 0.0
    %2976 = vadd.xlane.f32.xlu0 %v2975
    %v2977 = vpop.xlane.xlu0 %2976
    %v2978 = vmul.f32 %v2974, %v637
    %v2979 = vmul.f32 %v2977, %v637
    %v2980 = vadd.f32 %v2978, 1e-05
    %v2981 = vadd.f32 %v2979, 1e-05
    %v2982 = vrsqrt.pop %v2980
    %v2983 = vmul.f32 %v2982, %v2980
    %v2984 = vmul.f32 %v2983, %v2982
    %v2985 = vmul.f32 0.5, %v2984
    %v2986 = vsub.f32 1.5, %v2985
    %v2987 = vmul.f32 %v2982, %v2986
    %vm2988 = vweird.f32 %v2980
    %vm2989 = vweird.f32 %v2982
    %vm2990 = vmor %vm2988, %vm2989
    %v2991 = vsel %vm2990, %v2982, %v2987
    %v2992 = vrsqrt.pop %v2981
    %v2993 = vmul.f32 %v2992, %v2981
    %v2994 = vmul.f32 %v2993, %v2992
    %v2995 = vmul.f32 0.5, %v2994
    %v2996 = vsub.f32 1.5, %v2995
    %v2997 = vmul.f32 %v2992, %v2996
    %vm2998 = vweird.f32 %v2981
    %vm2999 = vweird.f32 %v2992
    %vm3000 = vmor %vm2998, %vm2999
    %v3001 = vsel %vm3000, %v2992, %v2997
    %v3002 = vmul.f32 %v2968, %v2991
    %v3003 = vmul.f32 %v2969, %v3001
    %v3004 = vperm.slane %v2958, 0
    %v3005 = vmul.f32 %v3002, %v3004
    %v3006 = vmul.f32 %v3003, %v3004
    %v3007 = vperm.slane %v2959, 0
    %v3008 = vadd.f32 %v3005, %v3007
    %v3009 = vadd.f32 %v3006, %v3007
    %s3010 = scalar_lea.vmem [#allocation2], 32
    %v3011 = vld [vmem:[%s3010] sm:$0xf]
    %v3012 = vld [vmem:[%s3010 + $0x4] sm:$0xf]
    %v3013 = vld [vmem:[%s3010 + $0x8] sm:$0xf]
    %v3014 = vld [vmem:[%s3010 + $0xc] sm:$0xf]
    %v3015 = vpack.c.bf16 %v3009, %v3008
    %v3016 = vld [vmem:[#allocation5 + $0xe] sm:$0x1]
    %v3017 = vperm.slane %v3016, 0
    %v3022 = vunpack.c.l.b16 %v3011
    %v3023 = vunpack.c.l.b16 %v3012
    %v3024 = vunpack.c.l.b16 %v3013
    %v3025 = vunpack.c.l.b16 %v3014
    %v3026 = vpack.c.b16 %v3023, %v3022
    %v3027 = vpack.c.b16 %v3025, %v3024
    %v3031 = vsel %vm81, %v3015, 0
    %3033 = vmatpush.bf16.msra.mxu0 0
    %3034 = vmatpush.bf16.msra.mxu0 0
    %3035 = vmatpush.bf16.msra.mxu0 0
    %3036 = vmatpush.bf16.msra.mxu0 0
    %3037 = vmatpush.bf16.msra.mxu0 0
    %3038 = vmatpush.bf16.msra.mxu0 0
    %3039 = vmatpush.bf16.msra.mxu0 %v3027
    %3040 = vmatpush.bf16.msra.mxu0 %v3026
    %3041 = vmatmul.bf16.gmra.mxu0 %v3031
    %v3042 = vpop.f32.mrf.mxu0
    %v3043 = vadd.f32 %v3017, %v3042
    %v3044 = vpop.f32.mrf.mxu0
    %v3045 = vadd.f32 %v3017, %v3044
    %3046 = vdwg.mxu0
    %v3047 = vmul.f32 %v3043, 0.5
    %v3048 = vmul.f32 %v3045, 0.5
    %v3049 = vmul.f32 %v3043, %v726
    %v3050 = vmul.f32 %v3045, %v726
    %v3051 = vmul.f32 %v3049, %v3049
    %v3052 = vmin.f32 16.0, %v3051
    %v3053 = vmul.f32 %v3052, 2.1237322e-06
    %v3054 = vadd.f32 %v3053, 0.00028619796
    %v3055 = vmul.f32 %v3052, %v3054
    %v3056 = vadd.f32 %v3055, 0.0036580483
    %v3057 = vmul.f32 %v3052, %v3056
    %v3058 = vadd.f32 %v3057, 0.05243302
    %v3059 = vmul.f32 %v3052, %v3058
    %v3060 = vadd.f32 %v3059, 0.18741608
    %v3061 = vmul.f32 %v3052, %v3060
    %v3062 = vadd.f32 %v3061, 1.1283791
    %v3063 = vmul.f32 %v3049, %v3062
    %v3064 = vmul.f32 %v3052, 3.8918573e-05
    %v3065 = vadd.f32 %v3064, 0.001143296
    %v3066 = vmul.f32 %v3052, %v3065
    %v3067 = vadd.f32 %v3066, 0.014752088
    %v3068 = vmul.f32 %v3052, %v3067
    %v3069 = vadd.f32 %v3068, 0.112945676
    %v3070 = vmul.f32 %v3052, %v3069
    %v3071 = vadd.f32 %v3070, 0.4994258
    %v3072 = vmul.f32 %v3052, %v3071
    %v3073 = vadd.f32 %v3072, 1.0
    %v3074 = vrcp.pop %v3073
    %v3075 = vmul.f32 %v3073, %v3074
    %v3076 = vsub.f32 1.0, %v3075
    %v3077 = vmul.f32 %v3074, %v3076
    %v3078 = vadd.f32 %v3074, %v3077
    %vm3079 = vweird.f32 %v3073
    %vm3080 = vweird.f32 %v3074
    %vm3081 = vmor %vm3079, %vm3080
    %v3082 = vsel %vm3081, %v3074, %v3078
    %v3083 = vand.u32 2147483647, %v3073
    %vm3084 = vcmp.eq.f32.partialorder %v3083, 8.507059e+37
    %v3085 = vand.u32 %v3073, 2147483648
    %v3086 = vor.u32 1.1754944e-38, %v3085
    %v3087 = vsel %vm3084, %v3086, %v3082
    %v3088 = vmul.f32 %v3063, %v3087
    %v3089 = vmin.f32 %v3088, 1.0
    %v3090 = vmax.f32 %v3089, -1.0
    %v3091 = vmul.f32 %v3050, %v3050
    %v3092 = vmin.f32 16.0, %v3091
    %v3093 = vmul.f32 %v3092, 2.1237322e-06
    %v3094 = vadd.f32 %v3093, 0.00028619796
    %v3095 = vmul.f32 %v3092, %v3094
    %v3096 = vadd.f32 %v3095, 0.0036580483
    %v3097 = vmul.f32 %v3092, %v3096
    %v3098 = vadd.f32 %v3097, 0.05243302
    %v3099 = vmul.f32 %v3092, %v3098
    %v3100 = vadd.f32 %v3099, 0.18741608
    %v3101 = vmul.f32 %v3092, %v3100
    %v3102 = vadd.f32 %v3101, 1.1283791
    %v3103 = vmul.f32 %v3050, %v3102
    %v3104 = vmul.f32 %v3092, 3.8918573e-05
    %v3105 = vadd.f32 %v3104, 0.001143296
    %v3106 = vmul.f32 %v3092, %v3105
    %v3107 = vadd.f32 %v3106, 0.014752088
    %v3108 = vmul.f32 %v3092, %v3107
    %v3109 = vadd.f32 %v3108, 0.112945676
    %v3110 = vmul.f32 %v3092, %v3109
    %v3111 = vadd.f32 %v3110, 0.4994258
    %v3112 = vmul.f32 %v3092, %v3111
    %v3113 = vadd.f32 %v3112, 1.0
    %v3114 = vrcp.pop %v3113
    %v3115 = vmul.f32 %v3113, %v3114
    %v3116 = vsub.f32 1.0, %v3115
    %v3117 = vmul.f32 %v3114, %v3116
    %v3118 = vadd.f32 %v3114, %v3117
    %vm3119 = vweird.f32 %v3113
    %vm3120 = vweird.f32 %v3114
    %vm3121 = vmor %vm3119, %vm3120
    %v3122 = vsel %vm3121, %v3114, %v3118
    %v3123 = vand.u32 2147483647, %v3113
    %vm3124 = vcmp.eq.f32.partialorder %v3123, 8.507059e+37
    %v3125 = vand.u32 %v3113, 2147483648
    %v3126 = vor.u32 1.1754944e-38, %v3125
    %v3127 = vsel %vm3124, %v3126, %v3122
    %v3128 = vmul.f32 %v3103, %v3127
    %v3129 = vmin.f32 %v3128, 1.0
    %v3130 = vmax.f32 %v3129, -1.0
    %v3131 = vadd.f32 %v3090, 1.0
    %v3132 = vadd.f32 %v3130, 1.0
    %v3133 = vmul.f32 %v3047, %v3131
    %v3134 = vmul.f32 %v3048, %v3132
    %s3135 = scalar_lea.vmem %s5, 64
    %v3136 = vld [vmem:[%s3135] sm:$0xf]
    %v3137 = vld [vmem:[%s3135 + $0x4] sm:$0xf]
    %v3138 = vld [vmem:[%s3135 + $0x8] sm:$0xf]
    %v3139 = vld [vmem:[%s3135 + $0xc] sm:$0xf]
    %v3140 = vld [vmem:[%s3135 + $0x10] sm:$0xf]
    %v3141 = vld [vmem:[%s3135 + $0x14] sm:$0xf]
    %v3142 = vld [vmem:[%s3135 + $0x18] sm:$0xf]
    %v3143 = vld [vmem:[%s3135 + $0x1c] sm:$0xf]
    %v3144 = vpack.c.bf16 %v3134, %v3133
    %v3145 = vld [vmem:[#allocation5 + $0x12] sm:$0x1]
    %v3146 = vperm.slane %v3145, 0
    %v3155 = vunpack.c.l.b16 %v3136
    %v3156 = vunpack.c.l.b16 %v3137
    %v3157 = vunpack.c.l.b16 %v3138
    %v3158 = vunpack.c.l.b16 %v3139
    %v3159 = vunpack.c.l.b16 %v3140
    %v3160 = vunpack.c.l.b16 %v3141
    %v3161 = vunpack.c.l.b16 %v3142
    %v3162 = vunpack.c.l.b16 %v3143
    %v3163 = vpack.c.b16 %v3156, %v3155
    %v3164 = vpack.c.b16 %v3158, %v3157
    %v3165 = vpack.c.b16 %v3160, %v3159
    %v3166 = vpack.c.b16 %v3162, %v3161
    %v3172 = vsel %vm848, %v3144, 0
    %3174 = vmatpush.bf16.msra.mxu0 0
    %3175 = vmatpush.bf16.msra.mxu0 0
    %3176 = vmatpush.bf16.msra.mxu0 0
    %3177 = vmatpush.bf16.msra.mxu0 0
    %3178 = vmatpush.bf16.msra.mxu0 %v3166
    %3179 = vmatpush.bf16.msra.mxu0 %v3165
    %3180 = vmatpush.bf16.msra.mxu0 %v3164
    %3181 = vmatpush.bf16.msra.mxu0 %v3163
    %3182 = vmatmul.bf16.gmra.mxu0 %v3172
    %v3183 = vpop.f32.mrf.mxu0
    %v3184 = vadd.f32 %v3146, %v3183
    %v3185 = vpop.f32.mrf.mxu0
    %v3186 = vadd.f32 %v3146, %v3185
    %3187 = vdwg.mxu0
    %v3188 = vadd.f32 %v3008, %v3184
    %v3189 = vadd.f32 %v3009, %v3186
    %v3190 = vld [vmem:[#allocation5 + $0x1a] sm:$0x1]
    %v3191 = vld [vmem:[#allocation5 + $0x24] sm:$0x1]
    %v3192 = vsel %vm81, %v3188, 0.0
    %3193 = vadd.xlane.f32.xlu0 %v3192
    %v3194 = vpop.xlane.xlu0 %3193
    %v3195 = vsel %vm81, %v3189, 0.0
    %3196 = vadd.xlane.f32.xlu0 %v3195
    %v3197 = vpop.xlane.xlu0 %3196
    %v3198 = vmul.f32 %v3194, %v637
    %v3199 = vmul.f32 %v3197, %v637
    %v3200 = vsub.f32 %v3188, %v3198
    %v3201 = vsub.f32 %v3189, %v3199
    %v3202 = vmul.f32 %v3200, %v3200
    %v3203 = vmul.f32 %v3201, %v3201
    %v3204 = vsel %vm81, %v3202, 0.0
    %3205 = vadd.xlane.f32.xlu0 %v3204
    %v3206 = vpop.xlane.xlu0 %3205
    %v3207 = vsel %vm81, %v3203, 0.0
    %3208 = vadd.xlane.f32.xlu0 %v3207
    %v3209 = vpop.xlane.xlu0 %3208
    %v3210 = vmul.f32 %v3206, %v637
    %v3211 = vmul.f32 %v3209, %v637
    %v3212 = vadd.f32 %v3210, 1e-05
    %v3213 = vadd.f32 %v3211, 1e-05
    %v3214 = vrsqrt.pop %v3212
    %v3215 = vmul.f32 %v3214, %v3212
    %v3216 = vmul.f32 %v3215, %v3214
    %v3217 = vmul.f32 0.5, %v3216
    %v3218 = vsub.f32 1.5, %v3217
    %v3219 = vmul.f32 %v3214, %v3218
    %vm3220 = vweird.f32 %v3212
    %vm3221 = vweird.f32 %v3214
    %vm3222 = vmor %vm3220, %vm3221
    %v3223 = vsel %vm3222, %v3214, %v3219
    %v3224 = vrsqrt.pop %v3213
    %v3225 = vmul.f32 %v3224, %v3213
    %v3226 = vmul.f32 %v3225, %v3224
    %v3227 = vmul.f32 0.5, %v3226
    %v3228 = vsub.f32 1.5, %v3227
    %v3229 = vmul.f32 %v3224, %v3228
    %vm3230 = vweird.f32 %v3213
    %vm3231 = vweird.f32 %v3224
    %vm3232 = vmor %vm3230, %vm3231
    %v3233 = vsel %vm3232, %v3224, %v3229
    %v3234 = vmul.f32 %v3200, %v3223
    %v3235 = vmul.f32 %v3201, %v3233
    %v3236 = vperm.slane %v3190, 0
    %v3237 = vmul.f32 %v3234, %v3236
    %v3238 = vmul.f32 %v3235, %v3236
    %v3239 = vperm.slane %v3191, 0
    %v3240 = vadd.f32 %v3237, %v3239
    %v3241 = vadd.f32 %v3238, %v3239
    %s3242 = scalar_lea.vmem %s2, 64
    %v3243 = vld [vmem:[%s3242] sm:$0xf]
    %v3244 = vld [vmem:[%s3242 + $0x4] sm:$0xf]
    %v3245 = vld [vmem:[%s3242 + $0x8] sm:$0xf]
    %v3246 = vld [vmem:[%s3242 + $0xc] sm:$0xf]
    %v3247 = vld [vmem:[#allocation5 + $0x4] sm:$0x1]
    %v3248 = vpack.c.bf16 %v3241, %v3240
    %v3249 = vperm.slane %v3247, 0
    %v3254 = vunpack.c.l.b16 %v3243
    %v3255 = vunpack.c.l.b16 %v3244
    %v3256 = vunpack.c.l.b16 %v3245
    %v3257 = vunpack.c.l.b16 %v3246
    %v3258 = vpack.c.b16 %v3255, %v3254
    %v3259 = vpack.c.b16 %v3257, %v3256
    %v3263 = vsel %vm81, %v3248, 0
    %3265 = vmatpush.bf16.msra.mxu0 0
    %3266 = vmatpush.bf16.msra.mxu0 0
    %3267 = vmatpush.bf16.msra.mxu0 0
    %3268 = vmatpush.bf16.msra.mxu0 0
    %3269 = vmatpush.bf16.msra.mxu0 0
    %3270 = vmatpush.bf16.msra.mxu0 0
    %3271 = vmatpush.bf16.msra.mxu0 %v3259
    %3272 = vmatpush.bf16.msra.mxu0 %v3258
    %3273 = vmatmul.bf16.gmra.mxu0 %v3263
    %v3274 = vpop.f32.mrf.mxu0
    %v3275 = vadd.f32 %v3249, %v3274
    %v3276 = vpop.f32.mrf.mxu0
    %v3277 = vadd.f32 %v3249, %v3276
    %3278 = vdwg.mxu0
    %v3279 = vpack.c.bf16 %v3275, %v3275
    %v3280 = vpack.c.bf16 %v3277, %v3277
    %v3282 = vunpack.c.l.b16 %v3279
    %v3283 = vpack.c.b16 %v3282, %v3282
    %3284 = vrot.lane.b32.xlu0 %v3283, 96
    %v3285 = vpop.permute.xlu0 %3284
    %v3287 = vsel %vm106, %v3279, 0
    %v3290 = vsel %vm106, %v3285, 0
    %3292 = vmatpush.bf16.xpose.msra.mxu0 0
    %3293 = vmatpush.bf16.xpose.msra.mxu0 0
    %3294 = vmatpush.bf16.xpose.msra.mxu0 0
    %3295 = vmatpush.bf16.xpose.msra.mxu0 0
    %3296 = vmatpush.bf16.xpose.msra.mxu0 0
    %3297 = vmatpush.bf16.xpose.msra.mxu0 0
    %3298 = vmatpush.bf16.xpose.msra.mxu0 0
    %3299 = vmatpush.bf16.xpose.msra.mxu0 %v3290
    %3300 = vmatmul.bf16.gmra.mxu0 %v3287
    %v3301 = vpop.f32.mrf.mxu0
    %v3302 = vadd.f32 0.0, %v3301
    %v3303 = vpop.f32.mrf.mxu0
    %3304 = vdwg.mxu0
    %v3306 = vunpack.c.l.b16 %v3280
    %v3307 = vpack.c.b16 %v3306, %v3306
    %3308 = vrot.lane.b32.xlu0 %v3307, 96
    %v3309 = vpop.permute.xlu0 %3308
    %v3311 = vsel %vm106, %v3280, 0
    %v3314 = vsel %vm106, %v3309, 0
    %3316 = vmatpush.bf16.xpose.msra.mxu0 0
    %3317 = vmatpush.bf16.xpose.msra.mxu0 0
    %3318 = vmatpush.bf16.xpose.msra.mxu0 0
    %3319 = vmatpush.bf16.xpose.msra.mxu0 0
    %3320 = vmatpush.bf16.xpose.msra.mxu0 0
    %3321 = vmatpush.bf16.xpose.msra.mxu0 0
    %3322 = vmatpush.bf16.xpose.msra.mxu0 0
    %3323 = vmatpush.bf16.xpose.msra.mxu0 %v3314
    %3324 = vmatmul.bf16.gmra.mxu0 %v3311
    %v3325 = vpop.f32.mrf.mxu0
    %v3326 = vadd.f32 0.0, %v3325
    %v3327 = vpop.f32.mrf.mxu0
    %3328 = vdwg.mxu0
    %v3329 = vsel %vm106, %v3302, -inf
    %3330 = vmax.xlane.f32.xlu0 %v3329
    %v3331 = vpop.xlane.xlu0 %3330
    %v3332 = vsel %vm106, %v3326, -inf
    %3333 = vmax.xlane.f32.xlu0 %v3332
    %v3334 = vpop.xlane.xlu0 %3333
    %v3335 = vsub.f32 %v3302, %v3331
    %v3336 = vsub.f32 %v3326, %v3334
    %v3337 = vmul.f32 %v3335, 1.442695
    %v3338 = vpow.pop %v3337
    %v3339 = vmul.f32 %v3336, 1.442695
    %v3340 = vpow.pop %v3339
    %v3341 = vsel %vm106, %v3338, 0.0
    %3342 = vadd.xlane.f32.xlu0 %v3341
    %v3343 = vpop.xlane.xlu0 %3342
    %v3344 = vsel %vm106, %v3340, 0.0
    %3345 = vadd.xlane.f32.xlu0 %v3344
    %v3346 = vpop.xlane.xlu0 %3345
    %v3347 = vrcp.pop %v3343
    %v3348 = vrcp.pop %v3346
    %v3349 = vmul.f32 %v3338, %v3347
    %v3350 = vmul.f32 %v3340, %v3348
    %v3351 = vpack.c.bf16 %v3349, %v3349
    %v3352 = vpack.c.bf16 %v3350, %v3350
    %3353 = vrot.lane.b32.xlu0 %v3283, 64
    %v3354 = vpop.permute.xlu0 %3353
    %v3356 = vsel %vm106, %v3351, 0
    %v3359 = vsel %vm179, %v3354, 0
    %3361 = vmatpush.bf16.msra.mxu0 0
    %3362 = vmatpush.bf16.msra.mxu0 0
    %3363 = vmatpush.bf16.msra.mxu0 0
    %3364 = vmatpush.bf16.msra.mxu0 0
    %3365 = vmatpush.bf16.msra.mxu0 0
    %3366 = vmatpush.bf16.msra.mxu0 0
    %3367 = vmatpush.bf16.msra.mxu0 0
    %3368 = vmatpush.bf16.msra.mxu0 %v3359
    %3369 = vmatmul.bf16.gmra.mxu0 %v3356
    %v3370 = vpop.f32.mrf.mxu0
    %v3371 = vadd.f32 0.0, %v3370
    %v3372 = vpop.f32.mrf.mxu0
    %3373 = vdwg.mxu0
    %3374 = vrot.lane.b32.xlu0 %v3307, 64
    %v3375 = vpop.permute.xlu0 %3374
    %v3377 = vsel %vm106, %v3352, 0
    %v3380 = vsel %vm179, %v3375, 0
    %3382 = vmatpush.bf16.msra.mxu0 0
    %3383 = vmatpush.bf16.msra.mxu0 0
    %3384 = vmatpush.bf16.msra.mxu0 0
    %3385 = vmatpush.bf16.msra.mxu0 0
    %3386 = vmatpush.bf16.msra.mxu0 0
    %3387 = vmatpush.bf16.msra.mxu0 0
    %3388 = vmatpush.bf16.msra.mxu0 0
    %3389 = vmatpush.bf16.msra.mxu0 %v3380
    %3390 = vmatmul.bf16.gmra.mxu0 %v3377
    %v3391 = vpop.f32.mrf.mxu0
    %v3392 = vadd.f32 0.0, %v3391
    %v3393 = vpop.f32.mrf.mxu0
    %3394 = vdwg.mxu0
    %3395 = vrot.lane.b32.xlu0 %v3283, 120
    %v3396 = vpop.permute.xlu0 %3395
    %3397 = vrot.lane.b32.xlu0 %v3283, 88
    %v3398 = vpop.permute.xlu0 %3397
    %v3400 = vsel %vm106, %v3396, 0
    %v3403 = vsel %vm106, %v3398, 0
    %3405 = vmatpush.bf16.xpose.msra.mxu0 0
    %3406 = vmatpush.bf16.xpose.msra.mxu0 0
    %3407 = vmatpush.bf16.xpose.msra.mxu0 0
    %3408 = vmatpush.bf16.xpose.msra.mxu0 0
    %3409 = vmatpush.bf16.xpose.msra.mxu0 0
    %3410 = vmatpush.bf16.xpose.msra.mxu0 0
    %3411 = vmatpush.bf16.xpose.msra.mxu0 0
    %3412 = vmatpush.bf16.xpose.msra.mxu0 %v3403
    %3413 = vmatmul.bf16.gmra.mxu0 %v3400
    %v3414 = vpop.f32.mrf.mxu0
    %v3415 = vadd.f32 0.0, %v3414
    %v3416 = vpop.f32.mrf.mxu0
    %3417 = vdwg.mxu0
    %3418 = vrot.lane.b32.xlu0 %v3307, 120
    %v3419 = vpop.permute.xlu0 %3418
    %3420 = vrot.lane.b32.xlu0 %v3307, 88
    %v3421 = vpop.permute.xlu0 %3420
    %v3423 = vsel %vm106, %v3419, 0
    %v3426 = vsel %vm106, %v3421, 0
    %3428 = vmatpush.bf16.xpose.msra.mxu0 0
    %3429 = vmatpush.bf16.xpose.msra.mxu0 0
    %3430 = vmatpush.bf16.xpose.msra.mxu0 0
    %3431 = vmatpush.bf16.xpose.msra.mxu0 0
    %3432 = vmatpush.bf16.xpose.msra.mxu0 0
    %3433 = vmatpush.bf16.xpose.msra.mxu0 0
    %3434 = vmatpush.bf16.xpose.msra.mxu0 0
    %3435 = vmatpush.bf16.xpose.msra.mxu0 %v3426
    %3436 = vmatmul.bf16.gmra.mxu0 %v3423
    %v3437 = vpop.f32.mrf.mxu0
    %v3438 = vadd.f32 0.0, %v3437
    %v3439 = vpop.f32.mrf.mxu0
    %3440 = vdwg.mxu0
    %v3441 = vsel %vm106, %v3415, -inf
    %3442 = vmax.xlane.f32.xlu0 %v3441
    %v3443 = vpop.xlane.xlu0 %3442
    %v3444 = vsel %vm106, %v3438, -inf
    %3445 = vmax.xlane.f32.xlu0 %v3444
    %v3446 = vpop.xlane.xlu0 %3445
    %v3447 = vsub.f32 %v3415, %v3443
    %v3448 = vsub.f32 %v3438, %v3446
    %v3449 = vmul.f32 %v3447, 1.442695
    %v3450 = vpow.pop %v3449
    %v3451 = vmul.f32 %v3448, 1.442695
    %v3452 = vpow.pop %v3451
    %v3453 = vsel %vm106, %v3450, 0.0
    %3454 = vadd.xlane.f32.xlu0 %v3453
    %v3455 = vpop.xlane.xlu0 %3454
    %v3456 = vsel %vm106, %v3452, 0.0
    %3457 = vadd.xlane.f32.xlu0 %v3456
    %v3458 = vpop.xlane.xlu0 %3457
    %v3459 = vrcp.pop %v3455
    %v3460 = vrcp.pop %v3458
    %v3461 = vmul.f32 %v3450, %v3459
    %v3462 = vmul.f32 %v3452, %v3460
    %v3463 = vpack.c.bf16 %v3461, %v3461
    %v3464 = vpack.c.bf16 %v3462, %v3462
    %3465 = vrot.lane.b32.xlu0 %v3283, 56
    %v3466 = vpop.permute.xlu0 %3465
    %v3468 = vsel %vm106, %v3463, 0
    %v3471 = vsel %vm179, %v3466, 0
    %3473 = vmatpush.bf16.msra.mxu0 0
    %3474 = vmatpush.bf16.msra.mxu0 0
    %3475 = vmatpush.bf16.msra.mxu0 0
    %3476 = vmatpush.bf16.msra.mxu0 0
    %3477 = vmatpush.bf16.msra.mxu0 0
    %3478 = vmatpush.bf16.msra.mxu0 0
    %3479 = vmatpush.bf16.msra.mxu0 0
    %3480 = vmatpush.bf16.msra.mxu0 %v3471
    %3481 = vmatmul.bf16.gmra.mxu0 %v3468
    %v3482 = vpop.f32.mrf.mxu0
    %v3483 = vadd.f32 0.0, %v3482
    %v3484 = vpop.f32.mrf.mxu0
    %3485 = vdwg.mxu0
    %3486 = vrot.lane.b32.xlu0 %v3307, 56
    %v3487 = vpop.permute.xlu0 %3486
    %v3489 = vsel %vm106, %v3464, 0
    %v3492 = vsel %vm179, %v3487, 0
    %3494 = vmatpush.bf16.msra.mxu0 0
    %3495 = vmatpush.bf16.msra.mxu0 0
    %3496 = vmatpush.bf16.msra.mxu0 0
    %3497 = vmatpush.bf16.msra.mxu0 0
    %3498 = vmatpush.bf16.msra.mxu0 0
    %3499 = vmatpush.bf16.msra.mxu0 0
    %3500 = vmatpush.bf16.msra.mxu0 0
    %3501 = vmatpush.bf16.msra.mxu0 %v3492
    %3502 = vmatmul.bf16.gmra.mxu0 %v3489
    %v3503 = vpop.f32.mrf.mxu0
    %v3504 = vadd.f32 0.0, %v3503
    %v3505 = vpop.f32.mrf.mxu0
    %3506 = vdwg.mxu0
    %3507 = vrot.lane.b32.xlu0 %v3283, 112
    %v3508 = vpop.permute.xlu0 %3507
    %3509 = vrot.lane.b32.xlu0 %v3283, 80
    %v3510 = vpop.permute.xlu0 %3509
    %v3512 = vsel %vm106, %v3508, 0
    %v3515 = vsel %vm106, %v3510, 0
    %3517 = vmatpush.bf16.xpose.msra.mxu0 0
    %3518 = vmatpush.bf16.xpose.msra.mxu0 0
    %3519 = vmatpush.bf16.xpose.msra.mxu0 0
    %3520 = vmatpush.bf16.xpose.msra.mxu0 0
    %3521 = vmatpush.bf16.xpose.msra.mxu0 0
    %3522 = vmatpush.bf16.xpose.msra.mxu0 0
    %3523 = vmatpush.bf16.xpose.msra.mxu0 0
    %3524 = vmatpush.bf16.xpose.msra.mxu0 %v3515
    %3525 = vmatmul.bf16.gmra.mxu0 %v3512
    %v3526 = vpop.f32.mrf.mxu0
    %v3527 = vadd.f32 0.0, %v3526
    %v3528 = vpop.f32.mrf.mxu0
    %3529 = vdwg.mxu0
    %3530 = vrot.lane.b32.xlu0 %v3307, 112
    %v3531 = vpop.permute.xlu0 %3530
    %3532 = vrot.lane.b32.xlu0 %v3307, 80
    %v3533 = vpop.permute.xlu0 %3532
    %v3535 = vsel %vm106, %v3531, 0
    %v3538 = vsel %vm106, %v3533, 0
    %3540 = vmatpush.bf16.xpose.msra.mxu0 0
    %3541 = vmatpush.bf16.xpose.msra.mxu0 0
    %3542 = vmatpush.bf16.xpose.msra.mxu0 0
    %3543 = vmatpush.bf16.xpose.msra.mxu0 0
    %3544 = vmatpush.bf16.xpose.msra.mxu0 0
    %3545 = vmatpush.bf16.xpose.msra.mxu0 0
    %3546 = vmatpush.bf16.xpose.msra.mxu0 0
    %3547 = vmatpush.bf16.xpose.msra.mxu0 %v3538
    %3548 = vmatmul.bf16.gmra.mxu0 %v3535
    %v3549 = vpop.f32.mrf.mxu0
    %v3550 = vadd.f32 0.0, %v3549
    %v3551 = vpop.f32.mrf.mxu0
    %3552 = vdwg.mxu0
    %v3553 = vsel %vm106, %v3527, -inf
    %3554 = vmax.xlane.f32.xlu0 %v3553
    %v3555 = vpop.xlane.xlu0 %3554
    %v3556 = vsel %vm106, %v3550, -inf
    %3557 = vmax.xlane.f32.xlu0 %v3556
    %v3558 = vpop.xlane.xlu0 %3557
    %v3559 = vsub.f32 %v3527, %v3555
    %v3560 = vsub.f32 %v3550, %v3558
    %v3561 = vmul.f32 %v3559, 1.442695
    %v3562 = vpow.pop %v3561
    %v3563 = vmul.f32 %v3560, 1.442695
    %v3564 = vpow.pop %v3563
    %v3565 = vsel %vm106, %v3562, 0.0
    %3566 = vadd.xlane.f32.xlu0 %v3565
    %v3567 = vpop.xlane.xlu0 %3566
    %v3568 = vsel %vm106, %v3564, 0.0
    %3569 = vadd.xlane.f32.xlu0 %v3568
    %v3570 = vpop.xlane.xlu0 %3569
    %v3571 = vrcp.pop %v3567
    %v3572 = vrcp.pop %v3570
    %v3573 = vmul.f32 %v3562, %v3571
    %v3574 = vmul.f32 %v3564, %v3572
    %v3575 = vpack.c.bf16 %v3573, %v3573
    %v3576 = vpack.c.bf16 %v3574, %v3574
    %3577 = vrot.lane.b32.xlu0 %v3283, 48
    %v3578 = vpop.permute.xlu0 %3577
    %v3580 = vsel %vm106, %v3575, 0
    %v3583 = vsel %vm179, %v3578, 0
    %3585 = vmatpush.bf16.msra.mxu0 0
    %3586 = vmatpush.bf16.msra.mxu0 0
    %3587 = vmatpush.bf16.msra.mxu0 0
    %3588 = vmatpush.bf16.msra.mxu0 0
    %3589 = vmatpush.bf16.msra.mxu0 0
    %3590 = vmatpush.bf16.msra.mxu0 0
    %3591 = vmatpush.bf16.msra.mxu0 0
    %3592 = vmatpush.bf16.msra.mxu0 %v3583
    %3593 = vmatmul.bf16.gmra.mxu0 %v3580
    %v3594 = vpop.f32.mrf.mxu0
    %v3595 = vadd.f32 0.0, %v3594
    %v3596 = vpop.f32.mrf.mxu0
    %3597 = vdwg.mxu0
    %3598 = vrot.lane.b32.xlu0 %v3307, 48
    %v3599 = vpop.permute.xlu0 %3598
    %v3601 = vsel %vm106, %v3576, 0
    %v3604 = vsel %vm179, %v3599, 0
    %3606 = vmatpush.bf16.msra.mxu0 0
    %3607 = vmatpush.bf16.msra.mxu0 0
    %3608 = vmatpush.bf16.msra.mxu0 0
    %3609 = vmatpush.bf16.msra.mxu0 0
    %3610 = vmatpush.bf16.msra.mxu0 0
    %3611 = vmatpush.bf16.msra.mxu0 0
    %3612 = vmatpush.bf16.msra.mxu0 0
    %3613 = vmatpush.bf16.msra.mxu0 %v3604
    %3614 = vmatmul.bf16.gmra.mxu0 %v3601
    %v3615 = vpop.f32.mrf.mxu0
    %v3616 = vadd.f32 0.0, %v3615
    %v3617 = vpop.f32.mrf.mxu0
    %3618 = vdwg.mxu0
    %3619 = vrot.lane.b32.xlu0 %v3283, 104
    %v3620 = vpop.permute.xlu0 %3619
    %3621 = vrot.lane.b32.xlu0 %v3283, 72
    %v3622 = vpop.permute.xlu0 %3621
    %v3624 = vsel %vm106, %v3620, 0
    %v3627 = vsel %vm106, %v3622, 0
    %3629 = vmatpush.bf16.xpose.msra.mxu0 0
    %3630 = vmatpush.bf16.xpose.msra.mxu0 0
    %3631 = vmatpush.bf16.xpose.msra.mxu0 0
    %3632 = vmatpush.bf16.xpose.msra.mxu0 0
    %3633 = vmatpush.bf16.xpose.msra.mxu0 0
    %3634 = vmatpush.bf16.xpose.msra.mxu0 0
    %3635 = vmatpush.bf16.xpose.msra.mxu0 0
    %3636 = vmatpush.bf16.xpose.msra.mxu0 %v3627
    %3637 = vmatmul.bf16.gmra.mxu0 %v3624
    %v3638 = vpop.f32.mrf.mxu0
    %v3639 = vadd.f32 0.0, %v3638
    %v3640 = vpop.f32.mrf.mxu0
    %3641 = vdwg.mxu0
    %3642 = vrot.lane.b32.xlu0 %v3307, 104
    %v3643 = vpop.permute.xlu0 %3642
    %3644 = vrot.lane.b32.xlu0 %v3307, 72
    %v3645 = vpop.permute.xlu0 %3644
    %v3647 = vsel %vm106, %v3643, 0
    %v3650 = vsel %vm106, %v3645, 0
    %3652 = vmatpush.bf16.xpose.msra.mxu0 0
    %3653 = vmatpush.bf16.xpose.msra.mxu0 0
    %3654 = vmatpush.bf16.xpose.msra.mxu0 0
    %3655 = vmatpush.bf16.xpose.msra.mxu0 0
    %3656 = vmatpush.bf16.xpose.msra.mxu0 0
    %3657 = vmatpush.bf16.xpose.msra.mxu0 0
    %3658 = vmatpush.bf16.xpose.msra.mxu0 0
    %3659 = vmatpush.bf16.xpose.msra.mxu0 %v3650
    %3660 = vmatmul.bf16.gmra.mxu0 %v3647
    %v3661 = vpop.f32.mrf.mxu0
    %v3662 = vadd.f32 0.0, %v3661
    %v3663 = vpop.f32.mrf.mxu0
    %3664 = vdwg.mxu0
    %v3665 = vsel %vm106, %v3639, -inf
    %3666 = vmax.xlane.f32.xlu0 %v3665
    %v3667 = vpop.xlane.xlu0 %3666
    %v3668 = vsel %vm106, %v3662, -inf
    %3669 = vmax.xlane.f32.xlu0 %v3668
    %v3670 = vpop.xlane.xlu0 %3669
    %v3671 = vsub.f32 %v3639, %v3667
    %v3672 = vsub.f32 %v3662, %v3670
    %v3673 = vmul.f32 %v3671, 1.442695
    %v3674 = vpow.pop %v3673
    %v3675 = vmul.f32 %v3672, 1.442695
    %v3676 = vpow.pop %v3675
    %v3677 = vsel %vm106, %v3674, 0.0
    %3678 = vadd.xlane.f32.xlu0 %v3677
    %v3679 = vpop.xlane.xlu0 %3678
    %v3680 = vsel %vm106, %v3676, 0.0
    %3681 = vadd.xlane.f32.xlu0 %v3680
    %v3682 = vpop.xlane.xlu0 %3681
    %v3683 = vrcp.pop %v3679
    %v3684 = vrcp.pop %v3682
    %v3685 = vmul.f32 %v3674, %v3683
    %v3686 = vmul.f32 %v3676, %v3684
    %v3687 = vpack.c.bf16 %v3685, %v3685
    %v3688 = vpack.c.bf16 %v3686, %v3686
    %3689 = vrot.lane.b32.xlu0 %v3283, 40
    %v3690 = vpop.permute.xlu0 %3689
    %v3692 = vsel %vm106, %v3687, 0
    %v3695 = vsel %vm179, %v3690, 0
    %3697 = vmatpush.bf16.msra.mxu0 0
    %3698 = vmatpush.bf16.msra.mxu0 0
    %3699 = vmatpush.bf16.msra.mxu0 0
    %3700 = vmatpush.bf16.msra.mxu0 0
    %3701 = vmatpush.bf16.msra.mxu0 0
    %3702 = vmatpush.bf16.msra.mxu0 0
    %3703 = vmatpush.bf16.msra.mxu0 0
    %3704 = vmatpush.bf16.msra.mxu0 %v3695
    %3705 = vmatmul.bf16.gmra.mxu0 %v3692
    %v3706 = vpop.f32.mrf.mxu0
    %v3707 = vadd.f32 0.0, %v3706
    %v3708 = vpop.f32.mrf.mxu0
    %3709 = vdwg.mxu0
    %3710 = vrot.lane.b32.xlu0 %v3307, 40
    %v3711 = vpop.permute.xlu0 %3710
    %v3713 = vsel %vm106, %v3688, 0
    %v3716 = vsel %vm179, %v3711, 0
    %3718 = vmatpush.bf16.msra.mxu0 0
    %3719 = vmatpush.bf16.msra.mxu0 0
    %3720 = vmatpush.bf16.msra.mxu0 0
    %3721 = vmatpush.bf16.msra.mxu0 0
    %3722 = vmatpush.bf16.msra.mxu0 0
    %3723 = vmatpush.bf16.msra.mxu0 0
    %3724 = vmatpush.bf16.msra.mxu0 0
    %3725 = vmatpush.bf16.msra.mxu0 %v3716
    %3726 = vmatmul.bf16.gmra.mxu0 %v3713
    %v3727 = vpop.f32.mrf.mxu0
    %v3728 = vadd.f32 0.0, %v3727
    %v3729 = vpop.f32.mrf.mxu0
    %3730 = vdwg.mxu0
    %3733 = vrot.lane.b32.xlu0 %v3483, 8
    %v3734 = vpop.permute.xlu0 %3733
    %3735 = vrot.lane.b32.xlu0 %v3504, 8
    %v3736 = vpop.permute.xlu0 %3735
    %3741 = vrot.lane.b32.xlu0 %v3595, 16
    %v3742 = vpop.permute.xlu0 %3741
    %3743 = vrot.lane.b32.xlu0 %v3616, 16
    %v3744 = vpop.permute.xlu0 %3743
    %3749 = vrot.lane.b32.xlu0 %v3707, 24
    %v3750 = vpop.permute.xlu0 %3749
    %3751 = vrot.lane.b32.xlu0 %v3728, 24
    %v3752 = vpop.permute.xlu0 %3751
    %v3755 = vsel %vm106, %v3371, %v3734
    %v3756 = vsel %vm106, %v3392, %v3736
    %v3757 = vsel %vm579, %v3755, %v3742
    %v3758 = vsel %vm579, %v3756, %v3744
    %v3759 = vsel %vm582, %v3757, %v3750
    %v3760 = vsel %vm582, %v3758, %v3752
    %s3761 = scalar_lea.vmem %s3, 64
    %v3762 = vld [vmem:[%s3761] sm:$0xf]
    %v3763 = vld [vmem:[%s3761 + $0x4] sm:$0xf]
    %v3764 = vld [vmem:[%s3761 + $0x8] sm:$0xf]
    %v3765 = vld [vmem:[%s3761 + $0xc] sm:$0xf]
    %v3766 = vpack.c.bf16 %v3760, %v3759
    %v3767 = vld [vmem:[#allocation5 + $0xa] sm:$0x1]
    %v3768 = vperm.slane %v3767, 0
    %v3773 = vunpack.c.l.b16 %v3762
    %v3774 = vunpack.c.l.b16 %v3763
    %v3775 = vunpack.c.l.b16 %v3764
    %v3776 = vunpack.c.l.b16 %v3765
    %v3777 = vpack.c.b16 %v3774, %v3773
    %v3778 = vpack.c.b16 %v3776, %v3775
    %v3782 = vsel %vm81, %v3766, 0
    %3784 = vmatpush.bf16.msra.mxu0 0
    %3785 = vmatpush.bf16.msra.mxu0 0
    %3786 = vmatpush.bf16.msra.mxu0 0
    %3787 = vmatpush.bf16.msra.mxu0 0
    %3788 = vmatpush.bf16.msra.mxu0 0
    %3789 = vmatpush.bf16.msra.mxu0 0
    %3790 = vmatpush.bf16.msra.mxu0 %v3778
    %3791 = vmatpush.bf16.msra.mxu0 %v3777
    %3792 = vmatmul.bf16.gmra.mxu0 %v3782
    %v3793 = vpop.f32.mrf.mxu0
    %v3794 = vadd.f32 %v3768, %v3793
    %v3795 = vpop.f32.mrf.mxu0
    %v3796 = vadd.f32 %v3768, %v3795
    %3797 = vdwg.mxu0
    %v3798 = vadd.f32 %v3240, %v3794
    %v3799 = vadd.f32 %v3241, %v3796
    %v3800 = vld [vmem:[#allocation5 + $0x1b] sm:$0x1]
    %v3801 = vld [vmem:[#allocation5 + $0x25] sm:$0x1]
    %v3802 = vsel %vm81, %v3798, 0.0
    %3803 = vadd.xlane.f32.xlu0 %v3802
    %v3804 = vpop.xlane.xlu0 %3803
    %v3805 = vsel %vm81, %v3799, 0.0
    %3806 = vadd.xlane.f32.xlu0 %v3805
    %v3807 = vpop.xlane.xlu0 %3806
    %v3808 = vmul.f32 %v3804, %v637
    %v3809 = vmul.f32 %v3807, %v637
    %v3810 = vsub.f32 %v3798, %v3808
    %v3811 = vsub.f32 %v3799, %v3809
    %v3812 = vmul.f32 %v3810, %v3810
    %v3813 = vmul.f32 %v3811, %v3811
    %v3814 = vsel %vm81, %v3812, 0.0
    %3815 = vadd.xlane.f32.xlu0 %v3814
    %v3816 = vpop.xlane.xlu0 %3815
    %v3817 = vsel %vm81, %v3813, 0.0
    %3818 = vadd.xlane.f32.xlu0 %v3817
    %v3819 = vpop.xlane.xlu0 %3818
    %v3820 = vmul.f32 %v3816, %v637
    %v3821 = vmul.f32 %v3819, %v637
    %v3822 = vadd.f32 %v3820, 1e-05
    %v3823 = vadd.f32 %v3821, 1e-05
    %v3824 = vrsqrt.pop %v3822
    %v3825 = vmul.f32 %v3824, %v3822
    %v3826 = vmul.f32 %v3825, %v3824
    %v3827 = vmul.f32 0.5, %v3826
    %v3828 = vsub.f32 1.5, %v3827
    %v3829 = vmul.f32 %v3824, %v3828
    %vm3830 = vweird.f32 %v3822
    %vm3831 = vweird.f32 %v3824
    %vm3832 = vmor %vm3830, %vm3831
    %v3833 = vsel %vm3832, %v3824, %v3829
    %v3834 = vrsqrt.pop %v3823
    %v3835 = vmul.f32 %v3834, %v3823
    %v3836 = vmul.f32 %v3835, %v3834
    %v3837 = vmul.f32 0.5, %v3836
    %v3838 = vsub.f32 1.5, %v3837
    %v3839 = vmul.f32 %v3834, %v3838
    %vm3840 = vweird.f32 %v3823
    %vm3841 = vweird.f32 %v3834
    %vm3842 = vmor %vm3840, %vm3841
    %v3843 = vsel %vm3842, %v3834, %v3839
    %v3844 = vmul.f32 %v3810, %v3833
    %v3845 = vmul.f32 %v3811, %v3843
    %v3846 = vperm.slane %v3800, 0
    %v3847 = vmul.f32 %v3844, %v3846
    %v3848 = vmul.f32 %v3845, %v3846
    %v3849 = vperm.slane %v3801, 0
    %v3850 = vadd.f32 %v3847, %v3849
    %v3851 = vadd.f32 %v3848, %v3849
    %s3852 = scalar_lea.vmem %s2, 80
    %v3853 = vld [vmem:[%s3852] sm:$0xf]
    %v3854 = vld [vmem:[%s3852 + $0x4] sm:$0xf]
    %v3855 = vld [vmem:[%s3852 + $0x8] sm:$0xf]
    %v3856 = vld [vmem:[%s3852 + $0xc] sm:$0xf]
    %v3857 = vld [vmem:[#allocation5 + $0x5] sm:$0x1]
    %v3858 = vpack.c.bf16 %v3851, %v3850
    %v3859 = vperm.slane %v3857, 0
    %v3864 = vunpack.c.l.b16 %v3853
    %v3865 = vunpack.c.l.b16 %v3854
    %v3866 = vunpack.c.l.b16 %v3855
    %v3867 = vunpack.c.l.b16 %v3856
    %v3868 = vpack.c.b16 %v3865, %v3864
    %v3869 = vpack.c.b16 %v3867, %v3866
    %v3873 = vsel %vm81, %v3858, 0
    %3875 = vmatpush.bf16.msra.mxu0 0
    %3876 = vmatpush.bf16.msra.mxu0 0
    %3877 = vmatpush.bf16.msra.mxu0 0
    %3878 = vmatpush.bf16.msra.mxu0 0
    %3879 = vmatpush.bf16.msra.mxu0 0
    %3880 = vmatpush.bf16.msra.mxu0 0
    %3881 = vmatpush.bf16.msra.mxu0 %v3869
    %3882 = vmatpush.bf16.msra.mxu0 %v3868
    %3883 = vmatmul.bf16.gmra.mxu0 %v3873
    %v3884 = vpop.f32.mrf.mxu0
    %v3885 = vadd.f32 %v3859, %v3884
    %v3886 = vpop.f32.mrf.mxu0
    %v3887 = vadd.f32 %v3859, %v3886
    %3888 = vdwg.mxu0
    %3889 = vmatpush.bf16.msra.mxu0 0
    %3890 = vmatpush.bf16.msra.mxu0 0
    %3891 = vmatpush.bf16.msra.mxu0 0
    %3892 = vmatpush.bf16.msra.mxu0 0
    %3893 = vmatpush.bf16.msra.mxu0 0
    %3894 = vmatpush.bf16.msra.mxu0 0
    %3895 = vmatpush.bf16.msra.mxu0 %v3869
    %3896 = vmatpush.bf16.msra.mxu0 %v3868
    %3897 = vmatmul.bf16.gmra.mxu0 %v2413
    %v3898 = vpop.f32.mrf.mxu0
    %v3899 = vadd.f32 %v3859, %v3898
    %v3900 = vpop.f32.mrf.mxu0
    %v3901 = vadd.f32 %v3859, %v3900
    %3902 = vdwg.mxu0
    %v3903 = vpack.c.bf16 %v3885, %v3885
    %v3904 = vpack.c.bf16 %v3887, %v3887
    %v3905 = vpack.c.bf16 %v3899, %v3899
    %v3906 = vpack.c.bf16 %v3901, %v3901
    %v3908 = vunpack.c.l.b16 %v3905
    %v3909 = vpack.c.b16 %v3908, %v3908
    %3910 = vrot.lane.b32.xlu0 %v3909, 96
    %v3911 = vpop.permute.xlu0 %3910
    %v3913 = vsel %vm106, %v3903, 0
    %v3916 = vsel %vm106, %v3911, 0
    %3918 = vmatpush.bf16.xpose.msra.mxu0 0
    %3919 = vmatpush.bf16.xpose.msra.mxu0 0
    %3920 = vmatpush.bf16.xpose.msra.mxu0 0
    %3921 = vmatpush.bf16.xpose.msra.mxu0 0
    %3922 = vmatpush.bf16.xpose.msra.mxu0 0
    %3923 = vmatpush.bf16.xpose.msra.mxu0 0
    %3924 = vmatpush.bf16.xpose.msra.mxu0 0
    %3925 = vmatpush.bf16.xpose.msra.mxu0 %v3916
    %3926 = vmatmul.bf16.gmra.mxu0 %v3913
    %v3927 = vpop.f32.mrf.mxu0
    %v3928 = vadd.f32 0.0, %v3927
    %v3929 = vpop.f32.mrf.mxu0
    %3930 = vdwg.mxu0
    %v3932 = vunpack.c.l.b16 %v3906
    %v3933 = vpack.c.b16 %v3932, %v3932
    %3934 = vrot.lane.b32.xlu0 %v3933, 96
    %v3935 = vpop.permute.xlu0 %3934
    %v3937 = vsel %vm106, %v3904, 0
    %v3940 = vsel %vm106, %v3935, 0
    %3942 = vmatpush.bf16.xpose.msra.mxu0 0
    %3943 = vmatpush.bf16.xpose.msra.mxu0 0
    %3944 = vmatpush.bf16.xpose.msra.mxu0 0
    %3945 = vmatpush.bf16.xpose.msra.mxu0 0
    %3946 = vmatpush.bf16.xpose.msra.mxu0 0
    %3947 = vmatpush.bf16.xpose.msra.mxu0 0
    %3948 = vmatpush.bf16.xpose.msra.mxu0 0
    %3949 = vmatpush.bf16.xpose.msra.mxu0 %v3940
    %3950 = vmatmul.bf16.gmra.mxu0 %v3937
    %v3951 = vpop.f32.mrf.mxu0
    %v3952 = vadd.f32 0.0, %v3951
    %v3953 = vpop.f32.mrf.mxu0
    %3954 = vdwg.mxu0
    %v3955 = vsel %vm106, %v3928, -inf
    %3956 = vmax.xlane.f32.xlu0 %v3955
    %v3957 = vpop.xlane.xlu0 %3956
    %v3958 = vsel %vm106, %v3952, -inf
    %3959 = vmax.xlane.f32.xlu0 %v3958
    %v3960 = vpop.xlane.xlu0 %3959
    %v3961 = vsub.f32 %v3928, %v3957
    %v3962 = vsub.f32 %v3952, %v3960
    %v3963 = vmul.f32 %v3961, 1.442695
    %v3964 = vpow.pop %v3963
    %v3965 = vmul.f32 %v3962, 1.442695
    %v3966 = vpow.pop %v3965
    %v3967 = vsel %vm106, %v3964, 0.0
    %3968 = vadd.xlane.f32.xlu0 %v3967
    %v3969 = vpop.xlane.xlu0 %3968
    %v3970 = vsel %vm106, %v3966, 0.0
    %3971 = vadd.xlane.f32.xlu0 %v3970
    %v3972 = vpop.xlane.xlu0 %3971
    %v3973 = vrcp.pop %v3969
    %v3974 = vrcp.pop %v3972
    %v3975 = vmul.f32 %v3964, %v3973
    %v3976 = vmul.f32 %v3966, %v3974
    %v3977 = vpack.c.bf16 %v3975, %v3975
    %v3978 = vpack.c.bf16 %v3976, %v3976
    %3979 = vrot.lane.b32.xlu0 %v3909, 64
    %v3980 = vpop.permute.xlu0 %3979
    %v3982 = vsel %vm106, %v3977, 0
    %v3985 = vsel %vm179, %v3980, 0
    %3987 = vmatpush.bf16.msra.mxu0 0
    %3988 = vmatpush.bf16.msra.mxu0 0
    %3989 = vmatpush.bf16.msra.mxu0 0
    %3990 = vmatpush.bf16.msra.mxu0 0
    %3991 = vmatpush.bf16.msra.mxu0 0
    %3992 = vmatpush.bf16.msra.mxu0 0
    %3993 = vmatpush.bf16.msra.mxu0 0
    %3994 = vmatpush.bf16.msra.mxu0 %v3985
    %3995 = vmatmul.bf16.gmra.mxu0 %v3982
    %v3996 = vpop.f32.mrf.mxu0
    %v3997 = vadd.f32 0.0, %v3996
    %v3998 = vpop.f32.mrf.mxu0
    %3999 = vdwg.mxu0
    %4000 = vrot.lane.b32.xlu0 %v3933, 64
    %v4001 = vpop.permute.xlu0 %4000
    %v4003 = vsel %vm106, %v3978, 0
    %v4006 = vsel %vm179, %v4001, 0
    %4008 = vmatpush.bf16.msra.mxu0 0
    %4009 = vmatpush.bf16.msra.mxu0 0
    %4010 = vmatpush.bf16.msra.mxu0 0
    %4011 = vmatpush.bf16.msra.mxu0 0
    %4012 = vmatpush.bf16.msra.mxu0 0
    %4013 = vmatpush.bf16.msra.mxu0 0
    %4014 = vmatpush.bf16.msra.mxu0 0
    %4015 = vmatpush.bf16.msra.mxu0 %v4006
    %4016 = vmatmul.bf16.gmra.mxu0 %v4003
    %v4017 = vpop.f32.mrf.mxu0
    %v4018 = vadd.f32 0.0, %v4017
    %v4019 = vpop.f32.mrf.mxu0
    %4020 = vdwg.mxu0
    %v4022 = vunpack.c.l.b16 %v3903
    %v4023 = vpack.c.b16 %v4022, %v4022
    %4024 = vrot.lane.b32.xlu0 %v4023, 120
    %v4025 = vpop.permute.xlu0 %4024
    %4026 = vrot.lane.b32.xlu0 %v3909, 88
    %v4027 = vpop.permute.xlu0 %4026
    %v4029 = vsel %vm106, %v4025, 0
    %v4032 = vsel %vm106, %v4027, 0
    %4034 = vmatpush.bf16.xpose.msra.mxu0 0
    %4035 = vmatpush.bf16.xpose.msra.mxu0 0
    %4036 = vmatpush.bf16.xpose.msra.mxu0 0
    %4037 = vmatpush.bf16.xpose.msra.mxu0 0
    %4038 = vmatpush.bf16.xpose.msra.mxu0 0
    %4039 = vmatpush.bf16.xpose.msra.mxu0 0
    %4040 = vmatpush.bf16.xpose.msra.mxu0 0
    %4041 = vmatpush.bf16.xpose.msra.mxu0 %v4032
    %4042 = vmatmul.bf16.gmra.mxu0 %v4029
    %v4043 = vpop.f32.mrf.mxu0
    %v4044 = vadd.f32 0.0, %v4043
    %v4045 = vpop.f32.mrf.mxu0
    %4046 = vdwg.mxu0
    %v4048 = vunpack.c.l.b16 %v3904
    %v4049 = vpack.c.b16 %v4048, %v4048
    %4050 = vrot.lane.b32.xlu0 %v4049, 120
    %v4051 = vpop.permute.xlu0 %4050
    %4052 = vrot.lane.b32.xlu0 %v3933, 88
    %v4053 = vpop.permute.xlu0 %4052
    %v4055 = vsel %vm106, %v4051, 0
    %v4058 = vsel %vm106, %v4053, 0
    %4060 = vmatpush.bf16.xpose.msra.mxu0 0
    %4061 = vmatpush.bf16.xpose.msra.mxu0 0
    %4062 = vmatpush.bf16.xpose.msra.mxu0 0
    %4063 = vmatpush.bf16.xpose.msra.mxu0 0
    %4064 = vmatpush.bf16.xpose.msra.mxu0 0
    %4065 = vmatpush.bf16.xpose.msra.mxu0 0
    %4066 = vmatpush.bf16.xpose.msra.mxu0 0
    %4067 = vmatpush.bf16.xpose.msra.mxu0 %v4058
    %4068 = vmatmul.bf16.gmra.mxu0 %v4055
    %v4069 = vpop.f32.mrf.mxu0
    %v4070 = vadd.f32 0.0, %v4069
    %v4071 = vpop.f32.mrf.mxu0
    %4072 = vdwg.mxu0
    %v4073 = vsel %vm106, %v4044, -inf
    %4074 = vmax.xlane.f32.xlu0 %v4073
    %v4075 = vpop.xlane.xlu0 %4074
    %v4076 = vsel %vm106, %v4070, -inf
    %4077 = vmax.xlane.f32.xlu0 %v4076
    %v4078 = vpop.xlane.xlu0 %4077
    %v4079 = vsub.f32 %v4044, %v4075
    %v4080 = vsub.f32 %v4070, %v4078
    %v4081 = vmul.f32 %v4079, 1.442695
    %v4082 = vpow.pop %v4081
    %v4083 = vmul.f32 %v4080, 1.442695
    %v4084 = vpow.pop %v4083
    %v4085 = vsel %vm106, %v4082, 0.0
    %4086 = vadd.xlane.f32.xlu0 %v4085
    %v4087 = vpop.xlane.xlu0 %4086
    %v4088 = vsel %vm106, %v4084, 0.0
    %4089 = vadd.xlane.f32.xlu0 %v4088
    %v4090 = vpop.xlane.xlu0 %4089
    %v4091 = vrcp.pop %v4087
    %v4092 = vrcp.pop %v4090
    %v4093 = vmul.f32 %v4082, %v4091
    %v4094 = vmul.f32 %v4084, %v4092
    %v4095 = vpack.c.bf16 %v4093, %v4093
    %v4096 = vpack.c.bf16 %v4094, %v4094
    %4097 = vrot.lane.b32.xlu0 %v3909, 56
    %v4098 = vpop.permute.xlu0 %4097
    %v4100 = vsel %vm106, %v4095, 0
    %v4103 = vsel %vm179, %v4098, 0
    %4105 = vmatpush.bf16.msra.mxu0 0
    %4106 = vmatpush.bf16.msra.mxu0 0
    %4107 = vmatpush.bf16.msra.mxu0 0
    %4108 = vmatpush.bf16.msra.mxu0 0
    %4109 = vmatpush.bf16.msra.mxu0 0
    %4110 = vmatpush.bf16.msra.mxu0 0
    %4111 = vmatpush.bf16.msra.mxu0 0
    %4112 = vmatpush.bf16.msra.mxu0 %v4103
    %4113 = vmatmul.bf16.gmra.mxu0 %v4100
    %v4114 = vpop.f32.mrf.mxu0
    %v4115 = vadd.f32 0.0, %v4114
    %v4116 = vpop.f32.mrf.mxu0
    %4117 = vdwg.mxu0
    %4118 = vrot.lane.b32.xlu0 %v3933, 56
    %v4119 = vpop.permute.xlu0 %4118
    %v4121 = vsel %vm106, %v4096, 0
    %v4124 = vsel %vm179, %v4119, 0
    %4126 = vmatpush.bf16.msra.mxu0 0
    %4127 = vmatpush.bf16.msra.mxu0 0
    %4128 = vmatpush.bf16.msra.mxu0 0
    %4129 = vmatpush.bf16.msra.mxu0 0
    %4130 = vmatpush.bf16.msra.mxu0 0
    %4131 = vmatpush.bf16.msra.mxu0 0
    %4132 = vmatpush.bf16.msra.mxu0 0
    %4133 = vmatpush.bf16.msra.mxu0 %v4124
    %4134 = vmatmul.bf16.gmra.mxu0 %v4121
    %v4135 = vpop.f32.mrf.mxu0
    %v4136 = vadd.f32 0.0, %v4135
    %v4137 = vpop.f32.mrf.mxu0
    %4138 = vdwg.mxu0
    %4139 = vrot.lane.b32.xlu0 %v4023, 112
    %v4140 = vpop.permute.xlu0 %4139
    %4141 = vrot.lane.b32.xlu0 %v3909, 80
    %v4142 = vpop.permute.xlu0 %4141
    %v4144 = vsel %vm106, %v4140, 0
    %v4147 = vsel %vm106, %v4142, 0
    %4149 = vmatpush.bf16.xpose.msra.mxu0 0
    %4150 = vmatpush.bf16.xpose.msra.mxu0 0
    %4151 = vmatpush.bf16.xpose.msra.mxu0 0
    %4152 = vmatpush.bf16.xpose.msra.mxu0 0
    %4153 = vmatpush.bf16.xpose.msra.mxu0 0
    %4154 = vmatpush.bf16.xpose.msra.mxu0 0
    %4155 = vmatpush.bf16.xpose.msra.mxu0 0
    %4156 = vmatpush.bf16.xpose.msra.mxu0 %v4147
    %4157 = vmatmul.bf16.gmra.mxu0 %v4144
    %v4158 = vpop.f32.mrf.mxu0
    %v4159 = vadd.f32 0.0, %v4158
    %v4160 = vpop.f32.mrf.mxu0
    %4161 = vdwg.mxu0
    %4162 = vrot.lane.b32.xlu0 %v4049, 112
    %v4163 = vpop.permute.xlu0 %4162
    %4164 = vrot.lane.b32.xlu0 %v3933, 80
    %v4165 = vpop.permute.xlu0 %4164
    %v4167 = vsel %vm106, %v4163, 0
    %v4170 = vsel %vm106, %v4165, 0
    %4172 = vmatpush.bf16.xpose.msra.mxu0 0
    %4173 = vmatpush.bf16.xpose.msra.mxu0 0
    %4174 = vmatpush.bf16.xpose.msra.mxu0 0
    %4175 = vmatpush.bf16.xpose.msra.mxu0 0
    %4176 = vmatpush.bf16.xpose.msra.mxu0 0
    %4177 = vmatpush.bf16.xpose.msra.mxu0 0
    %4178 = vmatpush.bf16.xpose.msra.mxu0 0
    %4179 = vmatpush.bf16.xpose.msra.mxu0 %v4170
    %4180 = vmatmul.bf16.gmra.mxu0 %v4167
    %v4181 = vpop.f32.mrf.mxu0
    %v4182 = vadd.f32 0.0, %v4181
    %v4183 = vpop.f32.mrf.mxu0
    %4184 = vdwg.mxu0
    %v4185 = vsel %vm106, %v4159, -inf
    %4186 = vmax.xlane.f32.xlu0 %v4185
    %v4187 = vpop.xlane.xlu0 %4186
    %v4188 = vsel %vm106, %v4182, -inf
    %4189 = vmax.xlane.f32.xlu0 %v4188
    %v4190 = vpop.xlane.xlu0 %4189
    %v4191 = vsub.f32 %v4159, %v4187
    %v4192 = vsub.f32 %v4182, %v4190
    %v4193 = vmul.f32 %v4191, 1.442695
    %v4194 = vpow.pop %v4193
    %v4195 = vmul.f32 %v4192, 1.442695
    %v4196 = vpow.pop %v4195
    %v4197 = vsel %vm106, %v4194, 0.0
    %4198 = vadd.xlane.f32.xlu0 %v4197
    %v4199 = vpop.xlane.xlu0 %4198
    %v4200 = vsel %vm106, %v4196, 0.0
    %4201 = vadd.xlane.f32.xlu0 %v4200
    %v4202 = vpop.xlane.xlu0 %4201
    %v4203 = vrcp.pop %v4199
    %v4204 = vrcp.pop %v4202
    %v4205 = vmul.f32 %v4194, %v4203
    %v4206 = vmul.f32 %v4196, %v4204
    %v4207 = vpack.c.bf16 %v4205, %v4205
    %v4208 = vpack.c.bf16 %v4206, %v4206
    %4209 = vrot.lane.b32.xlu0 %v3909, 48
    %v4210 = vpop.permute.xlu0 %4209
    %v4212 = vsel %vm106, %v4207, 0
    %v4215 = vsel %vm179, %v4210, 0
    %4217 = vmatpush.bf16.msra.mxu0 0
    %4218 = vmatpush.bf16.msra.mxu0 0
    %4219 = vmatpush.bf16.msra.mxu0 0
    %4220 = vmatpush.bf16.msra.mxu0 0
    %4221 = vmatpush.bf16.msra.mxu0 0
    %4222 = vmatpush.bf16.msra.mxu0 0
    %4223 = vmatpush.bf16.msra.mxu0 0
    %4224 = vmatpush.bf16.msra.mxu0 %v4215
    %4225 = vmatmul.bf16.gmra.mxu0 %v4212
    %v4226 = vpop.f32.mrf.mxu0
    %v4227 = vadd.f32 0.0, %v4226
    %v4228 = vpop.f32.mrf.mxu0
    %4229 = vdwg.mxu0
    %4230 = vrot.lane.b32.xlu0 %v3933, 48
    %v4231 = vpop.permute.xlu0 %4230
    %v4233 = vsel %vm106, %v4208, 0
    %v4236 = vsel %vm179, %v4231, 0
    %4238 = vmatpush.bf16.msra.mxu0 0
    %4239 = vmatpush.bf16.msra.mxu0 0
    %4240 = vmatpush.bf16.msra.mxu0 0
    %4241 = vmatpush.bf16.msra.mxu0 0
    %4242 = vmatpush.bf16.msra.mxu0 0
    %4243 = vmatpush.bf16.msra.mxu0 0
    %4244 = vmatpush.bf16.msra.mxu0 0
    %4245 = vmatpush.bf16.msra.mxu0 %v4236
    %4246 = vmatmul.bf16.gmra.mxu0 %v4233
    %v4247 = vpop.f32.mrf.mxu0
    %v4248 = vadd.f32 0.0, %v4247
    %v4249 = vpop.f32.mrf.mxu0
    %4250 = vdwg.mxu0
    %4251 = vrot.lane.b32.xlu0 %v4023, 104
    %v4252 = vpop.permute.xlu0 %4251
    %4253 = vrot.lane.b32.xlu0 %v3909, 72
    %v4254 = vpop.permute.xlu0 %4253
    %v4256 = vsel %vm106, %v4252, 0
    %v4259 = vsel %vm106, %v4254, 0
    %4261 = vmatpush.bf16.xpose.msra.mxu0 0
    %4262 = vmatpush.bf16.xpose.msra.mxu0 0
    %4263 = vmatpush.bf16.xpose.msra.mxu0 0
    %4264 = vmatpush.bf16.xpose.msra.mxu0 0
    %4265 = vmatpush.bf16.xpose.msra.mxu0 0
    %4266 = vmatpush.bf16.xpose.msra.mxu0 0
    %4267 = vmatpush.bf16.xpose.msra.mxu0 0
    %4268 = vmatpush.bf16.xpose.msra.mxu0 %v4259
    %4269 = vmatmul.bf16.gmra.mxu0 %v4256
    %v4270 = vpop.f32.mrf.mxu0
    %v4271 = vadd.f32 0.0, %v4270
    %v4272 = vpop.f32.mrf.mxu0
    %4273 = vdwg.mxu0
    %4274 = vrot.lane.b32.xlu0 %v4049, 104
    %v4275 = vpop.permute.xlu0 %4274
    %4276 = vrot.lane.b32.xlu0 %v3933, 72
    %v4277 = vpop.permute.xlu0 %4276
    %v4279 = vsel %vm106, %v4275, 0
    %v4282 = vsel %vm106, %v4277, 0
    %4284 = vmatpush.bf16.xpose.msra.mxu0 0
    %4285 = vmatpush.bf16.xpose.msra.mxu0 0
    %4286 = vmatpush.bf16.xpose.msra.mxu0 0
    %4287 = vmatpush.bf16.xpose.msra.mxu0 0
    %4288 = vmatpush.bf16.xpose.msra.mxu0 0
    %4289 = vmatpush.bf16.xpose.msra.mxu0 0
    %4290 = vmatpush.bf16.xpose.msra.mxu0 0
    %4291 = vmatpush.bf16.xpose.msra.mxu0 %v4282
    %4292 = vmatmul.bf16.gmra.mxu0 %v4279
    %v4293 = vpop.f32.mrf.mxu0
    %v4294 = vadd.f32 0.0, %v4293
    %v4295 = vpop.f32.mrf.mxu0
    %4296 = vdwg.mxu0
    %v4297 = vsel %vm106, %v4271, -inf
    %4298 = vmax.xlane.f32.xlu0 %v4297
    %v4299 = vpop.xlane.xlu0 %4298
    %v4300 = vsel %vm106, %v4294, -inf
    %4301 = vmax.xlane.f32.xlu0 %v4300
    %v4302 = vpop.xlane.xlu0 %4301
    %v4303 = vsub.f32 %v4271, %v4299
    %v4304 = vsub.f32 %v4294, %v4302
    %v4305 = vmul.f32 %v4303, 1.442695
    %v4306 = vpow.pop %v4305
    %v4307 = vmul.f32 %v4304, 1.442695
    %v4308 = vpow.pop %v4307
    %v4309 = vsel %vm106, %v4306, 0.0
    %4310 = vadd.xlane.f32.xlu0 %v4309
    %v4311 = vpop.xlane.xlu0 %4310
    %v4312 = vsel %vm106, %v4308, 0.0
    %4313 = vadd.xlane.f32.xlu0 %v4312
    %v4314 = vpop.xlane.xlu0 %4313
    %v4315 = vrcp.pop %v4311
    %v4316 = vrcp.pop %v4314
    %v4317 = vmul.f32 %v4306, %v4315
    %v4318 = vmul.f32 %v4308, %v4316
    %v4319 = vpack.c.bf16 %v4317, %v4317
    %v4320 = vpack.c.bf16 %v4318, %v4318
    %4321 = vrot.lane.b32.xlu0 %v3909, 40
    %v4322 = vpop.permute.xlu0 %4321
    %v4324 = vsel %vm106, %v4319, 0
    %v4327 = vsel %vm179, %v4322, 0
    %4329 = vmatpush.bf16.msra.mxu0 0
    %4330 = vmatpush.bf16.msra.mxu0 0
    %4331 = vmatpush.bf16.msra.mxu0 0
    %4332 = vmatpush.bf16.msra.mxu0 0
    %4333 = vmatpush.bf16.msra.mxu0 0
    %4334 = vmatpush.bf16.msra.mxu0 0
    %4335 = vmatpush.bf16.msra.mxu0 0
    %4336 = vmatpush.bf16.msra.mxu0 %v4327
    %4337 = vmatmul.bf16.gmra.mxu0 %v4324
    %v4338 = vpop.f32.mrf.mxu0
    %v4339 = vadd.f32 0.0, %v4338
    %v4340 = vpop.f32.mrf.mxu0
    %4341 = vdwg.mxu0
    %4342 = vrot.lane.b32.xlu0 %v3933, 40
    %v4343 = vpop.permute.xlu0 %4342
    %v4345 = vsel %vm106, %v4320, 0
    %v4348 = vsel %vm179, %v4343, 0
    %4350 = vmatpush.bf16.msra.mxu0 0
    %4351 = vmatpush.bf16.msra.mxu0 0
    %4352 = vmatpush.bf16.msra.mxu0 0
    %4353 = vmatpush.bf16.msra.mxu0 0
    %4354 = vmatpush.bf16.msra.mxu0 0
    %4355 = vmatpush.bf16.msra.mxu0 0
    %4356 = vmatpush.bf16.msra.mxu0 0
    %4357 = vmatpush.bf16.msra.mxu0 %v4348
    %4358 = vmatmul.bf16.gmra.mxu0 %v4345
    %v4359 = vpop.f32.mrf.mxu0
    %v4360 = vadd.f32 0.0, %v4359
    %v4361 = vpop.f32.mrf.mxu0
    %4362 = vdwg.mxu0
    %4365 = vrot.lane.b32.xlu0 %v4115, 8
    %v4366 = vpop.permute.xlu0 %4365
    %4367 = vrot.lane.b32.xlu0 %v4136, 8
    %v4368 = vpop.permute.xlu0 %4367
    %4373 = vrot.lane.b32.xlu0 %v4227, 16
    %v4374 = vpop.permute.xlu0 %4373
    %4375 = vrot.lane.b32.xlu0 %v4248, 16
    %v4376 = vpop.permute.xlu0 %4375
    %4381 = vrot.lane.b32.xlu0 %v4339, 24
    %v4382 = vpop.permute.xlu0 %4381
    %4383 = vrot.lane.b32.xlu0 %v4360, 24
    %v4384 = vpop.permute.xlu0 %4383
    %v4387 = vsel %vm106, %v3997, %v4366
    %v4388 = vsel %vm106, %v4018, %v4368
    %v4389 = vsel %vm579, %v4387, %v4374
    %v4390 = vsel %vm579, %v4388, %v4376
    %v4391 = vsel %vm582, %v4389, %v4382
    %v4392 = vsel %vm582, %v4390, %v4384
    %s4393 = scalar_lea.vmem %s3, 80
    %v4394 = vld [vmem:[%s4393] sm:$0xf]
    %v4395 = vld [vmem:[%s4393 + $0x4] sm:$0xf]
    %v4396 = vld [vmem:[%s4393 + $0x8] sm:$0xf]
    %v4397 = vld [vmem:[%s4393 + $0xc] sm:$0xf]
    %v4398 = vpack.c.bf16 %v4392, %v4391
    %v4399 = vld [vmem:[#allocation5 + $0xb] sm:$0x1]
    %v4400 = vperm.slane %v4399, 0
    %v4405 = vunpack.c.l.b16 %v4394
    %v4406 = vunpack.c.l.b16 %v4395
    %v4407 = vunpack.c.l.b16 %v4396
    %v4408 = vunpack.c.l.b16 %v4397
    %v4409 = vpack.c.b16 %v4406, %v4405
    %v4410 = vpack.c.b16 %v4408, %v4407
    %v4414 = vsel %vm81, %v4398, 0
    %4416 = vmatpush.bf16.msra.mxu0 0
    %4417 = vmatpush.bf16.msra.mxu0 0
    %4418 = vmatpush.bf16.msra.mxu0 0
    %4419 = vmatpush.bf16.msra.mxu0 0
    %4420 = vmatpush.bf16.msra.mxu0 0
    %4421 = vmatpush.bf16.msra.mxu0 0
    %4422 = vmatpush.bf16.msra.mxu0 %v4410
    %4423 = vmatpush.bf16.msra.mxu0 %v4409
    %4424 = vmatmul.bf16.gmra.mxu0 %v4414
    %v4425 = vpop.f32.mrf.mxu0
    %v4426 = vadd.f32 %v4400, %v4425
    %v4427 = vpop.f32.mrf.mxu0
    %v4428 = vadd.f32 %v4400, %v4427
    %4429 = vdwg.mxu0
    %v4430 = vadd.f32 %v3850, %v4426
    %v4431 = vadd.f32 %v3851, %v4428
    %v4432 = vld [vmem:[#allocation5 + $0x1c] sm:$0x1]
    %v4433 = vld [vmem:[#allocation5 + $0x26] sm:$0x1]
    %v4434 = vsel %vm81, %v4430, 0.0
    %4435 = vadd.xlane.f32.xlu0 %v4434
    %v4436 = vpop.xlane.xlu0 %4435
    %v4437 = vsel %vm81, %v4431, 0.0
    %4438 = vadd.xlane.f32.xlu0 %v4437
    %v4439 = vpop.xlane.xlu0 %4438
    %v4440 = vmul.f32 %v4436, %v637
    %v4441 = vmul.f32 %v4439, %v637
    %v4442 = vsub.f32 %v4430, %v4440
    %v4443 = vsub.f32 %v4431, %v4441
    %v4444 = vmul.f32 %v4442, %v4442
    %v4445 = vmul.f32 %v4443, %v4443
    %v4446 = vsel %vm81, %v4444, 0.0
    %4447 = vadd.xlane.f32.xlu0 %v4446
    %v4448 = vpop.xlane.xlu0 %4447
    %v4449 = vsel %vm81, %v4445, 0.0
    %4450 = vadd.xlane.f32.xlu0 %v4449
    %v4451 = vpop.xlane.xlu0 %4450
    %v4452 = vmul.f32 %v4448, %v637
    %v4453 = vmul.f32 %v4451, %v637
    %v4454 = vadd.f32 %v4452, 1e-05
    %v4455 = vadd.f32 %v4453, 1e-05
    %v4456 = vrsqrt.pop %v4454
    %v4457 = vmul.f32 %v4456, %v4454
    %v4458 = vmul.f32 %v4457, %v4456
    %v4459 = vmul.f32 0.5, %v4458
    %v4460 = vsub.f32 1.5, %v4459
    %v4461 = vmul.f32 %v4456, %v4460
    %vm4462 = vweird.f32 %v4454
    %vm4463 = vweird.f32 %v4456
    %vm4464 = vmor %vm4462, %vm4463
    %v4465 = vsel %vm4464, %v4456, %v4461
    %v4466 = vrsqrt.pop %v4455
    %v4467 = vmul.f32 %v4466, %v4455
    %v4468 = vmul.f32 %v4467, %v4466
    %v4469 = vmul.f32 0.5, %v4468
    %v4470 = vsub.f32 1.5, %v4469
    %v4471 = vmul.f32 %v4466, %v4470
    %vm4472 = vweird.f32 %v4455
    %vm4473 = vweird.f32 %v4466
    %vm4474 = vmor %vm4472, %vm4473
    %v4475 = vsel %vm4474, %v4466, %v4471
    %v4476 = vmul.f32 %v4442, %v4465
    %v4477 = vmul.f32 %v4443, %v4475
    %v4478 = vperm.slane %v4432, 0
    %v4479 = vmul.f32 %v4476, %v4478
    %v4480 = vmul.f32 %v4477, %v4478
    %v4481 = vperm.slane %v4433, 0
    %v4482 = vadd.f32 %v4479, %v4481
    %v4483 = vadd.f32 %v4480, %v4481
    %s4484 = scalar_lea.vmem [#allocation2], 48
    %v4485 = vld [vmem:[%s4484] sm:$0xf]
    %v4486 = vld [vmem:[%s4484 + $0x4] sm:$0xf]
    %v4487 = vld [vmem:[%s4484 + $0x8] sm:$0xf]
    %v4488 = vld [vmem:[%s4484 + $0xc] sm:$0xf]
    %v4489 = vpack.c.bf16 %v4483, %v4482
    %v4490 = vld [vmem:[#allocation5 + $0xf] sm:$0x1]
    %v4491 = vperm.slane %v4490, 0
    %v4496 = vunpack.c.l.b16 %v4485
    %v4497 = vunpack.c.l.b16 %v4486
    %v4498 = vunpack.c.l.b16 %v4487
    %v4499 = vunpack.c.l.b16 %v4488
    %v4500 = vpack.c.b16 %v4497, %v4496
    %v4501 = vpack.c.b16 %v4499, %v4498
    %v4505 = vsel %vm81, %v4489, 0
    %4507 = vmatpush.bf16.msra.mxu0 0
    %4508 = vmatpush.bf16.msra.mxu0 0
    %4509 = vmatpush.bf16.msra.mxu0 0
    %4510 = vmatpush.bf16.msra.mxu0 0
    %4511 = vmatpush.bf16.msra.mxu0 0
    %4512 = vmatpush.bf16.msra.mxu0 0
    %4513 = vmatpush.bf16.msra.mxu0 %v4501
    %4514 = vmatpush.bf16.msra.mxu0 %v4500
    %4515 = vmatmul.bf16.gmra.mxu0 %v4505
    %v4516 = vpop.f32.mrf.mxu0
    %v4517 = vadd.f32 %v4491, %v4516
    %v4518 = vpop.f32.mrf.mxu0
    %v4519 = vadd.f32 %v4491, %v4518
    %4520 = vdwg.mxu0
    %v4521 = vmul.f32 %v4517, 0.5
    %v4522 = vmul.f32 %v4519, 0.5
    %v4523 = vmul.f32 %v4517, %v726
    %v4524 = vmul.f32 %v4519, %v726
    %v4525 = vmul.f32 %v4523, %v4523
    %v4526 = vmin.f32 16.0, %v4525
    %v4527 = vmul.f32 %v4526, 2.1237322e-06
    %v4528 = vadd.f32 %v4527, 0.00028619796
    %v4529 = vmul.f32 %v4526, %v4528
    %v4530 = vadd.f32 %v4529, 0.0036580483
    %v4531 = vmul.f32 %v4526, %v4530
    %v4532 = vadd.f32 %v4531, 0.05243302
    %v4533 = vmul.f32 %v4526, %v4532
    %v4534 = vadd.f32 %v4533, 0.18741608
    %v4535 = vmul.f32 %v4526, %v4534
    %v4536 = vadd.f32 %v4535, 1.1283791
    %v4537 = vmul.f32 %v4523, %v4536
    %v4538 = vmul.f32 %v4526, 3.8918573e-05
    %v4539 = vadd.f32 %v4538, 0.001143296
    %v4540 = vmul.f32 %v4526, %v4539
    %v4541 = vadd.f32 %v4540, 0.014752088
    %v4542 = vmul.f32 %v4526, %v4541
    %v4543 = vadd.f32 %v4542, 0.112945676
    %v4544 = vmul.f32 %v4526, %v4543
    %v4545 = vadd.f32 %v4544, 0.4994258
    %v4546 = vmul.f32 %v4526, %v4545
    %v4547 = vadd.f32 %v4546, 1.0
    %v4548 = vrcp.pop %v4547
    %v4549 = vmul.f32 %v4547, %v4548
    %v4550 = vsub.f32 1.0, %v4549
    %v4551 = vmul.f32 %v4548, %v4550
    %v4552 = vadd.f32 %v4548, %v4551
    %vm4553 = vweird.f32 %v4547
    %vm4554 = vweird.f32 %v4548
    %vm4555 = vmor %vm4553, %vm4554
    %v4556 = vsel %vm4555, %v4548, %v4552
    %v4557 = vand.u32 2147483647, %v4547
    %vm4558 = vcmp.eq.f32.partialorder %v4557, 8.507059e+37
    %v4559 = vand.u32 %v4547, 2147483648
    %v4560 = vor.u32 1.1754944e-38, %v4559
    %v4561 = vsel %vm4558, %v4560, %v4556
    %v4562 = vmul.f32 %v4537, %v4561
    %v4563 = vmin.f32 %v4562, 1.0
    %v4564 = vmax.f32 %v4563, -1.0
    %v4565 = vmul.f32 %v4524, %v4524
    %v4566 = vmin.f32 16.0, %v4565
    %v4567 = vmul.f32 %v4566, 2.1237322e-06
    %v4568 = vadd.f32 %v4567, 0.00028619796
    %v4569 = vmul.f32 %v4566, %v4568
    %v4570 = vadd.f32 %v4569, 0.0036580483
    %v4571 = vmul.f32 %v4566, %v4570
    %v4572 = vadd.f32 %v4571, 0.05243302
    %v4573 = vmul.f32 %v4566, %v4572
    %v4574 = vadd.f32 %v4573, 0.18741608
    %v4575 = vmul.f32 %v4566, %v4574
    %v4576 = vadd.f32 %v4575, 1.1283791
    %v4577 = vmul.f32 %v4524, %v4576
    %v4578 = vmul.f32 %v4566, 3.8918573e-05
    %v4579 = vadd.f32 %v4578, 0.001143296
    %v4580 = vmul.f32 %v4566, %v4579
    %v4581 = vadd.f32 %v4580, 0.014752088
    %v4582 = vmul.f32 %v4566, %v4581
    %v4583 = vadd.f32 %v4582, 0.112945676
    %v4584 = vmul.f32 %v4566, %v4583
    %v4585 = vadd.f32 %v4584, 0.4994258
    %v4586 = vmul.f32 %v4566, %v4585
    %v4587 = vadd.f32 %v4586, 1.0
    %v4588 = vrcp.pop %v4587
    %v4589 = vmul.f32 %v4587, %v4588
    %v4590 = vsub.f32 1.0, %v4589
    %v4591 = vmul.f32 %v4588, %v4590
    %v4592 = vadd.f32 %v4588, %v4591
    %vm4593 = vweird.f32 %v4587
    %vm4594 = vweird.f32 %v4588
    %vm4595 = vmor %vm4593, %vm4594
    %v4596 = vsel %vm4595, %v4588, %v4592
    %v4597 = vand.u32 2147483647, %v4587
    %vm4598 = vcmp.eq.f32.partialorder %v4597, 8.507059e+37
    %v4599 = vand.u32 %v4587, 2147483648
    %v4600 = vor.u32 1.1754944e-38, %v4599
    %v4601 = vsel %vm4598, %v4600, %v4596
    %v4602 = vmul.f32 %v4577, %v4601
    %v4603 = vmin.f32 %v4602, 1.0
    %v4604 = vmax.f32 %v4603, -1.0
    %v4605 = vadd.f32 %v4564, 1.0
    %v4606 = vadd.f32 %v4604, 1.0
    %v4607 = vmul.f32 %v4521, %v4605
    %v4608 = vmul.f32 %v4522, %v4606
    %s4609 = scalar_lea.vmem %s5, 96
    %v4610 = vld [vmem:[%s4609] sm:$0xf]
    %v4611 = vld [vmem:[%s4609 + $0x4] sm:$0xf]
    %v4612 = vld [vmem:[%s4609 + $0x8] sm:$0xf]
    %v4613 = vld [vmem:[%s4609 + $0xc] sm:$0xf]
    %v4614 = vld [vmem:[%s4609 + $0x10] sm:$0xf]
    %v4615 = vld [vmem:[%s4609 + $0x14] sm:$0xf]
    %v4616 = vld [vmem:[%s4609 + $0x18] sm:$0xf]
    %v4617 = vld [vmem:[%s4609 + $0x1c] sm:$0xf]
    %v4618 = vpack.c.bf16 %v4608, %v4607
    %v4619 = vld [vmem:[#allocation5 + $0x13] sm:$0x1]
    %v4620 = vperm.slane %v4619, 0
    %v4629 = vunpack.c.l.b16 %v4610
    %v4630 = vunpack.c.l.b16 %v4611
    %v4631 = vunpack.c.l.b16 %v4612
    %v4632 = vunpack.c.l.b16 %v4613
    %v4633 = vunpack.c.l.b16 %v4614
    %v4634 = vunpack.c.l.b16 %v4615
    %v4635 = vunpack.c.l.b16 %v4616
    %v4636 = vunpack.c.l.b16 %v4617
    %v4637 = vpack.c.b16 %v4630, %v4629
    %v4638 = vpack.c.b16 %v4632, %v4631
    %v4639 = vpack.c.b16 %v4634, %v4633
    %v4640 = vpack.c.b16 %v4636, %v4635
    %v4646 = vsel %vm848, %v4618, 0
    %4648 = vmatpush.bf16.msra.mxu0 0
    %4649 = vmatpush.bf16.msra.mxu0 0
    %4650 = vmatpush.bf16.msra.mxu0 0
    %4651 = vmatpush.bf16.msra.mxu0 0
    %4652 = vmatpush.bf16.msra.mxu0 %v4640
    %4653 = vmatpush.bf16.msra.mxu0 %v4639
    %4654 = vmatpush.bf16.msra.mxu0 %v4638
    %4655 = vmatpush.bf16.msra.mxu0 %v4637
    %4656 = vmatmul.bf16.gmra.mxu0 %v4646
    %v4657 = vpop.f32.mrf.mxu0
    %v4658 = vadd.f32 %v4620, %v4657
    %v4659 = vpop.f32.mrf.mxu0
    %v4660 = vadd.f32 %v4620, %v4659
    %4661 = vdwg.mxu0
    %v4662 = vadd.f32 %v4482, %v4658
    %v4663 = vadd.f32 %v4483, %v4660
    %v4664 = vld [vmem:[#allocation5 + $0x1d] sm:$0x1]
    %v4665 = vld [vmem:[#allocation5 + $0x27] sm:$0x1]
    %v4666 = vsel %vm81, %v4662, 0.0
    %4667 = vadd.xlane.f32.xlu0 %v4666
    %v4668 = vpop.xlane.xlu0 %4667
    %v4669 = vsel %vm81, %v4663, 0.0
    %4670 = vadd.xlane.f32.xlu0 %v4669
    %v4671 = vpop.xlane.xlu0 %4670
    %v4672 = vmul.f32 %v4668, %v637
    %v4673 = vmul.f32 %v4671, %v637
    %v4674 = vsub.f32 %v4662, %v4672
    %v4675 = vsub.f32 %v4663, %v4673
    %v4676 = vmul.f32 %v4674, %v4674
    %v4677 = vmul.f32 %v4675, %v4675
    %v4678 = vsel %vm81, %v4676, 0.0
    %4679 = vadd.xlane.f32.xlu0 %v4678
    %v4680 = vpop.xlane.xlu0 %4679
    %v4681 = vsel %vm81, %v4677, 0.0
    %4682 = vadd.xlane.f32.xlu0 %v4681
    %v4683 = vpop.xlane.xlu0 %4682
    %v4684 = vmul.f32 %v4680, %v637
    %v4685 = vmul.f32 %v4683, %v637
    %v4686 = vadd.f32 %v4684, 1e-05
    %v4687 = vadd.f32 %v4685, 1e-05
    %v4688 = vrsqrt.pop %v4686
    %v4689 = vmul.f32 %v4688, %v4686
    %v4690 = vmul.f32 %v4689, %v4688
    %v4691 = vmul.f32 0.5, %v4690
    %v4692 = vsub.f32 1.5, %v4691
    %v4693 = vmul.f32 %v4688, %v4692
    %vm4694 = vweird.f32 %v4686
    %vm4695 = vweird.f32 %v4688
    %vm4696 = vmor %vm4694, %vm4695
    %v4697 = vsel %vm4696, %v4688, %v4693
    %v4698 = vrsqrt.pop %v4687
    %v4699 = vmul.f32 %v4698, %v4687
    %v4700 = vmul.f32 %v4699, %v4698
    %v4701 = vmul.f32 0.5, %v4700
    %v4702 = vsub.f32 1.5, %v4701
    %v4703 = vmul.f32 %v4698, %v4702
    %vm4704 = vweird.f32 %v4687
    %vm4705 = vweird.f32 %v4698
    %vm4706 = vmor %vm4704, %vm4705
    %v4707 = vsel %vm4706, %v4698, %v4703
    %v4708 = vmul.f32 %v4674, %v4697
    %v4709 = vmul.f32 %v4675, %v4707
    %v4710 = vperm.slane %v4664, 0
    %v4711 = vmul.f32 %v4708, %v4710
    %v4712 = vmul.f32 %v4709, %v4710
    %v4713 = vperm.slane %v4665, 0
    %v4714 = vadd.f32 %v4711, %v4713
    %v4715 = vadd.f32 %v4712, %v4713
    %v4716 = vsel %vm81, %v4714, 0.0
    %v4717 = vsel %vm81, %v4715, 0.0
    %v4718 = vadd.f32 %v4716, %v4717
    %v4719 = vrcp.pop 2.0
    %v4720 = vmul.f32 2.0, %v4719
    %v4721 = vsub.f32 1.0, %v4720
    %v4722 = vmul.f32 %v4719, %v4721
    %v4723 = vadd.f32 %v4719, %v4722
    %vm4724 = vweird.f32 %v4719
    %v4725 = vsel %vm4724, %v4719, %v4723
    %v4726 = vmul.f32 %v4718, %v4725
    %v4727 = vtanh.pop %v4726
    %4728 = vst.msk [vmem:[#allocation7] sm:$0xff] %vm81, %v4727
    // Predicated region
    $region38: #{transformer_embed.1} parent=1 // pred_check
      _
    $region39: #{transformer_embed.1} parent=1 // pred_check_branch
      %4730 = sbr.rel (0) target = $region41
    $region40: #{transformer_embed.1} parent=1 // pred_region
      %4732 = vsyncadd [#allocation4], 0
      %s4734 = sshll.u32 [#allocation7], 4
      %s4735 = int_to_ptr.vmem [resolvable:$true] %s4734
      %s4736 = sshll.u32 %s7, 4
      %s4737 = int_to_ptr.hbm [resolvable:$true] %s4736
      %4739 = dma.vmem_to_hbm [thread:$0]  %s4735, 128, %s4737, [#allocation4]
    $region41: #{transformer_embed.1} parent=1 // pred_fallthru
      _
    // Predicated region
    $region42: #{transformer_embed.1} parent=1 // pred_check
      _
    $region43: #{transformer_embed.1} parent=1 // pred_check_branch
      %4741 = sbr.rel (0) target = $region45
    $region44: #{transformer_embed.1} parent=1 // pred_region
      %4743 = dma.done [#allocation4], 128
    $region45: #{transformer_embed.1} parent=1 // pred_fallthru
      _
    %4744 = vsyncpa [#allocation3], 1
    %4745 = vsyncpa [#allocation6], 1
    %4746 = vsyncpa [#allocation4], 1

</llo_original>
